<compile_context>
chip_gen: v5e
topology: v5e:2x2
jax: 0.10.0
libtpu: 0.0.40
codegen_flags: <defaults>
</compile_context>

<pallas_src>
import functools

import numpy as np
import jax
import jax.numpy as jnp
from jax import lax
from jax.experimental import pallas as pl
from jax.experimental.pallas import tpu as pltpu


# ----------------------------------------------------------------------------
# Fused kernel: 4x (conv3x3 + folded BN + ReLU + maxpool2) + 2x maxout MLP
# ----------------------------------------------------------------------------
def _fused_cnn_maxo_kernel(
    x_ref, u_ref,
    r1_ref, r2_ref, r3_ref, r4_ref,
    cb1_ref, cb2_ref, cb3_ref, cb4_ref,
    fc1wx_ref, fc1wu_ref, fc1b_ref, fc2w_ref, fc2b_ref,
    o_ref,
    *, img_h, chans, mlp_dim, num_units, num_classes):
  f32 = jnp.float32
  bf16 = jnp.bfloat16
  BH = x_ref.shape[0]                      # B * img_h   (stacked image rows)
  B = BH // img_h

  # Per-image row coordinate of every sublane row (hoisted; shared by all the
  # dh boundary masks of every stage).
  hh = lax.broadcasted_iota(jnp.int32, (BH, 1), 0) % img_h

  def conv_stage(act, r_ref, b_ref, stride, mm_dtype):
    """3x3 conv (+folded BN) + ReLU in the row-banded layout.

    The kw taps, the 'same' zero padding in w, the post-pool column stride and
    the garbage column blocks are all folded into the banded RHS r_ref[dh];
    only the kh taps need a sublane roll + one per-row boundary mask.
    """
    n_out = r_ref.shape[2]
    acc = jnp.zeros((BH, n_out), f32)
    for d, dh in enumerate((-1, 0, 1)):
      if dh == 0:
        lhs = act
      else:
        lhs = pltpu.roll(act, (-dh * stride) % BH, axis=0)
        valid = (hh >= stride) if dh < 0 else (hh < img_h - stride)
        lhs = jnp.where(valid, lhs, 0.0)         # 'same' padding in h (+ stops
        #                                          cross-image wrap of the roll)
      acc = acc + jnp.dot(lhs.astype(mm_dtype), r_ref[d],
                          preferred_element_type=f32)
    return jnp.maximum(acc + b_ref[...], 0.0)    # folded conv-bias/BN + ReLU

  def pool2(y, stride, blk):
    """2x2 max-pool: rows h & h+stride (sublane roll) and column blocks j & j+1
    (lane roll by one channel block).  Live sites stay in place; dead rows /
    blocks carry finite garbage that later stages multiply by exact zeros."""
    y = jnp.maximum(y, pltpu.roll(y, (BH - stride) % BH, axis=0))
    width = y.shape[1]
    y = jnp.maximum(y, pltpu.roll(y, (width - blk) % width, axis=1))
    return y

  c1, c2, c3, c4 = chans
  x = x_ref[...]                                                 # (BH, W) f32
  a = conv_stage(x, r1_ref, cb1_ref, stride=1, mm_dtype=f32)     # (BH, 16*c1)
  a = pool2(a, 1, c1)
  a = conv_stage(a, r2_ref, cb2_ref, stride=2, mm_dtype=bf16)    # (BH, 8*c2)
  a = pool2(a, 2, c2)
  a = conv_stage(a, r3_ref, cb3_ref, stride=4, mm_dtype=bf16)    # (BH, 4*c3)
  a = pool2(a, 4, c3)
  a = conv_stage(a, r4_ref, cb4_ref, stride=8, mm_dtype=f32)     # (BH, 2*c4)
  a = pool2(a, 8, c4)

  # Final live site per image: row h == 0, lane block 0 -> the (1x1 x c4) CNN
  # feature (channel order == PyTorch's NCHW flatten for a 1x1 spatial tail).
  # Extract the B live rows with an exact one-hot selection matmul (no strided
  # sublane gather needed).
  col = lax.broadcasted_iota(jnp.int32, (B, BH), 1)
  img = lax.broadcasted_iota(jnp.int32, (B, BH), 0)
  sel = (col == img * img_h).astype(f32)                         # (B, BH)
  feat = jnp.dot(sel, a[:, 0:c4], preferred_element_type=f32)    # (B, c4)

  # maxout fc1 (f32): contraction split over [image-feat | global-feat] avoids
  # an in-kernel concat.
  y1 = (jnp.dot(feat, fc1wx_ref[...], preferred_element_type=f32)
        + jnp.dot(u_ref[...], fc1wu_ref[...], preferred_element_type=f32)
        + fc1b_ref[...])                                         # (B, U*M)
  h = y1[:, 0:mlp_dim]
  for u in range(1, num_units):
    h = jnp.maximum(h, y1[:, u * mlp_dim:(u + 1) * mlp_dim])

  # TODO(synk): nn.Dropout(p=dropout_mlp) / nn.Dropout2d are identity at inference.

  # maxout fc2 (f32).
  y2 = jnp.dot(h, fc2w_ref[...], preferred_element_type=f32) + fc2b_ref[...]
  out = y2[:, 0:num_classes]
  for u in range(1, num_units):
    out = jnp.maximum(out, y2[:, u * num_classes:(u + 1) * num_classes])
  o_ref[...] = out


# ----------------------------------------------------------------------------
# Weight packing: BN folding + banded per-dh RHS matrices + lane-dense MLP
# ----------------------------------------------------------------------------
def _banded_rhs(wf, nb_out, first_stage):
  """Banded RHS for one conv stage in the row-banded layout.

  Input lanes : ws*cin + ci, ws = previous stage's (compact) column block
                (post-pool live blocks sit at even ws; stage 1's input is the
                raw image, one lane per column).
  Output lanes: j*cout + co, j = compact live-column index of this stage.
  rhs[dh][ws*cin+ci, j*cout+co] = wf[dh, dw, ci, co] for the matching source
  block, zero elsewhere -- folding the kw taps, 'same' zero padding in w, the
  post-pool column stride and the dead input blocks into one constant matrix.
  """
  cin, cout = wf.shape[2], wf.shape[3]
  nb_in = nb_out if first_stage else 2 * nb_out
  rhs = np.zeros((3, nb_in * cin, nb_out * cout), np.float32)
  for d in range(3):                       # kh tap
    for j in range(nb_out):
      for t, dw in enumerate((-1, 0, 1)):  # kw tap
        if 0 <= j + dw < nb_out:           # 'same' padding in w
          ws = (j + dw) if first_stage else 2 * (j + dw)
          rhs[d, ws * cin:(ws + 1) * cin, j * cout:(j + 1) * cout] = wf[d, t]
  return rhs


def pack_params(params, H=16, W=16):
  """Fold conv-bias/BatchNorm, build per-stage banded RHS + tiled bias and the
  lane-dense maxout MLP weights (all constants; fetched once per kernel)."""
  assert H == 16 and W == 16
  # TODO(synk): other nrows/ncols/nchannels need a generalised stage-1 layout
  # and a gathered flatten for fc1; not needed for this configuration.
  stage_dtypes = (jnp.float32, jnp.bfloat16, jnp.bfloat16, jnp.float32)
  rhs_list, cb_list = [], []
  nb_out = W
  for i, (w, b, scale, shift) in enumerate(params["convs"]):
    w = np.asarray(w, np.float32)
    b = np.asarray(b, np.float32)
    scale = np.asarray(scale, np.float32)
    shift = np.asarray(shift, np.float32)
    cout = w.shape[-1]
    wf = w * scale.reshape(1, 1, 1, cout)            # fold BN scale into weight
    bf = b * scale + shift                           # fold conv bias + BN shift
    rhs_list.append(jnp.asarray(_banded_rhs(wf, nb_out, i == 0),
                                stage_dtypes[i]))
    cb_list.append(jnp.asarray(np.tile(bf, nb_out)[None, :], jnp.float32))
    nb_out //= 2

  fc1_w = np.asarray(params["fc1_w"], np.float32)    # (U, Z+D, M)
  fc1_b = np.asarray(params["fc1_b"], np.float32)    # (U, 1, M)
  fc2_w = np.asarray(params["fc2_w"], np.float32)    # (U, M, C)
  fc2_b = np.asarray(params["fc2_b"], np.float32)    # (U, 1, C)
  n_units, k1, mdim = fc1_w.shape
  num_classes = fc2_w.shape[-1]
  Z = int(params["convs"][-1][0].shape[-1])          # 1x1 spatial tail -> c4
  fc1w = fc1_w.transpose(1, 0, 2).reshape(k1, n_units * mdim)   # lane = u*M + m

  return {
      "rhs": tuple(rhs_list),
      "cbias": tuple(cb_list),
      "fc1wx": jnp.asarray(fc1w[:Z], jnp.float32),
      "fc1wu": jnp.asarray(fc1w[Z:], jnp.float32),
      "fc1b": jnp.asarray(fc1_b.reshape(1, n_units * mdim), jnp.float32),
      "fc2w": jnp.asarray(fc2_w.transpose(1, 0, 2).reshape(mdim,
                                                           n_units * num_classes),
                          jnp.float32),
      "fc2b": jnp.asarray(fc2_b.reshape(1, n_units * num_classes), jnp.float32),
  }


# ----------------------------------------------------------------------------
# Wrapper: batched pallas_call
# ----------------------------------------------------------------------------
def _pick_images_per_step(N):
  # Batch several images per grid step; keep the grid >= 2 (even -> both v7x
  # TensorCores get work) and keep the block sublane count a multiple of 8.
  for B in (32, 16, 8):
    if N % B == 0 and N // B >= 2:
      return B
  return N          # single grid step; every block equals the full array


@jax.jit
def cnn_maxo_forward(packed, X_nchw, U_feat):
  """CNN_MAXO.forward for data = {'x': X_nchw, 'u': U_feat} (inference)."""
  N, cin0, H, W = X_nchw.shape
  assert cin0 == 1, "fused kernel is specialised to single-channel images"
  assert H == 16 and W == 16, "fused kernel is specialised to 16x16 images"

  rhs, cbias = packed["rhs"], packed["cbias"]
  chans = tuple(int(cbias[i].shape[1]) // (W >> i) for i in range(4))
  mdim = packed["fc2w"].shape[0]
  n_units = packed["fc1wx"].shape[1] // mdim
  num_classes = packed["fc2w"].shape[1] // n_units
  D = U_feat.shape[1]
  assert packed["fc1wu"].shape[0] == D

  B = _pick_images_per_step(N)
  grid = (N // B,)

  # Lane-dense, HBM-contiguous image rows: (N*16, 16) f32, lane = column.
  x = X_nchw.reshape(N * H, W).astype(jnp.float32)

  weight_args = list(rhs) + list(cbias) + [
      packed["fc1wx"], packed["fc1wu"], packed["fc1b"],
      packed["fc2w"], packed["fc2b"]]
  # Constant blocks (index never changes) -> Pallas only DMAs them once.
  weight_specs = [pl.BlockSpec(a.shape, lambda g, nd=a.ndim: (0,) * nd)
                  for a in weight_args]

  kernel = functools.partial(
      _fused_cnn_maxo_kernel, img_h=H, chans=chans, mlp_dim=mdim,
      num_units=n_units, num_classes=num_classes)

  return pl.pallas_call(
      kernel,
      out_shape=jax.ShapeDtypeStruct((N, num_classes), jnp.float32),
      grid=grid,
      in_specs=[
          pl.BlockSpec((B * H, W), lambda g: (g, 0)),   # B stacked images
          pl.BlockSpec((B, D), lambda g: (g, 0)),       # global features
      ] + weight_specs,
      out_specs=pl.BlockSpec((B, num_classes), lambda g: (g, 0)),
      compiler_params=pltpu.CompilerParams(
          dimension_semantics=("parallel",)),           # batch across TCs
  )(x, U_feat.astype(jnp.float32), *weight_args)


# ----------------------------------------------------------------------------
# Parameter init (deterministic, synthetic -- mirrors the PyTorch __init__ shapes)
# ----------------------------------------------------------------------------
def init_params(key, D, C, nchannels=1, nrows=16, ncols=16, mlp_dim=32,
                num_units=6):
  conv_defs = [(nchannels, 32), (32, 32), (32, 32), (32, 64)]
  eps = 1e-5
  convs = []
  for i, (cin, cout) in enumerate(conv_defs):
    key, k1, k2 = jax.random.split(key, 3)
    fan_in = 9 * cin
    w = jax.random.normal(k1, (3, 3, cin, cout), jnp.float32) / jnp.sqrt(fan_in)
    b = 0.01 * jax.random.normal(k2, (cout,), jnp.float32)
    if i == 0:
      scale = jnp.ones((cout,), jnp.float32)            # no BatchNorm in block 1
      shift = jnp.zeros((cout,), jnp.float32)
    else:
      # BatchNorm eval mode with fresh stats: gamma=1, beta=0, mean=0, var=1
      scale = jnp.full((cout,), 1.0 / jnp.sqrt(1.0 + eps), jnp.float32)
      shift = jnp.zeros((cout,), jnp.float32)
    convs.append((w, b, scale, shift))

  Z = 64 * (nrows // 16) * (ncols // 16)
  K1 = Z + D
  key, ka, kb, kc, kd = jax.random.split(key, 5)
  params = {
      "convs": convs,
      "fc1_w": jax.random.normal(ka, (num_units, K1, mlp_dim), jnp.float32)
               * jnp.sqrt(2.0 / (K1 + mlp_dim)),            # xavier-normal
      "fc1_b": 0.01 * jax.random.normal(kb, (num_units, 1, mlp_dim), jnp.float32),
      "fc2_w": jax.random.normal(kc, (num_units, mlp_dim, C), jnp.float32)
               * jnp.sqrt(2.0 / (mlp_dim + C)),             # xavier-normal
      "fc2_b": 0.01 * jax.random.normal(kd, (num_units, 1, C), jnp.float32),
  }
  return params, Z


# ----------------------------------------------------------------------------
# Pure-JAX (XLA) reference of CNN_MAXO.forward, used for validation only
# ----------------------------------------------------------------------------
@jax.jit
def reference_forward(params, X_nchw, U_feat):
  x = jnp.transpose(X_nchw, (0, 2, 3, 1))                    # NHWC
  for (w, b, scale, shift) in params["convs"]:
    y = lax.conv_general_dilated(
        x, w, window_strides=(1, 1), padding="SAME",
        dimension_numbers=("NHWC", "HWIO", "NHWC"))
    y = jnp.maximum((y + b) * scale + shift, 0.0)            # conv-bias, BN, ReLU
    n, hh, ww, c = y.shape
    x = y.reshape(n, hh // 2, 2, ww // 2, 2, c).max(axis=(2, 4))   # MaxPool2d(2)
  n = x.shape[0]
  x1 = jnp.transpose(x, (0, 3, 1, 2)).reshape(n, -1)         # NCHW flatten
  xcat = jnp.concatenate([x1, U_feat], axis=1)

  def maxout(v, ws, bs):
    return (jnp.einsum("nk,ukm->unm", v, ws) + bs).max(axis=0)

  h = maxout(xcat, params["fc1_w"], params["fc1_b"])
  return maxout(h, params["fc2_w"], params["fc2_b"])


if __name__ == "__main__":
  key = jax.random.PRNGKey(0)
  N, nchannels, nrows, ncols = 16, 1, 16, 16
  D, C, mlp_dim, num_units = 8, 4, 32, 6

  kp, kx, ku = jax.random.split(key, 3)
  params, Z = init_params(kp, D=D, C=C, nchannels=nchannels, nrows=nrows,
                          ncols=ncols, mlp_dim=mlp_dim, num_units=num_units)

  X = jax.random.normal(kx, (N, nchannels, nrows, ncols), jnp.float32)
  U = jax.random.normal(ku, (N, D), jnp.float32)

  packed = pack_params(params, H=nrows, W=ncols)
  out = jax.block_until_ready(cnn_maxo_forward(packed, X, U))

  assert out.shape == (N, C), out.shape
  assert bool(jnp.all(jnp.isfinite(out)))

  # Check against the pure-JAX f32 reference (conv stages 2-3 run in bf16).
  ref = jax.block_until_ready(reference_forward(params, X, U))
  err = float(jnp.max(jnp.abs(out - ref)))
  assert err < 0.3, f"kernel/reference mismatch: max abs err = {err}"

  print("KERNEL_OK")
</pallas_src>

<mosaic_0001>
module attributes {stable_mosaic.version = 11 : i64} {
  func.func @_fused_cnn_maxo_kernel(%arg0: i32, %arg1: memref<128x16xf32, #tpu.memory_space<vmem>>, %arg2: memref<8x8xf32, #tpu.memory_space<vmem>>, %arg3: memref<3x16x512xf32, #tpu.memory_space<vmem>>, %arg4: memref<3x512x256xbf16, #tpu.memory_space<vmem>>, %arg5: memref<3x256x128xbf16, #tpu.memory_space<vmem>>, %arg6: memref<3x128x128xf32, #tpu.memory_space<vmem>>, %arg7: memref<1x512xf32, #tpu.memory_space<vmem>>, %arg8: memref<1x256xf32, #tpu.memory_space<vmem>>, %arg9: memref<1x128xf32, #tpu.memory_space<vmem>>, %arg10: memref<1x128xf32, #tpu.memory_space<vmem>>, %arg11: memref<64x192xf32, #tpu.memory_space<vmem>>, %arg12: memref<8x192xf32, #tpu.memory_space<vmem>>, %arg13: memref<1x192xf32, #tpu.memory_space<vmem>>, %arg14: memref<32x24xf32, #tpu.memory_space<vmem>>, %arg15: memref<1x24xf32, #tpu.memory_space<vmem>>, %arg16: memref<8x4xf32, #tpu.memory_space<vmem>>) attributes {dimension_semantics = [#tpu.dimension_semantics<parallel>], iteration_bounds = array<i64: 2>, scalar_prefetch = 0 : i64, scratch_operands = 0 : i64, tpu.core_type = #tpu.core_type<tc>, window_params = [{transform_indices = @transform_0, window_bounds = array<i64: 128, 16>}, {transform_indices = @transform_1, window_bounds = array<i64: 8, 8>}, {pipeline_mode = #tpu.pipeline_mode<synchronous>, transform_indices = @transform_2, window_bounds = array<i64: 3, 16, 512>}, {pipeline_mode = #tpu.pipeline_mode<synchronous>, transform_indices = @transform_3, window_bounds = array<i64: 3, 512, 256>}, {pipeline_mode = #tpu.pipeline_mode<synchronous>, transform_indices = @transform_4, window_bounds = array<i64: 3, 256, 128>}, {pipeline_mode = #tpu.pipeline_mode<synchronous>, transform_indices = @transform_5, window_bounds = array<i64: 3, 128, 128>}, {pipeline_mode = #tpu.pipeline_mode<synchronous>, transform_indices = @transform_6, window_bounds = array<i64: 1, 512>}, {pipeline_mode = #tpu.pipeline_mode<synchronous>, transform_indices = @transform_7, window_bounds = array<i64: 1, 256>}, {pipeline_mode = #tpu.pipeline_mode<synchronous>, transform_indices = @transform_8, window_bounds = array<i64: 1, 128>}, {pipeline_mode = #tpu.pipeline_mode<synchronous>, transform_indices = @transform_9, window_bounds = array<i64: 1, 128>}, {pipeline_mode = #tpu.pipeline_mode<synchronous>, transform_indices = @transform_10, window_bounds = array<i64: 64, 192>}, {pipeline_mode = #tpu.pipeline_mode<synchronous>, transform_indices = @transform_11, window_bounds = array<i64: 8, 192>}, {pipeline_mode = #tpu.pipeline_mode<synchronous>, transform_indices = @transform_12, window_bounds = array<i64: 1, 192>}, {pipeline_mode = #tpu.pipeline_mode<synchronous>, transform_indices = @transform_13, window_bounds = array<i64: 32, 24>}, {pipeline_mode = #tpu.pipeline_mode<synchronous>, transform_indices = @transform_14, window_bounds = array<i64: 1, 24>}, {transform_indices = @transform_15, window_bounds = array<i64: 8, 4>}]} {
    %0 = tpu.iota {dimensions = array<i32: 0>} : vector<128x1xi32>
    %c16_i32 = arith.constant 16 : i32
    %c0_i32 = arith.constant 0 : i32
    %1 = arith.cmpi eq, %c16_i32, %c0_i32 : i32
    %c1_i32 = arith.constant 1 : i32
    %2 = arith.select %1, %c1_i32, %c16_i32 : i32
    %3 = vector.broadcast %2 : i32 to vector<128x1xi32>
    %4 = arith.remsi %0, %3 : vector<128x1xi32>
    %c0_i32_0 = arith.constant 0 : i32
    %5 = vector.broadcast %c0_i32_0 : i32 to vector<128x1xi32>
    %6 = arith.cmpi ne, %4, %5 : vector<128x1xi32>
    %c0_i32_1 = arith.constant 0 : i32
    %7 = vector.broadcast %c0_i32_1 : i32 to vector<128x1xi32>
    %8 = arith.cmpi slt, %4, %7 : vector<128x1xi32>
    %c0_i32_2 = arith.constant 0 : i32
    %9 = arith.cmpi slt, %2, %c0_i32_2 : i32
    %10 = vector.broadcast %9 : i1 to vector<128x1xi1>
    %11 = vector.broadcast %10 : vector<128x1xi1> to vector<128x1xi1>
    %12 = arith.xori %8, %11 : vector<128x1xi1>
    %13 = arith.andi %12, %6 : vector<128x1xi1>
    %14 = vector.broadcast %2 : i32 to vector<128x1xi32>
    %15 = arith.addi %4, %14 : vector<128x1xi32>
    %16 = arith.select %13, %15, %4 : vector<128x1xi1>, vector<128x1xi32>
    %c0 = arith.constant 0 : index
    %c0_3 = arith.constant 0 : index
    %17 = vector.load %arg1[%c0, %c0_3] : memref<128x16xf32, #tpu.memory_space<vmem>>, vector<128x16xf32>
    %cst = arith.constant 0.000000e+00 : f32
    %18 = vector.broadcast %cst : f32 to vector<128x512xf32>
    %c1_i32_4 = arith.constant 1 : i32
    %19 = tpu.dynamic_rotate %17 by %c1_i32_4 dim 0 : vector<128x16xf32>, i32 -> vector<128x16xf32>
    %c1_i32_5 = arith.constant 1 : i32
    %20 = vector.broadcast %c1_i32_5 : i32 to vector<128x1xi32>
    %21 = arith.cmpi sge, %16, %20 : vector<128x1xi32>
    %cst_6 = arith.constant 0.000000e+00 : f32
    %22 = vector.shape_cast %21 : vector<128x1xi1> to vector<128x1xi1>
    %23 = vector.broadcast %22 : vector<128x1xi1> to vector<128x16xi1>
    %24 = vector.broadcast %cst_6 : f32 to vector<128x16xf32>
    %25 = arith.select %23, %19, %24 : vector<128x16xi1>, vector<128x16xf32>
    %c0_7 = arith.constant 0 : index
    %c0_8 = arith.constant 0 : index
    %c0_9 = arith.constant 0 : index
    %26 = vector.load %arg3[%c0_7, %c0_8, %c0_9] : memref<3x16x512xf32, #tpu.memory_space<vmem>>, vector<1x16x512xf32>
    %27 = vector.shape_cast %26 : vector<1x16x512xf32> to vector<16x512xf32>
    %cst_10 = arith.constant dense<0.000000e+00> : vector<128x512xf32>
    %28 = tpu.matmul %25, %27, %cst_10 {dimension_numbers = #tpu.dot_dimension_numbers<[1], [0], [0], [1], [0, 0, 1, 1], [], []>} : vector<128x16xf32>, vector<16x512xf32>, vector<128x512xf32> -> vector<128x512xf32>
    %29 = arith.addf %18, %28 : vector<128x512xf32>
    %c1 = arith.constant 1 : index
    %c0_11 = arith.constant 0 : index
    %c0_12 = arith.constant 0 : index
    %30 = vector.load %arg3[%c1, %c0_11, %c0_12] : memref<3x16x512xf32, #tpu.memory_space<vmem>>, vector<1x16x512xf32>
    %31 = vector.shape_cast %30 : vector<1x16x512xf32> to vector<16x512xf32>
    %cst_13 = arith.constant dense<0.000000e+00> : vector<128x512xf32>
    %32 = tpu.matmul %17, %31, %cst_13 {dimension_numbers = #tpu.dot_dimension_numbers<[1], [0], [0], [1], [0, 0, 1, 1], [], []>} : vector<128x16xf32>, vector<16x512xf32>, vector<128x512xf32> -> vector<128x512xf32>
    %33 = arith.addf %29, %32 : vector<128x512xf32>
    %c127_i32 = arith.constant 127 : i32
    %34 = tpu.dynamic_rotate %17 by %c127_i32 dim 0 : vector<128x16xf32>, i32 -> vector<128x16xf32>
    %c15_i32 = arith.constant 15 : i32
    %35 = vector.broadcast %c15_i32 : i32 to vector<128x1xi32>
    %36 = arith.cmpi slt, %16, %35 : vector<128x1xi32>
    %cst_14 = arith.constant 0.000000e+00 : f32
    %37 = vector.shape_cast %36 : vector<128x1xi1> to vector<128x1xi1>
    %38 = vector.broadcast %37 : vector<128x1xi1> to vector<128x16xi1>
    %39 = vector.broadcast %cst_14 : f32 to vector<128x16xf32>
    %40 = arith.select %38, %34, %39 : vector<128x16xi1>, vector<128x16xf32>
    %c2 = arith.constant 2 : index
    %c0_15 = arith.constant 0 : index
    %c0_16 = arith.constant 0 : index
    %41 = vector.load %arg3[%c2, %c0_15, %c0_16] : memref<3x16x512xf32, #tpu.memory_space<vmem>>, vector<1x16x512xf32>
    %42 = vector.shape_cast %41 : vector<1x16x512xf32> to vector<16x512xf32>
    %cst_17 = arith.constant dense<0.000000e+00> : vector<128x512xf32>
    %43 = tpu.matmul %40, %42, %cst_17 {dimension_numbers = #tpu.dot_dimension_numbers<[1], [0], [0], [1], [0, 0, 1, 1], [], []>} : vector<128x16xf32>, vector<16x512xf32>, vector<128x512xf32> -> vector<128x512xf32>
    %44 = arith.addf %33, %43 : vector<128x512xf32>
    %c0_18 = arith.constant 0 : index
    %c0_19 = arith.constant 0 : index
    %45 = vector.load %arg7[%c0_18, %c0_19] : memref<1x512xf32, #tpu.memory_space<vmem>>, vector<1x512xf32>
    %46 = vector.broadcast %45 : vector<1x512xf32> to vector<128x512xf32>
    %47 = arith.addf %44, %46 : vector<128x512xf32>
    %cst_20 = arith.constant 0.000000e+00 : f32
    %48 = vector.broadcast %cst_20 : f32 to vector<128x512xf32>
    %49 = arith.maximumf %47, %48 : vector<128x512xf32>
    %c127_i32_21 = arith.constant 127 : i32
    %50 = tpu.dynamic_rotate %49 by %c127_i32_21 dim 0 : vector<128x512xf32>, i32 -> vector<128x512xf32>
    %51 = arith.maximumf %49, %50 : vector<128x512xf32>
    %c480_i32 = arith.constant 480 : i32
    %52 = tpu.dynamic_rotate %51 by %c480_i32 dim 1 : vector<128x512xf32>, i32 -> vector<128x512xf32>
    %53 = arith.maximumf %51, %52 : vector<128x512xf32>
    %cst_22 = arith.constant 0.000000e+00 : f32
    %54 = vector.broadcast %cst_22 : f32 to vector<128x256xf32>
    %c2_i32 = arith.constant 2 : i32
    %55 = tpu.dynamic_rotate %53 by %c2_i32 dim 0 : vector<128x512xf32>, i32 -> vector<128x512xf32>
    %c2_i32_23 = arith.constant 2 : i32
    %56 = vector.broadcast %c2_i32_23 : i32 to vector<128x1xi32>
    %57 = arith.cmpi sge, %16, %56 : vector<128x1xi32>
    %cst_24 = arith.constant 0.000000e+00 : f32
    %58 = vector.shape_cast %57 : vector<128x1xi1> to vector<128x1xi1>
    %59 = vector.broadcast %58 : vector<128x1xi1> to vector<128x512xi1>
    %60 = vector.broadcast %cst_24 : f32 to vector<128x512xf32>
    %61 = arith.select %59, %55, %60 : vector<128x512xi1>, vector<128x512xf32>
    %62 = arith.truncf %61 : vector<128x512xf32> to vector<128x512xbf16>
    %c0_25 = arith.constant 0 : index
    %c0_26 = arith.constant 0 : index
    %c0_27 = arith.constant 0 : index
    %63 = vector.load %arg4[%c0_25, %c0_26, %c0_27] : memref<3x512x256xbf16, #tpu.memory_space<vmem>>, vector<1x512x256xbf16>
    %64 = vector.shape_cast %63 : vector<1x512x256xbf16> to vector<512x256xbf16>
    %cst_28 = arith.constant dense<0.000000e+00> : vector<128x256xf32>
    %65 = tpu.matmul %62, %64, %cst_28 {dimension_numbers = #tpu.dot_dimension_numbers<[1], [0], [0], [1], [0, 0, 1, 1], [], []>} : vector<128x512xbf16>, vector<512x256xbf16>, vector<128x256xf32> -> vector<128x256xf32>
    %66 = arith.addf %54, %65 : vector<128x256xf32>
    %67 = arith.truncf %53 : vector<128x512xf32> to vector<128x512xbf16>
    %c1_29 = arith.constant 1 : index
    %c0_30 = arith.constant 0 : index
    %c0_31 = arith.constant 0 : index
    %68 = vector.load %arg4[%c1_29, %c0_30, %c0_31] : memref<3x512x256xbf16, #tpu.memory_space<vmem>>, vector<1x512x256xbf16>
    %69 = vector.shape_cast %68 : vector<1x512x256xbf16> to vector<512x256xbf16>
    %cst_32 = arith.constant dense<0.000000e+00> : vector<128x256xf32>
    %70 = tpu.matmul %67, %69, %cst_32 {dimension_numbers = #tpu.dot_dimension_numbers<[1], [0], [0], [1], [0, 0, 1, 1], [], []>} : vector<128x512xbf16>, vector<512x256xbf16>, vector<128x256xf32> -> vector<128x256xf32>
    %71 = arith.addf %66, %70 : vector<128x256xf32>
    %c126_i32 = arith.constant 126 : i32
    %72 = tpu.dynamic_rotate %53 by %c126_i32 dim 0 : vector<128x512xf32>, i32 -> vector<128x512xf32>
    %c14_i32 = arith.constant 14 : i32
    %73 = vector.broadcast %c14_i32 : i32 to vector<128x1xi32>
    %74 = arith.cmpi slt, %16, %73 : vector<128x1xi32>
    %cst_33 = arith.constant 0.000000e+00 : f32
    %75 = vector.shape_cast %74 : vector<128x1xi1> to vector<128x1xi1>
    %76 = vector.broadcast %75 : vector<128x1xi1> to vector<128x512xi1>
    %77 = vector.broadcast %cst_33 : f32 to vector<128x512xf32>
    %78 = arith.select %76, %72, %77 : vector<128x512xi1>, vector<128x512xf32>
    %79 = arith.truncf %78 : vector<128x512xf32> to vector<128x512xbf16>
    %c2_34 = arith.constant 2 : index
    %c0_35 = arith.constant 0 : index
    %c0_36 = arith.constant 0 : index
    %80 = vector.load %arg4[%c2_34, %c0_35, %c0_36] : memref<3x512x256xbf16, #tpu.memory_space<vmem>>, vector<1x512x256xbf16>
    %81 = vector.shape_cast %80 : vector<1x512x256xbf16> to vector<512x256xbf16>
    %cst_37 = arith.constant dense<0.000000e+00> : vector<128x256xf32>
    %82 = tpu.matmul %79, %81, %cst_37 {dimension_numbers = #tpu.dot_dimension_numbers<[1], [0], [0], [1], [0, 0, 1, 1], [], []>} : vector<128x512xbf16>, vector<512x256xbf16>, vector<128x256xf32> -> vector<128x256xf32>
    %83 = arith.addf %71, %82 : vector<128x256xf32>
    %c0_38 = arith.constant 0 : index
    %c0_39 = arith.constant 0 : index
    %84 = vector.load %arg8[%c0_38, %c0_39] : memref<1x256xf32, #tpu.memory_space<vmem>>, vector<1x256xf32>
    %85 = vector.broadcast %84 : vector<1x256xf32> to vector<128x256xf32>
    %86 = arith.addf %83, %85 : vector<128x256xf32>
    %cst_40 = arith.constant 0.000000e+00 : f32
    %87 = vector.broadcast %cst_40 : f32 to vector<128x256xf32>
    %88 = arith.maximumf %86, %87 : vector<128x256xf32>
    %c126_i32_41 = arith.constant 126 : i32
    %89 = tpu.dynamic_rotate %88 by %c126_i32_41 dim 0 : vector<128x256xf32>, i32 -> vector<128x256xf32>
    %90 = arith.maximumf %88, %89 : vector<128x256xf32>
    %c224_i32 = arith.constant 224 : i32
    %91 = tpu.dynamic_rotate %90 by %c224_i32 dim 1 : vector<128x256xf32>, i32 -> vector<128x256xf32>
    %92 = arith.maximumf %90, %91 : vector<128x256xf32>
    %cst_42 = arith.constant 0.000000e+00 : f32
    %93 = vector.broadcast %cst_42 : f32 to vector<128x128xf32>
    %c4_i32 = arith.constant 4 : i32
    %94 = tpu.dynamic_rotate %92 by %c4_i32 dim 0 : vector<128x256xf32>, i32 -> vector<128x256xf32>
    %c4_i32_43 = arith.constant 4 : i32
    %95 = vector.broadcast %c4_i32_43 : i32 to vector<128x1xi32>
    %96 = arith.cmpi sge, %16, %95 : vector<128x1xi32>
    %cst_44 = arith.constant 0.000000e+00 : f32
    %97 = vector.shape_cast %96 : vector<128x1xi1> to vector<128x1xi1>
    %98 = vector.broadcast %97 : vector<128x1xi1> to vector<128x256xi1>
    %99 = vector.broadcast %cst_44 : f32 to vector<128x256xf32>
    %100 = arith.select %98, %94, %99 : vector<128x256xi1>, vector<128x256xf32>
    %101 = arith.truncf %100 : vector<128x256xf32> to vector<128x256xbf16>
    %c0_45 = arith.constant 0 : index
    %c0_46 = arith.constant 0 : index
    %c0_47 = arith.constant 0 : index
    %102 = vector.load %arg5[%c0_45, %c0_46, %c0_47] : memref<3x256x128xbf16, #tpu.memory_space<vmem>>, vector<1x256x128xbf16>
    %103 = vector.shape_cast %102 : vector<1x256x128xbf16> to vector<256x128xbf16>
    %cst_48 = arith.constant dense<0.000000e+00> : vector<128x128xf32>
    %104 = tpu.matmul %101, %103, %cst_48 {dimension_numbers = #tpu.dot_dimension_numbers<[1], [0], [0], [1], [0, 0, 1, 1], [], []>} : vector<128x256xbf16>, vector<256x128xbf16>, vector<128x128xf32> -> vector<128x128xf32>
    %105 = arith.addf %93, %104 : vector<128x128xf32>
    %106 = arith.truncf %92 : vector<128x256xf32> to vector<128x256xbf16>
    %c1_49 = arith.constant 1 : index
    %c0_50 = arith.constant 0 : index
    %c0_51 = arith.constant 0 : index
    %107 = vector.load %arg5[%c1_49, %c0_50, %c0_51] : memref<3x256x128xbf16, #tpu.memory_space<vmem>>, vector<1x256x128xbf16>
    %108 = vector.shape_cast %107 : vector<1x256x128xbf16> to vector<256x128xbf16>
    %cst_52 = arith.constant dense<0.000000e+00> : vector<128x128xf32>
    %109 = tpu.matmul %106, %108, %cst_52 {dimension_numbers = #tpu.dot_dimension_numbers<[1], [0], [0], [1], [0, 0, 1, 1], [], []>} : vector<128x256xbf16>, vector<256x128xbf16>, vector<128x128xf32> -> vector<128x128xf32>
    %110 = arith.addf %105, %109 : vector<128x128xf32>
    %c124_i32 = arith.constant 124 : i32
    %111 = tpu.dynamic_rotate %92 by %c124_i32 dim 0 : vector<128x256xf32>, i32 -> vector<128x256xf32>
    %c12_i32 = arith.constant 12 : i32
    %112 = vector.broadcast %c12_i32 : i32 to vector<128x1xi32>
    %113 = arith.cmpi slt, %16, %112 : vector<128x1xi32>
    %cst_53 = arith.constant 0.000000e+00 : f32
    %114 = vector.shape_cast %113 : vector<128x1xi1> to vector<128x1xi1>
    %115 = vector.broadcast %114 : vector<128x1xi1> to vector<128x256xi1>
    %116 = vector.broadcast %cst_53 : f32 to vector<128x256xf32>
    %117 = arith.select %115, %111, %116 : vector<128x256xi1>, vector<128x256xf32>
    %118 = arith.truncf %117 : vector<128x256xf32> to vector<128x256xbf16>
    %c2_54 = arith.constant 2 : index
    %c0_55 = arith.constant 0 : index
    %c0_56 = arith.constant 0 : index
    %119 = vector.load %arg5[%c2_54, %c0_55, %c0_56] : memref<3x256x128xbf16, #tpu.memory_space<vmem>>, vector<1x256x128xbf16>
    %120 = vector.shape_cast %119 : vector<1x256x128xbf16> to vector<256x128xbf16>
    %cst_57 = arith.constant dense<0.000000e+00> : vector<128x128xf32>
    %121 = tpu.matmul %118, %120, %cst_57 {dimension_numbers = #tpu.dot_dimension_numbers<[1], [0], [0], [1], [0, 0, 1, 1], [], []>} : vector<128x256xbf16>, vector<256x128xbf16>, vector<128x128xf32> -> vector<128x128xf32>
    %122 = arith.addf %110, %121 : vector<128x128xf32>
    %c0_58 = arith.constant 0 : index
    %c0_59 = arith.constant 0 : index
    %123 = vector.load %arg9[%c0_58, %c0_59] : memref<1x128xf32, #tpu.memory_space<vmem>>, vector<1x128xf32>
    %124 = vector.broadcast %123 : vector<1x128xf32> to vector<128x128xf32>
    %125 = arith.addf %122, %124 : vector<128x128xf32>
    %cst_60 = arith.constant 0.000000e+00 : f32
    %126 = vector.broadcast %cst_60 : f32 to vector<128x128xf32>
    %127 = arith.maximumf %125, %126 : vector<128x128xf32>
    %c124_i32_61 = arith.constant 124 : i32
    %128 = tpu.dynamic_rotate %127 by %c124_i32_61 dim 0 : vector<128x128xf32>, i32 -> vector<128x128xf32>
    %129 = arith.maximumf %127, %128 : vector<128x128xf32>
    %c96_i32 = arith.constant 96 : i32
    %130 = tpu.dynamic_rotate %129 by %c96_i32 dim 1 : vector<128x128xf32>, i32 -> vector<128x128xf32>
    %131 = arith.maximumf %129, %130 : vector<128x128xf32>
    %cst_62 = arith.constant 0.000000e+00 : f32
    %132 = vector.broadcast %cst_62 : f32 to vector<128x128xf32>
    %c8_i32 = arith.constant 8 : i32
    %133 = tpu.dynamic_rotate %131 by %c8_i32 dim 0 : vector<128x128xf32>, i32 -> vector<128x128xf32>
    %c8_i32_63 = arith.constant 8 : i32
    %134 = vector.broadcast %c8_i32_63 : i32 to vector<128x1xi32>
    %135 = arith.cmpi sge, %16, %134 : vector<128x1xi32>
    %cst_64 = arith.constant 0.000000e+00 : f32
    %136 = vector.shape_cast %135 : vector<128x1xi1> to vector<128x1xi1>
    %137 = vector.broadcast %136 : vector<128x1xi1> to vector<128x128xi1>
    %138 = vector.broadcast %cst_64 : f32 to vector<128x128xf32>
    %139 = arith.select %137, %133, %138 : vector<128x128xi1>, vector<128x128xf32>
    %c0_65 = arith.constant 0 : index
    %c0_66 = arith.constant 0 : index
    %c0_67 = arith.constant 0 : index
    %140 = vector.load %arg6[%c0_65, %c0_66, %c0_67] : memref<3x128x128xf32, #tpu.memory_space<vmem>>, vector<1x128x128xf32>
    %141 = vector.shape_cast %140 : vector<1x128x128xf32> to vector<128x128xf32>
    %cst_68 = arith.constant dense<0.000000e+00> : vector<128x128xf32>
    %142 = tpu.matmul %139, %141, %cst_68 {dimension_numbers = #tpu.dot_dimension_numbers<[1], [0], [0], [1], [0, 0, 1, 1], [], []>} : vector<128x128xf32>, vector<128x128xf32>, vector<128x128xf32> -> vector<128x128xf32>
    %143 = arith.addf %132, %142 : vector<128x128xf32>
    %c1_69 = arith.constant 1 : index
    %c0_70 = arith.constant 0 : index
    %c0_71 = arith.constant 0 : index
    %144 = vector.load %arg6[%c1_69, %c0_70, %c0_71] : memref<3x128x128xf32, #tpu.memory_space<vmem>>, vector<1x128x128xf32>
    %145 = vector.shape_cast %144 : vector<1x128x128xf32> to vector<128x128xf32>
    %cst_72 = arith.constant dense<0.000000e+00> : vector<128x128xf32>
    %146 = tpu.matmul %131, %145, %cst_72 {dimension_numbers = #tpu.dot_dimension_numbers<[1], [0], [0], [1], [0, 0, 1, 1], [], []>} : vector<128x128xf32>, vector<128x128xf32>, vector<128x128xf32> -> vector<128x128xf32>
    %147 = arith.addf %143, %146 : vector<128x128xf32>
    %c120_i32 = arith.constant 120 : i32
    %148 = tpu.dynamic_rotate %131 by %c120_i32 dim 0 : vector<128x128xf32>, i32 -> vector<128x128xf32>
    %c8_i32_73 = arith.constant 8 : i32
    %149 = vector.broadcast %c8_i32_73 : i32 to vector<128x1xi32>
    %150 = arith.cmpi slt, %16, %149 : vector<128x1xi32>
    %cst_74 = arith.constant 0.000000e+00 : f32
    %151 = vector.shape_cast %150 : vector<128x1xi1> to vector<128x1xi1>
    %152 = vector.broadcast %151 : vector<128x1xi1> to vector<128x128xi1>
    %153 = vector.broadcast %cst_74 : f32 to vector<128x128xf32>
    %154 = arith.select %152, %148, %153 : vector<128x128xi1>, vector<128x128xf32>
    %c2_75 = arith.constant 2 : index
    %c0_76 = arith.constant 0 : index
    %c0_77 = arith.constant 0 : index
    %155 = vector.load %arg6[%c2_75, %c0_76, %c0_77] : memref<3x128x128xf32, #tpu.memory_space<vmem>>, vector<1x128x128xf32>
    %156 = vector.shape_cast %155 : vector<1x128x128xf32> to vector<128x128xf32>
    %cst_78 = arith.constant dense<0.000000e+00> : vector<128x128xf32>
    %157 = tpu.matmul %154, %156, %cst_78 {dimension_numbers = #tpu.dot_dimension_numbers<[1], [0], [0], [1], [0, 0, 1, 1], [], []>} : vector<128x128xf32>, vector<128x128xf32>, vector<128x128xf32> -> vector<128x128xf32>
    %158 = arith.addf %147, %157 : vector<128x128xf32>
    %c0_79 = arith.constant 0 : index
    %c0_80 = arith.constant 0 : index
    %159 = vector.load %arg10[%c0_79, %c0_80] : memref<1x128xf32, #tpu.memory_space<vmem>>, vector<1x128xf32>
    %160 = vector.broadcast %159 : vector<1x128xf32> to vector<128x128xf32>
    %161 = arith.addf %158, %160 : vector<128x128xf32>
    %cst_81 = arith.constant 0.000000e+00 : f32
    %162 = vector.broadcast %cst_81 : f32 to vector<128x128xf32>
    %163 = arith.maximumf %161, %162 : vector<128x128xf32>
    %c120_i32_82 = arith.constant 120 : i32
    %164 = tpu.dynamic_rotate %163 by %c120_i32_82 dim 0 : vector<128x128xf32>, i32 -> vector<128x128xf32>
    %165 = arith.maximumf %163, %164 : vector<128x128xf32>
    %c64_i32 = arith.constant 64 : i32
    %166 = tpu.dynamic_rotate %165 by %c64_i32 dim 1 : vector<128x128xf32>, i32 -> vector<128x128xf32>
    %167 = arith.maximumf %165, %166 : vector<128x128xf32>
    %168 = tpu.iota {dimensions = array<i32: 1>} : vector<8x128xi32>
    %169 = tpu.iota {dimensions = array<i32: 0>} : vector<8x128xi32>
    %c16_i32_83 = arith.constant 16 : i32
    %170 = vector.broadcast %c16_i32_83 : i32 to vector<8x128xi32>
    %171 = arith.muli %169, %170 : vector<8x128xi32>
    %172 = arith.cmpi eq, %168, %171 : vector<8x128xi32>
    %173 = arith.extui %172 : vector<8x128xi1> to vector<8x128xi32>
    %174 = arith.sitofp %173 : vector<8x128xi32> to vector<8x128xf32>
    %175 = vector.extract_strided_slice %167 {offsets = [0, 0], sizes = [128, 64], strides = [1, 1]} : vector<128x128xf32> to vector<128x64xf32>
    %cst_84 = arith.constant dense<0.000000e+00> : vector<8x64xf32>
    %176 = tpu.matmul %174, %175, %cst_84 {dimension_numbers = #tpu.dot_dimension_numbers<[1], [0], [0], [1], [0, 0, 1, 1], [], []>} : vector<8x128xf32>, vector<128x64xf32>, vector<8x64xf32> -> vector<8x64xf32>
    %c0_85 = arith.constant 0 : index
    %c0_86 = arith.constant 0 : index
    %177 = vector.load %arg11[%c0_85, %c0_86] : memref<64x192xf32, #tpu.memory_space<vmem>>, vector<64x192xf32>
    %cst_87 = arith.constant dense<0.000000e+00> : vector<8x192xf32>
    %178 = tpu.matmul %176, %177, %cst_87 {dimension_numbers = #tpu.dot_dimension_numbers<[1], [0], [0], [1], [0, 0, 1, 1], [], []>} : vector<8x64xf32>, vector<64x192xf32>, vector<8x192xf32> -> vector<8x192xf32>
    %c0_88 = arith.constant 0 : index
    %c0_89 = arith.constant 0 : index
    %179 = vector.load %arg2[%c0_88, %c0_89] : memref<8x8xf32, #tpu.memory_space<vmem>>, vector<8x8xf32>
    %c0_90 = arith.constant 0 : index
    %c0_91 = arith.constant 0 : index
    %180 = vector.load %arg12[%c0_90, %c0_91] : memref<8x192xf32, #tpu.memory_space<vmem>>, vector<8x192xf32>
    %cst_92 = arith.constant dense<0.000000e+00> : vector<8x192xf32>
    %181 = tpu.matmul %179, %180, %cst_92 {dimension_numbers = #tpu.dot_dimension_numbers<[1], [0], [0], [1], [0, 0, 1, 1], [], []>} : vector<8x8xf32>, vector<8x192xf32>, vector<8x192xf32> -> vector<8x192xf32>
    %182 = arith.addf %178, %181 : vector<8x192xf32>
    %c0_93 = arith.constant 0 : index
    %c0_94 = arith.constant 0 : index
    %183 = vector.load %arg13[%c0_93, %c0_94] : memref<1x192xf32, #tpu.memory_space<vmem>>, vector<1x192xf32>
    %184 = vector.broadcast %183 : vector<1x192xf32> to vector<8x192xf32>
    %185 = arith.addf %182, %184 : vector<8x192xf32>
    %186 = vector.extract_strided_slice %185 {offsets = [0, 0], sizes = [8, 32], strides = [1, 1]} : vector<8x192xf32> to vector<8x32xf32>
    %187 = vector.extract_strided_slice %185 {offsets = [0, 32], sizes = [8, 32], strides = [1, 1]} : vector<8x192xf32> to vector<8x32xf32>
    %188 = arith.maximumf %186, %187 : vector<8x32xf32>
    %189 = vector.extract_strided_slice %185 {offsets = [0, 64], sizes = [8, 32], strides = [1, 1]} : vector<8x192xf32> to vector<8x32xf32>
    %190 = arith.maximumf %188, %189 : vector<8x32xf32>
    %191 = vector.extract_strided_slice %185 {offsets = [0, 96], sizes = [8, 32], strides = [1, 1]} : vector<8x192xf32> to vector<8x32xf32>
    %192 = arith.maximumf %190, %191 : vector<8x32xf32>
    %193 = vector.extract_strided_slice %185 {offsets = [0, 128], sizes = [8, 32], strides = [1, 1]} : vector<8x192xf32> to vector<8x32xf32>
    %194 = arith.maximumf %192, %193 : vector<8x32xf32>
    %195 = vector.extract_strided_slice %185 {offsets = [0, 160], sizes = [8, 32], strides = [1, 1]} : vector<8x192xf32> to vector<8x32xf32>
    %196 = arith.maximumf %194, %195 : vector<8x32xf32>
    %c0_95 = arith.constant 0 : index
    %c0_96 = arith.constant 0 : index
    %197 = vector.load %arg14[%c0_95, %c0_96] : memref<32x24xf32, #tpu.memory_space<vmem>>, vector<32x24xf32>
    %cst_97 = arith.constant dense<0.000000e+00> : vector<8x24xf32>
    %198 = tpu.matmul %196, %197, %cst_97 {dimension_numbers = #tpu.dot_dimension_numbers<[1], [0], [0], [1], [0, 0, 1, 1], [], []>} : vector<8x32xf32>, vector<32x24xf32>, vector<8x24xf32> -> vector<8x24xf32>
    %c0_98 = arith.constant 0 : index
    %c0_99 = arith.constant 0 : index
    %199 = vector.load %arg15[%c0_98, %c0_99] : memref<1x24xf32, #tpu.memory_space<vmem>>, vector<1x24xf32>
    %200 = vector.broadcast %199 : vector<1x24xf32> to vector<8x24xf32>
    %201 = arith.addf %198, %200 : vector<8x24xf32>
    %202 = vector.extract_strided_slice %201 {offsets = [0, 0], sizes = [8, 4], strides = [1, 1]} : vector<8x24xf32> to vector<8x4xf32>
    %203 = vector.extract_strided_slice %201 {offsets = [0, 4], sizes = [8, 4], strides = [1, 1]} : vector<8x24xf32> to vector<8x4xf32>
    %204 = arith.maximumf %202, %203 : vector<8x4xf32>
    %205 = vector.extract_strided_slice %201 {offsets = [0, 8], sizes = [8, 4], strides = [1, 1]} : vector<8x24xf32> to vector<8x4xf32>
    %206 = arith.maximumf %204, %205 : vector<8x4xf32>
    %207 = vector.extract_strided_slice %201 {offsets = [0, 12], sizes = [8, 4], strides = [1, 1]} : vector<8x24xf32> to vector<8x4xf32>
    %208 = arith.maximumf %206, %207 : vector<8x4xf32>
    %209 = vector.extract_strided_slice %201 {offsets = [0, 16], sizes = [8, 4], strides = [1, 1]} : vector<8x24xf32> to vector<8x4xf32>
    %210 = arith.maximumf %208, %209 : vector<8x4xf32>
    %211 = vector.extract_strided_slice %201 {offsets = [0, 20], sizes = [8, 4], strides = [1, 1]} : vector<8x24xf32> to vector<8x4xf32>
    %212 = arith.maximumf %210, %211 : vector<8x4xf32>
    %c0_100 = arith.constant 0 : index
    %c0_101 = arith.constant 0 : index
    %213 = vector.load %arg16[%c0_100, %c0_101] : memref<8x4xf32, #tpu.memory_space<vmem>>, vector<8x4xf32>
    tpu.vector_store %arg16[%c0_100, %c0_101], %212 {strides = array<i32>} : memref<8x4xf32, #tpu.memory_space<vmem>>, vector<8x4xf32>,
    return
  }
  func.func @transform_0(%arg0: i32) -> (i32, i32) {
    %c0_i32 = arith.constant 0 : i32
    %c0_i32_0 = arith.constant 0 : i32
    return %arg0, %c0_i32 : i32, i32
  }
  func.func @transform_1(%arg0: i32) -> (i32, i32) {
    %c0_i32 = arith.constant 0 : i32
    %c0_i32_0 = arith.constant 0 : i32
    return %arg0, %c0_i32 : i32, i32
  }
  func.func @transform_2(%arg0: i32) -> (i32, i32, i32) {
    %c0_i32 = arith.constant 0 : i32
    %c0_i32_0 = arith.constant 0 : i32
    %c0_i32_1 = arith.constant 0 : i32
    %c0_i32_2 = arith.constant 0 : i32
    return %c0_i32, %c0_i32_0, %c0_i32_1 : i32, i32, i32
  }
  func.func @transform_3(%arg0: i32) -> (i32, i32, i32) {
    %c0_i32 = arith.constant 0 : i32
    %c0_i32_0 = arith.constant 0 : i32
    %c0_i32_1 = arith.constant 0 : i32
    %c0_i32_2 = arith.constant 0 : i32
    return %c0_i32, %c0_i32_0, %c0_i32_1 : i32, i32, i32
  }
  func.func @transform_4(%arg0: i32) -> (i32, i32, i32) {
    %c0_i32 = arith.constant 0 : i32
    %c0_i32_0 = arith.constant 0 : i32
    %c0_i32_1 = arith.constant 0 : i32
    %c0_i32_2 = arith.constant 0 : i32
    return %c0_i32, %c0_i32_0, %c0_i32_1 : i32, i32, i32
  }
  func.func @transform_5(%arg0: i32) -> (i32, i32, i32) {
    %c0_i32 = arith.constant 0 : i32
    %c0_i32_0 = arith.constant 0 : i32
    %c0_i32_1 = arith.constant 0 : i32
    %c0_i32_2 = arith.constant 0 : i32
    return %c0_i32, %c0_i32_0, %c0_i32_1 : i32, i32, i32
  }
  func.func @transform_6(%arg0: i32) -> (i32, i32) {
    %c0_i32 = arith.constant 0 : i32
    %c0_i32_0 = arith.constant 0 : i32
    %c0_i32_1 = arith.constant 0 : i32
    return %c0_i32, %c0_i32_0 : i32, i32
  }
  func.func @transform_7(%arg0: i32) -> (i32, i32) {
    %c0_i32 = arith.constant 0 : i32
    %c0_i32_0 = arith.constant 0 : i32
    %c0_i32_1 = arith.constant 0 : i32
    return %c0_i32, %c0_i32_0 : i32, i32
  }
  func.func @transform_8(%arg0: i32) -> (i32, i32) {
    %c0_i32 = arith.constant 0 : i32
    %c0_i32_0 = arith.constant 0 : i32
    %c0_i32_1 = arith.constant 0 : i32
    return %c0_i32, %c0_i32_0 : i32, i32
  }
  func.func @transform_9(%arg0: i32) -> (i32, i32) {
    %c0_i32 = arith.constant 0 : i32
    %c0_i32_0 = arith.constant 0 : i32
    %c0_i32_1 = arith.constant 0 : i32
    return %c0_i32, %c0_i32_0 : i32, i32
  }
  func.func @transform_10(%arg0: i32) -> (i32, i32) {
    %c0_i32 = arith.constant 0 : i32
    %c0_i32_0 = arith.constant 0 : i32
    %c0_i32_1 = arith.constant 0 : i32
    return %c0_i32, %c0_i32_0 : i32, i32
  }
  func.func @transform_11(%arg0: i32) -> (i32, i32) {
    %c0_i32 = arith.constant 0 : i32
    %c0_i32_0 = arith.constant 0 : i32
    %c0_i32_1 = arith.constant 0 : i32
    return %c0_i32, %c0_i32_0 : i32, i32
  }
  func.func @transform_12(%arg0: i32) -> (i32, i32) {
    %c0_i32 = arith.constant 0 : i32
    %c0_i32_0 = arith.constant 0 : i32
    %c0_i32_1 = arith.constant 0 : i32
    return %c0_i32, %c0_i32_0 : i32, i32
  }
  func.func @transform_13(%arg0: i32) -> (i32, i32) {
    %c0_i32 = arith.constant 0 : i32
    %c0_i32_0 = arith.constant 0 : i32
    %c0_i32_1 = arith.constant 0 : i32
    return %c0_i32, %c0_i32_0 : i32, i32
  }
  func.func @transform_14(%arg0: i32) -> (i32, i32) {
    %c0_i32 = arith.constant 0 : i32
    %c0_i32_0 = arith.constant 0 : i32
    %c0_i32_1 = arith.constant 0 : i32
    return %c0_i32, %c0_i32_0 : i32, i32
  }
  func.func @transform_15(%arg0: i32) -> (i32, i32) {
    %c0_i32 = arith.constant 0 : i32
    %c0_i32_0 = arith.constant 0 : i32
    return %arg0, %c0_i32 : i32, i32
  }
}

</mosaic_0001>

<llo_original>
// kernel: cnn_maxo_forward.1
$region0: #{cnn_maxo_forward.1}
  #allocation0 [shape = 'u32[]', space=smem, size = 0x4, offset = 0x4, fixed_abs, tag = 'smem constant byte address 0x4 - core index']
  #allocation1 [shape = 'u32[72,128]{1,0:T(1,128)}', space=vmem, size = 0x9000, scoped, tag = 'internal scratch']
  %s0 = inlined_call_operand.hbm [shape: f32[256,16], index: 0, kind: input, shape index: {}]
  %s1 = inlined_call_operand.vmem [shape: f32[16,8], index: 1, kind: input, shape index: {}]
  %s2 = inlined_call_operand.hbm [shape: f32[3,16,512], index: 2, kind: input, shape index: {}]
  %s3 = inlined_call_operand.hbm [shape: bf16[3,512,256], index: 3, kind: input, shape index: {}]
  %s4 = inlined_call_operand.hbm [shape: bf16[3,256,128], index: 4, kind: input, shape index: {}]
  %s5 = inlined_call_operand.hbm [shape: f32[3,128,128], index: 5, kind: input, shape index: {}]
  %s6 = inlined_call_operand.vmem [shape: f32[1,512], index: 6, kind: input, shape index: {}]
  %s7 = inlined_call_operand.vmem [shape: f32[1,256], index: 7, kind: input, shape index: {}]
  %s8 = inlined_call_operand.vmem [shape: f32[1,128], index: 8, kind: input, shape index: {}]
  %s9 = inlined_call_operand.vmem [shape: f32[1,128], index: 9, kind: input, shape index: {}]
  %s10 = inlined_call_operand.hbm [shape: f32[64,192], index: 10, kind: input, shape index: {}]
  %s11 = inlined_call_operand.vmem [shape: f32[8,192], index: 11, kind: input, shape index: {}]
  %s12 = inlined_call_operand.vmem [shape: f32[1,192], index: 12, kind: input, shape index: {}]
  %s13 = inlined_call_operand.vmem [shape: f32[32,24], index: 13, kind: input, shape index: {}]
  %s14 = inlined_call_operand.vmem [shape: f32[1,24], index: 14, kind: input, shape index: {}]
  %s15 = inlined_call_operand.vmem [shape: f32[16,4], index: 15, kind: output, shape index: {}]
  %s16 = sld [smem:[#allocation0]]
  $region117: #{cnn_maxo_forward.1} parent=0
    _
  %s18 = ssub.s32 1, %s16
  %s19 = scalar_select 0, %s18, %s16
  $region1: #{cnn_maxo_forward.1} parent=0
    #allocation2 [shape = 'u8[131072]{0}', space=vmem, size = 0x20000, scoped, tag = 'input window, operand 0']
    #allocation3 [shape = 's32[2]{0}', space=sflag, size = 0x8, scoped, tag = 'scoped memory for cnn_maxo_forward.1']
    #allocation4 [shape = 'u8[98304]{0}', space=vmem, size = 0x18000, scoped, tag = 'input window, operand 2, single buffered']
    #allocation5 [shape = 's32[1]{0}', space=sflag, size = 0x4, scoped, tag = 'scoped memory for cnn_maxo_forward.1']
    #allocation6 [shape = 'u8[786432]{0}', space=vmem, size = 0xc0000, scoped, tag = 'input window, operand 3, single buffered']
    #allocation7 [shape = 'u8[196608]{0}', space=vmem, size = 0x30000, scoped, tag = 'input window, operand 4, single buffered']
    #allocation8 [shape = 's32[1]{0}', space=sflag, size = 0x4, scoped, tag = 'scoped memory for cnn_maxo_forward.1']
    #allocation9 [shape = 'u8[196608]{0}', space=vmem, size = 0x30000, scoped, tag = 'input window, operand 5, single buffered']
    #allocation10 [shape = 'u8[65536]{0}', space=vmem, size = 0x10000, scoped, tag = 'input window, operand 10, single buffered']
    #allocation11 [shape = 's32[1]{0}', space=sflag, size = 0x4, scoped, tag = 'scoped memory for cnn_maxo_forward.1']
    %20 = vsyncpa [#allocation3], 0
    %s21 = scalar_lea.sflag [#allocation3], 1
    %22 = vsyncpa %s21, 0
    %23 = vsyncpa [#allocation5], 0
    %24 = vsyncpa [#allocation8], 0
    %25 = vsyncpa [#allocation11], 0
    loop: start=0, step=1, limit=4
    $region2: #{cnn_maxo_forward.1} parent=1 // loop_pre_header
      _
    $region3: #{cnn_maxo_forward.1} parent=1 // loop_header
      %s27 = sphi 0, %s31
      %p28 = scmp.ge.s32.totalorder %s27, 4
      %s37 = sphi 0, %s39
      %s40 = sphi 0, %s37
      %s41 = sphi 0, %s40
      %s57 = sphi 0, %s41
      %s63 = sphi 0, %s65
      %s66 = sphi 0, %s63
      %s67 = sphi 0, %s66
      %s83 = sphi 0, %s67
      %s87 = sphi 0, %s87
      %s89 = sphi 0, %s87
      %s90 = sphi 0, %s89
      %s104 = sphi 0, %s90
      %s108 = sphi 0, %s108
      %s110 = sphi 0, %s108
      %s111 = sphi 0, %s110
      %s125 = sphi 0, %s111
      %s129 = sphi 0, %s129
      %s131 = sphi 0, %s129
      %s132 = sphi 0, %s131
      %s146 = sphi 0, %s132
      %s150 = sphi 0, %s150
      %s152 = sphi 0, %s150
      %s153 = sphi 0, %s152
      %s167 = sphi 0, %s153
      %s171 = sphi 0, %s171
      %s173 = sphi 0, %s171
      %s174 = sphi 0, %s173
      %s188 = sphi 0, %s174
      %s192 = sphi 0, %s192
      %s194 = sphi 0, %s192
      %s195 = sphi 0, %s194
      %s209 = sphi 0, %s195
      %s213 = sphi 0, %s213
      %s215 = sphi 0, %s213
      %s216 = sphi 0, %s215
      %s230 = sphi 0, %s216
      %s234 = sphi 0, %s234
      %s236 = sphi 0, %s234
      %s237 = sphi 0, %s236
      %s251 = sphi 0, %s237
      %s255 = sphi 0, %s255
      %s257 = sphi 0, %s255
      %s258 = sphi 0, %s257
      %s272 = sphi 0, %s258
      %s276 = sphi 0, %s276
      %s278 = sphi 0, %s276
      %s279 = sphi 0, %s278
      %s293 = sphi 0, %s279
      %s297 = sphi 0, %s297
      %s299 = sphi 0, %s297
      %s300 = sphi 0, %s299
      %s314 = sphi 0, %s300
      %s318 = sphi 0, %s318
      %s320 = sphi 0, %s318
      %s321 = sphi 0, %s320
      %s335 = sphi 0, %s321
      %s339 = sphi 0, %s339
      %s341 = sphi 0, %s339
      %s342 = sphi 0, %s341
      %s356 = sphi 0, %s342
      %s362 = sphi 0, %s364
      %s365 = sphi 0, %s362
      %s366 = sphi 0, %s365
      %s382 = sphi 0, %s366
    $region4: #{cnn_maxo_forward.1} parent=1 // loop_header_branch
      %30 = sbr.rel (%p28) target = $region8
    $region5: #{cnn_maxo_forward.1} parent=1 // loop_body
      %s32 = ssub.s32 %s27, 1
      %s33 = ssub.s32 %s27, 2
      %s34 = sadd.s32 %s27, 1
      %s35 = ssub.s32 %s27, %s34
      %p36 = scmp.eq.s32.totalorder %s35, 0
      %s38 = sadd.s32 %s37, 1
      %s39 = scalar_select %p36, %s37, %s38
      %p42 = pneg %p36
      %p43 = scmp.eq.s32.totalorder %s27, 1
      %p44 = por %p42, %p43
      %p45 = scmp.ne.s32.totalorder %s37, %s40
      %p46 = scmp.eq.s32.totalorder %s27, 0
      %p47 = por %p45, %p46
      %p48 = scmp.ne.s32.totalorder %s37, %s40
      %p49 = scmp.eq.s32.totalorder %s32, 1
      %p50 = por %p48, %p49
      %p51 = scmp.ne.s32.totalorder %s40, %s41
      %p52 = scmp.eq.s32.totalorder %s32, 0
      %p53 = por %p51, %p52
      %p54 = scmp.ne.s32.totalorder %s40, %s41
      %p55 = scmp.eq.s32.totalorder %s33, 1
      %p56 = por %p54, %p55
      %p58 = scmp.ne.s32.totalorder %s41, %s57
      %p59 = scmp.eq.s32.totalorder %s33, 0
      %p60 = por %p58, %p59
      %s61 = ssub.s32 %s27, %s34
      %p62 = scmp.eq.s32.totalorder %s61, 0
      %s64 = sadd.s32 %s63, 1
      %s65 = scalar_select %p62, %s63, %s64
      %p68 = pneg %p62
      %p69 = scmp.eq.s32.totalorder %s27, 1
      %p70 = por %p68, %p69
      %p71 = scmp.ne.s32.totalorder %s63, %s66
      %p72 = scmp.eq.s32.totalorder %s27, 0
      %p73 = por %p71, %p72
      %p74 = scmp.ne.s32.totalorder %s63, %s66
      %p75 = scmp.eq.s32.totalorder %s32, 1
      %p76 = por %p74, %p75
      %p77 = scmp.ne.s32.totalorder %s66, %s67
      %p78 = scmp.eq.s32.totalorder %s32, 0
      %p79 = por %p77, %p78
      %p80 = scmp.ne.s32.totalorder %s66, %s67
      %p81 = scmp.eq.s32.totalorder %s33, 1
      %p82 = por %p80, %p81
      %p84 = scmp.ne.s32.totalorder %s67, %s83
      %p85 = scmp.eq.s32.totalorder %s33, 0
      %p86 = por %p84, %p85
      %s88 = sadd.s32 %s87, 1
      %p91 = scmp.eq.s32.totalorder %s27, 1
      %p92 = scmp.ne.s32.totalorder %s87, %s89
      %p93 = scmp.eq.s32.totalorder %s27, 0
      %p94 = por %p92, %p93
      %p95 = scmp.ne.s32.totalorder %s87, %s89
      %p96 = scmp.eq.s32.totalorder %s32, 1
      %p97 = por %p95, %p96
      %p98 = scmp.ne.s32.totalorder %s89, %s90
      %p99 = scmp.eq.s32.totalorder %s32, 0
      %p100 = por %p98, %p99
      %p101 = scmp.ne.s32.totalorder %s89, %s90
      %p102 = scmp.eq.s32.totalorder %s33, 1
      %p103 = por %p101, %p102
      %p105 = scmp.ne.s32.totalorder %s90, %s104
      %p106 = scmp.eq.s32.totalorder %s33, 0
      %p107 = por %p105, %p106
      %s109 = sadd.s32 %s108, 1
      %p112 = scmp.eq.s32.totalorder %s27, 1
      %p113 = scmp.ne.s32.totalorder %s108, %s110
      %p114 = scmp.eq.s32.totalorder %s27, 0
      %p115 = por %p113, %p114
      %p116 = scmp.ne.s32.totalorder %s108, %s110
      %p117 = scmp.eq.s32.totalorder %s32, 1
      %p118 = por %p116, %p117
      %p119 = scmp.ne.s32.totalorder %s110, %s111
      %p120 = scmp.eq.s32.totalorder %s32, 0
      %p121 = por %p119, %p120
      %p122 = scmp.ne.s32.totalorder %s110, %s111
      %p123 = scmp.eq.s32.totalorder %s33, 1
      %p124 = por %p122, %p123
      %p126 = scmp.ne.s32.totalorder %s111, %s125
      %p127 = scmp.eq.s32.totalorder %s33, 0
      %p128 = por %p126, %p127
      %s130 = sadd.s32 %s129, 1
      %p133 = scmp.eq.s32.totalorder %s27, 1
      %p134 = scmp.ne.s32.totalorder %s129, %s131
      %p135 = scmp.eq.s32.totalorder %s27, 0
      %p136 = por %p134, %p135
      %p137 = scmp.ne.s32.totalorder %s129, %s131
      %p138 = scmp.eq.s32.totalorder %s32, 1
      %p139 = por %p137, %p138
      %p140 = scmp.ne.s32.totalorder %s131, %s132
      %p141 = scmp.eq.s32.totalorder %s32, 0
      %p142 = por %p140, %p141
      %p143 = scmp.ne.s32.totalorder %s131, %s132
      %p144 = scmp.eq.s32.totalorder %s33, 1
      %p145 = por %p143, %p144
      %p147 = scmp.ne.s32.totalorder %s132, %s146
      %p148 = scmp.eq.s32.totalorder %s33, 0
      %p149 = por %p147, %p148
      %s151 = sadd.s32 %s150, 1
      %p154 = scmp.eq.s32.totalorder %s27, 1
      %p155 = scmp.ne.s32.totalorder %s150, %s152
      %p156 = scmp.eq.s32.totalorder %s27, 0
      %p157 = por %p155, %p156
      %p158 = scmp.ne.s32.totalorder %s150, %s152
      %p159 = scmp.eq.s32.totalorder %s32, 1
      %p160 = por %p158, %p159
      %p161 = scmp.ne.s32.totalorder %s152, %s153
      %p162 = scmp.eq.s32.totalorder %s32, 0
      %p163 = por %p161, %p162
      %p164 = scmp.ne.s32.totalorder %s152, %s153
      %p165 = scmp.eq.s32.totalorder %s33, 1
      %p166 = por %p164, %p165
      %p168 = scmp.ne.s32.totalorder %s153, %s167
      %p169 = scmp.eq.s32.totalorder %s33, 0
      %p170 = por %p168, %p169
      %s172 = sadd.s32 %s171, 1
      %p175 = scmp.eq.s32.totalorder %s27, 1
      %p176 = scmp.ne.s32.totalorder %s171, %s173
      %p177 = scmp.eq.s32.totalorder %s27, 0
      %p178 = por %p176, %p177
      %p179 = scmp.ne.s32.totalorder %s171, %s173
      %p180 = scmp.eq.s32.totalorder %s32, 1
      %p181 = por %p179, %p180
      %p182 = scmp.ne.s32.totalorder %s173, %s174
      %p183 = scmp.eq.s32.totalorder %s32, 0
      %p184 = por %p182, %p183
      %p185 = scmp.ne.s32.totalorder %s173, %s174
      %p186 = scmp.eq.s32.totalorder %s33, 1
      %p187 = por %p185, %p186
      %p189 = scmp.ne.s32.totalorder %s174, %s188
      %p190 = scmp.eq.s32.totalorder %s33, 0
      %p191 = por %p189, %p190
      %s193 = sadd.s32 %s192, 1
      %p196 = scmp.eq.s32.totalorder %s27, 1
      %p197 = scmp.ne.s32.totalorder %s192, %s194
      %p198 = scmp.eq.s32.totalorder %s27, 0
      %p199 = por %p197, %p198
      %p200 = scmp.ne.s32.totalorder %s192, %s194
      %p201 = scmp.eq.s32.totalorder %s32, 1
      %p202 = por %p200, %p201
      %p203 = scmp.ne.s32.totalorder %s194, %s195
      %p204 = scmp.eq.s32.totalorder %s32, 0
      %p205 = por %p203, %p204
      %p206 = scmp.ne.s32.totalorder %s194, %s195
      %p207 = scmp.eq.s32.totalorder %s33, 1
      %p208 = por %p206, %p207
      %p210 = scmp.ne.s32.totalorder %s195, %s209
      %p211 = scmp.eq.s32.totalorder %s33, 0
      %p212 = por %p210, %p211
      %s214 = sadd.s32 %s213, 1
      %p217 = scmp.eq.s32.totalorder %s27, 1
      %p218 = scmp.ne.s32.totalorder %s213, %s215
      %p219 = scmp.eq.s32.totalorder %s27, 0
      %p220 = por %p218, %p219
      %p221 = scmp.ne.s32.totalorder %s213, %s215
      %p222 = scmp.eq.s32.totalorder %s32, 1
      %p223 = por %p221, %p222
      %p224 = scmp.ne.s32.totalorder %s215, %s216
      %p225 = scmp.eq.s32.totalorder %s32, 0
      %p226 = por %p224, %p225
      %p227 = scmp.ne.s32.totalorder %s215, %s216
      %p228 = scmp.eq.s32.totalorder %s33, 1
      %p229 = por %p227, %p228
      %p231 = scmp.ne.s32.totalorder %s216, %s230
      %p232 = scmp.eq.s32.totalorder %s33, 0
      %p233 = por %p231, %p232
      %s235 = sadd.s32 %s234, 1
      %p238 = scmp.eq.s32.totalorder %s27, 1
      %p239 = scmp.ne.s32.totalorder %s234, %s236
      %p240 = scmp.eq.s32.totalorder %s27, 0
      %p241 = por %p239, %p240
      %p242 = scmp.ne.s32.totalorder %s234, %s236
      %p243 = scmp.eq.s32.totalorder %s32, 1
      %p244 = por %p242, %p243
      %p245 = scmp.ne.s32.totalorder %s236, %s237
      %p246 = scmp.eq.s32.totalorder %s32, 0
      %p247 = por %p245, %p246
      %p248 = scmp.ne.s32.totalorder %s236, %s237
      %p249 = scmp.eq.s32.totalorder %s33, 1
      %p250 = por %p248, %p249
      %p252 = scmp.ne.s32.totalorder %s237, %s251
      %p253 = scmp.eq.s32.totalorder %s33, 0
      %p254 = por %p252, %p253
      %s256 = sadd.s32 %s255, 1
      %p259 = scmp.eq.s32.totalorder %s27, 1
      %p260 = scmp.ne.s32.totalorder %s255, %s257
      %p261 = scmp.eq.s32.totalorder %s27, 0
      %p262 = por %p260, %p261
      %p263 = scmp.ne.s32.totalorder %s255, %s257
      %p264 = scmp.eq.s32.totalorder %s32, 1
      %p265 = por %p263, %p264
      %p266 = scmp.ne.s32.totalorder %s257, %s258
      %p267 = scmp.eq.s32.totalorder %s32, 0
      %p268 = por %p266, %p267
      %p269 = scmp.ne.s32.totalorder %s257, %s258
      %p270 = scmp.eq.s32.totalorder %s33, 1
      %p271 = por %p269, %p270
      %p273 = scmp.ne.s32.totalorder %s258, %s272
      %p274 = scmp.eq.s32.totalorder %s33, 0
      %p275 = por %p273, %p274
      %s277 = sadd.s32 %s276, 1
      %p280 = scmp.eq.s32.totalorder %s27, 1
      %p281 = scmp.ne.s32.totalorder %s276, %s278
      %p282 = scmp.eq.s32.totalorder %s27, 0
      %p283 = por %p281, %p282
      %p284 = scmp.ne.s32.totalorder %s276, %s278
      %p285 = scmp.eq.s32.totalorder %s32, 1
      %p286 = por %p284, %p285
      %p287 = scmp.ne.s32.totalorder %s278, %s279
      %p288 = scmp.eq.s32.totalorder %s32, 0
      %p289 = por %p287, %p288
      %p290 = scmp.ne.s32.totalorder %s278, %s279
      %p291 = scmp.eq.s32.totalorder %s33, 1
      %p292 = por %p290, %p291
      %p294 = scmp.ne.s32.totalorder %s279, %s293
      %p295 = scmp.eq.s32.totalorder %s33, 0
      %p296 = por %p294, %p295
      %s298 = sadd.s32 %s297, 1
      %p301 = scmp.eq.s32.totalorder %s27, 1
      %p302 = scmp.ne.s32.totalorder %s297, %s299
      %p303 = scmp.eq.s32.totalorder %s27, 0
      %p304 = por %p302, %p303
      %p305 = scmp.ne.s32.totalorder %s297, %s299
      %p306 = scmp.eq.s32.totalorder %s32, 1
      %p307 = por %p305, %p306
      %p308 = scmp.ne.s32.totalorder %s299, %s300
      %p309 = scmp.eq.s32.totalorder %s32, 0
      %p310 = por %p308, %p309
      %p311 = scmp.ne.s32.totalorder %s299, %s300
      %p312 = scmp.eq.s32.totalorder %s33, 1
      %p313 = por %p311, %p312
      %p315 = scmp.ne.s32.totalorder %s300, %s314
      %p316 = scmp.eq.s32.totalorder %s33, 0
      %p317 = por %p315, %p316
      %s319 = sadd.s32 %s318, 1
      %p322 = scmp.eq.s32.totalorder %s27, 1
      %p323 = scmp.ne.s32.totalorder %s318, %s320
      %p324 = scmp.eq.s32.totalorder %s27, 0
      %p325 = por %p323, %p324
      %p326 = scmp.ne.s32.totalorder %s318, %s320
      %p327 = scmp.eq.s32.totalorder %s32, 1
      %p328 = por %p326, %p327
      %p329 = scmp.ne.s32.totalorder %s320, %s321
      %p330 = scmp.eq.s32.totalorder %s32, 0
      %p331 = por %p329, %p330
      %p332 = scmp.ne.s32.totalorder %s320, %s321
      %p333 = scmp.eq.s32.totalorder %s33, 1
      %p334 = por %p332, %p333
      %p336 = scmp.ne.s32.totalorder %s321, %s335
      %p337 = scmp.eq.s32.totalorder %s33, 0
      %p338 = por %p336, %p337
      %s340 = sadd.s32 %s339, 1
      %p343 = scmp.eq.s32.totalorder %s27, 1
      %p344 = scmp.ne.s32.totalorder %s339, %s341
      %p345 = scmp.eq.s32.totalorder %s27, 0
      %p346 = por %p344, %p345
      %p347 = scmp.ne.s32.totalorder %s339, %s341
      %p348 = scmp.eq.s32.totalorder %s32, 1
      %p349 = por %p347, %p348
      %p350 = scmp.ne.s32.totalorder %s341, %s342
      %p351 = scmp.eq.s32.totalorder %s32, 0
      %p352 = por %p350, %p351
      %p353 = scmp.ne.s32.totalorder %s341, %s342
      %p354 = scmp.eq.s32.totalorder %s33, 1
      %p355 = por %p353, %p354
      %p357 = scmp.ne.s32.totalorder %s342, %s356
      %p358 = scmp.eq.s32.totalorder %s33, 0
      %p359 = por %p357, %p358
      %s360 = ssub.s32 %s27, %s34
      %p361 = scmp.eq.s32.totalorder %s360, 0
      %s363 = sadd.s32 %s362, 1
      %s364 = scalar_select %p361, %s362, %s363
      %p367 = pneg %p361
      %p368 = scmp.eq.s32.totalorder %s27, 1
      %p369 = por %p367, %p368
      %p370 = scmp.ne.s32.totalorder %s362, %s365
      %p371 = scmp.eq.s32.totalorder %s27, 0
      %p372 = por %p370, %p371
      %p373 = scmp.ne.s32.totalorder %s362, %s365
      %p374 = scmp.eq.s32.totalorder %s32, 1
      %p375 = por %p373, %p374
      %p376 = scmp.ne.s32.totalorder %s365, %s366
      %p377 = scmp.eq.s32.totalorder %s32, 0
      %p378 = por %p376, %p377
      %p379 = scmp.ne.s32.totalorder %s365, %s366
      %p380 = scmp.eq.s32.totalorder %s33, 1
      %p381 = por %p379, %p380
      %p383 = scmp.ne.s32.totalorder %s366, %s382
      %p384 = scmp.eq.s32.totalorder %s33, 0
      %p385 = por %p383, %p384
      %p386 = scmp.le.s32.totalorder 1, %s27
      %p387 = scmp.lt.s32.totalorder %s27, 3
      %p388 = pnand %p386, %p387
      %p389 = pneg %p388
      // Predicated region
      $region9: #{cnn_maxo_forward.1} parent=5 // pred_check
        _
      $region10: #{cnn_maxo_forward.1} parent=5 // pred_check_branch
        %391 = sbr.rel (%p388) target = $region12
      $region11: #{cnn_maxo_forward.1} parent=5 // pred_region
        %s392 = ssub.s32 %s27, 1
        // Predicated region
        $region13: #{cnn_maxo_forward.1} parent=11 // pred_check
          %p393 = pneg %p100
        $region14: #{cnn_maxo_forward.1} parent=11 // pred_check_branch
          %395 = sbr.rel (%p393) target = $region16
        $region15: #{cnn_maxo_forward.1} parent=11 // pred_region
          %397 = vsyncadd [#allocation5], 0
          %s398 = sshll.u32 %s2, 4
          %s399 = int_to_ptr.hbm [resolvable:$true] %s398
          %s400 = sshll.u32 [#allocation4], 4
          %s401 = int_to_ptr.vmem [resolvable:$true] %s400
          %406 = dma.hbm_to_vmem [thread:$0]  %s399, 3072, %s401, [#allocation5], 512, 512, 32
        $region16: #{cnn_maxo_forward.1} parent=11 // pred_fallthru
          _
        // Predicated region
        $region17: #{cnn_maxo_forward.1} parent=11 // pred_check
          %p407 = pneg %p121
        $region18: #{cnn_maxo_forward.1} parent=11 // pred_check_branch
          %409 = sbr.rel (%p407) target = $region20
        $region19: #{cnn_maxo_forward.1} parent=11 // pred_region
          %411 = vsyncadd [#allocation5], 0
          %s412 = sshll.u32 %s3, 4
          %s413 = int_to_ptr.hbm [resolvable:$true] %s412
          %s414 = sshll.u32 [#allocation6], 4
          %s415 = int_to_ptr.vmem [resolvable:$true] %s414
          %420 = dma.hbm_to_vmem [thread:$0]  %s413, 24576, %s415, [#allocation5], 128, 128, 8
        $region20: #{cnn_maxo_forward.1} parent=11 // pred_fallthru
          _
        // Predicated region
        $region21: #{cnn_maxo_forward.1} parent=11 // pred_check
          %p421 = pneg %p142
        $region22: #{cnn_maxo_forward.1} parent=11 // pred_check_branch
          %423 = sbr.rel (%p421) target = $region24
        $region23: #{cnn_maxo_forward.1} parent=11 // pred_region
          %425 = vsyncadd [#allocation8], 0
          %s426 = sshll.u32 %s4, 4
          %s427 = int_to_ptr.hbm [resolvable:$true] %s426
          %s428 = sshll.u32 [#allocation7], 4
          %s429 = int_to_ptr.vmem [resolvable:$true] %s428
          %434 = dma.hbm_to_vmem [thread:$0]  %s427, 6144, %s429, [#allocation8], 64, 64, 4
        $region24: #{cnn_maxo_forward.1} parent=11 // pred_fallthru
          _
        // Predicated region
        $region25: #{cnn_maxo_forward.1} parent=11 // pred_check
          %p435 = pneg %p163
        $region26: #{cnn_maxo_forward.1} parent=11 // pred_check_branch
          %437 = sbr.rel (%p435) target = $region28
        $region27: #{cnn_maxo_forward.1} parent=11 // pred_region
          %439 = vsyncadd [#allocation8], 0
          %s440 = sshll.u32 %s5, 4
          %s441 = int_to_ptr.hbm [resolvable:$true] %s440
          %s442 = sshll.u32 [#allocation9], 4
          %s443 = int_to_ptr.vmem [resolvable:$true] %s442
          %448 = dma.hbm_to_vmem [thread:$0]  %s441, 6144, %s443, [#allocation8], 128, 128, 8
        $region28: #{cnn_maxo_forward.1} parent=11 // pred_fallthru
          _
        // Predicated region
        $region29: #{cnn_maxo_forward.1} parent=11 // pred_check
          %p449 = pneg %p184
        $region30: #{cnn_maxo_forward.1} parent=11 // pred_check_branch
          %451 = sbr.rel (%p449) target = $region32
        $region31: #{cnn_maxo_forward.1} parent=11 // pred_region
          _
        $region32: #{cnn_maxo_forward.1} parent=11 // pred_fallthru
          _
        // Predicated region
        $region33: #{cnn_maxo_forward.1} parent=11 // pred_check
          %p452 = pneg %p205
        $region34: #{cnn_maxo_forward.1} parent=11 // pred_check_branch
          %454 = sbr.rel (%p452) target = $region36
        $region35: #{cnn_maxo_forward.1} parent=11 // pred_region
          _
        $region36: #{cnn_maxo_forward.1} parent=11 // pred_fallthru
          _
        // Predicated region
        $region37: #{cnn_maxo_forward.1} parent=11 // pred_check
          %p455 = pneg %p226
        $region38: #{cnn_maxo_forward.1} parent=11 // pred_check_branch
          %457 = sbr.rel (%p455) target = $region40
        $region39: #{cnn_maxo_forward.1} parent=11 // pred_region
          _
        $region40: #{cnn_maxo_forward.1} parent=11 // pred_fallthru
          _
        // Predicated region
        $region41: #{cnn_maxo_forward.1} parent=11 // pred_check
          %p458 = pneg %p247
        $region42: #{cnn_maxo_forward.1} parent=11 // pred_check_branch
          %460 = sbr.rel (%p458) target = $region44
        $region43: #{cnn_maxo_forward.1} parent=11 // pred_region
          _
        $region44: #{cnn_maxo_forward.1} parent=11 // pred_fallthru
          _
        // Predicated region
        $region45: #{cnn_maxo_forward.1} parent=11 // pred_check
          %p461 = pneg %p268
        $region46: #{cnn_maxo_forward.1} parent=11 // pred_check_branch
          %463 = sbr.rel (%p461) target = $region48
        $region47: #{cnn_maxo_forward.1} parent=11 // pred_region
          %465 = vsyncadd [#allocation11], 0
          %s466 = sshll.u32 %s10, 4
          %s467 = int_to_ptr.hbm [resolvable:$true] %s466
          %s468 = sshll.u32 [#allocation10], 4
          %s469 = int_to_ptr.vmem [resolvable:$true] %s468
          %474 = dma.hbm_to_vmem [thread:$0]  %s467, 2048, %s469, [#allocation11], 256, 256, 16
        $region48: #{cnn_maxo_forward.1} parent=11 // pred_fallthru
          _
        // Predicated region
        $region49: #{cnn_maxo_forward.1} parent=11 // pred_check
          %p475 = pneg %p289
        $region50: #{cnn_maxo_forward.1} parent=11 // pred_check_branch
          %477 = sbr.rel (%p475) target = $region52
        $region51: #{cnn_maxo_forward.1} parent=11 // pred_region
          _
        $region52: #{cnn_maxo_forward.1} parent=11 // pred_fallthru
          _
        // Predicated region
        $region53: #{cnn_maxo_forward.1} parent=11 // pred_check
          %p478 = pneg %p310
        $region54: #{cnn_maxo_forward.1} parent=11 // pred_check_branch
          %480 = sbr.rel (%p478) target = $region56
        $region55: #{cnn_maxo_forward.1} parent=11 // pred_region
          _
        $region56: #{cnn_maxo_forward.1} parent=11 // pred_fallthru
          _
        // Predicated region
        $region57: #{cnn_maxo_forward.1} parent=11 // pred_check
          %p481 = pneg %p331
        $region58: #{cnn_maxo_forward.1} parent=11 // pred_check_branch
          %483 = sbr.rel (%p481) target = $region60
        $region59: #{cnn_maxo_forward.1} parent=11 // pred_region
          _
        $region60: #{cnn_maxo_forward.1} parent=11 // pred_fallthru
          _
        // Predicated region
        $region61: #{cnn_maxo_forward.1} parent=11 // pred_check
          %p484 = pneg %p352
        $region62: #{cnn_maxo_forward.1} parent=11 // pred_check_branch
          %486 = sbr.rel (%p484) target = $region64
        $region63: #{cnn_maxo_forward.1} parent=11 // pred_region
          _
        $region64: #{cnn_maxo_forward.1} parent=11 // pred_fallthru
          _
      $region12: #{cnn_maxo_forward.1} parent=5 // pred_fallthru
        _
      %p487 = scmp.lt.s32.totalorder %s27, 2
      // Predicated region
      $region65: #{cnn_maxo_forward.1} parent=5 // pred_check
        %p488 = pneg %p487
      $region66: #{cnn_maxo_forward.1} parent=5 // pred_check_branch
        %490 = sbr.rel (%p488) target = $region68
      $region67: #{cnn_maxo_forward.1} parent=5 // pred_region
        // Predicated region
        $region69: #{cnn_maxo_forward.1} parent=67 // pred_check
          %p491 = pneg %p47
        $region70: #{cnn_maxo_forward.1} parent=67 // pred_check_branch
          %493 = sbr.rel (%p491) target = $region72
        $region71: #{cnn_maxo_forward.1} parent=67 // pred_region
          %s494 = sand.u32 %s37, 1
          %s495 = scalar_lea.sflag [#allocation3], %s494
          %s496 = sand.u32 %s37, 1
          %s497 = smul.addr %s496, 128
          %s498 = scalar_lea.vmem [#allocation2], %s497
          %s499 = smul.u32 16, %s27
          %501 = vsyncadd %s495, 0
          %s502 = smul.addr %s499, 8
          %s503 = scalar_lea.hbm %s0, %s502
          %s504 = sshll.u32 %s503, 4
          %s505 = int_to_ptr.hbm [resolvable:$true] %s504
          %s506 = sshll.u32 %s498, 4
          %s507 = int_to_ptr.vmem [resolvable:$true] %s506
          %512 = dma.hbm_to_vmem [thread:$0]  %s505, 2048, %s507, %s495, 128, 128, 8
        $region72: #{cnn_maxo_forward.1} parent=67 // pred_fallthru
          _
        // Predicated region
        $region73: #{cnn_maxo_forward.1} parent=67 // pred_check
          %p513 = pneg %p73
        $region74: #{cnn_maxo_forward.1} parent=67 // pred_check_branch
          %515 = sbr.rel (%p513) target = $region76
        $region75: #{cnn_maxo_forward.1} parent=67 // pred_region
          %p516 = scmp.lt.s32.totalorder %s27, 1
          %s517 = scalar_select %p516, %s27, 1
          %s518 = smul.addr %s517, 8
          %s519 = scalar_lea.vmem %s1, %s518
        $region76: #{cnn_maxo_forward.1} parent=67 // pred_fallthru
          _
      $region68: #{cnn_maxo_forward.1} parent=5 // pred_fallthru
        _
      %p520 = scmp.le.s32.totalorder 1, %s27
      %p521 = scmp.lt.s32.totalorder %s27, 3
      %p522 = pnand %p520, %p521
      %p523 = pneg %p522
      // Predicated region
      $region77: #{cnn_maxo_forward.1} parent=5 // pred_check
        _
      $region78: #{cnn_maxo_forward.1} parent=5 // pred_check_branch
        %525 = sbr.rel (%p522) target = $region80
      $region79: #{cnn_maxo_forward.1} parent=5 // pred_region
        %s526 = ssub.s32 %s27, 1
        %s527 = sand.u32 %s40, 1
        %s528 = scalar_lea.sflag [#allocation3], %s527
        %s529 = sand.u32 %s40, 1
        %s530 = smul.addr %s529, 128
        %s531 = scalar_lea.vmem [#allocation2], %s530
        // Predicated region
        $region81: #{cnn_maxo_forward.1} parent=79 // pred_check
          %p532 = pneg %p53
        $region82: #{cnn_maxo_forward.1} parent=79 // pred_check_branch
          %534 = sbr.rel (%p532) target = $region84
        $region83: #{cnn_maxo_forward.1} parent=79 // pred_region
          %536 = dma.done %s528, 2048
        $region84: #{cnn_maxo_forward.1} parent=79 // pred_fallthru
          _
        // Predicated region
        $region85: #{cnn_maxo_forward.1} parent=79 // pred_check
          %p537 = pneg %p100
        $region86: #{cnn_maxo_forward.1} parent=79 // pred_check_branch
          %539 = sbr.rel (%p537) target = $region88
        $region87: #{cnn_maxo_forward.1} parent=79 // pred_region
          %541 = dma.done [#allocation5], 3072
        $region88: #{cnn_maxo_forward.1} parent=79 // pred_fallthru
          _
        // Predicated region
        $region89: #{cnn_maxo_forward.1} parent=79 // pred_check
          %p542 = pneg %p121
        $region90: #{cnn_maxo_forward.1} parent=79 // pred_check_branch
          %544 = sbr.rel (%p542) target = $region92
        $region91: #{cnn_maxo_forward.1} parent=79 // pred_region
          %546 = dma.done [#allocation5], 24576
        $region92: #{cnn_maxo_forward.1} parent=79 // pred_fallthru
          _
        // Predicated region
        $region93: #{cnn_maxo_forward.1} parent=79 // pred_check
          %p547 = pneg %p142
        $region94: #{cnn_maxo_forward.1} parent=79 // pred_check_branch
          %549 = sbr.rel (%p547) target = $region96
        $region95: #{cnn_maxo_forward.1} parent=79 // pred_region
          %551 = dma.done [#allocation8], 6144
        $region96: #{cnn_maxo_forward.1} parent=79 // pred_fallthru
          _
        // Predicated region
        $region97: #{cnn_maxo_forward.1} parent=79 // pred_check
          %p552 = pneg %p163
        $region98: #{cnn_maxo_forward.1} parent=79 // pred_check_branch
          %554 = sbr.rel (%p552) target = $region100
        $region99: #{cnn_maxo_forward.1} parent=79 // pred_region
          %556 = dma.done [#allocation8], 6144
        $region100: #{cnn_maxo_forward.1} parent=79 // pred_fallthru
          _
        // Predicated region
        $region101: #{cnn_maxo_forward.1} parent=79 // pred_check
          %p557 = pneg %p268
        $region102: #{cnn_maxo_forward.1} parent=79 // pred_check_branch
          %559 = sbr.rel (%p557) target = $region104
        $region103: #{cnn_maxo_forward.1} parent=79 // pred_region
          %561 = dma.done [#allocation11], 2048
        $region104: #{cnn_maxo_forward.1} parent=79 // pred_fallthru
          _
        %s562 = sand.u32 %s40, 1
        %s563 = scalar_lea.sflag [#allocation3], %s562
        %s564 = sand.u32 %s40, 1
        %s565 = smul.addr %s564, 128
        %s566 = scalar_lea.vmem [#allocation2], %s565
        %p567 = pneg %p53
        %p568 = pneg %p50
        %p569 = scmp.lt.s32.totalorder %s32, 1
        %s570 = scalar_select %p569, %s32, 1
        %s571 = smul.addr %s570, 8
        %s572 = scalar_lea.vmem %s1, %s571
        %p573 = pneg %p79
        %p574 = pneg %p76
        %p575 = pneg %p100
        %p576 = pneg %p97
        %p577 = pneg %p121
        %p578 = pneg %p118
        %p579 = pneg %p142
        %p580 = pneg %p139
        %p581 = pneg %p163
        %p582 = pneg %p160
        %p583 = pneg %p184
        %p584 = pneg %p181
        %p585 = pneg %p205
        %p586 = pneg %p202
        %p587 = pneg %p226
        %p588 = pneg %p223
        %p589 = pneg %p247
        %p590 = pneg %p244
        %p591 = pneg %p268
        %p592 = pneg %p265
        %p593 = pneg %p289
        %p594 = pneg %p286
        %p595 = pneg %p310
        %p596 = pneg %p307
        %p597 = pneg %p331
        %p598 = pneg %p328
        %p599 = pneg %p352
        %p600 = pneg %p349
        %p601 = pneg %p378
        %p602 = pneg %p375
        %p603 = scmp.lt.s32.totalorder %s32, 1
        %s604 = scalar_select %p603, %s32, 1
        %s605 = smul.addr %s604, 8
        %s606 = scalar_lea.vmem %s15, %s605
        %s607 = smul.u32 16, %s32
        %p608 = scmp.lt.s32.totalorder %s32, 1
        %s609 = scalar_select %p608, %s32, 1
        %s610 = smul.addr %s609, 8
        %s611 = scalar_lea.vmem %s1, %s610
        %p612 = scmp.lt.s32.totalorder %s32, 1
        %s613 = scalar_select %p612, %s32, 1
        %s614 = smul.addr %s613, 8
        %s615 = scalar_lea.vmem %s15, %s614
        %v616 = vlaneseq
        %v617 = vshrl.u32 %v616, 7
        %v618 = vadd.s32 %v617, 8
        %v619 = vadd.s32 %v617, 16
        %v620 = vadd.s32 %v617, 24
        %v621 = vadd.s32 %v617, 32
        %v622 = vadd.s32 %v617, 40
        %v623 = vadd.s32 %v617, 48
        %v624 = vadd.s32 %v617, 56
        %v625 = vadd.s32 %v617, 64
        %v626 = vadd.s32 %v617, 72
        %v627 = vadd.s32 %v617, 80
        %v628 = vadd.s32 %v617, 88
        %v629 = vadd.s32 %v617, 96
        %v630 = vadd.s32 %v617, 104
        %v631 = vadd.s32 %v617, 112
        %v632 = vadd.s32 %v617, 120
        %vm633 = vcmp.lt.s32.totalorder %v617, 0
        %v634 = vsub.s32 0, %v617
        %v635 = vsel %vm633, %v634, %v617
        %v636 = vshrl.u32 %v635, 4
        %v637 = vand.u32 %v635, 15
        %v638 = vsub.s32 0, %v637
        %v639 = vsel %vm633, %v638, %v637
        %vm640 = vcmp.lt.s32.totalorder %v618, 0
        %v641 = vsub.s32 0, %v618
        %v642 = vsel %vm640, %v641, %v618
        %v643 = vshrl.u32 %v642, 4
        %v644 = vand.u32 %v642, 15
        %v645 = vsub.s32 0, %v644
        %v646 = vsel %vm640, %v645, %v644
        %vm647 = vcmp.lt.s32.totalorder %v619, 0
        %v648 = vsub.s32 0, %v619
        %v649 = vsel %vm647, %v648, %v619
        %v650 = vshrl.u32 %v649, 4
        %v651 = vand.u32 %v649, 15
        %v652 = vsub.s32 0, %v651
        %v653 = vsel %vm647, %v652, %v651
        %vm654 = vcmp.lt.s32.totalorder %v620, 0
        %v655 = vsub.s32 0, %v620
        %v656 = vsel %vm654, %v655, %v620
        %v657 = vshrl.u32 %v656, 4
        %v658 = vand.u32 %v656, 15
        %v659 = vsub.s32 0, %v658
        %v660 = vsel %vm654, %v659, %v658
        %vm661 = vcmp.lt.s32.totalorder %v621, 0
        %v662 = vsub.s32 0, %v621
        %v663 = vsel %vm661, %v662, %v621
        %v664 = vshrl.u32 %v663, 4
        %v665 = vand.u32 %v663, 15
        %v666 = vsub.s32 0, %v665
        %v667 = vsel %vm661, %v666, %v665
        %vm668 = vcmp.lt.s32.totalorder %v622, 0
        %v669 = vsub.s32 0, %v622
        %v670 = vsel %vm668, %v669, %v622
        %v671 = vshrl.u32 %v670, 4
        %v672 = vand.u32 %v670, 15
        %v673 = vsub.s32 0, %v672
        %v674 = vsel %vm668, %v673, %v672
        %vm675 = vcmp.lt.s32.totalorder %v623, 0
        %v676 = vsub.s32 0, %v623
        %v677 = vsel %vm675, %v676, %v623
        %v678 = vshrl.u32 %v677, 4
        %v679 = vand.u32 %v677, 15
        %v680 = vsub.s32 0, %v679
        %v681 = vsel %vm675, %v680, %v679
        %vm682 = vcmp.lt.s32.totalorder %v624, 0
        %v683 = vsub.s32 0, %v624
        %v684 = vsel %vm682, %v683, %v624
        %v685 = vshrl.u32 %v684, 4
        %v686 = vand.u32 %v684, 15
        %v687 = vsub.s32 0, %v686
        %v688 = vsel %vm682, %v687, %v686
        %vm689 = vcmp.lt.s32.totalorder %v625, 0
        %v690 = vsub.s32 0, %v625
        %v691 = vsel %vm689, %v690, %v625
        %v692 = vshrl.u32 %v691, 4
        %v693 = vand.u32 %v691, 15
        %v694 = vsub.s32 0, %v693
        %v695 = vsel %vm689, %v694, %v693
        %vm696 = vcmp.lt.s32.totalorder %v626, 0
        %v697 = vsub.s32 0, %v626
        %v698 = vsel %vm696, %v697, %v626
        %v699 = vshrl.u32 %v698, 4
        %v700 = vand.u32 %v698, 15
        %v701 = vsub.s32 0, %v700
        %v702 = vsel %vm696, %v701, %v700
        %vm703 = vcmp.lt.s32.totalorder %v627, 0
        %v704 = vsub.s32 0, %v627
        %v705 = vsel %vm703, %v704, %v627
        %v706 = vshrl.u32 %v705, 4
        %v707 = vand.u32 %v705, 15
        %v708 = vsub.s32 0, %v707
        %v709 = vsel %vm703, %v708, %v707
        %vm710 = vcmp.lt.s32.totalorder %v628, 0
        %v711 = vsub.s32 0, %v628
        %v712 = vsel %vm710, %v711, %v628
        %v713 = vshrl.u32 %v712, 4
        %v714 = vand.u32 %v712, 15
        %v715 = vsub.s32 0, %v714
        %v716 = vsel %vm710, %v715, %v714
        %vm717 = vcmp.lt.s32.totalorder %v629, 0
        %v718 = vsub.s32 0, %v629
        %v719 = vsel %vm717, %v718, %v629
        %v720 = vshrl.u32 %v719, 4
        %v721 = vand.u32 %v719, 15
        %v722 = vsub.s32 0, %v721
        %v723 = vsel %vm717, %v722, %v721
        %vm724 = vcmp.lt.s32.totalorder %v630, 0
        %v725 = vsub.s32 0, %v630
        %v726 = vsel %vm724, %v725, %v630
        %v727 = vshrl.u32 %v726, 4
        %v728 = vand.u32 %v726, 15
        %v729 = vsub.s32 0, %v728
        %v730 = vsel %vm724, %v729, %v728
        %vm731 = vcmp.lt.s32.totalorder %v631, 0
        %v732 = vsub.s32 0, %v631
        %v733 = vsel %vm731, %v732, %v631
        %v734 = vshrl.u32 %v733, 4
        %v735 = vand.u32 %v733, 15
        %v736 = vsub.s32 0, %v735
        %v737 = vsel %vm731, %v736, %v735
        %vm738 = vcmp.lt.s32.totalorder %v632, 0
        %v739 = vsub.s32 0, %v632
        %v740 = vsel %vm738, %v739, %v632
        %v741 = vshrl.u32 %v740, 4
        %v742 = vand.u32 %v740, 15
        %v743 = vsub.s32 0, %v742
        %v744 = vsel %vm738, %v743, %v742
        %vm745 = vcmp.ne.s32.totalorder %v639, 0
        %vm746 = vcmp.ne.s32.totalorder %v646, 0
        %vm747 = vcmp.ne.s32.totalorder %v653, 0
        %vm748 = vcmp.ne.s32.totalorder %v660, 0
        %vm749 = vcmp.ne.s32.totalorder %v667, 0
        %vm750 = vcmp.ne.s32.totalorder %v674, 0
        %vm751 = vcmp.ne.s32.totalorder %v681, 0
        %vm752 = vcmp.ne.s32.totalorder %v688, 0
        %vm753 = vcmp.ne.s32.totalorder %v695, 0
        %vm754 = vcmp.ne.s32.totalorder %v702, 0
        %vm755 = vcmp.ne.s32.totalorder %v709, 0
        %vm756 = vcmp.ne.s32.totalorder %v716, 0
        %vm757 = vcmp.ne.s32.totalorder %v723, 0
        %vm758 = vcmp.ne.s32.totalorder %v730, 0
        %vm759 = vcmp.ne.s32.totalorder %v737, 0
        %vm760 = vcmp.ne.s32.totalorder %v744, 0
        %vm761 = vcmp.lt.s32.totalorder %v639, 0
        %vm762 = vcmp.lt.s32.totalorder %v646, 0
        %vm763 = vcmp.lt.s32.totalorder %v653, 0
        %vm764 = vcmp.lt.s32.totalorder %v660, 0
        %vm765 = vcmp.lt.s32.totalorder %v667, 0
        %vm766 = vcmp.lt.s32.totalorder %v674, 0
        %vm767 = vcmp.lt.s32.totalorder %v681, 0
        %vm768 = vcmp.lt.s32.totalorder %v688, 0
        %vm769 = vcmp.lt.s32.totalorder %v695, 0
        %vm770 = vcmp.lt.s32.totalorder %v702, 0
        %vm771 = vcmp.lt.s32.totalorder %v709, 0
        %vm772 = vcmp.lt.s32.totalorder %v716, 0
        %vm773 = vcmp.lt.s32.totalorder %v723, 0
        %vm774 = vcmp.lt.s32.totalorder %v730, 0
        %vm775 = vcmp.lt.s32.totalorder %v737, 0
        %vm776 = vcmp.lt.s32.totalorder %v744, 0
        %vm777 = vmand %vm761, %vm745
        %vm778 = vmand %vm762, %vm746
        %vm779 = vmand %vm763, %vm747
        %vm780 = vmand %vm764, %vm748
        %vm781 = vmand %vm765, %vm749
        %vm782 = vmand %vm766, %vm750
        %vm783 = vmand %vm767, %vm751
        %vm784 = vmand %vm768, %vm752
        %vm785 = vmand %vm769, %vm753
        %vm786 = vmand %vm770, %vm754
        %vm787 = vmand %vm771, %vm755
        %vm788 = vmand %vm772, %vm756
        %vm789 = vmand %vm773, %vm757
        %vm790 = vmand %vm774, %vm758
        %vm791 = vmand %vm775, %vm759
        %vm792 = vmand %vm776, %vm760
        %v793 = vadd.s32 %v639, 16
        %v794 = vadd.s32 %v646, 16
        %v795 = vadd.s32 %v653, 16
        %v796 = vadd.s32 %v660, 16
        %v797 = vadd.s32 %v667, 16
        %v798 = vadd.s32 %v674, 16
        %v799 = vadd.s32 %v681, 16
        %v800 = vadd.s32 %v688, 16
        %v801 = vadd.s32 %v695, 16
        %v802 = vadd.s32 %v702, 16
        %v803 = vadd.s32 %v709, 16
        %v804 = vadd.s32 %v716, 16
        %v805 = vadd.s32 %v723, 16
        %v806 = vadd.s32 %v730, 16
        %v807 = vadd.s32 %v737, 16
        %v808 = vadd.s32 %v744, 16
        %v809 = vsel %vm777, %v793, %v639
        %v810 = vsel %vm778, %v794, %v646
        %v811 = vsel %vm779, %v795, %v653
        %v812 = vsel %vm780, %v796, %v660
        %v813 = vsel %vm781, %v797, %v667
        %v814 = vsel %vm782, %v798, %v674
        %v815 = vsel %vm783, %v799, %v681
        %v816 = vsel %vm784, %v800, %v688
        %v817 = vsel %vm785, %v801, %v695
        %v818 = vsel %vm786, %v802, %v702
        %v819 = vsel %vm787, %v803, %v709
        %v820 = vsel %vm788, %v804, %v716
        %v821 = vsel %vm789, %v805, %v723
        %v822 = vsel %vm790, %v806, %v730
        %v823 = vsel %vm791, %v807, %v737
        %v824 = vsel %vm792, %v808, %v744
        %v825 = vld [vmem:[%s531] sm:$0xff]
        %v826 = vld [vmem:[%s531 + $0x8] sm:$0xff]
        %v827 = vld [vmem:[%s531 + $0x10] sm:$0xff]
        %v828 = vld [vmem:[%s531 + $0x18] sm:$0xff]
        %v829 = vld [vmem:[%s531 + $0x20] sm:$0xff]
        %v830 = vld [vmem:[%s531 + $0x28] sm:$0xff]
        %v831 = vld [vmem:[%s531 + $0x30] sm:$0xff]
        %v832 = vld [vmem:[%s531 + $0x38] sm:$0xff]
        %v833 = vld [vmem:[%s531 + $0x40] sm:$0xff]
        %v834 = vld [vmem:[%s531 + $0x48] sm:$0xff]
        %v835 = vld [vmem:[%s531 + $0x50] sm:$0xff]
        %v836 = vld [vmem:[%s531 + $0x58] sm:$0xff]
        %v837 = vld [vmem:[%s531 + $0x60] sm:$0xff]
        %v838 = vld [vmem:[%s531 + $0x68] sm:$0xff]
        %v839 = vld [vmem:[%s531 + $0x70] sm:$0xff]
        %v840 = vld [vmem:[%s531 + $0x78] sm:$0xff]
        %v841 = vrot.slane %v825, 7
        %v842 = vrot.slane %v826, 7
        %v843 = vrot.slane %v827, 7
        %v844 = vrot.slane %v828, 7
        %v845 = vrot.slane %v829, 7
        %v846 = vrot.slane %v830, 7
        %v847 = vrot.slane %v831, 7
        %v848 = vrot.slane %v832, 7
        %v849 = vrot.slane %v833, 7
        %v850 = vrot.slane %v834, 7
        %v851 = vrot.slane %v835, 7
        %v852 = vrot.slane %v836, 7
        %v853 = vrot.slane %v837, 7
        %v854 = vrot.slane %v838, 7
        %v855 = vrot.slane %v839, 7
        %v856 = vrot.slane %v840, 7
        %vm857 = vcmp.lt.s32.totalorder %v617, 1
        %v858 = vsel %vm857, %v855, %v856
        %v859 = vsel %vm857, %v854, %v855
        %v860 = vsel %vm857, %v853, %v854
        %v861 = vsel %vm857, %v852, %v853
        %v862 = vsel %vm857, %v851, %v852
        %v863 = vsel %vm857, %v850, %v851
        %v864 = vsel %vm857, %v849, %v850
        %v865 = vsel %vm857, %v848, %v849
        %v866 = vsel %vm857, %v847, %v848
        %v867 = vsel %vm857, %v846, %v847
        %v868 = vsel %vm857, %v845, %v846
        %v869 = vsel %vm857, %v844, %v845
        %v870 = vsel %vm857, %v843, %v844
        %v871 = vsel %vm857, %v842, %v843
        %v872 = vsel %vm857, %v841, %v842
        %v873 = vsel %vm857, %v856, %v841
        %vm874 = vcmp.ge.s32.totalorder %v809, 1
        %vm875 = vcmp.ge.s32.totalorder %v810, 1
        %vm876 = vcmp.ge.s32.totalorder %v811, 1
        %vm877 = vcmp.ge.s32.totalorder %v812, 1
        %vm878 = vcmp.ge.s32.totalorder %v813, 1
        %vm879 = vcmp.ge.s32.totalorder %v814, 1
        %vm880 = vcmp.ge.s32.totalorder %v815, 1
        %vm881 = vcmp.ge.s32.totalorder %v816, 1
        %vm882 = vcmp.ge.s32.totalorder %v817, 1
        %vm883 = vcmp.ge.s32.totalorder %v818, 1
        %vm884 = vcmp.ge.s32.totalorder %v819, 1
        %vm885 = vcmp.ge.s32.totalorder %v820, 1
        %vm886 = vcmp.ge.s32.totalorder %v821, 1
        %vm887 = vcmp.ge.s32.totalorder %v822, 1
        %vm888 = vcmp.ge.s32.totalorder %v823, 1
        %vm889 = vcmp.ge.s32.totalorder %v824, 1
        %v890 = vsel %vm874, 1, 0
        %v891 = vsel %vm875, 1, 0
        %v892 = vsel %vm876, 1, 0
        %v893 = vsel %vm877, 1, 0
        %v894 = vsel %vm878, 1, 0
        %v895 = vsel %vm879, 1, 0
        %v896 = vsel %vm880, 1, 0
        %v897 = vsel %vm881, 1, 0
        %v898 = vsel %vm882, 1, 0
        %v899 = vsel %vm883, 1, 0
        %v900 = vsel %vm884, 1, 0
        %v901 = vsel %vm885, 1, 0
        %v902 = vsel %vm886, 1, 0
        %v903 = vsel %vm887, 1, 0
        %v904 = vsel %vm888, 1, 0
        %v905 = vsel %vm889, 1, 0
        %vm906 = vcmp.eq.s32.totalorder %v890, 1
        %vm907 = vcmp.eq.s32.totalorder %v891, 1
        %vm908 = vcmp.eq.s32.totalorder %v892, 1
        %vm909 = vcmp.eq.s32.totalorder %v893, 1
        %vm910 = vcmp.eq.s32.totalorder %v894, 1
        %vm911 = vcmp.eq.s32.totalorder %v895, 1
        %vm912 = vcmp.eq.s32.totalorder %v896, 1
        %vm913 = vcmp.eq.s32.totalorder %v897, 1
        %vm914 = vcmp.eq.s32.totalorder %v898, 1
        %vm915 = vcmp.eq.s32.totalorder %v899, 1
        %vm916 = vcmp.eq.s32.totalorder %v900, 1
        %vm917 = vcmp.eq.s32.totalorder %v901, 1
        %vm918 = vcmp.eq.s32.totalorder %v902, 1
        %vm919 = vcmp.eq.s32.totalorder %v903, 1
        %vm920 = vcmp.eq.s32.totalorder %v904, 1
        %vm921 = vcmp.eq.s32.totalorder %v905, 1
        %v922 = vsel %vm906, %v873, 0.0
        %v923 = vsel %vm907, %v872, 0.0
        %v924 = vsel %vm908, %v871, 0.0
        %v925 = vsel %vm909, %v870, 0.0
        %v926 = vsel %vm910, %v869, 0.0
        %v927 = vsel %vm911, %v868, 0.0
        %v928 = vsel %vm912, %v867, 0.0
        %v929 = vsel %vm913, %v866, 0.0
        %v930 = vsel %vm914, %v865, 0.0
        %v931 = vsel %vm915, %v864, 0.0
        %v932 = vsel %vm916, %v863, 0.0
        %v933 = vsel %vm917, %v862, 0.0
        %v934 = vsel %vm918, %v861, 0.0
        %v935 = vsel %vm919, %v860, 0.0
        %v936 = vsel %vm920, %v859, 0.0
        %v937 = vsel %vm921, %v858, 0.0
        %v938 = vld [vmem:[#allocation4] sm:$0xff]
        %v939 = vld [vmem:[#allocation4 + $0x8] sm:$0xff]
        %v940 = vld [vmem:[#allocation4 + $0x10] sm:$0xff]
        %v941 = vld [vmem:[#allocation4 + $0x18] sm:$0xff]
        %v942 = vld [vmem:[#allocation4 + $0x20] sm:$0xff]
        %v943 = vld [vmem:[#allocation4 + $0x28] sm:$0xff]
        %v944 = vld [vmem:[#allocation4 + $0x30] sm:$0xff]
        %v945 = vld [vmem:[#allocation4 + $0x38] sm:$0xff]
        %s946 = scalar_lea.vmem [#allocation4], 64
        %v947 = vld [vmem:[%s946] sm:$0xff]
        %v948 = vld [vmem:[%s946 + $0x8] sm:$0xff]
        %v949 = vld [vmem:[%s946 + $0x10] sm:$0xff]
        %v950 = vld [vmem:[%s946 + $0x18] sm:$0xff]
        %v951 = vld [vmem:[%s946 + $0x20] sm:$0xff]
        %v952 = vld [vmem:[%s946 + $0x28] sm:$0xff]
        %v953 = vld [vmem:[%s946 + $0x30] sm:$0xff]
        %v954 = vld [vmem:[%s946 + $0x38] sm:$0xff]
        %vm955 = vcmask 130048
        %v957 = vsel %vm955, %v825, 0
        %v960 = vsel %vm955, %v826, 0
        %v963 = vsel %vm955, %v827, 0
        %v966 = vsel %vm955, %v828, 0
        %v969 = vsel %vm955, %v829, 0
        %v972 = vsel %vm955, %v830, 0
        %v975 = vsel %vm955, %v831, 0
        %v978 = vsel %vm955, %v832, 0
        %v981 = vsel %vm955, %v833, 0
        %v984 = vsel %vm955, %v834, 0
        %v987 = vsel %vm955, %v835, 0
        %v990 = vsel %vm955, %v836, 0
        %v993 = vsel %vm955, %v837, 0
        %v996 = vsel %vm955, %v838, 0
        %v999 = vsel %vm955, %v839, 0
        %v1002 = vsel %vm955, %v840, 0
        %1004 = vmatpush.msra.mxu0 0.0
        %1005 = vmatpush.msra.mxu0 0.0
        %1006 = vmatpush.msra.mxu0 0.0
        %1007 = vmatpush.msra.mxu0 0.0
        %1008 = vmatpush.msra.mxu0 0.0
        %1009 = vmatpush.msra.mxu0 0.0
        %1010 = vmatpush.msra.mxu0 0.0
        %1011 = vmatpush.msra.mxu0 0.0
        %1012 = vmatpush.msra.mxu0 0.0
        %1013 = vmatpush.msra.mxu0 0.0
        %1014 = vmatpush.msra.mxu0 0.0
        %1015 = vmatpush.msra.mxu0 0.0
        %1016 = vmatpush.msra.mxu0 0.0
        %1017 = vmatpush.msra.mxu0 0.0
        %1018 = vmatpush.msra.mxu0 %v951
        %1019 = vmatpush.msra.mxu0 %v947
        %1020 = vmatmul.f32.gmra.mxu0 %v957
        %v1021 = vpop.f32.mrf.mxu0
        %v1022 = vadd.f32 0.0, %v1021
        %1023 = vmatmul.f32.gmra.mxu0 %v960
        %v1024 = vpop.f32.mrf.mxu0
        %v1025 = vadd.f32 0.0, %v1024
        %1026 = vmatmul.f32.gmra.mxu0 %v963
        %v1027 = vpop.f32.mrf.mxu0
        %v1028 = vadd.f32 0.0, %v1027
        %1029 = vmatmul.f32.gmra.mxu0 %v966
        %v1030 = vpop.f32.mrf.mxu0
        %v1031 = vadd.f32 0.0, %v1030
        %1032 = vmatmul.f32.gmra.mxu0 %v969
        %v1033 = vpop.f32.mrf.mxu0
        %v1034 = vadd.f32 0.0, %v1033
        %1035 = vmatmul.f32.gmra.mxu0 %v972
        %v1036 = vpop.f32.mrf.mxu0
        %v1037 = vadd.f32 0.0, %v1036
        %1038 = vmatmul.f32.gmra.mxu0 %v975
        %v1039 = vpop.f32.mrf.mxu0
        %v1040 = vadd.f32 0.0, %v1039
        %1041 = vmatmul.f32.gmra.mxu0 %v978
        %v1042 = vpop.f32.mrf.mxu0
        %v1043 = vadd.f32 0.0, %v1042
        %1044 = vmatmul.f32.gmra.mxu0 %v981
        %v1045 = vpop.f32.mrf.mxu0
        %v1046 = vadd.f32 0.0, %v1045
        %1047 = vmatmul.f32.gmra.mxu0 %v984
        %v1048 = vpop.f32.mrf.mxu0
        %v1049 = vadd.f32 0.0, %v1048
        %1050 = vmatmul.f32.gmra.mxu0 %v987
        %v1051 = vpop.f32.mrf.mxu0
        %v1052 = vadd.f32 0.0, %v1051
        %1053 = vmatmul.f32.gmra.mxu0 %v990
        %v1054 = vpop.f32.mrf.mxu0
        %v1055 = vadd.f32 0.0, %v1054
        %1056 = vmatmul.f32.gmra.mxu0 %v993
        %v1057 = vpop.f32.mrf.mxu0
        %v1058 = vadd.f32 0.0, %v1057
        %1059 = vmatmul.f32.gmra.mxu0 %v996
        %v1060 = vpop.f32.mrf.mxu0
        %v1061 = vadd.f32 0.0, %v1060
        %1062 = vmatmul.f32.gmra.mxu0 %v999
        %v1063 = vpop.f32.mrf.mxu0
        %v1064 = vadd.f32 0.0, %v1063
        %1065 = vmatmul.f32.gmra.mxu0 %v1002
        %v1066 = vpop.f32.mrf.mxu0
        %v1067 = vadd.f32 0.0, %v1066
        %1068 = vdwg.mxu0
        %1069 = vmatpush.msra.mxu0 0.0
        %1070 = vmatpush.msra.mxu0 0.0
        %1071 = vmatpush.msra.mxu0 0.0
        %1072 = vmatpush.msra.mxu0 0.0
        %1073 = vmatpush.msra.mxu0 0.0
        %1074 = vmatpush.msra.mxu0 0.0
        %1075 = vmatpush.msra.mxu0 0.0
        %1076 = vmatpush.msra.mxu0 0.0
        %1077 = vmatpush.msra.mxu0 0.0
        %1078 = vmatpush.msra.mxu0 0.0
        %1079 = vmatpush.msra.mxu0 0.0
        %1080 = vmatpush.msra.mxu0 0.0
        %1081 = vmatpush.msra.mxu0 0.0
        %1082 = vmatpush.msra.mxu0 0.0
        %1083 = vmatpush.msra.mxu0 %v952
        %1084 = vmatpush.msra.mxu0 %v948
        %1085 = vmatmul.f32.gmra.mxu0 %v957
        %v1086 = vpop.f32.mrf.mxu0
        %v1087 = vadd.f32 0.0, %v1086
        %1088 = vmatmul.f32.gmra.mxu0 %v960
        %v1089 = vpop.f32.mrf.mxu0
        %v1090 = vadd.f32 0.0, %v1089
        %1091 = vmatmul.f32.gmra.mxu0 %v963
        %v1092 = vpop.f32.mrf.mxu0
        %v1093 = vadd.f32 0.0, %v1092
        %1094 = vmatmul.f32.gmra.mxu0 %v966
        %v1095 = vpop.f32.mrf.mxu0
        %v1096 = vadd.f32 0.0, %v1095
        %1097 = vmatmul.f32.gmra.mxu0 %v969
        %v1098 = vpop.f32.mrf.mxu0
        %v1099 = vadd.f32 0.0, %v1098
        %1100 = vmatmul.f32.gmra.mxu0 %v972
        %v1101 = vpop.f32.mrf.mxu0
        %v1102 = vadd.f32 0.0, %v1101
        %1103 = vmatmul.f32.gmra.mxu0 %v975
        %v1104 = vpop.f32.mrf.mxu0
        %v1105 = vadd.f32 0.0, %v1104
        %1106 = vmatmul.f32.gmra.mxu0 %v978
        %v1107 = vpop.f32.mrf.mxu0
        %v1108 = vadd.f32 0.0, %v1107
        %1109 = vmatmul.f32.gmra.mxu0 %v981
        %v1110 = vpop.f32.mrf.mxu0
        %v1111 = vadd.f32 0.0, %v1110
        %1112 = vmatmul.f32.gmra.mxu0 %v984
        %v1113 = vpop.f32.mrf.mxu0
        %v1114 = vadd.f32 0.0, %v1113
        %1115 = vmatmul.f32.gmra.mxu0 %v987
        %v1116 = vpop.f32.mrf.mxu0
        %v1117 = vadd.f32 0.0, %v1116
        %1118 = vmatmul.f32.gmra.mxu0 %v990
        %v1119 = vpop.f32.mrf.mxu0
        %v1120 = vadd.f32 0.0, %v1119
        %1121 = vmatmul.f32.gmra.mxu0 %v993
        %v1122 = vpop.f32.mrf.mxu0
        %v1123 = vadd.f32 0.0, %v1122
        %1124 = vmatmul.f32.gmra.mxu0 %v996
        %v1125 = vpop.f32.mrf.mxu0
        %v1126 = vadd.f32 0.0, %v1125
        %1127 = vmatmul.f32.gmra.mxu0 %v999
        %v1128 = vpop.f32.mrf.mxu0
        %v1129 = vadd.f32 0.0, %v1128
        %1130 = vmatmul.f32.gmra.mxu0 %v1002
        %v1131 = vpop.f32.mrf.mxu0
        %v1132 = vadd.f32 0.0, %v1131
        %1133 = vdwg.mxu0
        %1134 = vmatpush.msra.mxu0 0.0
        %1135 = vmatpush.msra.mxu0 0.0
        %1136 = vmatpush.msra.mxu0 0.0
        %1137 = vmatpush.msra.mxu0 0.0
        %1138 = vmatpush.msra.mxu0 0.0
        %1139 = vmatpush.msra.mxu0 0.0
        %1140 = vmatpush.msra.mxu0 0.0
        %1141 = vmatpush.msra.mxu0 0.0
        %1142 = vmatpush.msra.mxu0 0.0
        %1143 = vmatpush.msra.mxu0 0.0
        %1144 = vmatpush.msra.mxu0 0.0
        %1145 = vmatpush.msra.mxu0 0.0
        %1146 = vmatpush.msra.mxu0 0.0
        %1147 = vmatpush.msra.mxu0 0.0
        %1148 = vmatpush.msra.mxu0 %v953
        %1149 = vmatpush.msra.mxu0 %v949
        %1150 = vmatmul.f32.gmra.mxu0 %v957
        %v1151 = vpop.f32.mrf.mxu0
        %v1152 = vadd.f32 0.0, %v1151
        %1153 = vmatmul.f32.gmra.mxu0 %v960
        %v1154 = vpop.f32.mrf.mxu0
        %v1155 = vadd.f32 0.0, %v1154
        %1156 = vmatmul.f32.gmra.mxu0 %v963
        %v1157 = vpop.f32.mrf.mxu0
        %v1158 = vadd.f32 0.0, %v1157
        %1159 = vmatmul.f32.gmra.mxu0 %v966
        %v1160 = vpop.f32.mrf.mxu0
        %v1161 = vadd.f32 0.0, %v1160
        %1162 = vmatmul.f32.gmra.mxu0 %v969
        %v1163 = vpop.f32.mrf.mxu0
        %v1164 = vadd.f32 0.0, %v1163
        %1165 = vmatmul.f32.gmra.mxu0 %v972
        %v1166 = vpop.f32.mrf.mxu0
        %v1167 = vadd.f32 0.0, %v1166
        %1168 = vmatmul.f32.gmra.mxu0 %v975
        %v1169 = vpop.f32.mrf.mxu0
        %v1170 = vadd.f32 0.0, %v1169
        %1171 = vmatmul.f32.gmra.mxu0 %v978
        %v1172 = vpop.f32.mrf.mxu0
        %v1173 = vadd.f32 0.0, %v1172
        %1174 = vmatmul.f32.gmra.mxu0 %v981
        %v1175 = vpop.f32.mrf.mxu0
        %v1176 = vadd.f32 0.0, %v1175
        %1177 = vmatmul.f32.gmra.mxu0 %v984
        %v1178 = vpop.f32.mrf.mxu0
        %v1179 = vadd.f32 0.0, %v1178
        %1180 = vmatmul.f32.gmra.mxu0 %v987
        %v1181 = vpop.f32.mrf.mxu0
        %v1182 = vadd.f32 0.0, %v1181
        %1183 = vmatmul.f32.gmra.mxu0 %v990
        %v1184 = vpop.f32.mrf.mxu0
        %v1185 = vadd.f32 0.0, %v1184
        %1186 = vmatmul.f32.gmra.mxu0 %v993
        %v1187 = vpop.f32.mrf.mxu0
        %v1188 = vadd.f32 0.0, %v1187
        %1189 = vmatmul.f32.gmra.mxu0 %v996
        %v1190 = vpop.f32.mrf.mxu0
        %v1191 = vadd.f32 0.0, %v1190
        %1192 = vmatmul.f32.gmra.mxu0 %v999
        %v1193 = vpop.f32.mrf.mxu0
        %v1194 = vadd.f32 0.0, %v1193
        %1195 = vmatmul.f32.gmra.mxu0 %v1002
        %v1196 = vpop.f32.mrf.mxu0
        %v1197 = vadd.f32 0.0, %v1196
        %1198 = vdwg.mxu0
        %1199 = vmatpush.msra.mxu0 0.0
        %1200 = vmatpush.msra.mxu0 0.0
        %1201 = vmatpush.msra.mxu0 0.0
        %1202 = vmatpush.msra.mxu0 0.0
        %1203 = vmatpush.msra.mxu0 0.0
        %1204 = vmatpush.msra.mxu0 0.0
        %1205 = vmatpush.msra.mxu0 0.0
        %1206 = vmatpush.msra.mxu0 0.0
        %1207 = vmatpush.msra.mxu0 0.0
        %1208 = vmatpush.msra.mxu0 0.0
        %1209 = vmatpush.msra.mxu0 0.0
        %1210 = vmatpush.msra.mxu0 0.0
        %1211 = vmatpush.msra.mxu0 0.0
        %1212 = vmatpush.msra.mxu0 0.0
        %1213 = vmatpush.msra.mxu0 %v954
        %1214 = vmatpush.msra.mxu0 %v950
        %1215 = vmatmul.f32.gmra.mxu0 %v957
        %v1216 = vpop.f32.mrf.mxu0
        %v1217 = vadd.f32 0.0, %v1216
        %1218 = vmatmul.f32.gmra.mxu0 %v960
        %v1219 = vpop.f32.mrf.mxu0
        %v1220 = vadd.f32 0.0, %v1219
        %1221 = vmatmul.f32.gmra.mxu0 %v963
        %v1222 = vpop.f32.mrf.mxu0
        %v1223 = vadd.f32 0.0, %v1222
        %1224 = vmatmul.f32.gmra.mxu0 %v966
        %v1225 = vpop.f32.mrf.mxu0
        %v1226 = vadd.f32 0.0, %v1225
        %1227 = vmatmul.f32.gmra.mxu0 %v969
        %v1228 = vpop.f32.mrf.mxu0
        %v1229 = vadd.f32 0.0, %v1228
        %1230 = vmatmul.f32.gmra.mxu0 %v972
        %v1231 = vpop.f32.mrf.mxu0
        %v1232 = vadd.f32 0.0, %v1231
        %1233 = vmatmul.f32.gmra.mxu0 %v975
        %v1234 = vpop.f32.mrf.mxu0
        %v1235 = vadd.f32 0.0, %v1234
        %1236 = vmatmul.f32.gmra.mxu0 %v978
        %v1237 = vpop.f32.mrf.mxu0
        %v1238 = vadd.f32 0.0, %v1237
        %1239 = vmatmul.f32.gmra.mxu0 %v981
        %v1240 = vpop.f32.mrf.mxu0
        %v1241 = vadd.f32 0.0, %v1240
        %1242 = vmatmul.f32.gmra.mxu0 %v984
        %v1243 = vpop.f32.mrf.mxu0
        %v1244 = vadd.f32 0.0, %v1243
        %1245 = vmatmul.f32.gmra.mxu0 %v987
        %v1246 = vpop.f32.mrf.mxu0
        %v1247 = vadd.f32 0.0, %v1246
        %1248 = vmatmul.f32.gmra.mxu0 %v990
        %v1249 = vpop.f32.mrf.mxu0
        %v1250 = vadd.f32 0.0, %v1249
        %1251 = vmatmul.f32.gmra.mxu0 %v993
        %v1252 = vpop.f32.mrf.mxu0
        %v1253 = vadd.f32 0.0, %v1252
        %1254 = vmatmul.f32.gmra.mxu0 %v996
        %v1255 = vpop.f32.mrf.mxu0
        %v1256 = vadd.f32 0.0, %v1255
        %1257 = vmatmul.f32.gmra.mxu0 %v999
        %v1258 = vpop.f32.mrf.mxu0
        %v1259 = vadd.f32 0.0, %v1258
        %1260 = vmatmul.f32.gmra.mxu0 %v1002
        %v1261 = vpop.f32.mrf.mxu0
        %v1262 = vadd.f32 0.0, %v1261
        %1263 = vdwg.mxu0
        %v1265 = vsel %vm955, %v922, 0
        %v1268 = vsel %vm955, %v923, 0
        %v1271 = vsel %vm955, %v924, 0
        %v1274 = vsel %vm955, %v925, 0
        %v1277 = vsel %vm955, %v926, 0
        %v1280 = vsel %vm955, %v927, 0
        %v1283 = vsel %vm955, %v928, 0
        %v1286 = vsel %vm955, %v929, 0
        %v1289 = vsel %vm955, %v930, 0
        %v1292 = vsel %vm955, %v931, 0
        %v1295 = vsel %vm955, %v932, 0
        %v1298 = vsel %vm955, %v933, 0
        %v1301 = vsel %vm955, %v934, 0
        %v1304 = vsel %vm955, %v935, 0
        %v1307 = vsel %vm955, %v936, 0
        %v1310 = vsel %vm955, %v937, 0
        %1312 = vmatpush.msra.mxu0 0.0
        %1313 = vmatpush.msra.mxu0 0.0
        %1314 = vmatpush.msra.mxu0 0.0
        %1315 = vmatpush.msra.mxu0 0.0
        %1316 = vmatpush.msra.mxu0 0.0
        %1317 = vmatpush.msra.mxu0 0.0
        %1318 = vmatpush.msra.mxu0 0.0
        %1319 = vmatpush.msra.mxu0 0.0
        %1320 = vmatpush.msra.mxu0 0.0
        %1321 = vmatpush.msra.mxu0 0.0
        %1322 = vmatpush.msra.mxu0 0.0
        %1323 = vmatpush.msra.mxu0 0.0
        %1324 = vmatpush.msra.mxu0 0.0
        %1325 = vmatpush.msra.mxu0 0.0
        %1326 = vmatpush.msra.mxu0 %v942
        %1327 = vmatpush.msra.mxu0 %v938
        %1328 = vmatmul.f32.gmra.mxu0 %v1265
        %v1329 = vpop.f32.mrf.mxu0
        %v1330 = vadd.f32 %v1022, %v1329
        %1331 = vmatmul.f32.gmra.mxu0 %v1268
        %v1332 = vpop.f32.mrf.mxu0
        %v1333 = vadd.f32 %v1025, %v1332
        %1334 = vmatmul.f32.gmra.mxu0 %v1271
        %v1335 = vpop.f32.mrf.mxu0
        %v1336 = vadd.f32 %v1028, %v1335
        %1337 = vmatmul.f32.gmra.mxu0 %v1274
        %v1338 = vpop.f32.mrf.mxu0
        %v1339 = vadd.f32 %v1031, %v1338
        %1340 = vmatmul.f32.gmra.mxu0 %v1277
        %v1341 = vpop.f32.mrf.mxu0
        %v1342 = vadd.f32 %v1034, %v1341
        %1343 = vmatmul.f32.gmra.mxu0 %v1280
        %v1344 = vpop.f32.mrf.mxu0
        %v1345 = vadd.f32 %v1037, %v1344
        %1346 = vmatmul.f32.gmra.mxu0 %v1283
        %v1347 = vpop.f32.mrf.mxu0
        %v1348 = vadd.f32 %v1040, %v1347
        %1349 = vmatmul.f32.gmra.mxu0 %v1286
        %v1350 = vpop.f32.mrf.mxu0
        %v1351 = vadd.f32 %v1043, %v1350
        %1352 = vmatmul.f32.gmra.mxu0 %v1289
        %v1353 = vpop.f32.mrf.mxu0
        %v1354 = vadd.f32 %v1046, %v1353
        %1355 = vmatmul.f32.gmra.mxu0 %v1292
        %v1356 = vpop.f32.mrf.mxu0
        %v1357 = vadd.f32 %v1049, %v1356
        %1358 = vmatmul.f32.gmra.mxu0 %v1295
        %v1359 = vpop.f32.mrf.mxu0
        %v1360 = vadd.f32 %v1052, %v1359
        %1361 = vmatmul.f32.gmra.mxu0 %v1298
        %v1362 = vpop.f32.mrf.mxu0
        %v1363 = vadd.f32 %v1055, %v1362
        %1364 = vmatmul.f32.gmra.mxu0 %v1301
        %v1365 = vpop.f32.mrf.mxu0
        %v1366 = vadd.f32 %v1058, %v1365
        %1367 = vmatmul.f32.gmra.mxu0 %v1304
        %v1368 = vpop.f32.mrf.mxu0
        %v1369 = vadd.f32 %v1061, %v1368
        %1370 = vmatmul.f32.gmra.mxu0 %v1307
        %v1371 = vpop.f32.mrf.mxu0
        %v1372 = vadd.f32 %v1064, %v1371
        %1373 = vmatmul.f32.gmra.mxu0 %v1310
        %v1374 = vpop.f32.mrf.mxu0
        %v1375 = vadd.f32 %v1067, %v1374
        %1376 = vdwg.mxu0
        %1377 = vmatpush.msra.mxu0 0.0
        %1378 = vmatpush.msra.mxu0 0.0
        %1379 = vmatpush.msra.mxu0 0.0
        %1380 = vmatpush.msra.mxu0 0.0
        %1381 = vmatpush.msra.mxu0 0.0
        %1382 = vmatpush.msra.mxu0 0.0
        %1383 = vmatpush.msra.mxu0 0.0
        %1384 = vmatpush.msra.mxu0 0.0
        %1385 = vmatpush.msra.mxu0 0.0
        %1386 = vmatpush.msra.mxu0 0.0
        %1387 = vmatpush.msra.mxu0 0.0
        %1388 = vmatpush.msra.mxu0 0.0
        %1389 = vmatpush.msra.mxu0 0.0
        %1390 = vmatpush.msra.mxu0 0.0
        %1391 = vmatpush.msra.mxu0 %v943
        %1392 = vmatpush.msra.mxu0 %v939
        %1393 = vmatmul.f32.gmra.mxu0 %v1265
        %v1394 = vpop.f32.mrf.mxu0
        %v1395 = vadd.f32 %v1087, %v1394
        %1396 = vmatmul.f32.gmra.mxu0 %v1268
        %v1397 = vpop.f32.mrf.mxu0
        %v1398 = vadd.f32 %v1090, %v1397
        %1399 = vmatmul.f32.gmra.mxu0 %v1271
        %v1400 = vpop.f32.mrf.mxu0
        %v1401 = vadd.f32 %v1093, %v1400
        %1402 = vmatmul.f32.gmra.mxu0 %v1274
        %v1403 = vpop.f32.mrf.mxu0
        %v1404 = vadd.f32 %v1096, %v1403
        %1405 = vmatmul.f32.gmra.mxu0 %v1277
        %v1406 = vpop.f32.mrf.mxu0
        %v1407 = vadd.f32 %v1099, %v1406
        %1408 = vmatmul.f32.gmra.mxu0 %v1280
        %v1409 = vpop.f32.mrf.mxu0
        %v1410 = vadd.f32 %v1102, %v1409
        %1411 = vmatmul.f32.gmra.mxu0 %v1283
        %v1412 = vpop.f32.mrf.mxu0
        %v1413 = vadd.f32 %v1105, %v1412
        %1414 = vmatmul.f32.gmra.mxu0 %v1286
        %v1415 = vpop.f32.mrf.mxu0
        %v1416 = vadd.f32 %v1108, %v1415
        %1417 = vmatmul.f32.gmra.mxu0 %v1289
        %v1418 = vpop.f32.mrf.mxu0
        %v1419 = vadd.f32 %v1111, %v1418
        %1420 = vmatmul.f32.gmra.mxu0 %v1292
        %v1421 = vpop.f32.mrf.mxu0
        %v1422 = vadd.f32 %v1114, %v1421
        %1423 = vmatmul.f32.gmra.mxu0 %v1295
        %v1424 = vpop.f32.mrf.mxu0
        %v1425 = vadd.f32 %v1117, %v1424
        %1426 = vmatmul.f32.gmra.mxu0 %v1298
        %v1427 = vpop.f32.mrf.mxu0
        %v1428 = vadd.f32 %v1120, %v1427
        %1429 = vmatmul.f32.gmra.mxu0 %v1301
        %v1430 = vpop.f32.mrf.mxu0
        %v1431 = vadd.f32 %v1123, %v1430
        %1432 = vmatmul.f32.gmra.mxu0 %v1304
        %v1433 = vpop.f32.mrf.mxu0
        %v1434 = vadd.f32 %v1126, %v1433
        %1435 = vmatmul.f32.gmra.mxu0 %v1307
        %v1436 = vpop.f32.mrf.mxu0
        %v1437 = vadd.f32 %v1129, %v1436
        %1438 = vmatmul.f32.gmra.mxu0 %v1310
        %v1439 = vpop.f32.mrf.mxu0
        %v1440 = vadd.f32 %v1132, %v1439
        %1441 = vdwg.mxu0
        %1442 = vmatpush.msra.mxu0 0.0
        %1443 = vmatpush.msra.mxu0 0.0
        %1444 = vmatpush.msra.mxu0 0.0
        %1445 = vmatpush.msra.mxu0 0.0
        %1446 = vmatpush.msra.mxu0 0.0
        %1447 = vmatpush.msra.mxu0 0.0
        %1448 = vmatpush.msra.mxu0 0.0
        %1449 = vmatpush.msra.mxu0 0.0
        %1450 = vmatpush.msra.mxu0 0.0
        %1451 = vmatpush.msra.mxu0 0.0
        %1452 = vmatpush.msra.mxu0 0.0
        %1453 = vmatpush.msra.mxu0 0.0
        %1454 = vmatpush.msra.mxu0 0.0
        %1455 = vmatpush.msra.mxu0 0.0
        %1456 = vmatpush.msra.mxu0 %v944
        %1457 = vmatpush.msra.mxu0 %v940
        %1458 = vmatmul.f32.gmra.mxu0 %v1265
        %v1459 = vpop.f32.mrf.mxu0
        %v1460 = vadd.f32 %v1152, %v1459
        %1461 = vmatmul.f32.gmra.mxu0 %v1268
        %v1462 = vpop.f32.mrf.mxu0
        %v1463 = vadd.f32 %v1155, %v1462
        %1464 = vmatmul.f32.gmra.mxu0 %v1271
        %v1465 = vpop.f32.mrf.mxu0
        %v1466 = vadd.f32 %v1158, %v1465
        %1467 = vmatmul.f32.gmra.mxu0 %v1274
        %v1468 = vpop.f32.mrf.mxu0
        %v1469 = vadd.f32 %v1161, %v1468
        %1470 = vmatmul.f32.gmra.mxu0 %v1277
        %v1471 = vpop.f32.mrf.mxu0
        %v1472 = vadd.f32 %v1164, %v1471
        %1473 = vmatmul.f32.gmra.mxu0 %v1280
        %v1474 = vpop.f32.mrf.mxu0
        %v1475 = vadd.f32 %v1167, %v1474
        %1476 = vmatmul.f32.gmra.mxu0 %v1283
        %v1477 = vpop.f32.mrf.mxu0
        %v1478 = vadd.f32 %v1170, %v1477
        %1479 = vmatmul.f32.gmra.mxu0 %v1286
        %v1480 = vpop.f32.mrf.mxu0
        %v1481 = vadd.f32 %v1173, %v1480
        %1482 = vmatmul.f32.gmra.mxu0 %v1289
        %v1483 = vpop.f32.mrf.mxu0
        %v1484 = vadd.f32 %v1176, %v1483
        %1485 = vmatmul.f32.gmra.mxu0 %v1292
        %v1486 = vpop.f32.mrf.mxu0
        %v1487 = vadd.f32 %v1179, %v1486
        %1488 = vmatmul.f32.gmra.mxu0 %v1295
        %v1489 = vpop.f32.mrf.mxu0
        %v1490 = vadd.f32 %v1182, %v1489
        %1491 = vmatmul.f32.gmra.mxu0 %v1298
        %v1492 = vpop.f32.mrf.mxu0
        %v1493 = vadd.f32 %v1185, %v1492
        %1494 = vmatmul.f32.gmra.mxu0 %v1301
        %v1495 = vpop.f32.mrf.mxu0
        %v1496 = vadd.f32 %v1188, %v1495
        %1497 = vmatmul.f32.gmra.mxu0 %v1304
        %v1498 = vpop.f32.mrf.mxu0
        %v1499 = vadd.f32 %v1191, %v1498
        %1500 = vmatmul.f32.gmra.mxu0 %v1307
        %v1501 = vpop.f32.mrf.mxu0
        %v1502 = vadd.f32 %v1194, %v1501
        %1503 = vmatmul.f32.gmra.mxu0 %v1310
        %v1504 = vpop.f32.mrf.mxu0
        %v1505 = vadd.f32 %v1197, %v1504
        %1506 = vdwg.mxu0
        %1507 = vmatpush.msra.mxu0 0.0
        %1508 = vmatpush.msra.mxu0 0.0
        %1509 = vmatpush.msra.mxu0 0.0
        %1510 = vmatpush.msra.mxu0 0.0
        %1511 = vmatpush.msra.mxu0 0.0
        %1512 = vmatpush.msra.mxu0 0.0
        %1513 = vmatpush.msra.mxu0 0.0
        %1514 = vmatpush.msra.mxu0 0.0
        %1515 = vmatpush.msra.mxu0 0.0
        %1516 = vmatpush.msra.mxu0 0.0
        %1517 = vmatpush.msra.mxu0 0.0
        %1518 = vmatpush.msra.mxu0 0.0
        %1519 = vmatpush.msra.mxu0 0.0
        %1520 = vmatpush.msra.mxu0 0.0
        %1521 = vmatpush.msra.mxu0 %v945
        %1522 = vmatpush.msra.mxu0 %v941
        %1523 = vmatmul.f32.gmra.mxu0 %v1265
        %v1524 = vpop.f32.mrf.mxu0
        %v1525 = vadd.f32 %v1217, %v1524
        %1526 = vmatmul.f32.gmra.mxu0 %v1268
        %v1527 = vpop.f32.mrf.mxu0
        %v1528 = vadd.f32 %v1220, %v1527
        %1529 = vmatmul.f32.gmra.mxu0 %v1271
        %v1530 = vpop.f32.mrf.mxu0
        %v1531 = vadd.f32 %v1223, %v1530
        %1532 = vmatmul.f32.gmra.mxu0 %v1274
        %v1533 = vpop.f32.mrf.mxu0
        %v1534 = vadd.f32 %v1226, %v1533
        %1535 = vmatmul.f32.gmra.mxu0 %v1277
        %v1536 = vpop.f32.mrf.mxu0
        %v1537 = vadd.f32 %v1229, %v1536
        %1538 = vmatmul.f32.gmra.mxu0 %v1280
        %v1539 = vpop.f32.mrf.mxu0
        %v1540 = vadd.f32 %v1232, %v1539
        %1541 = vmatmul.f32.gmra.mxu0 %v1283
        %v1542 = vpop.f32.mrf.mxu0
        %v1543 = vadd.f32 %v1235, %v1542
        %1544 = vmatmul.f32.gmra.mxu0 %v1286
        %v1545 = vpop.f32.mrf.mxu0
        %v1546 = vadd.f32 %v1238, %v1545
        %1547 = vmatmul.f32.gmra.mxu0 %v1289
        %v1548 = vpop.f32.mrf.mxu0
        %v1549 = vadd.f32 %v1241, %v1548
        %1550 = vmatmul.f32.gmra.mxu0 %v1292
        %v1551 = vpop.f32.mrf.mxu0
        %v1552 = vadd.f32 %v1244, %v1551
        %1553 = vmatmul.f32.gmra.mxu0 %v1295
        %v1554 = vpop.f32.mrf.mxu0
        %v1555 = vadd.f32 %v1247, %v1554
        %1556 = vmatmul.f32.gmra.mxu0 %v1298
        %v1557 = vpop.f32.mrf.mxu0
        %v1558 = vadd.f32 %v1250, %v1557
        %1559 = vmatmul.f32.gmra.mxu0 %v1301
        %v1560 = vpop.f32.mrf.mxu0
        %v1561 = vadd.f32 %v1253, %v1560
        %1562 = vmatmul.f32.gmra.mxu0 %v1304
        %v1563 = vpop.f32.mrf.mxu0
        %v1564 = vadd.f32 %v1256, %v1563
        %1565 = vmatmul.f32.gmra.mxu0 %v1307
        %v1566 = vpop.f32.mrf.mxu0
        %v1567 = vadd.f32 %v1259, %v1566
        %1568 = vmatmul.f32.gmra.mxu0 %v1310
        %v1569 = vpop.f32.mrf.mxu0
        %v1570 = vadd.f32 %v1262, %v1569
        %1571 = vdwg.mxu0
        %v1572 = vrot.slane %v825, 1
        %v1573 = vrot.slane %v826, 1
        %v1574 = vrot.slane %v827, 1
        %v1575 = vrot.slane %v828, 1
        %v1576 = vrot.slane %v829, 1
        %v1577 = vrot.slane %v830, 1
        %v1578 = vrot.slane %v831, 1
        %v1579 = vrot.slane %v832, 1
        %v1580 = vrot.slane %v833, 1
        %v1581 = vrot.slane %v834, 1
        %v1582 = vrot.slane %v835, 1
        %v1583 = vrot.slane %v836, 1
        %v1584 = vrot.slane %v837, 1
        %v1585 = vrot.slane %v838, 1
        %v1586 = vrot.slane %v839, 1
        %v1587 = vrot.slane %v840, 1
        %vm1588 = vcmp.lt.s32.totalorder %v617, 7
        %v1589 = vsel %vm1588, %v1586, %v1587
        %v1590 = vsel %vm1588, %v1585, %v1586
        %v1591 = vsel %vm1588, %v1584, %v1585
        %v1592 = vsel %vm1588, %v1583, %v1584
        %v1593 = vsel %vm1588, %v1582, %v1583
        %v1594 = vsel %vm1588, %v1581, %v1582
        %v1595 = vsel %vm1588, %v1580, %v1581
        %v1596 = vsel %vm1588, %v1579, %v1580
        %v1597 = vsel %vm1588, %v1578, %v1579
        %v1598 = vsel %vm1588, %v1577, %v1578
        %v1599 = vsel %vm1588, %v1576, %v1577
        %v1600 = vsel %vm1588, %v1575, %v1576
        %v1601 = vsel %vm1588, %v1574, %v1575
        %v1602 = vsel %vm1588, %v1573, %v1574
        %v1603 = vsel %vm1588, %v1572, %v1573
        %v1604 = vsel %vm1588, %v1587, %v1572
        %vm1605 = vcmp.lt.s32.totalorder %v809, 15
        %vm1606 = vcmp.lt.s32.totalorder %v810, 15
        %vm1607 = vcmp.lt.s32.totalorder %v811, 15
        %vm1608 = vcmp.lt.s32.totalorder %v812, 15
        %vm1609 = vcmp.lt.s32.totalorder %v813, 15
        %vm1610 = vcmp.lt.s32.totalorder %v814, 15
        %vm1611 = vcmp.lt.s32.totalorder %v815, 15
        %vm1612 = vcmp.lt.s32.totalorder %v816, 15
        %vm1613 = vcmp.lt.s32.totalorder %v817, 15
        %vm1614 = vcmp.lt.s32.totalorder %v818, 15
        %vm1615 = vcmp.lt.s32.totalorder %v819, 15
        %vm1616 = vcmp.lt.s32.totalorder %v820, 15
        %vm1617 = vcmp.lt.s32.totalorder %v821, 15
        %vm1618 = vcmp.lt.s32.totalorder %v822, 15
        %vm1619 = vcmp.lt.s32.totalorder %v823, 15
        %vm1620 = vcmp.lt.s32.totalorder %v824, 15
        %v1621 = vsel %vm1605, 1, 0
        %v1622 = vsel %vm1606, 1, 0
        %v1623 = vsel %vm1607, 1, 0
        %v1624 = vsel %vm1608, 1, 0
        %v1625 = vsel %vm1609, 1, 0
        %v1626 = vsel %vm1610, 1, 0
        %v1627 = vsel %vm1611, 1, 0
        %v1628 = vsel %vm1612, 1, 0
        %v1629 = vsel %vm1613, 1, 0
        %v1630 = vsel %vm1614, 1, 0
        %v1631 = vsel %vm1615, 1, 0
        %v1632 = vsel %vm1616, 1, 0
        %v1633 = vsel %vm1617, 1, 0
        %v1634 = vsel %vm1618, 1, 0
        %v1635 = vsel %vm1619, 1, 0
        %v1636 = vsel %vm1620, 1, 0
        %vm1637 = vcmp.eq.s32.totalorder %v1621, 1
        %vm1638 = vcmp.eq.s32.totalorder %v1622, 1
        %vm1639 = vcmp.eq.s32.totalorder %v1623, 1
        %vm1640 = vcmp.eq.s32.totalorder %v1624, 1
        %vm1641 = vcmp.eq.s32.totalorder %v1625, 1
        %vm1642 = vcmp.eq.s32.totalorder %v1626, 1
        %vm1643 = vcmp.eq.s32.totalorder %v1627, 1
        %vm1644 = vcmp.eq.s32.totalorder %v1628, 1
        %vm1645 = vcmp.eq.s32.totalorder %v1629, 1
        %vm1646 = vcmp.eq.s32.totalorder %v1630, 1
        %vm1647 = vcmp.eq.s32.totalorder %v1631, 1
        %vm1648 = vcmp.eq.s32.totalorder %v1632, 1
        %vm1649 = vcmp.eq.s32.totalorder %v1633, 1
        %vm1650 = vcmp.eq.s32.totalorder %v1634, 1
        %vm1651 = vcmp.eq.s32.totalorder %v1635, 1
        %vm1652 = vcmp.eq.s32.totalorder %v1636, 1
        %v1653 = vsel %vm1637, %v1603, 0.0
        %v1654 = vsel %vm1638, %v1602, 0.0
        %v1655 = vsel %vm1639, %v1601, 0.0
        %v1656 = vsel %vm1640, %v1600, 0.0
        %v1657 = vsel %vm1641, %v1599, 0.0
        %v1658 = vsel %vm1642, %v1598, 0.0
        %v1659 = vsel %vm1643, %v1597, 0.0
        %v1660 = vsel %vm1644, %v1596, 0.0
        %v1661 = vsel %vm1645, %v1595, 0.0
        %v1662 = vsel %vm1646, %v1594, 0.0
        %v1663 = vsel %vm1647, %v1593, 0.0
        %v1664 = vsel %vm1648, %v1592, 0.0
        %v1665 = vsel %vm1649, %v1591, 0.0
        %v1666 = vsel %vm1650, %v1590, 0.0
        %v1667 = vsel %vm1651, %v1589, 0.0
        %v1668 = vsel %vm1652, %v1604, 0.0
        %s1669 = scalar_lea.vmem [#allocation4], 128
        %v1670 = vld [vmem:[%s1669] sm:$0xff]
        %v1671 = vld [vmem:[%s1669 + $0x8] sm:$0xff]
        %v1672 = vld [vmem:[%s1669 + $0x10] sm:$0xff]
        %v1673 = vld [vmem:[%s1669 + $0x18] sm:$0xff]
        %v1674 = vld [vmem:[%s1669 + $0x20] sm:$0xff]
        %v1675 = vld [vmem:[%s1669 + $0x28] sm:$0xff]
        %v1676 = vld [vmem:[%s1669 + $0x30] sm:$0xff]
        %v1677 = vld [vmem:[%s1669 + $0x38] sm:$0xff]
        %v1679 = vsel %vm955, %v1653, 0
        %v1682 = vsel %vm955, %v1654, 0
        %v1685 = vsel %vm955, %v1655, 0
        %v1688 = vsel %vm955, %v1656, 0
        %v1691 = vsel %vm955, %v1657, 0
        %v1694 = vsel %vm955, %v1658, 0
        %v1697 = vsel %vm955, %v1659, 0
        %v1700 = vsel %vm955, %v1660, 0
        %v1703 = vsel %vm955, %v1661, 0
        %v1706 = vsel %vm955, %v1662, 0
        %v1709 = vsel %vm955, %v1663, 0
        %v1712 = vsel %vm955, %v1664, 0
        %v1715 = vsel %vm955, %v1665, 0
        %v1718 = vsel %vm955, %v1666, 0
        %v1721 = vsel %vm955, %v1667, 0
        %v1724 = vsel %vm955, %v1668, 0
        %1726 = vmatpush.msra.mxu0 0.0
        %1727 = vmatpush.msra.mxu0 0.0
        %1728 = vmatpush.msra.mxu0 0.0
        %1729 = vmatpush.msra.mxu0 0.0
        %1730 = vmatpush.msra.mxu0 0.0
        %1731 = vmatpush.msra.mxu0 0.0
        %1732 = vmatpush.msra.mxu0 0.0
        %1733 = vmatpush.msra.mxu0 0.0
        %1734 = vmatpush.msra.mxu0 0.0
        %1735 = vmatpush.msra.mxu0 0.0
        %1736 = vmatpush.msra.mxu0 0.0
        %1737 = vmatpush.msra.mxu0 0.0
        %1738 = vmatpush.msra.mxu0 0.0
        %1739 = vmatpush.msra.mxu0 0.0
        %1740 = vmatpush.msra.mxu0 %v1674
        %1741 = vmatpush.msra.mxu0 %v1670
        %1742 = vmatmul.f32.gmra.mxu0 %v1679
        %v1743 = vpop.f32.mrf.mxu0
        %v1744 = vadd.f32 0.0, %v1743
        %1745 = vmatmul.f32.gmra.mxu0 %v1682
        %v1746 = vpop.f32.mrf.mxu0
        %v1747 = vadd.f32 0.0, %v1746
        %1748 = vmatmul.f32.gmra.mxu0 %v1685
        %v1749 = vpop.f32.mrf.mxu0
        %v1750 = vadd.f32 0.0, %v1749
        %1751 = vmatmul.f32.gmra.mxu0 %v1688
        %v1752 = vpop.f32.mrf.mxu0
        %v1753 = vadd.f32 0.0, %v1752
        %1754 = vmatmul.f32.gmra.mxu0 %v1691
        %v1755 = vpop.f32.mrf.mxu0
        %v1756 = vadd.f32 0.0, %v1755
        %1757 = vmatmul.f32.gmra.mxu0 %v1694
        %v1758 = vpop.f32.mrf.mxu0
        %v1759 = vadd.f32 0.0, %v1758
        %1760 = vmatmul.f32.gmra.mxu0 %v1697
        %v1761 = vpop.f32.mrf.mxu0
        %v1762 = vadd.f32 0.0, %v1761
        %1763 = vmatmul.f32.gmra.mxu0 %v1700
        %v1764 = vpop.f32.mrf.mxu0
        %v1765 = vadd.f32 0.0, %v1764
        %1766 = vmatmul.f32.gmra.mxu0 %v1703
        %v1767 = vpop.f32.mrf.mxu0
        %v1768 = vadd.f32 0.0, %v1767
        %1769 = vmatmul.f32.gmra.mxu0 %v1706
        %v1770 = vpop.f32.mrf.mxu0
        %v1771 = vadd.f32 0.0, %v1770
        %1772 = vmatmul.f32.gmra.mxu0 %v1709
        %v1773 = vpop.f32.mrf.mxu0
        %v1774 = vadd.f32 0.0, %v1773
        %1775 = vmatmul.f32.gmra.mxu0 %v1712
        %v1776 = vpop.f32.mrf.mxu0
        %v1777 = vadd.f32 0.0, %v1776
        %1778 = vmatmul.f32.gmra.mxu0 %v1715
        %v1779 = vpop.f32.mrf.mxu0
        %v1780 = vadd.f32 0.0, %v1779
        %1781 = vmatmul.f32.gmra.mxu0 %v1718
        %v1782 = vpop.f32.mrf.mxu0
        %v1783 = vadd.f32 0.0, %v1782
        %1784 = vmatmul.f32.gmra.mxu0 %v1721
        %v1785 = vpop.f32.mrf.mxu0
        %v1786 = vadd.f32 0.0, %v1785
        %1787 = vmatmul.f32.gmra.mxu0 %v1724
        %v1788 = vpop.f32.mrf.mxu0
        %v1789 = vadd.f32 0.0, %v1788
        %1790 = vdwg.mxu0
        %1791 = vmatpush.msra.mxu0 0.0
        %1792 = vmatpush.msra.mxu0 0.0
        %1793 = vmatpush.msra.mxu0 0.0
        %1794 = vmatpush.msra.mxu0 0.0
        %1795 = vmatpush.msra.mxu0 0.0
        %1796 = vmatpush.msra.mxu0 0.0
        %1797 = vmatpush.msra.mxu0 0.0
        %1798 = vmatpush.msra.mxu0 0.0
        %1799 = vmatpush.msra.mxu0 0.0
        %1800 = vmatpush.msra.mxu0 0.0
        %1801 = vmatpush.msra.mxu0 0.0
        %1802 = vmatpush.msra.mxu0 0.0
        %1803 = vmatpush.msra.mxu0 0.0
        %1804 = vmatpush.msra.mxu0 0.0
        %1805 = vmatpush.msra.mxu0 %v1675
        %1806 = vmatpush.msra.mxu0 %v1671
        %1807 = vmatmul.f32.gmra.mxu0 %v1679
        %v1808 = vpop.f32.mrf.mxu0
        %v1809 = vadd.f32 0.0, %v1808
        %1810 = vmatmul.f32.gmra.mxu0 %v1682
        %v1811 = vpop.f32.mrf.mxu0
        %v1812 = vadd.f32 0.0, %v1811
        %1813 = vmatmul.f32.gmra.mxu0 %v1685
        %v1814 = vpop.f32.mrf.mxu0
        %v1815 = vadd.f32 0.0, %v1814
        %1816 = vmatmul.f32.gmra.mxu0 %v1688
        %v1817 = vpop.f32.mrf.mxu0
        %v1818 = vadd.f32 0.0, %v1817
        %1819 = vmatmul.f32.gmra.mxu0 %v1691
        %v1820 = vpop.f32.mrf.mxu0
        %v1821 = vadd.f32 0.0, %v1820
        %1822 = vmatmul.f32.gmra.mxu0 %v1694
        %v1823 = vpop.f32.mrf.mxu0
        %v1824 = vadd.f32 0.0, %v1823
        %1825 = vmatmul.f32.gmra.mxu0 %v1697
        %v1826 = vpop.f32.mrf.mxu0
        %v1827 = vadd.f32 0.0, %v1826
        %1828 = vmatmul.f32.gmra.mxu0 %v1700
        %v1829 = vpop.f32.mrf.mxu0
        %v1830 = vadd.f32 0.0, %v1829
        %1831 = vmatmul.f32.gmra.mxu0 %v1703
        %v1832 = vpop.f32.mrf.mxu0
        %v1833 = vadd.f32 0.0, %v1832
        %1834 = vmatmul.f32.gmra.mxu0 %v1706
        %v1835 = vpop.f32.mrf.mxu0
        %v1836 = vadd.f32 0.0, %v1835
        %1837 = vmatmul.f32.gmra.mxu0 %v1709
        %v1838 = vpop.f32.mrf.mxu0
        %v1839 = vadd.f32 0.0, %v1838
        %1840 = vmatmul.f32.gmra.mxu0 %v1712
        %v1841 = vpop.f32.mrf.mxu0
        %v1842 = vadd.f32 0.0, %v1841
        %1843 = vmatmul.f32.gmra.mxu0 %v1715
        %v1844 = vpop.f32.mrf.mxu0
        %v1845 = vadd.f32 0.0, %v1844
        %1846 = vmatmul.f32.gmra.mxu0 %v1718
        %v1847 = vpop.f32.mrf.mxu0
        %v1848 = vadd.f32 0.0, %v1847
        %1849 = vmatmul.f32.gmra.mxu0 %v1721
        %v1850 = vpop.f32.mrf.mxu0
        %v1851 = vadd.f32 0.0, %v1850
        %1852 = vmatmul.f32.gmra.mxu0 %v1724
        %v1853 = vpop.f32.mrf.mxu0
        %v1854 = vadd.f32 0.0, %v1853
        %1855 = vdwg.mxu0
        %1856 = vmatpush.msra.mxu0 0.0
        %1857 = vmatpush.msra.mxu0 0.0
        %1858 = vmatpush.msra.mxu0 0.0
        %1859 = vmatpush.msra.mxu0 0.0
        %1860 = vmatpush.msra.mxu0 0.0
        %1861 = vmatpush.msra.mxu0 0.0
        %1862 = vmatpush.msra.mxu0 0.0
        %1863 = vmatpush.msra.mxu0 0.0
        %1864 = vmatpush.msra.mxu0 0.0
        %1865 = vmatpush.msra.mxu0 0.0
        %1866 = vmatpush.msra.mxu0 0.0
        %1867 = vmatpush.msra.mxu0 0.0
        %1868 = vmatpush.msra.mxu0 0.0
        %1869 = vmatpush.msra.mxu0 0.0
        %1870 = vmatpush.msra.mxu0 %v1676
        %1871 = vmatpush.msra.mxu0 %v1672
        %1872 = vmatmul.f32.gmra.mxu0 %v1679
        %v1873 = vpop.f32.mrf.mxu0
        %v1874 = vadd.f32 0.0, %v1873
        %1875 = vmatmul.f32.gmra.mxu0 %v1682
        %v1876 = vpop.f32.mrf.mxu0
        %v1877 = vadd.f32 0.0, %v1876
        %1878 = vmatmul.f32.gmra.mxu0 %v1685
        %v1879 = vpop.f32.mrf.mxu0
        %v1880 = vadd.f32 0.0, %v1879
        %1881 = vmatmul.f32.gmra.mxu0 %v1688
        %v1882 = vpop.f32.mrf.mxu0
        %v1883 = vadd.f32 0.0, %v1882
        %1884 = vmatmul.f32.gmra.mxu0 %v1691
        %v1885 = vpop.f32.mrf.mxu0
        %v1886 = vadd.f32 0.0, %v1885
        %1887 = vmatmul.f32.gmra.mxu0 %v1694
        %v1888 = vpop.f32.mrf.mxu0
        %v1889 = vadd.f32 0.0, %v1888
        %1890 = vmatmul.f32.gmra.mxu0 %v1697
        %v1891 = vpop.f32.mrf.mxu0
        %v1892 = vadd.f32 0.0, %v1891
        %1893 = vmatmul.f32.gmra.mxu0 %v1700
        %v1894 = vpop.f32.mrf.mxu0
        %v1895 = vadd.f32 0.0, %v1894
        %1896 = vmatmul.f32.gmra.mxu0 %v1703
        %v1897 = vpop.f32.mrf.mxu0
        %v1898 = vadd.f32 0.0, %v1897
        %1899 = vmatmul.f32.gmra.mxu0 %v1706
        %v1900 = vpop.f32.mrf.mxu0
        %v1901 = vadd.f32 0.0, %v1900
        %1902 = vmatmul.f32.gmra.mxu0 %v1709
        %v1903 = vpop.f32.mrf.mxu0
        %v1904 = vadd.f32 0.0, %v1903
        %1905 = vmatmul.f32.gmra.mxu0 %v1712
        %v1906 = vpop.f32.mrf.mxu0
        %v1907 = vadd.f32 0.0, %v1906
        %1908 = vmatmul.f32.gmra.mxu0 %v1715
        %v1909 = vpop.f32.mrf.mxu0
        %v1910 = vadd.f32 0.0, %v1909
        %1911 = vmatmul.f32.gmra.mxu0 %v1718
        %v1912 = vpop.f32.mrf.mxu0
        %v1913 = vadd.f32 0.0, %v1912
        %1914 = vmatmul.f32.gmra.mxu0 %v1721
        %v1915 = vpop.f32.mrf.mxu0
        %v1916 = vadd.f32 0.0, %v1915
        %1917 = vmatmul.f32.gmra.mxu0 %v1724
        %v1918 = vpop.f32.mrf.mxu0
        %v1919 = vadd.f32 0.0, %v1918
        %1920 = vdwg.mxu0
        %1921 = vmatpush.msra.mxu0 0.0
        %1922 = vmatpush.msra.mxu0 0.0
        %1923 = vmatpush.msra.mxu0 0.0
        %1924 = vmatpush.msra.mxu0 0.0
        %1925 = vmatpush.msra.mxu0 0.0
        %1926 = vmatpush.msra.mxu0 0.0
        %1927 = vmatpush.msra.mxu0 0.0
        %1928 = vmatpush.msra.mxu0 0.0
        %1929 = vmatpush.msra.mxu0 0.0
        %1930 = vmatpush.msra.mxu0 0.0
        %1931 = vmatpush.msra.mxu0 0.0
        %1932 = vmatpush.msra.mxu0 0.0
        %1933 = vmatpush.msra.mxu0 0.0
        %1934 = vmatpush.msra.mxu0 0.0
        %1935 = vmatpush.msra.mxu0 %v1677
        %1936 = vmatpush.msra.mxu0 %v1673
        %1937 = vmatmul.f32.gmra.mxu0 %v1679
        %v1938 = vpop.f32.mrf.mxu0
        %v1939 = vadd.f32 0.0, %v1938
        %1940 = vmatmul.f32.gmra.mxu0 %v1682
        %v1941 = vpop.f32.mrf.mxu0
        %v1942 = vadd.f32 0.0, %v1941
        %1943 = vmatmul.f32.gmra.mxu0 %v1685
        %v1944 = vpop.f32.mrf.mxu0
        %v1945 = vadd.f32 0.0, %v1944
        %1946 = vmatmul.f32.gmra.mxu0 %v1688
        %v1947 = vpop.f32.mrf.mxu0
        %v1948 = vadd.f32 0.0, %v1947
        %1949 = vmatmul.f32.gmra.mxu0 %v1691
        %v1950 = vpop.f32.mrf.mxu0
        %v1951 = vadd.f32 0.0, %v1950
        %1952 = vmatmul.f32.gmra.mxu0 %v1694
        %v1953 = vpop.f32.mrf.mxu0
        %v1954 = vadd.f32 0.0, %v1953
        %1955 = vmatmul.f32.gmra.mxu0 %v1697
        %v1956 = vpop.f32.mrf.mxu0
        %v1957 = vadd.f32 0.0, %v1956
        %1958 = vmatmul.f32.gmra.mxu0 %v1700
        %v1959 = vpop.f32.mrf.mxu0
        %v1960 = vadd.f32 0.0, %v1959
        %1961 = vmatmul.f32.gmra.mxu0 %v1703
        %v1962 = vpop.f32.mrf.mxu0
        %v1963 = vadd.f32 0.0, %v1962
        %1964 = vmatmul.f32.gmra.mxu0 %v1706
        %v1965 = vpop.f32.mrf.mxu0
        %v1966 = vadd.f32 0.0, %v1965
        %1967 = vmatmul.f32.gmra.mxu0 %v1709
        %v1968 = vpop.f32.mrf.mxu0
        %v1969 = vadd.f32 0.0, %v1968
        %1970 = vmatmul.f32.gmra.mxu0 %v1712
        %v1971 = vpop.f32.mrf.mxu0
        %v1972 = vadd.f32 0.0, %v1971
        %1973 = vmatmul.f32.gmra.mxu0 %v1715
        %v1974 = vpop.f32.mrf.mxu0
        %v1975 = vadd.f32 0.0, %v1974
        %1976 = vmatmul.f32.gmra.mxu0 %v1718
        %v1977 = vpop.f32.mrf.mxu0
        %v1978 = vadd.f32 0.0, %v1977
        %1979 = vmatmul.f32.gmra.mxu0 %v1721
        %v1980 = vpop.f32.mrf.mxu0
        %v1981 = vadd.f32 0.0, %v1980
        %1982 = vmatmul.f32.gmra.mxu0 %v1724
        %v1983 = vpop.f32.mrf.mxu0
        %v1984 = vadd.f32 0.0, %v1983
        %1985 = vdwg.mxu0
        %v1986 = vadd.f32 %v1330, %v1744
        %v1987 = vadd.f32 %v1395, %v1809
        %v1988 = vadd.f32 %v1460, %v1874
        %v1989 = vadd.f32 %v1525, %v1939
        %v1990 = vadd.f32 %v1333, %v1747
        %v1991 = vadd.f32 %v1398, %v1812
        %v1992 = vadd.f32 %v1463, %v1877
        %v1993 = vadd.f32 %v1528, %v1942
        %v1994 = vadd.f32 %v1336, %v1750
        %v1995 = vadd.f32 %v1401, %v1815
        %v1996 = vadd.f32 %v1466, %v1880
        %v1997 = vadd.f32 %v1531, %v1945
        %v1998 = vadd.f32 %v1339, %v1753
        %v1999 = vadd.f32 %v1404, %v1818
        %v2000 = vadd.f32 %v1469, %v1883
        %v2001 = vadd.f32 %v1534, %v1948
        %v2002 = vadd.f32 %v1342, %v1756
        %v2003 = vadd.f32 %v1407, %v1821
        %v2004 = vadd.f32 %v1472, %v1886
        %v2005 = vadd.f32 %v1537, %v1951
        %v2006 = vadd.f32 %v1345, %v1759
        %v2007 = vadd.f32 %v1410, %v1824
        %v2008 = vadd.f32 %v1475, %v1889
        %v2009 = vadd.f32 %v1540, %v1954
        %v2010 = vadd.f32 %v1348, %v1762
        %v2011 = vadd.f32 %v1413, %v1827
        %v2012 = vadd.f32 %v1478, %v1892
        %v2013 = vadd.f32 %v1543, %v1957
        %v2014 = vadd.f32 %v1351, %v1765
        %v2015 = vadd.f32 %v1416, %v1830
        %v2016 = vadd.f32 %v1481, %v1895
        %v2017 = vadd.f32 %v1546, %v1960
        %v2018 = vadd.f32 %v1354, %v1768
        %v2019 = vadd.f32 %v1419, %v1833
        %v2020 = vadd.f32 %v1484, %v1898
        %v2021 = vadd.f32 %v1549, %v1963
        %v2022 = vadd.f32 %v1357, %v1771
        %v2023 = vadd.f32 %v1422, %v1836
        %v2024 = vadd.f32 %v1487, %v1901
        %v2025 = vadd.f32 %v1552, %v1966
        %v2026 = vadd.f32 %v1360, %v1774
        %v2027 = vadd.f32 %v1425, %v1839
        %v2028 = vadd.f32 %v1490, %v1904
        %v2029 = vadd.f32 %v1555, %v1969
        %v2030 = vadd.f32 %v1363, %v1777
        %v2031 = vadd.f32 %v1428, %v1842
        %v2032 = vadd.f32 %v1493, %v1907
        %v2033 = vadd.f32 %v1558, %v1972
        %v2034 = vadd.f32 %v1366, %v1780
        %v2035 = vadd.f32 %v1431, %v1845
        %v2036 = vadd.f32 %v1496, %v1910
        %v2037 = vadd.f32 %v1561, %v1975
        %v2038 = vadd.f32 %v1369, %v1783
        %v2039 = vadd.f32 %v1434, %v1848
        %v2040 = vadd.f32 %v1499, %v1913
        %v2041 = vadd.f32 %v1564, %v1978
        %v2042 = vadd.f32 %v1372, %v1786
        %v2043 = vadd.f32 %v1437, %v1851
        %v2044 = vadd.f32 %v1502, %v1916
        %v2045 = vadd.f32 %v1567, %v1981
        %v2046 = vadd.f32 %v1375, %v1789
        %v2047 = vadd.f32 %v1440, %v1854
        %v2048 = vadd.f32 %v1505, %v1919
        %v2049 = vadd.f32 %v1570, %v1984
        %v2050 = vld [vmem:[%s6] sm:$0xf]
        %v2052 = vperm.slane %v2050, 0
        %v2053 = vperm.slane %v2050, 1
        %v2054 = vperm.slane %v2050, 2
        %v2055 = vperm.slane %v2050, 3
        %v2060 = vadd.f32 %v1986, %v2052
        %v2061 = vadd.f32 %v1987, %v2053
        %v2062 = vadd.f32 %v1988, %v2054
        %v2063 = vadd.f32 %v1989, %v2055
        %v2064 = vadd.f32 %v1990, %v2052
        %v2065 = vadd.f32 %v1991, %v2053
        %v2066 = vadd.f32 %v1992, %v2054
        %v2067 = vadd.f32 %v1993, %v2055
        %v2068 = vadd.f32 %v1994, %v2052
        %v2069 = vadd.f32 %v1995, %v2053
        %v2070 = vadd.f32 %v1996, %v2054
        %v2071 = vadd.f32 %v1997, %v2055
        %v2072 = vadd.f32 %v1998, %v2052
        %v2073 = vadd.f32 %v1999, %v2053
        %v2074 = vadd.f32 %v2000, %v2054
        %v2075 = vadd.f32 %v2001, %v2055
        %v2076 = vadd.f32 %v2002, %v2052
        %v2077 = vadd.f32 %v2003, %v2053
        %v2078 = vadd.f32 %v2004, %v2054
        %v2079 = vadd.f32 %v2005, %v2055
        %v2080 = vadd.f32 %v2006, %v2052
        %v2081 = vadd.f32 %v2007, %v2053
        %v2082 = vadd.f32 %v2008, %v2054
        %v2083 = vadd.f32 %v2009, %v2055
        %v2084 = vadd.f32 %v2010, %v2052
        %v2085 = vadd.f32 %v2011, %v2053
        %v2086 = vadd.f32 %v2012, %v2054
        %v2087 = vadd.f32 %v2013, %v2055
        %v2088 = vadd.f32 %v2014, %v2052
        %v2089 = vadd.f32 %v2015, %v2053
        %v2090 = vadd.f32 %v2016, %v2054
        %v2091 = vadd.f32 %v2017, %v2055
        %v2092 = vadd.f32 %v2018, %v2052
        %v2093 = vadd.f32 %v2019, %v2053
        %v2094 = vadd.f32 %v2020, %v2054
        %v2095 = vadd.f32 %v2021, %v2055
        %v2096 = vadd.f32 %v2022, %v2052
        %v2097 = vadd.f32 %v2023, %v2053
        %v2098 = vadd.f32 %v2024, %v2054
        %v2099 = vadd.f32 %v2025, %v2055
        %v2100 = vadd.f32 %v2026, %v2052
        %v2101 = vadd.f32 %v2027, %v2053
        %v2102 = vadd.f32 %v2028, %v2054
        %v2103 = vadd.f32 %v2029, %v2055
        %v2104 = vadd.f32 %v2030, %v2052
        %v2105 = vadd.f32 %v2031, %v2053
        %v2106 = vadd.f32 %v2032, %v2054
        %v2107 = vadd.f32 %v2033, %v2055
        %v2108 = vadd.f32 %v2034, %v2052
        %v2109 = vadd.f32 %v2035, %v2053
        %v2110 = vadd.f32 %v2036, %v2054
        %v2111 = vadd.f32 %v2037, %v2055
        %v2112 = vadd.f32 %v2038, %v2052
        %v2113 = vadd.f32 %v2039, %v2053
        %v2114 = vadd.f32 %v2040, %v2054
        %v2115 = vadd.f32 %v2041, %v2055
        %v2116 = vadd.f32 %v2042, %v2052
        %v2117 = vadd.f32 %v2043, %v2053
        %v2118 = vadd.f32 %v2044, %v2054
        %v2119 = vadd.f32 %v2045, %v2055
        %v2120 = vadd.f32 %v2046, %v2052
        %v2121 = vadd.f32 %v2047, %v2053
        %v2122 = vadd.f32 %v2048, %v2054
        %v2123 = vadd.f32 %v2049, %v2055
        %v2124 = vmax.f32 %v2060, 0.0
        %v2125 = vmax.f32 %v2061, 0.0
        %v2126 = vmax.f32 %v2062, 0.0
        %v2127 = vmax.f32 %v2063, 0.0
        %v2128 = vmax.f32 %v2064, 0.0
        %v2129 = vmax.f32 %v2065, 0.0
        %v2130 = vmax.f32 %v2066, 0.0
        %v2131 = vmax.f32 %v2067, 0.0
        %v2132 = vmax.f32 %v2068, 0.0
        %v2133 = vmax.f32 %v2069, 0.0
        %v2134 = vmax.f32 %v2070, 0.0
        %v2135 = vmax.f32 %v2071, 0.0
        %v2136 = vmax.f32 %v2072, 0.0
        %v2137 = vmax.f32 %v2073, 0.0
        %v2138 = vmax.f32 %v2074, 0.0
        %v2139 = vmax.f32 %v2075, 0.0
        %v2140 = vmax.f32 %v2076, 0.0
        %v2141 = vmax.f32 %v2077, 0.0
        %v2142 = vmax.f32 %v2078, 0.0
        %v2143 = vmax.f32 %v2079, 0.0
        %v2144 = vmax.f32 %v2080, 0.0
        %v2145 = vmax.f32 %v2081, 0.0
        %v2146 = vmax.f32 %v2082, 0.0
        %v2147 = vmax.f32 %v2083, 0.0
        %v2148 = vmax.f32 %v2084, 0.0
        %v2149 = vmax.f32 %v2085, 0.0
        %v2150 = vmax.f32 %v2086, 0.0
        %v2151 = vmax.f32 %v2087, 0.0
        %v2152 = vmax.f32 %v2088, 0.0
        %v2153 = vmax.f32 %v2089, 0.0
        %v2154 = vmax.f32 %v2090, 0.0
        %v2155 = vmax.f32 %v2091, 0.0
        %v2156 = vmax.f32 %v2092, 0.0
        %v2157 = vmax.f32 %v2093, 0.0
        %v2158 = vmax.f32 %v2094, 0.0
        %v2159 = vmax.f32 %v2095, 0.0
        %v2160 = vmax.f32 %v2096, 0.0
        %v2161 = vmax.f32 %v2097, 0.0
        %v2162 = vmax.f32 %v2098, 0.0
        %v2163 = vmax.f32 %v2099, 0.0
        %v2164 = vmax.f32 %v2100, 0.0
        %v2165 = vmax.f32 %v2101, 0.0
        %v2166 = vmax.f32 %v2102, 0.0
        %v2167 = vmax.f32 %v2103, 0.0
        %v2168 = vmax.f32 %v2104, 0.0
        %v2169 = vmax.f32 %v2105, 0.0
        %v2170 = vmax.f32 %v2106, 0.0
        %v2171 = vmax.f32 %v2107, 0.0
        %v2172 = vmax.f32 %v2108, 0.0
        %v2173 = vmax.f32 %v2109, 0.0
        %v2174 = vmax.f32 %v2110, 0.0
        %v2175 = vmax.f32 %v2111, 0.0
        %v2176 = vmax.f32 %v2112, 0.0
        %v2177 = vmax.f32 %v2113, 0.0
        %v2178 = vmax.f32 %v2114, 0.0
        %v2179 = vmax.f32 %v2115, 0.0
        %v2180 = vmax.f32 %v2116, 0.0
        %v2181 = vmax.f32 %v2117, 0.0
        %v2182 = vmax.f32 %v2118, 0.0
        %v2183 = vmax.f32 %v2119, 0.0
        %v2184 = vmax.f32 %v2120, 0.0
        %v2185 = vmax.f32 %v2121, 0.0
        %v2186 = vmax.f32 %v2122, 0.0
        %v2187 = vmax.f32 %v2123, 0.0
        %v2188 = vrot.slane %v2124, 1
        %v2189 = vrot.slane %v2125, 1
        %v2190 = vrot.slane %v2126, 1
        %v2191 = vrot.slane %v2127, 1
        %v2192 = vrot.slane %v2128, 1
        %v2193 = vrot.slane %v2129, 1
        %v2194 = vrot.slane %v2130, 1
        %v2195 = vrot.slane %v2131, 1
        %v2196 = vrot.slane %v2132, 1
        %v2197 = vrot.slane %v2133, 1
        %v2198 = vrot.slane %v2134, 1
        %v2199 = vrot.slane %v2135, 1
        %v2200 = vrot.slane %v2136, 1
        %v2201 = vrot.slane %v2137, 1
        %v2202 = vrot.slane %v2138, 1
        %v2203 = vrot.slane %v2139, 1
        %v2204 = vrot.slane %v2140, 1
        %v2205 = vrot.slane %v2141, 1
        %v2206 = vrot.slane %v2142, 1
        %v2207 = vrot.slane %v2143, 1
        %v2208 = vrot.slane %v2144, 1
        %v2209 = vrot.slane %v2145, 1
        %v2210 = vrot.slane %v2146, 1
        %v2211 = vrot.slane %v2147, 1
        %v2212 = vrot.slane %v2148, 1
        %v2213 = vrot.slane %v2149, 1
        %v2214 = vrot.slane %v2150, 1
        %v2215 = vrot.slane %v2151, 1
        %v2216 = vrot.slane %v2152, 1
        %v2217 = vrot.slane %v2153, 1
        %v2218 = vrot.slane %v2154, 1
        %v2219 = vrot.slane %v2155, 1
        %v2220 = vrot.slane %v2156, 1
        %v2221 = vrot.slane %v2157, 1
        %v2222 = vrot.slane %v2158, 1
        %v2223 = vrot.slane %v2159, 1
        %v2224 = vrot.slane %v2160, 1
        %v2225 = vrot.slane %v2161, 1
        %v2226 = vrot.slane %v2162, 1
        %v2227 = vrot.slane %v2163, 1
        %v2228 = vrot.slane %v2164, 1
        %v2229 = vrot.slane %v2165, 1
        %v2230 = vrot.slane %v2166, 1
        %v2231 = vrot.slane %v2167, 1
        %v2232 = vrot.slane %v2168, 1
        %v2233 = vrot.slane %v2169, 1
        %v2234 = vrot.slane %v2170, 1
        %v2235 = vrot.slane %v2171, 1
        %v2236 = vrot.slane %v2172, 1
        %v2237 = vrot.slane %v2173, 1
        %v2238 = vrot.slane %v2174, 1
        %v2239 = vrot.slane %v2175, 1
        %v2240 = vrot.slane %v2176, 1
        %v2241 = vrot.slane %v2177, 1
        %v2242 = vrot.slane %v2178, 1
        %v2243 = vrot.slane %v2179, 1
        %v2244 = vrot.slane %v2180, 1
        %v2245 = vrot.slane %v2181, 1
        %v2246 = vrot.slane %v2182, 1
        %v2247 = vrot.slane %v2183, 1
        %v2248 = vrot.slane %v2184, 1
        %v2249 = vrot.slane %v2185, 1
        %v2250 = vrot.slane %v2186, 1
        %v2251 = vrot.slane %v2187, 1
        %v2252 = vsel %vm1588, %v2244, %v2248
        %v2253 = vsel %vm1588, %v2245, %v2249
        %v2254 = vsel %vm1588, %v2246, %v2250
        %v2255 = vsel %vm1588, %v2247, %v2251
        %v2256 = vsel %vm1588, %v2240, %v2244
        %v2257 = vsel %vm1588, %v2241, %v2245
        %v2258 = vsel %vm1588, %v2242, %v2246
        %v2259 = vsel %vm1588, %v2243, %v2247
        %v2260 = vsel %vm1588, %v2236, %v2240
        %v2261 = vsel %vm1588, %v2237, %v2241
        %v2262 = vsel %vm1588, %v2238, %v2242
        %v2263 = vsel %vm1588, %v2239, %v2243
        %v2264 = vsel %vm1588, %v2232, %v2236
        %v2265 = vsel %vm1588, %v2233, %v2237
        %v2266 = vsel %vm1588, %v2234, %v2238
        %v2267 = vsel %vm1588, %v2235, %v2239
        %v2268 = vsel %vm1588, %v2228, %v2232
        %v2269 = vsel %vm1588, %v2229, %v2233
        %v2270 = vsel %vm1588, %v2230, %v2234
        %v2271 = vsel %vm1588, %v2231, %v2235
        %v2272 = vsel %vm1588, %v2224, %v2228
        %v2273 = vsel %vm1588, %v2225, %v2229
        %v2274 = vsel %vm1588, %v2226, %v2230
        %v2275 = vsel %vm1588, %v2227, %v2231
        %v2276 = vsel %vm1588, %v2220, %v2224
        %v2277 = vsel %vm1588, %v2221, %v2225
        %v2278 = vsel %vm1588, %v2222, %v2226
        %v2279 = vsel %vm1588, %v2223, %v2227
        %v2280 = vsel %vm1588, %v2216, %v2220
        %v2281 = vsel %vm1588, %v2217, %v2221
        %v2282 = vsel %vm1588, %v2218, %v2222
        %v2283 = vsel %vm1588, %v2219, %v2223
        %v2284 = vsel %vm1588, %v2212, %v2216
        %v2285 = vsel %vm1588, %v2213, %v2217
        %v2286 = vsel %vm1588, %v2214, %v2218
        %v2287 = vsel %vm1588, %v2215, %v2219
        %v2288 = vsel %vm1588, %v2208, %v2212
        %v2289 = vsel %vm1588, %v2209, %v2213
        %v2290 = vsel %vm1588, %v2210, %v2214
        %v2291 = vsel %vm1588, %v2211, %v2215
        %v2292 = vsel %vm1588, %v2204, %v2208
        %v2293 = vsel %vm1588, %v2205, %v2209
        %v2294 = vsel %vm1588, %v2206, %v2210
        %v2295 = vsel %vm1588, %v2207, %v2211
        %v2296 = vsel %vm1588, %v2200, %v2204
        %v2297 = vsel %vm1588, %v2201, %v2205
        %v2298 = vsel %vm1588, %v2202, %v2206
        %v2299 = vsel %vm1588, %v2203, %v2207
        %v2300 = vsel %vm1588, %v2196, %v2200
        %v2301 = vsel %vm1588, %v2197, %v2201
        %v2302 = vsel %vm1588, %v2198, %v2202
        %v2303 = vsel %vm1588, %v2199, %v2203
        %v2304 = vsel %vm1588, %v2192, %v2196
        %v2305 = vsel %vm1588, %v2193, %v2197
        %v2306 = vsel %vm1588, %v2194, %v2198
        %v2307 = vsel %vm1588, %v2195, %v2199
        %v2308 = vsel %vm1588, %v2188, %v2192
        %v2309 = vsel %vm1588, %v2189, %v2193
        %v2310 = vsel %vm1588, %v2190, %v2194
        %v2311 = vsel %vm1588, %v2191, %v2195
        %v2312 = vsel %vm1588, %v2248, %v2188
        %v2313 = vsel %vm1588, %v2249, %v2189
        %v2314 = vsel %vm1588, %v2250, %v2190
        %v2315 = vsel %vm1588, %v2251, %v2191
        %v2316 = vmax.f32 %v2124, %v2308
        %v2317 = vmax.f32 %v2125, %v2309
        %v2318 = vmax.f32 %v2126, %v2310
        %v2319 = vmax.f32 %v2127, %v2311
        %v2320 = vmax.f32 %v2128, %v2304
        %v2321 = vmax.f32 %v2129, %v2305
        %v2322 = vmax.f32 %v2130, %v2306
        %v2323 = vmax.f32 %v2131, %v2307
        %v2324 = vmax.f32 %v2132, %v2300
        %v2325 = vmax.f32 %v2133, %v2301
        %v2326 = vmax.f32 %v2134, %v2302
        %v2327 = vmax.f32 %v2135, %v2303
        %v2328 = vmax.f32 %v2136, %v2296
        %v2329 = vmax.f32 %v2137, %v2297
        %v2330 = vmax.f32 %v2138, %v2298
        %v2331 = vmax.f32 %v2139, %v2299
        %v2332 = vmax.f32 %v2140, %v2292
        %v2333 = vmax.f32 %v2141, %v2293
        %v2334 = vmax.f32 %v2142, %v2294
        %v2335 = vmax.f32 %v2143, %v2295
        %v2336 = vmax.f32 %v2144, %v2288
        %v2337 = vmax.f32 %v2145, %v2289
        %v2338 = vmax.f32 %v2146, %v2290
        %v2339 = vmax.f32 %v2147, %v2291
        %v2340 = vmax.f32 %v2148, %v2284
        %v2341 = vmax.f32 %v2149, %v2285
        %v2342 = vmax.f32 %v2150, %v2286
        %v2343 = vmax.f32 %v2151, %v2287
        %v2344 = vmax.f32 %v2152, %v2280
        %v2345 = vmax.f32 %v2153, %v2281
        %v2346 = vmax.f32 %v2154, %v2282
        %v2347 = vmax.f32 %v2155, %v2283
        %v2348 = vmax.f32 %v2156, %v2276
        %v2349 = vmax.f32 %v2157, %v2277
        %v2350 = vmax.f32 %v2158, %v2278
        %v2351 = vmax.f32 %v2159, %v2279
        %v2352 = vmax.f32 %v2160, %v2272
        %v2353 = vmax.f32 %v2161, %v2273
        %v2354 = vmax.f32 %v2162, %v2274
        %v2355 = vmax.f32 %v2163, %v2275
        %v2356 = vmax.f32 %v2164, %v2268
        %v2357 = vmax.f32 %v2165, %v2269
        %v2358 = vmax.f32 %v2166, %v2270
        %v2359 = vmax.f32 %v2167, %v2271
        %v2360 = vmax.f32 %v2168, %v2264
        %v2361 = vmax.f32 %v2169, %v2265
        %v2362 = vmax.f32 %v2170, %v2266
        %v2363 = vmax.f32 %v2171, %v2267
        %v2364 = vmax.f32 %v2172, %v2260
        %v2365 = vmax.f32 %v2173, %v2261
        %v2366 = vmax.f32 %v2174, %v2262
        %v2367 = vmax.f32 %v2175, %v2263
        %v2368 = vmax.f32 %v2176, %v2256
        %v2369 = vmax.f32 %v2177, %v2257
        %v2370 = vmax.f32 %v2178, %v2258
        %v2371 = vmax.f32 %v2179, %v2259
        %v2372 = vmax.f32 %v2180, %v2252
        %v2373 = vmax.f32 %v2181, %v2253
        %v2374 = vmax.f32 %v2182, %v2254
        %v2375 = vmax.f32 %v2183, %v2255
        %v2376 = vmax.f32 %v2184, %v2312
        %v2377 = vmax.f32 %v2185, %v2313
        %v2378 = vmax.f32 %v2186, %v2314
        %v2379 = vmax.f32 %v2187, %v2315
        %2380 = vrot.lane.b32.xlu0 %v2316, 96
        %v2381 = vpop.permute.xlu0 %2380
        %2382 = vrot.lane.b32.xlu0 %v2320, 96
        %v2383 = vpop.permute.xlu0 %2382
        %2384 = vrot.lane.b32.xlu0 %v2324, 96
        %v2385 = vpop.permute.xlu0 %2384
        %2386 = vrot.lane.b32.xlu0 %v2328, 96
        %v2387 = vpop.permute.xlu0 %2386
        %2388 = vrot.lane.b32.xlu0 %v2332, 96
        %v2389 = vpop.permute.xlu0 %2388
        %2390 = vrot.lane.b32.xlu0 %v2336, 96
        %v2391 = vpop.permute.xlu0 %2390
        %2392 = vrot.lane.b32.xlu0 %v2340, 96
        %v2393 = vpop.permute.xlu0 %2392
        %2394 = vrot.lane.b32.xlu0 %v2344, 96
        %v2395 = vpop.permute.xlu0 %2394
        %2396 = vrot.lane.b32.xlu0 %v2348, 96
        %v2397 = vpop.permute.xlu0 %2396
        %2398 = vrot.lane.b32.xlu0 %v2352, 96
        %v2399 = vpop.permute.xlu0 %2398
        %2400 = vrot.lane.b32.xlu0 %v2356, 96
        %v2401 = vpop.permute.xlu0 %2400
        %2402 = vrot.lane.b32.xlu0 %v2360, 96
        %v2403 = vpop.permute.xlu0 %2402
        %2404 = vrot.lane.b32.xlu0 %v2364, 96
        %v2405 = vpop.permute.xlu0 %2404
        %2406 = vrot.lane.b32.xlu0 %v2368, 96
        %v2407 = vpop.permute.xlu0 %2406
        %2408 = vrot.lane.b32.xlu0 %v2372, 96
        %v2409 = vpop.permute.xlu0 %2408
        %2410 = vrot.lane.b32.xlu0 %v2376, 96
        %v2411 = vpop.permute.xlu0 %2410
        %2412 = vrot.lane.b32.xlu0 %v2317, 96
        %v2413 = vpop.permute.xlu0 %2412
        %2414 = vrot.lane.b32.xlu0 %v2321, 96
        %v2415 = vpop.permute.xlu0 %2414
        %2416 = vrot.lane.b32.xlu0 %v2325, 96
        %v2417 = vpop.permute.xlu0 %2416
        %2418 = vrot.lane.b32.xlu0 %v2329, 96
        %v2419 = vpop.permute.xlu0 %2418
        %2420 = vrot.lane.b32.xlu0 %v2333, 96
        %v2421 = vpop.permute.xlu0 %2420
        %2422 = vrot.lane.b32.xlu0 %v2337, 96
        %v2423 = vpop.permute.xlu0 %2422
        %2424 = vrot.lane.b32.xlu0 %v2341, 96
        %v2425 = vpop.permute.xlu0 %2424
        %2426 = vrot.lane.b32.xlu0 %v2345, 96
        %v2427 = vpop.permute.xlu0 %2426
        %2428 = vrot.lane.b32.xlu0 %v2349, 96
        %v2429 = vpop.permute.xlu0 %2428
        %2430 = vrot.lane.b32.xlu0 %v2353, 96
        %v2431 = vpop.permute.xlu0 %2430
        %2432 = vrot.lane.b32.xlu0 %v2357, 96
        %v2433 = vpop.permute.xlu0 %2432
        %2434 = vrot.lane.b32.xlu0 %v2361, 96
        %v2435 = vpop.permute.xlu0 %2434
        %2436 = vrot.lane.b32.xlu0 %v2365, 96
        %v2437 = vpop.permute.xlu0 %2436
        %2438 = vrot.lane.b32.xlu0 %v2369, 96
        %v2439 = vpop.permute.xlu0 %2438
        %2440 = vrot.lane.b32.xlu0 %v2373, 96
        %v2441 = vpop.permute.xlu0 %2440
        %2442 = vrot.lane.b32.xlu0 %v2377, 96
        %v2443 = vpop.permute.xlu0 %2442
        %2444 = vrot.lane.b32.xlu0 %v2318, 96
        %v2445 = vpop.permute.xlu0 %2444
        %2446 = vrot.lane.b32.xlu0 %v2322, 96
        %v2447 = vpop.permute.xlu0 %2446
        %2448 = vrot.lane.b32.xlu0 %v2326, 96
        %v2449 = vpop.permute.xlu0 %2448
        %2450 = vrot.lane.b32.xlu0 %v2330, 96
        %v2451 = vpop.permute.xlu0 %2450
        %2452 = vrot.lane.b32.xlu0 %v2334, 96
        %v2453 = vpop.permute.xlu0 %2452
        %2454 = vrot.lane.b32.xlu0 %v2338, 96
        %v2455 = vpop.permute.xlu0 %2454
        %2456 = vrot.lane.b32.xlu0 %v2342, 96
        %v2457 = vpop.permute.xlu0 %2456
        %2458 = vrot.lane.b32.xlu0 %v2346, 96
        %v2459 = vpop.permute.xlu0 %2458
        %2460 = vrot.lane.b32.xlu0 %v2350, 96
        %v2461 = vpop.permute.xlu0 %2460
        %2462 = vrot.lane.b32.xlu0 %v2354, 96
        %v2463 = vpop.permute.xlu0 %2462
        %2464 = vrot.lane.b32.xlu0 %v2358, 96
        %v2465 = vpop.permute.xlu0 %2464
        %2466 = vrot.lane.b32.xlu0 %v2362, 96
        %v2467 = vpop.permute.xlu0 %2466
        %2468 = vrot.lane.b32.xlu0 %v2366, 96
        %v2469 = vpop.permute.xlu0 %2468
        %2470 = vrot.lane.b32.xlu0 %v2370, 96
        %v2471 = vpop.permute.xlu0 %2470
        %2472 = vrot.lane.b32.xlu0 %v2374, 96
        %v2473 = vpop.permute.xlu0 %2472
        %2474 = vrot.lane.b32.xlu0 %v2378, 96
        %v2475 = vpop.permute.xlu0 %2474
        %2476 = vrot.lane.b32.xlu0 %v2319, 96
        %v2477 = vpop.permute.xlu0 %2476
        %2478 = vrot.lane.b32.xlu0 %v2323, 96
        %v2479 = vpop.permute.xlu0 %2478
        %2480 = vrot.lane.b32.xlu0 %v2327, 96
        %v2481 = vpop.permute.xlu0 %2480
        %2482 = vrot.lane.b32.xlu0 %v2331, 96
        %v2483 = vpop.permute.xlu0 %2482
        %2484 = vrot.lane.b32.xlu0 %v2335, 96
        %v2485 = vpop.permute.xlu0 %2484
        %2486 = vrot.lane.b32.xlu0 %v2339, 96
        %v2487 = vpop.permute.xlu0 %2486
        %2488 = vrot.lane.b32.xlu0 %v2343, 96
        %v2489 = vpop.permute.xlu0 %2488
        %2490 = vrot.lane.b32.xlu0 %v2347, 96
        %v2491 = vpop.permute.xlu0 %2490
        %2492 = vrot.lane.b32.xlu0 %v2351, 96
        %v2493 = vpop.permute.xlu0 %2492
        %2494 = vrot.lane.b32.xlu0 %v2355, 96
        %v2495 = vpop.permute.xlu0 %2494
        %2496 = vrot.lane.b32.xlu0 %v2359, 96
        %v2497 = vpop.permute.xlu0 %2496
        %2498 = vrot.lane.b32.xlu0 %v2363, 96
        %v2499 = vpop.permute.xlu0 %2498
        %2500 = vrot.lane.b32.xlu0 %v2367, 96
        %v2501 = vpop.permute.xlu0 %2500
        %2502 = vrot.lane.b32.xlu0 %v2371, 96
        %v2503 = vpop.permute.xlu0 %2502
        %2504 = vrot.lane.b32.xlu0 %v2375, 96
        %v2505 = vpop.permute.xlu0 %2504
        %2506 = vrot.lane.b32.xlu0 %v2379, 96
        %v2507 = vpop.permute.xlu0 %2506
        %v2508 = vlaneseq
        %v2509 = vand.u32 %v2508, 127
        %vm2510 = vcmp.lt.s32.totalorder %v2509, 96
        %v2511 = vsel %vm2510, %v2445, %v2477
        %v2512 = vsel %vm2510, %v2447, %v2479
        %v2513 = vsel %vm2510, %v2449, %v2481
        %v2514 = vsel %vm2510, %v2451, %v2483
        %v2515 = vsel %vm2510, %v2453, %v2485
        %v2516 = vsel %vm2510, %v2455, %v2487
        %v2517 = vsel %vm2510, %v2457, %v2489
        %v2518 = vsel %vm2510, %v2459, %v2491
        %v2519 = vsel %vm2510, %v2461, %v2493
        %v2520 = vsel %vm2510, %v2463, %v2495
        %v2521 = vsel %vm2510, %v2465, %v2497
        %v2522 = vsel %vm2510, %v2467, %v2499
        %v2523 = vsel %vm2510, %v2469, %v2501
        %v2524 = vsel %vm2510, %v2471, %v2503
        %v2525 = vsel %vm2510, %v2473, %v2505
        %v2526 = vsel %vm2510, %v2475, %v2507
        %v2527 = vsel %vm2510, %v2413, %v2445
        %v2528 = vsel %vm2510, %v2415, %v2447
        %v2529 = vsel %vm2510, %v2417, %v2449
        %v2530 = vsel %vm2510, %v2419, %v2451
        %v2531 = vsel %vm2510, %v2421, %v2453
        %v2532 = vsel %vm2510, %v2423, %v2455
        %v2533 = vsel %vm2510, %v2425, %v2457
        %v2534 = vsel %vm2510, %v2427, %v2459
        %v2535 = vsel %vm2510, %v2429, %v2461
        %v2536 = vsel %vm2510, %v2431, %v2463
        %v2537 = vsel %vm2510, %v2433, %v2465
        %v2538 = vsel %vm2510, %v2435, %v2467
        %v2539 = vsel %vm2510, %v2437, %v2469
        %v2540 = vsel %vm2510, %v2439, %v2471
        %v2541 = vsel %vm2510, %v2441, %v2473
        %v2542 = vsel %vm2510, %v2443, %v2475
        %v2543 = vsel %vm2510, %v2381, %v2413
        %v2544 = vsel %vm2510, %v2383, %v2415
        %v2545 = vsel %vm2510, %v2385, %v2417
        %v2546 = vsel %vm2510, %v2387, %v2419
        %v2547 = vsel %vm2510, %v2389, %v2421
        %v2548 = vsel %vm2510, %v2391, %v2423
        %v2549 = vsel %vm2510, %v2393, %v2425
        %v2550 = vsel %vm2510, %v2395, %v2427
        %v2551 = vsel %vm2510, %v2397, %v2429
        %v2552 = vsel %vm2510, %v2399, %v2431
        %v2553 = vsel %vm2510, %v2401, %v2433
        %v2554 = vsel %vm2510, %v2403, %v2435
        %v2555 = vsel %vm2510, %v2405, %v2437
        %v2556 = vsel %vm2510, %v2407, %v2439
        %v2557 = vsel %vm2510, %v2409, %v2441
        %v2558 = vsel %vm2510, %v2411, %v2443
        %v2559 = vsel %vm2510, %v2477, %v2381
        %v2560 = vsel %vm2510, %v2479, %v2383
        %v2561 = vsel %vm2510, %v2481, %v2385
        %v2562 = vsel %vm2510, %v2483, %v2387
        %v2563 = vsel %vm2510, %v2485, %v2389
        %v2564 = vsel %vm2510, %v2487, %v2391
        %v2565 = vsel %vm2510, %v2489, %v2393
        %v2566 = vsel %vm2510, %v2491, %v2395
        %v2567 = vsel %vm2510, %v2493, %v2397
        %v2568 = vsel %vm2510, %v2495, %v2399
        %v2569 = vsel %vm2510, %v2497, %v2401
        %v2570 = vsel %vm2510, %v2499, %v2403
        %v2571 = vsel %vm2510, %v2501, %v2405
        %v2572 = vsel %vm2510, %v2503, %v2407
        %v2573 = vsel %vm2510, %v2505, %v2409
        %v2574 = vsel %vm2510, %v2507, %v2411
        %v2575 = vmax.f32 %v2316, %v2543
        %v2576 = vmax.f32 %v2317, %v2527
        %v2577 = vmax.f32 %v2318, %v2511
        %v2578 = vmax.f32 %v2319, %v2559
        %v2579 = vmax.f32 %v2320, %v2544
        %v2580 = vmax.f32 %v2321, %v2528
        %v2581 = vmax.f32 %v2322, %v2512
        %v2582 = vmax.f32 %v2323, %v2560
        %v2583 = vmax.f32 %v2324, %v2545
        %v2584 = vmax.f32 %v2325, %v2529
        %v2585 = vmax.f32 %v2326, %v2513
        %v2586 = vmax.f32 %v2327, %v2561
        %v2587 = vmax.f32 %v2328, %v2546
        %v2588 = vmax.f32 %v2329, %v2530
        %v2589 = vmax.f32 %v2330, %v2514
        %v2590 = vmax.f32 %v2331, %v2562
        %v2591 = vmax.f32 %v2332, %v2547
        %v2592 = vmax.f32 %v2333, %v2531
        %v2593 = vmax.f32 %v2334, %v2515
        %v2594 = vmax.f32 %v2335, %v2563
        %v2595 = vmax.f32 %v2336, %v2548
        %v2596 = vmax.f32 %v2337, %v2532
        %v2597 = vmax.f32 %v2338, %v2516
        %v2598 = vmax.f32 %v2339, %v2564
        %v2599 = vmax.f32 %v2340, %v2549
        %v2600 = vmax.f32 %v2341, %v2533
        %v2601 = vmax.f32 %v2342, %v2517
        %v2602 = vmax.f32 %v2343, %v2565
        %v2603 = vmax.f32 %v2344, %v2550
        %v2604 = vmax.f32 %v2345, %v2534
        %v2605 = vmax.f32 %v2346, %v2518
        %v2606 = vmax.f32 %v2347, %v2566
        %v2607 = vmax.f32 %v2348, %v2551
        %v2608 = vmax.f32 %v2349, %v2535
        %v2609 = vmax.f32 %v2350, %v2519
        %v2610 = vmax.f32 %v2351, %v2567
        %v2611 = vmax.f32 %v2352, %v2552
        %v2612 = vmax.f32 %v2353, %v2536
        %v2613 = vmax.f32 %v2354, %v2520
        %v2614 = vmax.f32 %v2355, %v2568
        %v2615 = vmax.f32 %v2356, %v2553
        %v2616 = vmax.f32 %v2357, %v2537
        %v2617 = vmax.f32 %v2358, %v2521
        %v2618 = vmax.f32 %v2359, %v2569
        %v2619 = vmax.f32 %v2360, %v2554
        %v2620 = vmax.f32 %v2361, %v2538
        %v2621 = vmax.f32 %v2362, %v2522
        %v2622 = vmax.f32 %v2363, %v2570
        %v2623 = vmax.f32 %v2364, %v2555
        %v2624 = vmax.f32 %v2365, %v2539
        %v2625 = vmax.f32 %v2366, %v2523
        %v2626 = vmax.f32 %v2367, %v2571
        %v2627 = vmax.f32 %v2368, %v2556
        %v2628 = vmax.f32 %v2369, %v2540
        %v2629 = vmax.f32 %v2370, %v2524
        %v2630 = vmax.f32 %v2371, %v2572
        %v2631 = vmax.f32 %v2372, %v2557
        %v2632 = vmax.f32 %v2373, %v2541
        %v2633 = vmax.f32 %v2374, %v2525
        %v2634 = vmax.f32 %v2375, %v2573
        %v2635 = vmax.f32 %v2376, %v2558
        %v2636 = vmax.f32 %v2377, %v2542
        %v2637 = vmax.f32 %v2378, %v2526
        %v2638 = vmax.f32 %v2379, %v2574
        %v2639 = vrot.slane %v2575, 6
        %v2640 = vrot.slane %v2576, 6
        %v2641 = vrot.slane %v2577, 6
        %v2642 = vrot.slane %v2578, 6
        %v2643 = vrot.slane %v2579, 6
        %v2644 = vrot.slane %v2580, 6
        %v2645 = vrot.slane %v2581, 6
        %v2646 = vrot.slane %v2582, 6
        %v2647 = vrot.slane %v2583, 6
        %v2648 = vrot.slane %v2584, 6
        %v2649 = vrot.slane %v2585, 6
        %v2650 = vrot.slane %v2586, 6
        %v2651 = vrot.slane %v2587, 6
        %v2652 = vrot.slane %v2588, 6
        %v2653 = vrot.slane %v2589, 6
        %v2654 = vrot.slane %v2590, 6
        %v2655 = vrot.slane %v2591, 6
        %v2656 = vrot.slane %v2592, 6
        %v2657 = vrot.slane %v2593, 6
        %v2658 = vrot.slane %v2594, 6
        %v2659 = vrot.slane %v2595, 6
        %v2660 = vrot.slane %v2596, 6
        %v2661 = vrot.slane %v2597, 6
        %v2662 = vrot.slane %v2598, 6
        %v2663 = vrot.slane %v2599, 6
        %v2664 = vrot.slane %v2600, 6
        %v2665 = vrot.slane %v2601, 6
        %v2666 = vrot.slane %v2602, 6
        %v2667 = vrot.slane %v2603, 6
        %v2668 = vrot.slane %v2604, 6
        %v2669 = vrot.slane %v2605, 6
        %v2670 = vrot.slane %v2606, 6
        %v2671 = vrot.slane %v2607, 6
        %v2672 = vrot.slane %v2608, 6
        %v2673 = vrot.slane %v2609, 6
        %v2674 = vrot.slane %v2610, 6
        %v2675 = vrot.slane %v2611, 6
        %v2676 = vrot.slane %v2612, 6
        %v2677 = vrot.slane %v2613, 6
        %v2678 = vrot.slane %v2614, 6
        %v2679 = vrot.slane %v2615, 6
        %v2680 = vrot.slane %v2616, 6
        %v2681 = vrot.slane %v2617, 6
        %v2682 = vrot.slane %v2618, 6
        %v2683 = vrot.slane %v2619, 6
        %v2684 = vrot.slane %v2620, 6
        %v2685 = vrot.slane %v2621, 6
        %v2686 = vrot.slane %v2622, 6
        %v2687 = vrot.slane %v2623, 6
        %v2688 = vrot.slane %v2624, 6
        %v2689 = vrot.slane %v2625, 6
        %v2690 = vrot.slane %v2626, 6
        %v2691 = vrot.slane %v2627, 6
        %v2692 = vrot.slane %v2628, 6
        %v2693 = vrot.slane %v2629, 6
        %v2694 = vrot.slane %v2630, 6
        %v2695 = vrot.slane %v2631, 6
        %v2696 = vrot.slane %v2632, 6
        %v2697 = vrot.slane %v2633, 6
        %v2698 = vrot.slane %v2634, 6
        %v2699 = vrot.slane %v2635, 6
        %v2700 = vrot.slane %v2636, 6
        %v2701 = vrot.slane %v2637, 6
        %v2702 = vrot.slane %v2638, 6
        %vm2703 = vcmp.lt.s32.totalorder %v617, 2
        %v2704 = vsel %vm2703, %v2695, %v2699
        %v2705 = vsel %vm2703, %v2696, %v2700
        %v2706 = vsel %vm2703, %v2697, %v2701
        %v2707 = vsel %vm2703, %v2698, %v2702
        %v2708 = vsel %vm2703, %v2691, %v2695
        %v2709 = vsel %vm2703, %v2692, %v2696
        %v2710 = vsel %vm2703, %v2693, %v2697
        %v2711 = vsel %vm2703, %v2694, %v2698
        %v2712 = vsel %vm2703, %v2687, %v2691
        %v2713 = vsel %vm2703, %v2688, %v2692
        %v2714 = vsel %vm2703, %v2689, %v2693
        %v2715 = vsel %vm2703, %v2690, %v2694
        %v2716 = vsel %vm2703, %v2683, %v2687
        %v2717 = vsel %vm2703, %v2684, %v2688
        %v2718 = vsel %vm2703, %v2685, %v2689
        %v2719 = vsel %vm2703, %v2686, %v2690
        %v2720 = vsel %vm2703, %v2679, %v2683
        %v2721 = vsel %vm2703, %v2680, %v2684
        %v2722 = vsel %vm2703, %v2681, %v2685
        %v2723 = vsel %vm2703, %v2682, %v2686
        %v2724 = vsel %vm2703, %v2675, %v2679
        %v2725 = vsel %vm2703, %v2676, %v2680
        %v2726 = vsel %vm2703, %v2677, %v2681
        %v2727 = vsel %vm2703, %v2678, %v2682
        %v2728 = vsel %vm2703, %v2671, %v2675
        %v2729 = vsel %vm2703, %v2672, %v2676
        %v2730 = vsel %vm2703, %v2673, %v2677
        %v2731 = vsel %vm2703, %v2674, %v2678
        %v2732 = vsel %vm2703, %v2667, %v2671
        %v2733 = vsel %vm2703, %v2668, %v2672
        %v2734 = vsel %vm2703, %v2669, %v2673
        %v2735 = vsel %vm2703, %v2670, %v2674
        %v2736 = vsel %vm2703, %v2663, %v2667
        %v2737 = vsel %vm2703, %v2664, %v2668
        %v2738 = vsel %vm2703, %v2665, %v2669
        %v2739 = vsel %vm2703, %v2666, %v2670
        %v2740 = vsel %vm2703, %v2659, %v2663
        %v2741 = vsel %vm2703, %v2660, %v2664
        %v2742 = vsel %vm2703, %v2661, %v2665
        %v2743 = vsel %vm2703, %v2662, %v2666
        %v2744 = vsel %vm2703, %v2655, %v2659
        %v2745 = vsel %vm2703, %v2656, %v2660
        %v2746 = vsel %vm2703, %v2657, %v2661
        %v2747 = vsel %vm2703, %v2658, %v2662
        %v2748 = vsel %vm2703, %v2651, %v2655
        %v2749 = vsel %vm2703, %v2652, %v2656
        %v2750 = vsel %vm2703, %v2653, %v2657
        %v2751 = vsel %vm2703, %v2654, %v2658
        %v2752 = vsel %vm2703, %v2647, %v2651
        %v2753 = vsel %vm2703, %v2648, %v2652
        %v2754 = vsel %vm2703, %v2649, %v2653
        %v2755 = vsel %vm2703, %v2650, %v2654
        %v2756 = vsel %vm2703, %v2643, %v2647
        %v2757 = vsel %vm2703, %v2644, %v2648
        %v2758 = vsel %vm2703, %v2645, %v2649
        %v2759 = vsel %vm2703, %v2646, %v2650
        %v2760 = vsel %vm2703, %v2639, %v2643
        %v2761 = vsel %vm2703, %v2640, %v2644
        %v2762 = vsel %vm2703, %v2641, %v2645
        %v2763 = vsel %vm2703, %v2642, %v2646
        %v2764 = vsel %vm2703, %v2699, %v2639
        %v2765 = vsel %vm2703, %v2700, %v2640
        %v2766 = vsel %vm2703, %v2701, %v2641
        %v2767 = vsel %vm2703, %v2702, %v2642
        %vm2768 = vcmp.ge.s32.totalorder %v809, 2
        %vm2769 = vcmp.ge.s32.totalorder %v810, 2
        %vm2770 = vcmp.ge.s32.totalorder %v811, 2
        %vm2771 = vcmp.ge.s32.totalorder %v812, 2
        %vm2772 = vcmp.ge.s32.totalorder %v813, 2
        %vm2773 = vcmp.ge.s32.totalorder %v814, 2
        %vm2774 = vcmp.ge.s32.totalorder %v815, 2
        %vm2775 = vcmp.ge.s32.totalorder %v816, 2
        %vm2776 = vcmp.ge.s32.totalorder %v817, 2
        %vm2777 = vcmp.ge.s32.totalorder %v818, 2
        %vm2778 = vcmp.ge.s32.totalorder %v819, 2
        %vm2779 = vcmp.ge.s32.totalorder %v820, 2
        %vm2780 = vcmp.ge.s32.totalorder %v821, 2
        %vm2781 = vcmp.ge.s32.totalorder %v822, 2
        %vm2782 = vcmp.ge.s32.totalorder %v823, 2
        %vm2783 = vcmp.ge.s32.totalorder %v824, 2
        %v2784 = vsel %vm2768, 1, 0
        %v2785 = vsel %vm2769, 1, 0
        %v2786 = vsel %vm2770, 1, 0
        %v2787 = vsel %vm2771, 1, 0
        %v2788 = vsel %vm2772, 1, 0
        %v2789 = vsel %vm2773, 1, 0
        %v2790 = vsel %vm2774, 1, 0
        %v2791 = vsel %vm2775, 1, 0
        %v2792 = vsel %vm2776, 1, 0
        %v2793 = vsel %vm2777, 1, 0
        %v2794 = vsel %vm2778, 1, 0
        %v2795 = vsel %vm2779, 1, 0
        %v2796 = vsel %vm2780, 1, 0
        %v2797 = vsel %vm2781, 1, 0
        %v2798 = vsel %vm2782, 1, 0
        %v2799 = vsel %vm2783, 1, 0
        %vm2800 = vcmp.eq.s32.totalorder %v2784, 1
        %vm2801 = vcmp.eq.s32.totalorder %v2785, 1
        %vm2802 = vcmp.eq.s32.totalorder %v2786, 1
        %vm2803 = vcmp.eq.s32.totalorder %v2787, 1
        %vm2804 = vcmp.eq.s32.totalorder %v2788, 1
        %vm2805 = vcmp.eq.s32.totalorder %v2789, 1
        %vm2806 = vcmp.eq.s32.totalorder %v2790, 1
        %vm2807 = vcmp.eq.s32.totalorder %v2791, 1
        %vm2808 = vcmp.eq.s32.totalorder %v2792, 1
        %vm2809 = vcmp.eq.s32.totalorder %v2793, 1
        %vm2810 = vcmp.eq.s32.totalorder %v2794, 1
        %vm2811 = vcmp.eq.s32.totalorder %v2795, 1
        %vm2812 = vcmp.eq.s32.totalorder %v2796, 1
        %vm2813 = vcmp.eq.s32.totalorder %v2797, 1
        %vm2814 = vcmp.eq.s32.totalorder %v2798, 1
        %vm2815 = vcmp.eq.s32.totalorder %v2799, 1
        %v2816 = vsel %vm2800, %v2764, 0.0
        %v2817 = vsel %vm2800, %v2765, 0.0
        %v2818 = vsel %vm2800, %v2766, 0.0
        %v2819 = vsel %vm2800, %v2767, 0.0
        %v2820 = vsel %vm2801, %v2760, 0.0
        %v2821 = vsel %vm2801, %v2761, 0.0
        %v2822 = vsel %vm2801, %v2762, 0.0
        %v2823 = vsel %vm2801, %v2763, 0.0
        %v2824 = vsel %vm2802, %v2756, 0.0
        %v2825 = vsel %vm2802, %v2757, 0.0
        %v2826 = vsel %vm2802, %v2758, 0.0
        %v2827 = vsel %vm2802, %v2759, 0.0
        %v2828 = vsel %vm2803, %v2752, 0.0
        %v2829 = vsel %vm2803, %v2753, 0.0
        %v2830 = vsel %vm2803, %v2754, 0.0
        %v2831 = vsel %vm2803, %v2755, 0.0
        %v2832 = vsel %vm2804, %v2748, 0.0
        %v2833 = vsel %vm2804, %v2749, 0.0
        %v2834 = vsel %vm2804, %v2750, 0.0
        %v2835 = vsel %vm2804, %v2751, 0.0
        %v2836 = vsel %vm2805, %v2744, 0.0
        %v2837 = vsel %vm2805, %v2745, 0.0
        %v2838 = vsel %vm2805, %v2746, 0.0
        %v2839 = vsel %vm2805, %v2747, 0.0
        %v2840 = vsel %vm2806, %v2740, 0.0
        %v2841 = vsel %vm2806, %v2741, 0.0
        %v2842 = vsel %vm2806, %v2742, 0.0
        %v2843 = vsel %vm2806, %v2743, 0.0
        %v2844 = vsel %vm2807, %v2736, 0.0
        %v2845 = vsel %vm2807, %v2737, 0.0
        %v2846 = vsel %vm2807, %v2738, 0.0
        %v2847 = vsel %vm2807, %v2739, 0.0
        %v2848 = vsel %vm2808, %v2732, 0.0
        %v2849 = vsel %vm2808, %v2733, 0.0
        %v2850 = vsel %vm2808, %v2734, 0.0
        %v2851 = vsel %vm2808, %v2735, 0.0
        %v2852 = vsel %vm2809, %v2728, 0.0
        %v2853 = vsel %vm2809, %v2729, 0.0
        %v2854 = vsel %vm2809, %v2730, 0.0
        %v2855 = vsel %vm2809, %v2731, 0.0
        %v2856 = vsel %vm2810, %v2724, 0.0
        %v2857 = vsel %vm2810, %v2725, 0.0
        %v2858 = vsel %vm2810, %v2726, 0.0
        %v2859 = vsel %vm2810, %v2727, 0.0
        %v2860 = vsel %vm2811, %v2720, 0.0
        %v2861 = vsel %vm2811, %v2721, 0.0
        %v2862 = vsel %vm2811, %v2722, 0.0
        %v2863 = vsel %vm2811, %v2723, 0.0
        %v2864 = vsel %vm2812, %v2716, 0.0
        %v2865 = vsel %vm2812, %v2717, 0.0
        %v2866 = vsel %vm2812, %v2718, 0.0
        %v2867 = vsel %vm2812, %v2719, 0.0
        %v2868 = vsel %vm2813, %v2712, 0.0
        %v2869 = vsel %vm2813, %v2713, 0.0
        %v2870 = vsel %vm2813, %v2714, 0.0
        %v2871 = vsel %vm2813, %v2715, 0.0
        %v2872 = vsel %vm2814, %v2708, 0.0
        %v2873 = vsel %vm2814, %v2709, 0.0
        %v2874 = vsel %vm2814, %v2710, 0.0
        %v2875 = vsel %vm2814, %v2711, 0.0
        %v2876 = vsel %vm2815, %v2704, 0.0
        %v2877 = vsel %vm2815, %v2705, 0.0
        %v2878 = vsel %vm2815, %v2706, 0.0
        %v2879 = vsel %vm2815, %v2707, 0.0
        %v2880 = vpack.c.bf16 %v2820, %v2816
        %v2881 = vpack.c.bf16 %v2821, %v2817
        %v2882 = vpack.c.bf16 %v2822, %v2818
        %v2883 = vpack.c.bf16 %v2823, %v2819
        %v2884 = vpack.c.bf16 %v2828, %v2824
        %v2885 = vpack.c.bf16 %v2829, %v2825
        %v2886 = vpack.c.bf16 %v2830, %v2826
        %v2887 = vpack.c.bf16 %v2831, %v2827
        %v2888 = vpack.c.bf16 %v2836, %v2832
        %v2889 = vpack.c.bf16 %v2837, %v2833
        %v2890 = vpack.c.bf16 %v2838, %v2834
        %v2891 = vpack.c.bf16 %v2839, %v2835
        %v2892 = vpack.c.bf16 %v2844, %v2840
        %v2893 = vpack.c.bf16 %v2845, %v2841
        %v2894 = vpack.c.bf16 %v2846, %v2842
        %v2895 = vpack.c.bf16 %v2847, %v2843
        %v2896 = vpack.c.bf16 %v2852, %v2848
        %v2897 = vpack.c.bf16 %v2853, %v2849
        %v2898 = vpack.c.bf16 %v2854, %v2850
        %v2899 = vpack.c.bf16 %v2855, %v2851
        %v2900 = vpack.c.bf16 %v2860, %v2856
        %v2901 = vpack.c.bf16 %v2861, %v2857
        %v2902 = vpack.c.bf16 %v2862, %v2858
        %v2903 = vpack.c.bf16 %v2863, %v2859
        %v2904 = vpack.c.bf16 %v2868, %v2864
        %v2905 = vpack.c.bf16 %v2869, %v2865
        %v2906 = vpack.c.bf16 %v2870, %v2866
        %v2907 = vpack.c.bf16 %v2871, %v2867
        %v2908 = vpack.c.bf16 %v2876, %v2872
        %v2909 = vpack.c.bf16 %v2877, %v2873
        %v2910 = vpack.c.bf16 %v2878, %v2874
        %v2911 = vpack.c.bf16 %v2879, %v2875
        %v2912 = vld [vmem:[#allocation6] sm:$0xff]
        %v2913 = vld [vmem:[#allocation6 + $0x8] sm:$0xff]
        %v2914 = vld [vmem:[#allocation6 + $0x10] sm:$0xff]
        %v2915 = vld [vmem:[#allocation6 + $0x18] sm:$0xff]
        %v2916 = vld [vmem:[#allocation6 + $0x20] sm:$0xff]
        %v2917 = vld [vmem:[#allocation6 + $0x28] sm:$0xff]
        %v2918 = vld [vmem:[#allocation6 + $0x30] sm:$0xff]
        %v2919 = vld [vmem:[#allocation6 + $0x38] sm:$0xff]
        %v2920 = vld [vmem:[#allocation6 + $0x40] sm:$0xff]
        %v2921 = vld [vmem:[#allocation6 + $0x48] sm:$0xff]
        %v2922 = vld [vmem:[#allocation6 + $0x50] sm:$0xff]
        %v2923 = vld [vmem:[#allocation6 + $0x58] sm:$0xff]
        %v2924 = vld [vmem:[#allocation6 + $0x60] sm:$0xff]
        %v2925 = vld [vmem:[#allocation6 + $0x68] sm:$0xff]
        %v2926 = vld [vmem:[#allocation6 + $0x70] sm:$0xff]
        %v2927 = vld [vmem:[#allocation6 + $0x78] sm:$0xff]
        %v2928 = vld [vmem:[#allocation6 + $0x80] sm:$0xff]
        %v2929 = vld [vmem:[#allocation6 + $0x88] sm:$0xff]
        %v2930 = vld [vmem:[#allocation6 + $0x90] sm:$0xff]
        %v2931 = vld [vmem:[#allocation6 + $0x98] sm:$0xff]
        %v2932 = vld [vmem:[#allocation6 + $0xa0] sm:$0xff]
        %v2933 = vld [vmem:[#allocation6 + $0xa8] sm:$0xff]
        %v2934 = vld [vmem:[#allocation6 + $0xb0] sm:$0xff]
        %v2935 = vld [vmem:[#allocation6 + $0xb8] sm:$0xff]
        %v2936 = vld [vmem:[#allocation6 + $0xc0] sm:$0xff]
        %v2937 = vld [vmem:[#allocation6 + $0xc8] sm:$0xff]
        %v2938 = vld [vmem:[#allocation6 + $0xd0] sm:$0xff]
        %v2939 = vld [vmem:[#allocation6 + $0xd8] sm:$0xff]
        %v2940 = vld [vmem:[#allocation6 + $0xe0] sm:$0xff]
        %v2941 = vld [vmem:[#allocation6 + $0xe8] sm:$0xff]
        %v2942 = vld [vmem:[#allocation6 + $0xf0] sm:$0xff]
        %v2943 = vld [vmem:[#allocation6 + $0xf8] sm:$0xff]
        %v2944 = vld [vmem:[#allocation6 + $0x100] sm:$0xff]
        %v2945 = vld [vmem:[#allocation6 + $0x108] sm:$0xff]
        %v2946 = vld [vmem:[#allocation6 + $0x110] sm:$0xff]
        %v2947 = vld [vmem:[#allocation6 + $0x118] sm:$0xff]
        %v2948 = vld [vmem:[#allocation6 + $0x120] sm:$0xff]
        %v2949 = vld [vmem:[#allocation6 + $0x128] sm:$0xff]
        %v2950 = vld [vmem:[#allocation6 + $0x130] sm:$0xff]
        %v2951 = vld [vmem:[#allocation6 + $0x138] sm:$0xff]
        %v2952 = vld [vmem:[#allocation6 + $0x140] sm:$0xff]
        %v2953 = vld [vmem:[#allocation6 + $0x148] sm:$0xff]
        %v2954 = vld [vmem:[#allocation6 + $0x150] sm:$0xff]
        %v2955 = vld [vmem:[#allocation6 + $0x158] sm:$0xff]
        %v2956 = vld [vmem:[#allocation6 + $0x160] sm:$0xff]
        %v2957 = vld [vmem:[#allocation6 + $0x168] sm:$0xff]
        %v2958 = vld [vmem:[#allocation6 + $0x170] sm:$0xff]
        %v2959 = vld [vmem:[#allocation6 + $0x178] sm:$0xff]
        %v2960 = vld [vmem:[#allocation6 + $0x180] sm:$0xff]
        %v2961 = vld [vmem:[#allocation6 + $0x188] sm:$0xff]
        %v2962 = vld [vmem:[#allocation6 + $0x190] sm:$0xff]
        %v2963 = vld [vmem:[#allocation6 + $0x198] sm:$0xff]
        %v2964 = vld [vmem:[#allocation6 + $0x1a0] sm:$0xff]
        %v2965 = vld [vmem:[#allocation6 + $0x1a8] sm:$0xff]
        %v2966 = vld [vmem:[#allocation6 + $0x1b0] sm:$0xff]
        %v2967 = vld [vmem:[#allocation6 + $0x1b8] sm:$0xff]
        %v2968 = vld [vmem:[#allocation6 + $0x1c0] sm:$0xff]
        %v2969 = vld [vmem:[#allocation6 + $0x1c8] sm:$0xff]
        %v2970 = vld [vmem:[#allocation6 + $0x1d0] sm:$0xff]
        %v2971 = vld [vmem:[#allocation6 + $0x1d8] sm:$0xff]
        %v2972 = vld [vmem:[#allocation6 + $0x1e0] sm:$0xff]
        %v2973 = vld [vmem:[#allocation6 + $0x1e8] sm:$0xff]
        %v2974 = vld [vmem:[#allocation6 + $0x1f0] sm:$0xff]
        %v2975 = vld [vmem:[#allocation6 + $0x1f8] sm:$0xff]
        %v2976 = vpack.c.bf16 %v2579, %v2575
        %v2977 = vpack.c.bf16 %v2580, %v2576
        %v2978 = vpack.c.bf16 %v2581, %v2577
        %v2979 = vpack.c.bf16 %v2582, %v2578
        %v2980 = vpack.c.bf16 %v2587, %v2583
        %v2981 = vpack.c.bf16 %v2588, %v2584
        %v2982 = vpack.c.bf16 %v2589, %v2585
        %v2983 = vpack.c.bf16 %v2590, %v2586
        %v2984 = vpack.c.bf16 %v2595, %v2591
        %v2985 = vpack.c.bf16 %v2596, %v2592
        %v2986 = vpack.c.bf16 %v2597, %v2593
        %v2987 = vpack.c.bf16 %v2598, %v2594
        %v2988 = vpack.c.bf16 %v2603, %v2599
        %v2989 = vpack.c.bf16 %v2604, %v2600
        %v2990 = vpack.c.bf16 %v2605, %v2601
        %v2991 = vpack.c.bf16 %v2606, %v2602
        %v2992 = vpack.c.bf16 %v2611, %v2607
        %v2993 = vpack.c.bf16 %v2612, %v2608
        %v2994 = vpack.c.bf16 %v2613, %v2609
        %v2995 = vpack.c.bf16 %v2614, %v2610
        %v2996 = vpack.c.bf16 %v2619, %v2615
        %v2997 = vpack.c.bf16 %v2620, %v2616
        %v2998 = vpack.c.bf16 %v2621, %v2617
        %v2999 = vpack.c.bf16 %v2622, %v2618
        %v3000 = vpack.c.bf16 %v2627, %v2623
        %v3001 = vpack.c.bf16 %v2628, %v2624
        %v3002 = vpack.c.bf16 %v2629, %v2625
        %v3003 = vpack.c.bf16 %v2630, %v2626
        %v3004 = vpack.c.bf16 %v2635, %v2631
        %v3005 = vpack.c.bf16 %v2636, %v2632
        %v3006 = vpack.c.bf16 %v2637, %v2633
        %v3007 = vpack.c.bf16 %v2638, %v2634
        %s3008 = scalar_lea.vmem [#allocation6], 512
        %v3009 = vld [vmem:[%s3008] sm:$0xff]
        %v3010 = vld [vmem:[%s3008 + $0x8] sm:$0xff]
        %v3011 = vld [vmem:[%s3008 + $0x10] sm:$0xff]
        %v3012 = vld [vmem:[%s3008 + $0x18] sm:$0xff]
        %v3013 = vld [vmem:[%s3008 + $0x20] sm:$0xff]
        %v3014 = vld [vmem:[%s3008 + $0x28] sm:$0xff]
        %v3015 = vld [vmem:[%s3008 + $0x30] sm:$0xff]
        %v3016 = vld [vmem:[%s3008 + $0x38] sm:$0xff]
        %v3017 = vld [vmem:[%s3008 + $0x40] sm:$0xff]
        %v3018 = vld [vmem:[%s3008 + $0x48] sm:$0xff]
        %v3019 = vld [vmem:[%s3008 + $0x50] sm:$0xff]
        %v3020 = vld [vmem:[%s3008 + $0x58] sm:$0xff]
        %v3021 = vld [vmem:[%s3008 + $0x60] sm:$0xff]
        %v3022 = vld [vmem:[%s3008 + $0x68] sm:$0xff]
        %v3023 = vld [vmem:[%s3008 + $0x70] sm:$0xff]
        %v3024 = vld [vmem:[%s3008 + $0x78] sm:$0xff]
        %v3025 = vld [vmem:[%s3008 + $0x80] sm:$0xff]
        %v3026 = vld [vmem:[%s3008 + $0x88] sm:$0xff]
        %v3027 = vld [vmem:[%s3008 + $0x90] sm:$0xff]
        %v3028 = vld [vmem:[%s3008 + $0x98] sm:$0xff]
        %v3029 = vld [vmem:[%s3008 + $0xa0] sm:$0xff]
        %v3030 = vld [vmem:[%s3008 + $0xa8] sm:$0xff]
        %v3031 = vld [vmem:[%s3008 + $0xb0] sm:$0xff]
        %v3032 = vld [vmem:[%s3008 + $0xb8] sm:$0xff]
        %v3033 = vld [vmem:[%s3008 + $0xc0] sm:$0xff]
        %v3034 = vld [vmem:[%s3008 + $0xc8] sm:$0xff]
        %v3035 = vld [vmem:[%s3008 + $0xd0] sm:$0xff]
        %v3036 = vld [vmem:[%s3008 + $0xd8] sm:$0xff]
        %v3037 = vld [vmem:[%s3008 + $0xe0] sm:$0xff]
        %v3038 = vld [vmem:[%s3008 + $0xe8] sm:$0xff]
        %v3039 = vld [vmem:[%s3008 + $0xf0] sm:$0xff]
        %v3040 = vld [vmem:[%s3008 + $0xf8] sm:$0xff]
        %v3041 = vld [vmem:[%s3008 + $0x100] sm:$0xff]
        %v3042 = vld [vmem:[%s3008 + $0x108] sm:$0xff]
        %v3043 = vld [vmem:[%s3008 + $0x110] sm:$0xff]
        %v3044 = vld [vmem:[%s3008 + $0x118] sm:$0xff]
        %v3045 = vld [vmem:[%s3008 + $0x120] sm:$0xff]
        %v3046 = vld [vmem:[%s3008 + $0x128] sm:$0xff]
        %v3047 = vld [vmem:[%s3008 + $0x130] sm:$0xff]
        %v3048 = vld [vmem:[%s3008 + $0x138] sm:$0xff]
        %v3049 = vld [vmem:[%s3008 + $0x140] sm:$0xff]
        %v3050 = vld [vmem:[%s3008 + $0x148] sm:$0xff]
        %v3051 = vld [vmem:[%s3008 + $0x150] sm:$0xff]
        %v3052 = vld [vmem:[%s3008 + $0x158] sm:$0xff]
        %v3053 = vld [vmem:[%s3008 + $0x160] sm:$0xff]
        %v3054 = vld [vmem:[%s3008 + $0x168] sm:$0xff]
        %v3055 = vld [vmem:[%s3008 + $0x170] sm:$0xff]
        %v3056 = vld [vmem:[%s3008 + $0x178] sm:$0xff]
        %v3057 = vld [vmem:[%s3008 + $0x180] sm:$0xff]
        %v3058 = vld [vmem:[%s3008 + $0x188] sm:$0xff]
        %v3059 = vld [vmem:[%s3008 + $0x190] sm:$0xff]
        %v3060 = vld [vmem:[%s3008 + $0x198] sm:$0xff]
        %v3061 = vld [vmem:[%s3008 + $0x1a0] sm:$0xff]
        %v3062 = vld [vmem:[%s3008 + $0x1a8] sm:$0xff]
        %v3063 = vld [vmem:[%s3008 + $0x1b0] sm:$0xff]
        %v3064 = vld [vmem:[%s3008 + $0x1b8] sm:$0xff]
        %v3065 = vld [vmem:[%s3008 + $0x1c0] sm:$0xff]
        %v3066 = vld [vmem:[%s3008 + $0x1c8] sm:$0xff]
        %v3067 = vld [vmem:[%s3008 + $0x1d0] sm:$0xff]
        %v3068 = vld [vmem:[%s3008 + $0x1d8] sm:$0xff]
        %v3069 = vld [vmem:[%s3008 + $0x1e0] sm:$0xff]
        %v3070 = vld [vmem:[%s3008 + $0x1e8] sm:$0xff]
        %v3071 = vld [vmem:[%s3008 + $0x1f0] sm:$0xff]
        %v3072 = vld [vmem:[%s3008 + $0x1f8] sm:$0xff]
        %v3137 = vunpack.c.l.b16 %v3009
        %v3138 = vunpack.c.h.b16 %v3009
        %v3139 = vunpack.c.l.b16 %v3010
        %v3140 = vunpack.c.h.b16 %v3010
        %v3141 = vunpack.c.l.b16 %v3011
        %v3142 = vunpack.c.h.b16 %v3011
        %v3143 = vunpack.c.l.b16 %v3012
        %v3144 = vunpack.c.h.b16 %v3012
        %v3145 = vunpack.c.l.b16 %v3013
        %v3146 = vunpack.c.h.b16 %v3013
        %v3147 = vunpack.c.l.b16 %v3014
        %v3148 = vunpack.c.h.b16 %v3014
        %v3149 = vunpack.c.l.b16 %v3015
        %v3150 = vunpack.c.h.b16 %v3015
        %v3151 = vunpack.c.l.b16 %v3016
        %v3152 = vunpack.c.h.b16 %v3016
        %v3153 = vunpack.c.l.b16 %v3017
        %v3154 = vunpack.c.h.b16 %v3017
        %v3155 = vunpack.c.l.b16 %v3018
        %v3156 = vunpack.c.h.b16 %v3018
        %v3157 = vunpack.c.l.b16 %v3019
        %v3158 = vunpack.c.h.b16 %v3019
        %v3159 = vunpack.c.l.b16 %v3020
        %v3160 = vunpack.c.h.b16 %v3020
        %v3161 = vunpack.c.l.b16 %v3021
        %v3162 = vunpack.c.h.b16 %v3021
        %v3163 = vunpack.c.l.b16 %v3022
        %v3164 = vunpack.c.h.b16 %v3022
        %v3165 = vunpack.c.l.b16 %v3023
        %v3166 = vunpack.c.h.b16 %v3023
        %v3167 = vunpack.c.l.b16 %v3024
        %v3168 = vunpack.c.h.b16 %v3024
        %v3169 = vunpack.c.l.b16 %v3025
        %v3170 = vunpack.c.h.b16 %v3025
        %v3171 = vunpack.c.l.b16 %v3026
        %v3172 = vunpack.c.h.b16 %v3026
        %v3173 = vunpack.c.l.b16 %v3027
        %v3174 = vunpack.c.h.b16 %v3027
        %v3175 = vunpack.c.l.b16 %v3028
        %v3176 = vunpack.c.h.b16 %v3028
        %v3177 = vunpack.c.l.b16 %v3029
        %v3178 = vunpack.c.h.b16 %v3029
        %v3179 = vunpack.c.l.b16 %v3030
        %v3180 = vunpack.c.h.b16 %v3030
        %v3181 = vunpack.c.l.b16 %v3031
        %v3182 = vunpack.c.h.b16 %v3031
        %v3183 = vunpack.c.l.b16 %v3032
        %v3184 = vunpack.c.h.b16 %v3032
        %v3185 = vunpack.c.l.b16 %v3033
        %v3186 = vunpack.c.h.b16 %v3033
        %v3187 = vunpack.c.l.b16 %v3034
        %v3188 = vunpack.c.h.b16 %v3034
        %v3189 = vunpack.c.l.b16 %v3035
        %v3190 = vunpack.c.h.b16 %v3035
        %v3191 = vunpack.c.l.b16 %v3036
        %v3192 = vunpack.c.h.b16 %v3036
        %v3193 = vunpack.c.l.b16 %v3037
        %v3194 = vunpack.c.h.b16 %v3037
        %v3195 = vunpack.c.l.b16 %v3038
        %v3196 = vunpack.c.h.b16 %v3038
        %v3197 = vunpack.c.l.b16 %v3039
        %v3198 = vunpack.c.h.b16 %v3039
        %v3199 = vunpack.c.l.b16 %v3040
        %v3200 = vunpack.c.h.b16 %v3040
        %v3201 = vunpack.c.l.b16 %v3041
        %v3202 = vunpack.c.h.b16 %v3041
        %v3203 = vunpack.c.l.b16 %v3042
        %v3204 = vunpack.c.h.b16 %v3042
        %v3205 = vunpack.c.l.b16 %v3043
        %v3206 = vunpack.c.h.b16 %v3043
        %v3207 = vunpack.c.l.b16 %v3044
        %v3208 = vunpack.c.h.b16 %v3044
        %v3209 = vunpack.c.l.b16 %v3045
        %v3210 = vunpack.c.h.b16 %v3045
        %v3211 = vunpack.c.l.b16 %v3046
        %v3212 = vunpack.c.h.b16 %v3046
        %v3213 = vunpack.c.l.b16 %v3047
        %v3214 = vunpack.c.h.b16 %v3047
        %v3215 = vunpack.c.l.b16 %v3048
        %v3216 = vunpack.c.h.b16 %v3048
        %v3217 = vunpack.c.l.b16 %v3049
        %v3218 = vunpack.c.h.b16 %v3049
        %v3219 = vunpack.c.l.b16 %v3050
        %v3220 = vunpack.c.h.b16 %v3050
        %v3221 = vunpack.c.l.b16 %v3051
        %v3222 = vunpack.c.h.b16 %v3051
        %v3223 = vunpack.c.l.b16 %v3052
        %v3224 = vunpack.c.h.b16 %v3052
        %v3225 = vunpack.c.l.b16 %v3053
        %v3226 = vunpack.c.h.b16 %v3053
        %v3227 = vunpack.c.l.b16 %v3054
        %v3228 = vunpack.c.h.b16 %v3054
        %v3229 = vunpack.c.l.b16 %v3055
        %v3230 = vunpack.c.h.b16 %v3055
        %v3231 = vunpack.c.l.b16 %v3056
        %v3232 = vunpack.c.h.b16 %v3056
        %v3233 = vunpack.c.l.b16 %v3057
        %v3234 = vunpack.c.h.b16 %v3057
        %v3235 = vunpack.c.l.b16 %v3058
        %v3236 = vunpack.c.h.b16 %v3058
        %v3237 = vunpack.c.l.b16 %v3059
        %v3238 = vunpack.c.h.b16 %v3059
        %v3239 = vunpack.c.l.b16 %v3060
        %v3240 = vunpack.c.h.b16 %v3060
        %v3241 = vunpack.c.l.b16 %v3061
        %v3242 = vunpack.c.h.b16 %v3061
        %v3243 = vunpack.c.l.b16 %v3062
        %v3244 = vunpack.c.h.b16 %v3062
        %v3245 = vunpack.c.l.b16 %v3063
        %v3246 = vunpack.c.h.b16 %v3063
        %v3247 = vunpack.c.l.b16 %v3064
        %v3248 = vunpack.c.h.b16 %v3064
        %v3249 = vunpack.c.l.b16 %v3065
        %v3250 = vunpack.c.h.b16 %v3065
        %v3251 = vunpack.c.l.b16 %v3066
        %v3252 = vunpack.c.h.b16 %v3066
        %v3253 = vunpack.c.l.b16 %v3067
        %v3254 = vunpack.c.h.b16 %v3067
        %v3255 = vunpack.c.l.b16 %v3068
        %v3256 = vunpack.c.h.b16 %v3068
        %v3257 = vunpack.c.l.b16 %v3069
        %v3258 = vunpack.c.h.b16 %v3069
        %v3259 = vunpack.c.l.b16 %v3070
        %v3260 = vunpack.c.h.b16 %v3070
        %v3261 = vunpack.c.l.b16 %v3071
        %v3262 = vunpack.c.h.b16 %v3071
        %v3263 = vunpack.c.l.b16 %v3072
        %v3264 = vunpack.c.h.b16 %v3072
        %v3265 = vpack.c.b16 %v3139, %v3137
        %v3266 = vpack.c.b16 %v3140, %v3138
        %v3267 = vpack.c.b16 %v3143, %v3141
        %v3268 = vpack.c.b16 %v3144, %v3142
        %v3269 = vpack.c.b16 %v3147, %v3145
        %v3270 = vpack.c.b16 %v3148, %v3146
        %v3271 = vpack.c.b16 %v3151, %v3149
        %v3272 = vpack.c.b16 %v3152, %v3150
        %v3273 = vpack.c.b16 %v3155, %v3153
        %v3274 = vpack.c.b16 %v3156, %v3154
        %v3275 = vpack.c.b16 %v3159, %v3157
        %v3276 = vpack.c.b16 %v3160, %v3158
        %v3277 = vpack.c.b16 %v3163, %v3161
        %v3278 = vpack.c.b16 %v3164, %v3162
        %v3279 = vpack.c.b16 %v3167, %v3165
        %v3280 = vpack.c.b16 %v3168, %v3166
        %v3281 = vpack.c.b16 %v3171, %v3169
        %v3282 = vpack.c.b16 %v3172, %v3170
        %v3283 = vpack.c.b16 %v3175, %v3173
        %v3284 = vpack.c.b16 %v3176, %v3174
        %v3285 = vpack.c.b16 %v3179, %v3177
        %v3286 = vpack.c.b16 %v3180, %v3178
        %v3287 = vpack.c.b16 %v3183, %v3181
        %v3288 = vpack.c.b16 %v3184, %v3182
        %v3289 = vpack.c.b16 %v3187, %v3185
        %v3290 = vpack.c.b16 %v3188, %v3186
        %v3291 = vpack.c.b16 %v3191, %v3189
        %v3292 = vpack.c.b16 %v3192, %v3190
        %v3293 = vpack.c.b16 %v3195, %v3193
        %v3294 = vpack.c.b16 %v3196, %v3194
        %v3295 = vpack.c.b16 %v3199, %v3197
        %v3296 = vpack.c.b16 %v3200, %v3198
        %v3297 = vpack.c.b16 %v3203, %v3201
        %v3298 = vpack.c.b16 %v3204, %v3202
        %v3299 = vpack.c.b16 %v3207, %v3205
        %v3300 = vpack.c.b16 %v3208, %v3206
        %v3301 = vpack.c.b16 %v3211, %v3209
        %v3302 = vpack.c.b16 %v3212, %v3210
        %v3303 = vpack.c.b16 %v3215, %v3213
        %v3304 = vpack.c.b16 %v3216, %v3214
        %v3305 = vpack.c.b16 %v3219, %v3217
        %v3306 = vpack.c.b16 %v3220, %v3218
        %v3307 = vpack.c.b16 %v3223, %v3221
        %v3308 = vpack.c.b16 %v3224, %v3222
        %v3309 = vpack.c.b16 %v3227, %v3225
        %v3310 = vpack.c.b16 %v3228, %v3226
        %v3311 = vpack.c.b16 %v3231, %v3229
        %v3312 = vpack.c.b16 %v3232, %v3230
        %v3313 = vpack.c.b16 %v3235, %v3233
        %v3314 = vpack.c.b16 %v3236, %v3234
        %v3315 = vpack.c.b16 %v3239, %v3237
        %v3316 = vpack.c.b16 %v3240, %v3238
        %v3317 = vpack.c.b16 %v3243, %v3241
        %v3318 = vpack.c.b16 %v3244, %v3242
        %v3319 = vpack.c.b16 %v3247, %v3245
        %v3320 = vpack.c.b16 %v3248, %v3246
        %v3321 = vpack.c.b16 %v3251, %v3249
        %v3322 = vpack.c.b16 %v3252, %v3250
        %v3323 = vpack.c.b16 %v3255, %v3253
        %v3324 = vpack.c.b16 %v3256, %v3254
        %v3325 = vpack.c.b16 %v3259, %v3257
        %v3326 = vpack.c.b16 %v3260, %v3258
        %v3327 = vpack.c.b16 %v3263, %v3261
        %v3328 = vpack.c.b16 %v3264, %v3262
        %3393 = vmatpush.bf16.msra.mxu0 %v3279
        %3394 = vmatpush.bf16.msra.mxu0 %v3277
        %3395 = vmatpush.bf16.msra.mxu0 %v3275
        %3396 = vmatpush.bf16.msra.mxu0 %v3273
        %3397 = vmatpush.bf16.msra.mxu0 %v3271
        %3398 = vmatpush.bf16.msra.mxu0 %v3269
        %3399 = vmatpush.bf16.msra.mxu0 %v3267
        %3400 = vmatpush.bf16.msra.mxu0 %v3265
        %3401 = vmatmul.bf16.gmra.mxu0 %v2976
        %v3402 = vpop.f32.mrf.mxu0
        %v3403 = vadd.f32 0.0, %v3402
        %v3404 = vpop.f32.mrf.mxu0
        %v3405 = vadd.f32 0.0, %v3404
        %3406 = vmatmul.bf16.gmra.mxu0 %v2980
        %v3407 = vpop.f32.mrf.mxu0
        %v3408 = vadd.f32 0.0, %v3407
        %v3409 = vpop.f32.mrf.mxu0
        %v3410 = vadd.f32 0.0, %v3409
        %3411 = vmatmul.bf16.gmra.mxu0 %v2984
        %v3412 = vpop.f32.mrf.mxu0
        %v3413 = vadd.f32 0.0, %v3412
        %v3414 = vpop.f32.mrf.mxu0
        %v3415 = vadd.f32 0.0, %v3414
        %3416 = vmatmul.bf16.gmra.mxu0 %v2988
        %v3417 = vpop.f32.mrf.mxu0
        %v3418 = vadd.f32 0.0, %v3417
        %v3419 = vpop.f32.mrf.mxu0
        %v3420 = vadd.f32 0.0, %v3419
        %3421 = vmatmul.bf16.gmra.mxu0 %v2992
        %v3422 = vpop.f32.mrf.mxu0
        %v3423 = vadd.f32 0.0, %v3422
        %v3424 = vpop.f32.mrf.mxu0
        %v3425 = vadd.f32 0.0, %v3424
        %3426 = vmatmul.bf16.gmra.mxu0 %v2996
        %v3427 = vpop.f32.mrf.mxu0
        %v3428 = vadd.f32 0.0, %v3427
        %v3429 = vpop.f32.mrf.mxu0
        %v3430 = vadd.f32 0.0, %v3429
        %3431 = vmatmul.bf16.gmra.mxu0 %v3000
        %v3432 = vpop.f32.mrf.mxu0
        %v3433 = vadd.f32 0.0, %v3432
        %v3434 = vpop.f32.mrf.mxu0
        %v3435 = vadd.f32 0.0, %v3434
        %3436 = vmatmul.bf16.gmra.mxu0 %v3004
        %v3437 = vpop.f32.mrf.mxu0
        %v3438 = vadd.f32 0.0, %v3437
        %v3439 = vpop.f32.mrf.mxu0
        %v3440 = vadd.f32 0.0, %v3439
        %3441 = vdwg.mxu0
        %3442 = vmatpush.bf16.msra.mxu0 %v3295
        %3443 = vmatpush.bf16.msra.mxu0 %v3293
        %3444 = vmatpush.bf16.msra.mxu0 %v3291
        %3445 = vmatpush.bf16.msra.mxu0 %v3289
        %3446 = vmatpush.bf16.msra.mxu0 %v3287
        %3447 = vmatpush.bf16.msra.mxu0 %v3285
        %3448 = vmatpush.bf16.msra.mxu0 %v3283
        %3449 = vmatpush.bf16.msra.mxu0 %v3281
        %3450 = vmatmul.bf16.gmra.mxu0 %v2977
        %v3451 = vpop.f32.mrf.mxu0
        %v3452 = vadd.f32 %v3403, %v3451
        %v3453 = vpop.f32.mrf.mxu0
        %v3454 = vadd.f32 %v3405, %v3453
        %3455 = vmatmul.bf16.gmra.mxu0 %v2981
        %v3456 = vpop.f32.mrf.mxu0
        %v3457 = vadd.f32 %v3408, %v3456
        %v3458 = vpop.f32.mrf.mxu0
        %v3459 = vadd.f32 %v3410, %v3458
        %3460 = vmatmul.bf16.gmra.mxu0 %v2985
        %v3461 = vpop.f32.mrf.mxu0
        %v3462 = vadd.f32 %v3413, %v3461
        %v3463 = vpop.f32.mrf.mxu0
        %v3464 = vadd.f32 %v3415, %v3463
        %3465 = vmatmul.bf16.gmra.mxu0 %v2989
        %v3466 = vpop.f32.mrf.mxu0
        %v3467 = vadd.f32 %v3418, %v3466
        %v3468 = vpop.f32.mrf.mxu0
        %v3469 = vadd.f32 %v3420, %v3468
        %3470 = vmatmul.bf16.gmra.mxu0 %v2993
        %v3471 = vpop.f32.mrf.mxu0
        %v3472 = vadd.f32 %v3423, %v3471
        %v3473 = vpop.f32.mrf.mxu0
        %v3474 = vadd.f32 %v3425, %v3473
        %3475 = vmatmul.bf16.gmra.mxu0 %v2997
        %v3476 = vpop.f32.mrf.mxu0
        %v3477 = vadd.f32 %v3428, %v3476
        %v3478 = vpop.f32.mrf.mxu0
        %v3479 = vadd.f32 %v3430, %v3478
        %3480 = vmatmul.bf16.gmra.mxu0 %v3001
        %v3481 = vpop.f32.mrf.mxu0
        %v3482 = vadd.f32 %v3433, %v3481
        %v3483 = vpop.f32.mrf.mxu0
        %v3484 = vadd.f32 %v3435, %v3483
        %3485 = vmatmul.bf16.gmra.mxu0 %v3005
        %v3486 = vpop.f32.mrf.mxu0
        %v3487 = vadd.f32 %v3438, %v3486
        %v3488 = vpop.f32.mrf.mxu0
        %v3489 = vadd.f32 %v3440, %v3488
        %3490 = vdwg.mxu0
        %3491 = vmatpush.bf16.msra.mxu0 %v3311
        %3492 = vmatpush.bf16.msra.mxu0 %v3309
        %3493 = vmatpush.bf16.msra.mxu0 %v3307
        %3494 = vmatpush.bf16.msra.mxu0 %v3305
        %3495 = vmatpush.bf16.msra.mxu0 %v3303
        %3496 = vmatpush.bf16.msra.mxu0 %v3301
        %3497 = vmatpush.bf16.msra.mxu0 %v3299
        %3498 = vmatpush.bf16.msra.mxu0 %v3297
        %3499 = vmatmul.bf16.gmra.mxu0 %v2978
        %v3500 = vpop.f32.mrf.mxu0
        %v3501 = vadd.f32 %v3452, %v3500
        %v3502 = vpop.f32.mrf.mxu0
        %v3503 = vadd.f32 %v3454, %v3502
        %3504 = vmatmul.bf16.gmra.mxu0 %v2982
        %v3505 = vpop.f32.mrf.mxu0
        %v3506 = vadd.f32 %v3457, %v3505
        %v3507 = vpop.f32.mrf.mxu0
        %v3508 = vadd.f32 %v3459, %v3507
        %3509 = vmatmul.bf16.gmra.mxu0 %v2986
        %v3510 = vpop.f32.mrf.mxu0
        %v3511 = vadd.f32 %v3462, %v3510
        %v3512 = vpop.f32.mrf.mxu0
        %v3513 = vadd.f32 %v3464, %v3512
        %3514 = vmatmul.bf16.gmra.mxu0 %v2990
        %v3515 = vpop.f32.mrf.mxu0
        %v3516 = vadd.f32 %v3467, %v3515
        %v3517 = vpop.f32.mrf.mxu0
        %v3518 = vadd.f32 %v3469, %v3517
        %3519 = vmatmul.bf16.gmra.mxu0 %v2994
        %v3520 = vpop.f32.mrf.mxu0
        %v3521 = vadd.f32 %v3472, %v3520
        %v3522 = vpop.f32.mrf.mxu0
        %v3523 = vadd.f32 %v3474, %v3522
        %3524 = vmatmul.bf16.gmra.mxu0 %v2998
        %v3525 = vpop.f32.mrf.mxu0
        %v3526 = vadd.f32 %v3477, %v3525
        %v3527 = vpop.f32.mrf.mxu0
        %v3528 = vadd.f32 %v3479, %v3527
        %3529 = vmatmul.bf16.gmra.mxu0 %v3002
        %v3530 = vpop.f32.mrf.mxu0
        %v3531 = vadd.f32 %v3482, %v3530
        %v3532 = vpop.f32.mrf.mxu0
        %v3533 = vadd.f32 %v3484, %v3532
        %3534 = vmatmul.bf16.gmra.mxu0 %v3006
        %v3535 = vpop.f32.mrf.mxu0
        %v3536 = vadd.f32 %v3487, %v3535
        %v3537 = vpop.f32.mrf.mxu0
        %v3538 = vadd.f32 %v3489, %v3537
        %3539 = vdwg.mxu0
        %3540 = vmatpush.bf16.msra.mxu0 %v3327
        %3541 = vmatpush.bf16.msra.mxu0 %v3325
        %3542 = vmatpush.bf16.msra.mxu0 %v3323
        %3543 = vmatpush.bf16.msra.mxu0 %v3321
        %3544 = vmatpush.bf16.msra.mxu0 %v3319
        %3545 = vmatpush.bf16.msra.mxu0 %v3317
        %3546 = vmatpush.bf16.msra.mxu0 %v3315
        %3547 = vmatpush.bf16.msra.mxu0 %v3313
        %3548 = vmatmul.bf16.gmra.mxu0 %v2979
        %v3549 = vpop.f32.mrf.mxu0
        %v3550 = vadd.f32 %v3501, %v3549
        %v3551 = vpop.f32.mrf.mxu0
        %v3552 = vadd.f32 %v3503, %v3551
        %3553 = vmatmul.bf16.gmra.mxu0 %v2983
        %v3554 = vpop.f32.mrf.mxu0
        %v3555 = vadd.f32 %v3506, %v3554
        %v3556 = vpop.f32.mrf.mxu0
        %v3557 = vadd.f32 %v3508, %v3556
        %3558 = vmatmul.bf16.gmra.mxu0 %v2987
        %v3559 = vpop.f32.mrf.mxu0
        %v3560 = vadd.f32 %v3511, %v3559
        %v3561 = vpop.f32.mrf.mxu0
        %v3562 = vadd.f32 %v3513, %v3561
        %3563 = vmatmul.bf16.gmra.mxu0 %v2991
        %v3564 = vpop.f32.mrf.mxu0
        %v3565 = vadd.f32 %v3516, %v3564
        %v3566 = vpop.f32.mrf.mxu0
        %v3567 = vadd.f32 %v3518, %v3566
        %3568 = vmatmul.bf16.gmra.mxu0 %v2995
        %v3569 = vpop.f32.mrf.mxu0
        %v3570 = vadd.f32 %v3521, %v3569
        %v3571 = vpop.f32.mrf.mxu0
        %v3572 = vadd.f32 %v3523, %v3571
        %3573 = vmatmul.bf16.gmra.mxu0 %v2999
        %v3574 = vpop.f32.mrf.mxu0
        %v3575 = vadd.f32 %v3526, %v3574
        %v3576 = vpop.f32.mrf.mxu0
        %v3577 = vadd.f32 %v3528, %v3576
        %3578 = vmatmul.bf16.gmra.mxu0 %v3003
        %v3579 = vpop.f32.mrf.mxu0
        %v3580 = vadd.f32 %v3531, %v3579
        %v3581 = vpop.f32.mrf.mxu0
        %v3582 = vadd.f32 %v3533, %v3581
        %3583 = vmatmul.bf16.gmra.mxu0 %v3007
        %v3584 = vpop.f32.mrf.mxu0
        %v3585 = vadd.f32 %v3536, %v3584
        %v3586 = vpop.f32.mrf.mxu0
        %v3587 = vadd.f32 %v3538, %v3586
        %3588 = vdwg.mxu0
        %3589 = vmatpush.bf16.msra.mxu0 %v3280
        %3590 = vmatpush.bf16.msra.mxu0 %v3278
        %3591 = vmatpush.bf16.msra.mxu0 %v3276
        %3592 = vmatpush.bf16.msra.mxu0 %v3274
        %3593 = vmatpush.bf16.msra.mxu0 %v3272
        %3594 = vmatpush.bf16.msra.mxu0 %v3270
        %3595 = vmatpush.bf16.msra.mxu0 %v3268
        %3596 = vmatpush.bf16.msra.mxu0 %v3266
        %3597 = vmatmul.bf16.gmra.mxu0 %v2976
        %v3598 = vpop.f32.mrf.mxu0
        %v3599 = vadd.f32 0.0, %v3598
        %v3600 = vpop.f32.mrf.mxu0
        %v3601 = vadd.f32 0.0, %v3600
        %3602 = vmatmul.bf16.gmra.mxu0 %v2980
        %v3603 = vpop.f32.mrf.mxu0
        %v3604 = vadd.f32 0.0, %v3603
        %v3605 = vpop.f32.mrf.mxu0
        %v3606 = vadd.f32 0.0, %v3605
        %3607 = vmatmul.bf16.gmra.mxu0 %v2984
        %v3608 = vpop.f32.mrf.mxu0
        %v3609 = vadd.f32 0.0, %v3608
        %v3610 = vpop.f32.mrf.mxu0
        %v3611 = vadd.f32 0.0, %v3610
        %3612 = vmatmul.bf16.gmra.mxu0 %v2988
        %v3613 = vpop.f32.mrf.mxu0
        %v3614 = vadd.f32 0.0, %v3613
        %v3615 = vpop.f32.mrf.mxu0
        %v3616 = vadd.f32 0.0, %v3615
        %3617 = vmatmul.bf16.gmra.mxu0 %v2992
        %v3618 = vpop.f32.mrf.mxu0
        %v3619 = vadd.f32 0.0, %v3618
        %v3620 = vpop.f32.mrf.mxu0
        %v3621 = vadd.f32 0.0, %v3620
        %3622 = vmatmul.bf16.gmra.mxu0 %v2996
        %v3623 = vpop.f32.mrf.mxu0
        %v3624 = vadd.f32 0.0, %v3623
        %v3625 = vpop.f32.mrf.mxu0
        %v3626 = vadd.f32 0.0, %v3625
        %3627 = vmatmul.bf16.gmra.mxu0 %v3000
        %v3628 = vpop.f32.mrf.mxu0
        %v3629 = vadd.f32 0.0, %v3628
        %v3630 = vpop.f32.mrf.mxu0
        %v3631 = vadd.f32 0.0, %v3630
        %3632 = vmatmul.bf16.gmra.mxu0 %v3004
        %v3633 = vpop.f32.mrf.mxu0
        %v3634 = vadd.f32 0.0, %v3633
        %v3635 = vpop.f32.mrf.mxu0
        %v3636 = vadd.f32 0.0, %v3635
        %3637 = vdwg.mxu0
        %3638 = vmatpush.bf16.msra.mxu0 %v3296
        %3639 = vmatpush.bf16.msra.mxu0 %v3294
        %3640 = vmatpush.bf16.msra.mxu0 %v3292
        %3641 = vmatpush.bf16.msra.mxu0 %v3290
        %3642 = vmatpush.bf16.msra.mxu0 %v3288
        %3643 = vmatpush.bf16.msra.mxu0 %v3286
        %3644 = vmatpush.bf16.msra.mxu0 %v3284
        %3645 = vmatpush.bf16.msra.mxu0 %v3282
        %3646 = vmatmul.bf16.gmra.mxu0 %v2977
        %v3647 = vpop.f32.mrf.mxu0
        %v3648 = vadd.f32 %v3599, %v3647
        %v3649 = vpop.f32.mrf.mxu0
        %v3650 = vadd.f32 %v3601, %v3649
        %3651 = vmatmul.bf16.gmra.mxu0 %v2981
        %v3652 = vpop.f32.mrf.mxu0
        %v3653 = vadd.f32 %v3604, %v3652
        %v3654 = vpop.f32.mrf.mxu0
        %v3655 = vadd.f32 %v3606, %v3654
        %3656 = vmatmul.bf16.gmra.mxu0 %v2985
        %v3657 = vpop.f32.mrf.mxu0
        %v3658 = vadd.f32 %v3609, %v3657
        %v3659 = vpop.f32.mrf.mxu0
        %v3660 = vadd.f32 %v3611, %v3659
        %3661 = vmatmul.bf16.gmra.mxu0 %v2989
        %v3662 = vpop.f32.mrf.mxu0
        %v3663 = vadd.f32 %v3614, %v3662
        %v3664 = vpop.f32.mrf.mxu0
        %v3665 = vadd.f32 %v3616, %v3664
        %3666 = vmatmul.bf16.gmra.mxu0 %v2993
        %v3667 = vpop.f32.mrf.mxu0
        %v3668 = vadd.f32 %v3619, %v3667
        %v3669 = vpop.f32.mrf.mxu0
        %v3670 = vadd.f32 %v3621, %v3669
        %3671 = vmatmul.bf16.gmra.mxu0 %v2997
        %v3672 = vpop.f32.mrf.mxu0
        %v3673 = vadd.f32 %v3624, %v3672
        %v3674 = vpop.f32.mrf.mxu0
        %v3675 = vadd.f32 %v3626, %v3674
        %3676 = vmatmul.bf16.gmra.mxu0 %v3001
        %v3677 = vpop.f32.mrf.mxu0
        %v3678 = vadd.f32 %v3629, %v3677
        %v3679 = vpop.f32.mrf.mxu0
        %v3680 = vadd.f32 %v3631, %v3679
        %3681 = vmatmul.bf16.gmra.mxu0 %v3005
        %v3682 = vpop.f32.mrf.mxu0
        %v3683 = vadd.f32 %v3634, %v3682
        %v3684 = vpop.f32.mrf.mxu0
        %v3685 = vadd.f32 %v3636, %v3684
        %3686 = vdwg.mxu0
        %3687 = vmatpush.bf16.msra.mxu0 %v3312
        %3688 = vmatpush.bf16.msra.mxu0 %v3310
        %3689 = vmatpush.bf16.msra.mxu0 %v3308
        %3690 = vmatpush.bf16.msra.mxu0 %v3306
        %3691 = vmatpush.bf16.msra.mxu0 %v3304
        %3692 = vmatpush.bf16.msra.mxu0 %v3302
        %3693 = vmatpush.bf16.msra.mxu0 %v3300
        %3694 = vmatpush.bf16.msra.mxu0 %v3298
        %3695 = vmatmul.bf16.gmra.mxu0 %v2978
        %v3696 = vpop.f32.mrf.mxu0
        %v3697 = vadd.f32 %v3648, %v3696
        %v3698 = vpop.f32.mrf.mxu0
        %v3699 = vadd.f32 %v3650, %v3698
        %3700 = vmatmul.bf16.gmra.mxu0 %v2982
        %v3701 = vpop.f32.mrf.mxu0
        %v3702 = vadd.f32 %v3653, %v3701
        %v3703 = vpop.f32.mrf.mxu0
        %v3704 = vadd.f32 %v3655, %v3703
        %3705 = vmatmul.bf16.gmra.mxu0 %v2986
        %v3706 = vpop.f32.mrf.mxu0
        %v3707 = vadd.f32 %v3658, %v3706
        %v3708 = vpop.f32.mrf.mxu0
        %v3709 = vadd.f32 %v3660, %v3708
        %3710 = vmatmul.bf16.gmra.mxu0 %v2990
        %v3711 = vpop.f32.mrf.mxu0
        %v3712 = vadd.f32 %v3663, %v3711
        %v3713 = vpop.f32.mrf.mxu0
        %v3714 = vadd.f32 %v3665, %v3713
        %3715 = vmatmul.bf16.gmra.mxu0 %v2994
        %v3716 = vpop.f32.mrf.mxu0
        %v3717 = vadd.f32 %v3668, %v3716
        %v3718 = vpop.f32.mrf.mxu0
        %v3719 = vadd.f32 %v3670, %v3718
        %3720 = vmatmul.bf16.gmra.mxu0 %v2998
        %v3721 = vpop.f32.mrf.mxu0
        %v3722 = vadd.f32 %v3673, %v3721
        %v3723 = vpop.f32.mrf.mxu0
        %v3724 = vadd.f32 %v3675, %v3723
        %3725 = vmatmul.bf16.gmra.mxu0 %v3002
        %v3726 = vpop.f32.mrf.mxu0
        %v3727 = vadd.f32 %v3678, %v3726
        %v3728 = vpop.f32.mrf.mxu0
        %v3729 = vadd.f32 %v3680, %v3728
        %3730 = vmatmul.bf16.gmra.mxu0 %v3006
        %v3731 = vpop.f32.mrf.mxu0
        %v3732 = vadd.f32 %v3683, %v3731
        %v3733 = vpop.f32.mrf.mxu0
        %v3734 = vadd.f32 %v3685, %v3733
        %3735 = vdwg.mxu0
        %3736 = vmatpush.bf16.msra.mxu0 %v3328
        %3737 = vmatpush.bf16.msra.mxu0 %v3326
        %3738 = vmatpush.bf16.msra.mxu0 %v3324
        %3739 = vmatpush.bf16.msra.mxu0 %v3322
        %3740 = vmatpush.bf16.msra.mxu0 %v3320
        %3741 = vmatpush.bf16.msra.mxu0 %v3318
        %3742 = vmatpush.bf16.msra.mxu0 %v3316
        %3743 = vmatpush.bf16.msra.mxu0 %v3314
        %3744 = vmatmul.bf16.gmra.mxu0 %v2979
        %v3745 = vpop.f32.mrf.mxu0
        %v3746 = vadd.f32 %v3697, %v3745
        %v3747 = vpop.f32.mrf.mxu0
        %v3748 = vadd.f32 %v3699, %v3747
        %3749 = vmatmul.bf16.gmra.mxu0 %v2983
        %v3750 = vpop.f32.mrf.mxu0
        %v3751 = vadd.f32 %v3702, %v3750
        %v3752 = vpop.f32.mrf.mxu0
        %v3753 = vadd.f32 %v3704, %v3752
        %3754 = vmatmul.bf16.gmra.mxu0 %v2987
        %v3755 = vpop.f32.mrf.mxu0
        %v3756 = vadd.f32 %v3707, %v3755
        %v3757 = vpop.f32.mrf.mxu0
        %v3758 = vadd.f32 %v3709, %v3757
        %3759 = vmatmul.bf16.gmra.mxu0 %v2991
        %v3760 = vpop.f32.mrf.mxu0
        %v3761 = vadd.f32 %v3712, %v3760
        %v3762 = vpop.f32.mrf.mxu0
        %v3763 = vadd.f32 %v3714, %v3762
        %3764 = vmatmul.bf16.gmra.mxu0 %v2995
        %v3765 = vpop.f32.mrf.mxu0
        %v3766 = vadd.f32 %v3717, %v3765
        %v3767 = vpop.f32.mrf.mxu0
        %v3768 = vadd.f32 %v3719, %v3767
        %3769 = vmatmul.bf16.gmra.mxu0 %v2999
        %v3770 = vpop.f32.mrf.mxu0
        %v3771 = vadd.f32 %v3722, %v3770
        %v3772 = vpop.f32.mrf.mxu0
        %v3773 = vadd.f32 %v3724, %v3772
        %3774 = vmatmul.bf16.gmra.mxu0 %v3003
        %v3775 = vpop.f32.mrf.mxu0
        %v3776 = vadd.f32 %v3727, %v3775
        %v3777 = vpop.f32.mrf.mxu0
        %v3778 = vadd.f32 %v3729, %v3777
        %3779 = vmatmul.bf16.gmra.mxu0 %v3007
        %v3780 = vpop.f32.mrf.mxu0
        %v3781 = vadd.f32 %v3732, %v3780
        %v3782 = vpop.f32.mrf.mxu0
        %v3783 = vadd.f32 %v3734, %v3782
        %3784 = vdwg.mxu0
        %v3849 = vunpack.c.l.b16 %v2912
        %v3850 = vunpack.c.h.b16 %v2912
        %v3851 = vunpack.c.l.b16 %v2913
        %v3852 = vunpack.c.h.b16 %v2913
        %v3853 = vunpack.c.l.b16 %v2914
        %v3854 = vunpack.c.h.b16 %v2914
        %v3855 = vunpack.c.l.b16 %v2915
        %v3856 = vunpack.c.h.b16 %v2915
        %v3857 = vunpack.c.l.b16 %v2916
        %v3858 = vunpack.c.h.b16 %v2916
        %v3859 = vunpack.c.l.b16 %v2917
        %v3860 = vunpack.c.h.b16 %v2917
        %v3861 = vunpack.c.l.b16 %v2918
        %v3862 = vunpack.c.h.b16 %v2918
        %v3863 = vunpack.c.l.b16 %v2919
        %v3864 = vunpack.c.h.b16 %v2919
        %v3865 = vunpack.c.l.b16 %v2920
        %v3866 = vunpack.c.h.b16 %v2920
        %v3867 = vunpack.c.l.b16 %v2921
        %v3868 = vunpack.c.h.b16 %v2921
        %v3869 = vunpack.c.l.b16 %v2922
        %v3870 = vunpack.c.h.b16 %v2922
        %v3871 = vunpack.c.l.b16 %v2923
        %v3872 = vunpack.c.h.b16 %v2923
        %v3873 = vunpack.c.l.b16 %v2924
        %v3874 = vunpack.c.h.b16 %v2924
        %v3875 = vunpack.c.l.b16 %v2925
        %v3876 = vunpack.c.h.b16 %v2925
        %v3877 = vunpack.c.l.b16 %v2926
        %v3878 = vunpack.c.h.b16 %v2926
        %v3879 = vunpack.c.l.b16 %v2927
        %v3880 = vunpack.c.h.b16 %v2927
        %v3881 = vunpack.c.l.b16 %v2928
        %v3882 = vunpack.c.h.b16 %v2928
        %v3883 = vunpack.c.l.b16 %v2929
        %v3884 = vunpack.c.h.b16 %v2929
        %v3885 = vunpack.c.l.b16 %v2930
        %v3886 = vunpack.c.h.b16 %v2930
        %v3887 = vunpack.c.l.b16 %v2931
        %v3888 = vunpack.c.h.b16 %v2931
        %v3889 = vunpack.c.l.b16 %v2932
        %v3890 = vunpack.c.h.b16 %v2932
        %v3891 = vunpack.c.l.b16 %v2933
        %v3892 = vunpack.c.h.b16 %v2933
        %v3893 = vunpack.c.l.b16 %v2934
        %v3894 = vunpack.c.h.b16 %v2934
        %v3895 = vunpack.c.l.b16 %v2935
        %v3896 = vunpack.c.h.b16 %v2935
        %v3897 = vunpack.c.l.b16 %v2936
        %v3898 = vunpack.c.h.b16 %v2936
        %v3899 = vunpack.c.l.b16 %v2937
        %v3900 = vunpack.c.h.b16 %v2937
        %v3901 = vunpack.c.l.b16 %v2938
        %v3902 = vunpack.c.h.b16 %v2938
        %v3903 = vunpack.c.l.b16 %v2939
        %v3904 = vunpack.c.h.b16 %v2939
        %v3905 = vunpack.c.l.b16 %v2940
        %v3906 = vunpack.c.h.b16 %v2940
        %v3907 = vunpack.c.l.b16 %v2941
        %v3908 = vunpack.c.h.b16 %v2941
        %v3909 = vunpack.c.l.b16 %v2942
        %v3910 = vunpack.c.h.b16 %v2942
        %v3911 = vunpack.c.l.b16 %v2943
        %v3912 = vunpack.c.h.b16 %v2943
        %v3913 = vunpack.c.l.b16 %v2944
        %v3914 = vunpack.c.h.b16 %v2944
        %v3915 = vunpack.c.l.b16 %v2945
        %v3916 = vunpack.c.h.b16 %v2945
        %v3917 = vunpack.c.l.b16 %v2946
        %v3918 = vunpack.c.h.b16 %v2946
        %v3919 = vunpack.c.l.b16 %v2947
        %v3920 = vunpack.c.h.b16 %v2947
        %v3921 = vunpack.c.l.b16 %v2948
        %v3922 = vunpack.c.h.b16 %v2948
        %v3923 = vunpack.c.l.b16 %v2949
        %v3924 = vunpack.c.h.b16 %v2949
        %v3925 = vunpack.c.l.b16 %v2950
        %v3926 = vunpack.c.h.b16 %v2950
        %v3927 = vunpack.c.l.b16 %v2951
        %v3928 = vunpack.c.h.b16 %v2951
        %v3929 = vunpack.c.l.b16 %v2952
        %v3930 = vunpack.c.h.b16 %v2952
        %v3931 = vunpack.c.l.b16 %v2953
        %v3932 = vunpack.c.h.b16 %v2953
        %v3933 = vunpack.c.l.b16 %v2954
        %v3934 = vunpack.c.h.b16 %v2954
        %v3935 = vunpack.c.l.b16 %v2955
        %v3936 = vunpack.c.h.b16 %v2955
        %v3937 = vunpack.c.l.b16 %v2956
        %v3938 = vunpack.c.h.b16 %v2956
        %v3939 = vunpack.c.l.b16 %v2957
        %v3940 = vunpack.c.h.b16 %v2957
        %v3941 = vunpack.c.l.b16 %v2958
        %v3942 = vunpack.c.h.b16 %v2958
        %v3943 = vunpack.c.l.b16 %v2959
        %v3944 = vunpack.c.h.b16 %v2959
        %v3945 = vunpack.c.l.b16 %v2960
        %v3946 = vunpack.c.h.b16 %v2960
        %v3947 = vunpack.c.l.b16 %v2961
        %v3948 = vunpack.c.h.b16 %v2961
        %v3949 = vunpack.c.l.b16 %v2962
        %v3950 = vunpack.c.h.b16 %v2962
        %v3951 = vunpack.c.l.b16 %v2963
        %v3952 = vunpack.c.h.b16 %v2963
        %v3953 = vunpack.c.l.b16 %v2964
        %v3954 = vunpack.c.h.b16 %v2964
        %v3955 = vunpack.c.l.b16 %v2965
        %v3956 = vunpack.c.h.b16 %v2965
        %v3957 = vunpack.c.l.b16 %v2966
        %v3958 = vunpack.c.h.b16 %v2966
        %v3959 = vunpack.c.l.b16 %v2967
        %v3960 = vunpack.c.h.b16 %v2967
        %v3961 = vunpack.c.l.b16 %v2968
        %v3962 = vunpack.c.h.b16 %v2968
        %v3963 = vunpack.c.l.b16 %v2969
        %v3964 = vunpack.c.h.b16 %v2969
        %v3965 = vunpack.c.l.b16 %v2970
        %v3966 = vunpack.c.h.b16 %v2970
        %v3967 = vunpack.c.l.b16 %v2971
        %v3968 = vunpack.c.h.b16 %v2971
        %v3969 = vunpack.c.l.b16 %v2972
        %v3970 = vunpack.c.h.b16 %v2972
        %v3971 = vunpack.c.l.b16 %v2973
        %v3972 = vunpack.c.h.b16 %v2973
        %v3973 = vunpack.c.l.b16 %v2974
        %v3974 = vunpack.c.h.b16 %v2974
        %v3975 = vunpack.c.l.b16 %v2975
        %v3976 = vunpack.c.h.b16 %v2975
        %v3977 = vpack.c.b16 %v3851, %v3849
        %v3978 = vpack.c.b16 %v3852, %v3850
        %v3979 = vpack.c.b16 %v3855, %v3853
        %v3980 = vpack.c.b16 %v3856, %v3854
        %v3981 = vpack.c.b16 %v3859, %v3857
        %v3982 = vpack.c.b16 %v3860, %v3858
        %v3983 = vpack.c.b16 %v3863, %v3861
        %v3984 = vpack.c.b16 %v3864, %v3862
        %v3985 = vpack.c.b16 %v3867, %v3865
        %v3986 = vpack.c.b16 %v3868, %v3866
        %v3987 = vpack.c.b16 %v3871, %v3869
        %v3988 = vpack.c.b16 %v3872, %v3870
        %v3989 = vpack.c.b16 %v3875, %v3873
        %v3990 = vpack.c.b16 %v3876, %v3874
        %v3991 = vpack.c.b16 %v3879, %v3877
        %v3992 = vpack.c.b16 %v3880, %v3878
        %v3993 = vpack.c.b16 %v3883, %v3881
        %v3994 = vpack.c.b16 %v3884, %v3882
        %v3995 = vpack.c.b16 %v3887, %v3885
        %v3996 = vpack.c.b16 %v3888, %v3886
        %v3997 = vpack.c.b16 %v3891, %v3889
        %v3998 = vpack.c.b16 %v3892, %v3890
        %v3999 = vpack.c.b16 %v3895, %v3893
        %v4000 = vpack.c.b16 %v3896, %v3894
        %v4001 = vpack.c.b16 %v3899, %v3897
        %v4002 = vpack.c.b16 %v3900, %v3898
        %v4003 = vpack.c.b16 %v3903, %v3901
        %v4004 = vpack.c.b16 %v3904, %v3902
        %v4005 = vpack.c.b16 %v3907, %v3905
        %v4006 = vpack.c.b16 %v3908, %v3906
        %v4007 = vpack.c.b16 %v3911, %v3909
        %v4008 = vpack.c.b16 %v3912, %v3910
        %v4009 = vpack.c.b16 %v3915, %v3913
        %v4010 = vpack.c.b16 %v3916, %v3914
        %v4011 = vpack.c.b16 %v3919, %v3917
        %v4012 = vpack.c.b16 %v3920, %v3918
        %v4013 = vpack.c.b16 %v3923, %v3921
        %v4014 = vpack.c.b16 %v3924, %v3922
        %v4015 = vpack.c.b16 %v3927, %v3925
        %v4016 = vpack.c.b16 %v3928, %v3926
        %v4017 = vpack.c.b16 %v3931, %v3929
        %v4018 = vpack.c.b16 %v3932, %v3930
        %v4019 = vpack.c.b16 %v3935, %v3933
        %v4020 = vpack.c.b16 %v3936, %v3934
        %v4021 = vpack.c.b16 %v3939, %v3937
        %v4022 = vpack.c.b16 %v3940, %v3938
        %v4023 = vpack.c.b16 %v3943, %v3941
        %v4024 = vpack.c.b16 %v3944, %v3942
        %v4025 = vpack.c.b16 %v3947, %v3945
        %v4026 = vpack.c.b16 %v3948, %v3946
        %v4027 = vpack.c.b16 %v3951, %v3949
        %v4028 = vpack.c.b16 %v3952, %v3950
        %v4029 = vpack.c.b16 %v3955, %v3953
        %v4030 = vpack.c.b16 %v3956, %v3954
        %v4031 = vpack.c.b16 %v3959, %v3957
        %v4032 = vpack.c.b16 %v3960, %v3958
        %v4033 = vpack.c.b16 %v3963, %v3961
        %v4034 = vpack.c.b16 %v3964, %v3962
        %v4035 = vpack.c.b16 %v3967, %v3965
        %v4036 = vpack.c.b16 %v3968, %v3966
        %v4037 = vpack.c.b16 %v3971, %v3969
        %v4038 = vpack.c.b16 %v3972, %v3970
        %v4039 = vpack.c.b16 %v3975, %v3973
        %v4040 = vpack.c.b16 %v3976, %v3974
        %4105 = vmatpush.bf16.msra.mxu0 %v3991
        %4106 = vmatpush.bf16.msra.mxu0 %v3989
        %4107 = vmatpush.bf16.msra.mxu0 %v3987
        %4108 = vmatpush.bf16.msra.mxu0 %v3985
        %4109 = vmatpush.bf16.msra.mxu0 %v3983
        %4110 = vmatpush.bf16.msra.mxu0 %v3981
        %4111 = vmatpush.bf16.msra.mxu0 %v3979
        %4112 = vmatpush.bf16.msra.mxu0 %v3977
        %4113 = vmatmul.bf16.gmra.mxu0 %v2880
        %v4114 = vpop.f32.mrf.mxu0
        %v4115 = vadd.f32 %v3550, %v4114
        %v4116 = vpop.f32.mrf.mxu0
        %v4117 = vadd.f32 %v3552, %v4116
        %4118 = vmatmul.bf16.gmra.mxu0 %v2884
        %v4119 = vpop.f32.mrf.mxu0
        %v4120 = vadd.f32 %v3555, %v4119
        %v4121 = vpop.f32.mrf.mxu0
        %v4122 = vadd.f32 %v3557, %v4121
        %4123 = vmatmul.bf16.gmra.mxu0 %v2888
        %v4124 = vpop.f32.mrf.mxu0
        %v4125 = vadd.f32 %v3560, %v4124
        %v4126 = vpop.f32.mrf.mxu0
        %v4127 = vadd.f32 %v3562, %v4126
        %4128 = vmatmul.bf16.gmra.mxu0 %v2892
        %v4129 = vpop.f32.mrf.mxu0
        %v4130 = vadd.f32 %v3565, %v4129
        %v4131 = vpop.f32.mrf.mxu0
        %v4132 = vadd.f32 %v3567, %v4131
        %4133 = vmatmul.bf16.gmra.mxu0 %v2896
        %v4134 = vpop.f32.mrf.mxu0
        %v4135 = vadd.f32 %v3570, %v4134
        %v4136 = vpop.f32.mrf.mxu0
        %v4137 = vadd.f32 %v3572, %v4136
        %4138 = vmatmul.bf16.gmra.mxu0 %v2900
        %v4139 = vpop.f32.mrf.mxu0
        %v4140 = vadd.f32 %v3575, %v4139
        %v4141 = vpop.f32.mrf.mxu0
        %v4142 = vadd.f32 %v3577, %v4141
        %4143 = vmatmul.bf16.gmra.mxu0 %v2904
        %v4144 = vpop.f32.mrf.mxu0
        %v4145 = vadd.f32 %v3580, %v4144
        %v4146 = vpop.f32.mrf.mxu0
        %v4147 = vadd.f32 %v3582, %v4146
        %4148 = vmatmul.bf16.gmra.mxu0 %v2908
        %v4149 = vpop.f32.mrf.mxu0
        %v4150 = vadd.f32 %v3585, %v4149
        %v4151 = vpop.f32.mrf.mxu0
        %v4152 = vadd.f32 %v3587, %v4151
        %4153 = vdwg.mxu0
        %4154 = vmatpush.bf16.msra.mxu0 %v4007
        %4155 = vmatpush.bf16.msra.mxu0 %v4005
        %4156 = vmatpush.bf16.msra.mxu0 %v4003
        %4157 = vmatpush.bf16.msra.mxu0 %v4001
        %4158 = vmatpush.bf16.msra.mxu0 %v3999
        %4159 = vmatpush.bf16.msra.mxu0 %v3997
        %4160 = vmatpush.bf16.msra.mxu0 %v3995
        %4161 = vmatpush.bf16.msra.mxu0 %v3993
        %4162 = vmatmul.bf16.gmra.mxu0 %v2881
        %v4163 = vpop.f32.mrf.mxu0
        %v4164 = vadd.f32 %v4115, %v4163
        %v4165 = vpop.f32.mrf.mxu0
        %v4166 = vadd.f32 %v4117, %v4165
        %4167 = vmatmul.bf16.gmra.mxu0 %v2885
        %v4168 = vpop.f32.mrf.mxu0
        %v4169 = vadd.f32 %v4120, %v4168
        %v4170 = vpop.f32.mrf.mxu0
        %v4171 = vadd.f32 %v4122, %v4170
        %4172 = vmatmul.bf16.gmra.mxu0 %v2889
        %v4173 = vpop.f32.mrf.mxu0
        %v4174 = vadd.f32 %v4125, %v4173
        %v4175 = vpop.f32.mrf.mxu0
        %v4176 = vadd.f32 %v4127, %v4175
        %4177 = vmatmul.bf16.gmra.mxu0 %v2893
        %v4178 = vpop.f32.mrf.mxu0
        %v4179 = vadd.f32 %v4130, %v4178
        %v4180 = vpop.f32.mrf.mxu0
        %v4181 = vadd.f32 %v4132, %v4180
        %4182 = vmatmul.bf16.gmra.mxu0 %v2897
        %v4183 = vpop.f32.mrf.mxu0
        %v4184 = vadd.f32 %v4135, %v4183
        %v4185 = vpop.f32.mrf.mxu0
        %v4186 = vadd.f32 %v4137, %v4185
        %4187 = vmatmul.bf16.gmra.mxu0 %v2901
        %v4188 = vpop.f32.mrf.mxu0
        %v4189 = vadd.f32 %v4140, %v4188
        %v4190 = vpop.f32.mrf.mxu0
        %v4191 = vadd.f32 %v4142, %v4190
        %4192 = vmatmul.bf16.gmra.mxu0 %v2905
        %v4193 = vpop.f32.mrf.mxu0
        %v4194 = vadd.f32 %v4145, %v4193
        %v4195 = vpop.f32.mrf.mxu0
        %v4196 = vadd.f32 %v4147, %v4195
        %4197 = vmatmul.bf16.gmra.mxu0 %v2909
        %v4198 = vpop.f32.mrf.mxu0
        %v4199 = vadd.f32 %v4150, %v4198
        %v4200 = vpop.f32.mrf.mxu0
        %v4201 = vadd.f32 %v4152, %v4200
        %4202 = vdwg.mxu0
        %4203 = vmatpush.bf16.msra.mxu0 %v4023
        %4204 = vmatpush.bf16.msra.mxu0 %v4021
        %4205 = vmatpush.bf16.msra.mxu0 %v4019
        %4206 = vmatpush.bf16.msra.mxu0 %v4017
        %4207 = vmatpush.bf16.msra.mxu0 %v4015
        %4208 = vmatpush.bf16.msra.mxu0 %v4013
        %4209 = vmatpush.bf16.msra.mxu0 %v4011
        %4210 = vmatpush.bf16.msra.mxu0 %v4009
        %4211 = vmatmul.bf16.gmra.mxu0 %v2882
        %v4212 = vpop.f32.mrf.mxu0
        %v4213 = vadd.f32 %v4164, %v4212
        %v4214 = vpop.f32.mrf.mxu0
        %v4215 = vadd.f32 %v4166, %v4214
        %4216 = vmatmul.bf16.gmra.mxu0 %v2886
        %v4217 = vpop.f32.mrf.mxu0
        %v4218 = vadd.f32 %v4169, %v4217
        %v4219 = vpop.f32.mrf.mxu0
        %v4220 = vadd.f32 %v4171, %v4219
        %4221 = vmatmul.bf16.gmra.mxu0 %v2890
        %v4222 = vpop.f32.mrf.mxu0
        %v4223 = vadd.f32 %v4174, %v4222
        %v4224 = vpop.f32.mrf.mxu0
        %v4225 = vadd.f32 %v4176, %v4224
        %4226 = vmatmul.bf16.gmra.mxu0 %v2894
        %v4227 = vpop.f32.mrf.mxu0
        %v4228 = vadd.f32 %v4179, %v4227
        %v4229 = vpop.f32.mrf.mxu0
        %v4230 = vadd.f32 %v4181, %v4229
        %4231 = vmatmul.bf16.gmra.mxu0 %v2898
        %v4232 = vpop.f32.mrf.mxu0
        %v4233 = vadd.f32 %v4184, %v4232
        %v4234 = vpop.f32.mrf.mxu0
        %v4235 = vadd.f32 %v4186, %v4234
        %4236 = vmatmul.bf16.gmra.mxu0 %v2902
        %v4237 = vpop.f32.mrf.mxu0
        %v4238 = vadd.f32 %v4189, %v4237
        %v4239 = vpop.f32.mrf.mxu0
        %v4240 = vadd.f32 %v4191, %v4239
        %4241 = vmatmul.bf16.gmra.mxu0 %v2906
        %v4242 = vpop.f32.mrf.mxu0
        %v4243 = vadd.f32 %v4194, %v4242
        %v4244 = vpop.f32.mrf.mxu0
        %v4245 = vadd.f32 %v4196, %v4244
        %4246 = vmatmul.bf16.gmra.mxu0 %v2910
        %v4247 = vpop.f32.mrf.mxu0
        %v4248 = vadd.f32 %v4199, %v4247
        %v4249 = vpop.f32.mrf.mxu0
        %v4250 = vadd.f32 %v4201, %v4249
        %4251 = vdwg.mxu0
        %4252 = vmatpush.bf16.msra.mxu0 %v4039
        %4253 = vmatpush.bf16.msra.mxu0 %v4037
        %4254 = vmatpush.bf16.msra.mxu0 %v4035
        %4255 = vmatpush.bf16.msra.mxu0 %v4033
        %4256 = vmatpush.bf16.msra.mxu0 %v4031
        %4257 = vmatpush.bf16.msra.mxu0 %v4029
        %4258 = vmatpush.bf16.msra.mxu0 %v4027
        %4259 = vmatpush.bf16.msra.mxu0 %v4025
        %4260 = vmatmul.bf16.gmra.mxu0 %v2883
        %v4261 = vpop.f32.mrf.mxu0
        %v4262 = vadd.f32 %v4213, %v4261
        %v4263 = vpop.f32.mrf.mxu0
        %v4264 = vadd.f32 %v4215, %v4263
        %4265 = vmatmul.bf16.gmra.mxu0 %v2887
        %v4266 = vpop.f32.mrf.mxu0
        %v4267 = vadd.f32 %v4218, %v4266
        %v4268 = vpop.f32.mrf.mxu0
        %v4269 = vadd.f32 %v4220, %v4268
        %4270 = vmatmul.bf16.gmra.mxu0 %v2891
        %v4271 = vpop.f32.mrf.mxu0
        %v4272 = vadd.f32 %v4223, %v4271
        %v4273 = vpop.f32.mrf.mxu0
        %v4274 = vadd.f32 %v4225, %v4273
        %4275 = vmatmul.bf16.gmra.mxu0 %v2895
        %v4276 = vpop.f32.mrf.mxu0
        %v4277 = vadd.f32 %v4228, %v4276
        %v4278 = vpop.f32.mrf.mxu0
        %v4279 = vadd.f32 %v4230, %v4278
        %4280 = vmatmul.bf16.gmra.mxu0 %v2899
        %v4281 = vpop.f32.mrf.mxu0
        %v4282 = vadd.f32 %v4233, %v4281
        %v4283 = vpop.f32.mrf.mxu0
        %v4284 = vadd.f32 %v4235, %v4283
        %4285 = vmatmul.bf16.gmra.mxu0 %v2903
        %v4286 = vpop.f32.mrf.mxu0
        %v4287 = vadd.f32 %v4238, %v4286
        %v4288 = vpop.f32.mrf.mxu0
        %v4289 = vadd.f32 %v4240, %v4288
        %4290 = vmatmul.bf16.gmra.mxu0 %v2907
        %v4291 = vpop.f32.mrf.mxu0
        %v4292 = vadd.f32 %v4243, %v4291
        %v4293 = vpop.f32.mrf.mxu0
        %v4294 = vadd.f32 %v4245, %v4293
        %4295 = vmatmul.bf16.gmra.mxu0 %v2911
        %v4296 = vpop.f32.mrf.mxu0
        %v4297 = vadd.f32 %v4248, %v4296
        %v4298 = vpop.f32.mrf.mxu0
        %v4299 = vadd.f32 %v4250, %v4298
        %4300 = vdwg.mxu0
        %4301 = vmatpush.bf16.msra.mxu0 %v3992
        %4302 = vmatpush.bf16.msra.mxu0 %v3990
        %4303 = vmatpush.bf16.msra.mxu0 %v3988
        %4304 = vmatpush.bf16.msra.mxu0 %v3986
        %4305 = vmatpush.bf16.msra.mxu0 %v3984
        %4306 = vmatpush.bf16.msra.mxu0 %v3982
        %4307 = vmatpush.bf16.msra.mxu0 %v3980
        %4308 = vmatpush.bf16.msra.mxu0 %v3978
        %4309 = vmatmul.bf16.gmra.mxu0 %v2880
        %v4310 = vpop.f32.mrf.mxu0
        %v4311 = vadd.f32 %v3746, %v4310
        %v4312 = vpop.f32.mrf.mxu0
        %v4313 = vadd.f32 %v3748, %v4312
        %4314 = vmatmul.bf16.gmra.mxu0 %v2884
        %v4315 = vpop.f32.mrf.mxu0
        %v4316 = vadd.f32 %v3751, %v4315
        %v4317 = vpop.f32.mrf.mxu0
        %v4318 = vadd.f32 %v3753, %v4317
        %4319 = vmatmul.bf16.gmra.mxu0 %v2888
        %v4320 = vpop.f32.mrf.mxu0
        %v4321 = vadd.f32 %v3756, %v4320
        %v4322 = vpop.f32.mrf.mxu0
        %v4323 = vadd.f32 %v3758, %v4322
        %4324 = vmatmul.bf16.gmra.mxu0 %v2892
        %v4325 = vpop.f32.mrf.mxu0
        %v4326 = vadd.f32 %v3761, %v4325
        %v4327 = vpop.f32.mrf.mxu0
        %v4328 = vadd.f32 %v3763, %v4327
        %4329 = vmatmul.bf16.gmra.mxu0 %v2896
        %v4330 = vpop.f32.mrf.mxu0
        %v4331 = vadd.f32 %v3766, %v4330
        %v4332 = vpop.f32.mrf.mxu0
        %v4333 = vadd.f32 %v3768, %v4332
        %4334 = vmatmul.bf16.gmra.mxu0 %v2900
        %v4335 = vpop.f32.mrf.mxu0
        %v4336 = vadd.f32 %v3771, %v4335
        %v4337 = vpop.f32.mrf.mxu0
        %v4338 = vadd.f32 %v3773, %v4337
        %4339 = vmatmul.bf16.gmra.mxu0 %v2904
        %v4340 = vpop.f32.mrf.mxu0
        %v4341 = vadd.f32 %v3776, %v4340
        %v4342 = vpop.f32.mrf.mxu0
        %v4343 = vadd.f32 %v3778, %v4342
        %4344 = vmatmul.bf16.gmra.mxu0 %v2908
        %v4345 = vpop.f32.mrf.mxu0
        %v4346 = vadd.f32 %v3781, %v4345
        %v4347 = vpop.f32.mrf.mxu0
        %v4348 = vadd.f32 %v3783, %v4347
        %4349 = vdwg.mxu0
        %4350 = vmatpush.bf16.msra.mxu0 %v4008
        %4351 = vmatpush.bf16.msra.mxu0 %v4006
        %4352 = vmatpush.bf16.msra.mxu0 %v4004
        %4353 = vmatpush.bf16.msra.mxu0 %v4002
        %4354 = vmatpush.bf16.msra.mxu0 %v4000
        %4355 = vmatpush.bf16.msra.mxu0 %v3998
        %4356 = vmatpush.bf16.msra.mxu0 %v3996
        %4357 = vmatpush.bf16.msra.mxu0 %v3994
        %4358 = vmatmul.bf16.gmra.mxu0 %v2881
        %v4359 = vpop.f32.mrf.mxu0
        %v4360 = vadd.f32 %v4311, %v4359
        %v4361 = vpop.f32.mrf.mxu0
        %v4362 = vadd.f32 %v4313, %v4361
        %4363 = vmatmul.bf16.gmra.mxu0 %v2885
        %v4364 = vpop.f32.mrf.mxu0
        %v4365 = vadd.f32 %v4316, %v4364
        %v4366 = vpop.f32.mrf.mxu0
        %v4367 = vadd.f32 %v4318, %v4366
        %4368 = vmatmul.bf16.gmra.mxu0 %v2889
        %v4369 = vpop.f32.mrf.mxu0
        %v4370 = vadd.f32 %v4321, %v4369
        %v4371 = vpop.f32.mrf.mxu0
        %v4372 = vadd.f32 %v4323, %v4371
        %4373 = vmatmul.bf16.gmra.mxu0 %v2893
        %v4374 = vpop.f32.mrf.mxu0
        %v4375 = vadd.f32 %v4326, %v4374
        %v4376 = vpop.f32.mrf.mxu0
        %v4377 = vadd.f32 %v4328, %v4376
        %4378 = vmatmul.bf16.gmra.mxu0 %v2897
        %v4379 = vpop.f32.mrf.mxu0
        %v4380 = vadd.f32 %v4331, %v4379
        %v4381 = vpop.f32.mrf.mxu0
        %v4382 = vadd.f32 %v4333, %v4381
        %4383 = vmatmul.bf16.gmra.mxu0 %v2901
        %v4384 = vpop.f32.mrf.mxu0
        %v4385 = vadd.f32 %v4336, %v4384
        %v4386 = vpop.f32.mrf.mxu0
        %v4387 = vadd.f32 %v4338, %v4386
        %4388 = vmatmul.bf16.gmra.mxu0 %v2905
        %v4389 = vpop.f32.mrf.mxu0
        %v4390 = vadd.f32 %v4341, %v4389
        %v4391 = vpop.f32.mrf.mxu0
        %v4392 = vadd.f32 %v4343, %v4391
        %4393 = vmatmul.bf16.gmra.mxu0 %v2909
        %v4394 = vpop.f32.mrf.mxu0
        %v4395 = vadd.f32 %v4346, %v4394
        %v4396 = vpop.f32.mrf.mxu0
        %v4397 = vadd.f32 %v4348, %v4396
        %4398 = vdwg.mxu0
        %4399 = vmatpush.bf16.msra.mxu0 %v4024
        %4400 = vmatpush.bf16.msra.mxu0 %v4022
        %4401 = vmatpush.bf16.msra.mxu0 %v4020
        %4402 = vmatpush.bf16.msra.mxu0 %v4018
        %4403 = vmatpush.bf16.msra.mxu0 %v4016
        %4404 = vmatpush.bf16.msra.mxu0 %v4014
        %4405 = vmatpush.bf16.msra.mxu0 %v4012
        %4406 = vmatpush.bf16.msra.mxu0 %v4010
        %4407 = vmatmul.bf16.gmra.mxu0 %v2882
        %v4408 = vpop.f32.mrf.mxu0
        %v4409 = vadd.f32 %v4360, %v4408
        %v4410 = vpop.f32.mrf.mxu0
        %v4411 = vadd.f32 %v4362, %v4410
        %4412 = vmatmul.bf16.gmra.mxu0 %v2886
        %v4413 = vpop.f32.mrf.mxu0
        %v4414 = vadd.f32 %v4365, %v4413
        %v4415 = vpop.f32.mrf.mxu0
        %v4416 = vadd.f32 %v4367, %v4415
        %4417 = vmatmul.bf16.gmra.mxu0 %v2890
        %v4418 = vpop.f32.mrf.mxu0
        %v4419 = vadd.f32 %v4370, %v4418
        %v4420 = vpop.f32.mrf.mxu0
        %v4421 = vadd.f32 %v4372, %v4420
        %4422 = vmatmul.bf16.gmra.mxu0 %v2894
        %v4423 = vpop.f32.mrf.mxu0
        %v4424 = vadd.f32 %v4375, %v4423
        %v4425 = vpop.f32.mrf.mxu0
        %v4426 = vadd.f32 %v4377, %v4425
        %4427 = vmatmul.bf16.gmra.mxu0 %v2898
        %v4428 = vpop.f32.mrf.mxu0
        %v4429 = vadd.f32 %v4380, %v4428
        %v4430 = vpop.f32.mrf.mxu0
        %v4431 = vadd.f32 %v4382, %v4430
        %4432 = vmatmul.bf16.gmra.mxu0 %v2902
        %v4433 = vpop.f32.mrf.mxu0
        %v4434 = vadd.f32 %v4385, %v4433
        %v4435 = vpop.f32.mrf.mxu0
        %v4436 = vadd.f32 %v4387, %v4435
        %4437 = vmatmul.bf16.gmra.mxu0 %v2906
        %v4438 = vpop.f32.mrf.mxu0
        %v4439 = vadd.f32 %v4390, %v4438
        %v4440 = vpop.f32.mrf.mxu0
        %v4441 = vadd.f32 %v4392, %v4440
        %4442 = vmatmul.bf16.gmra.mxu0 %v2910
        %v4443 = vpop.f32.mrf.mxu0
        %v4444 = vadd.f32 %v4395, %v4443
        %v4445 = vpop.f32.mrf.mxu0
        %v4446 = vadd.f32 %v4397, %v4445
        %4447 = vdwg.mxu0
        %4448 = vmatpush.bf16.msra.mxu0 %v4040
        %4449 = vmatpush.bf16.msra.mxu0 %v4038
        %4450 = vmatpush.bf16.msra.mxu0 %v4036
        %4451 = vmatpush.bf16.msra.mxu0 %v4034
        %4452 = vmatpush.bf16.msra.mxu0 %v4032
        %4453 = vmatpush.bf16.msra.mxu0 %v4030
        %4454 = vmatpush.bf16.msra.mxu0 %v4028
        %4455 = vmatpush.bf16.msra.mxu0 %v4026
        %4456 = vmatmul.bf16.gmra.mxu0 %v2883
        %v4457 = vpop.f32.mrf.mxu0
        %v4458 = vadd.f32 %v4409, %v4457
        %v4459 = vpop.f32.mrf.mxu0
        %v4460 = vadd.f32 %v4411, %v4459
        %4461 = vmatmul.bf16.gmra.mxu0 %v2887
        %v4462 = vpop.f32.mrf.mxu0
        %v4463 = vadd.f32 %v4414, %v4462
        %v4464 = vpop.f32.mrf.mxu0
        %v4465 = vadd.f32 %v4416, %v4464
        %4466 = vmatmul.bf16.gmra.mxu0 %v2891
        %v4467 = vpop.f32.mrf.mxu0
        %v4468 = vadd.f32 %v4419, %v4467
        %v4469 = vpop.f32.mrf.mxu0
        %v4470 = vadd.f32 %v4421, %v4469
        %4471 = vmatmul.bf16.gmra.mxu0 %v2895
        %v4472 = vpop.f32.mrf.mxu0
        %v4473 = vadd.f32 %v4424, %v4472
        %v4474 = vpop.f32.mrf.mxu0
        %v4475 = vadd.f32 %v4426, %v4474
        %4476 = vmatmul.bf16.gmra.mxu0 %v2899
        %v4477 = vpop.f32.mrf.mxu0
        %v4478 = vadd.f32 %v4429, %v4477
        %v4479 = vpop.f32.mrf.mxu0
        %v4480 = vadd.f32 %v4431, %v4479
        %4481 = vmatmul.bf16.gmra.mxu0 %v2903
        %v4482 = vpop.f32.mrf.mxu0
        %v4483 = vadd.f32 %v4434, %v4482
        %v4484 = vpop.f32.mrf.mxu0
        %v4485 = vadd.f32 %v4436, %v4484
        %4486 = vmatmul.bf16.gmra.mxu0 %v2907
        %v4487 = vpop.f32.mrf.mxu0
        %v4488 = vadd.f32 %v4439, %v4487
        %v4489 = vpop.f32.mrf.mxu0
        %v4490 = vadd.f32 %v4441, %v4489
        %4491 = vmatmul.bf16.gmra.mxu0 %v2911
        %v4492 = vpop.f32.mrf.mxu0
        %v4493 = vadd.f32 %v4444, %v4492
        %v4494 = vpop.f32.mrf.mxu0
        %v4495 = vadd.f32 %v4446, %v4494
        %4496 = vdwg.mxu0
        %v4497 = vrot.slane %v2575, 2
        %v4498 = vrot.slane %v2576, 2
        %v4499 = vrot.slane %v2577, 2
        %v4500 = vrot.slane %v2578, 2
        %v4501 = vrot.slane %v2579, 2
        %v4502 = vrot.slane %v2580, 2
        %v4503 = vrot.slane %v2581, 2
        %v4504 = vrot.slane %v2582, 2
        %v4505 = vrot.slane %v2583, 2
        %v4506 = vrot.slane %v2584, 2
        %v4507 = vrot.slane %v2585, 2
        %v4508 = vrot.slane %v2586, 2
        %v4509 = vrot.slane %v2587, 2
        %v4510 = vrot.slane %v2588, 2
        %v4511 = vrot.slane %v2589, 2
        %v4512 = vrot.slane %v2590, 2
        %v4513 = vrot.slane %v2591, 2
        %v4514 = vrot.slane %v2592, 2
        %v4515 = vrot.slane %v2593, 2
        %v4516 = vrot.slane %v2594, 2
        %v4517 = vrot.slane %v2595, 2
        %v4518 = vrot.slane %v2596, 2
        %v4519 = vrot.slane %v2597, 2
        %v4520 = vrot.slane %v2598, 2
        %v4521 = vrot.slane %v2599, 2
        %v4522 = vrot.slane %v2600, 2
        %v4523 = vrot.slane %v2601, 2
        %v4524 = vrot.slane %v2602, 2
        %v4525 = vrot.slane %v2603, 2
        %v4526 = vrot.slane %v2604, 2
        %v4527 = vrot.slane %v2605, 2
        %v4528 = vrot.slane %v2606, 2
        %v4529 = vrot.slane %v2607, 2
        %v4530 = vrot.slane %v2608, 2
        %v4531 = vrot.slane %v2609, 2
        %v4532 = vrot.slane %v2610, 2
        %v4533 = vrot.slane %v2611, 2
        %v4534 = vrot.slane %v2612, 2
        %v4535 = vrot.slane %v2613, 2
        %v4536 = vrot.slane %v2614, 2
        %v4537 = vrot.slane %v2615, 2
        %v4538 = vrot.slane %v2616, 2
        %v4539 = vrot.slane %v2617, 2
        %v4540 = vrot.slane %v2618, 2
        %v4541 = vrot.slane %v2619, 2
        %v4542 = vrot.slane %v2620, 2
        %v4543 = vrot.slane %v2621, 2
        %v4544 = vrot.slane %v2622, 2
        %v4545 = vrot.slane %v2623, 2
        %v4546 = vrot.slane %v2624, 2
        %v4547 = vrot.slane %v2625, 2
        %v4548 = vrot.slane %v2626, 2
        %v4549 = vrot.slane %v2627, 2
        %v4550 = vrot.slane %v2628, 2
        %v4551 = vrot.slane %v2629, 2
        %v4552 = vrot.slane %v2630, 2
        %v4553 = vrot.slane %v2631, 2
        %v4554 = vrot.slane %v2632, 2
        %v4555 = vrot.slane %v2633, 2
        %v4556 = vrot.slane %v2634, 2
        %v4557 = vrot.slane %v2635, 2
        %v4558 = vrot.slane %v2636, 2
        %v4559 = vrot.slane %v2637, 2
        %v4560 = vrot.slane %v2638, 2
        %vm4561 = vcmp.lt.s32.totalorder %v617, 6
        %v4562 = vsel %vm4561, %v4553, %v4557
        %v4563 = vsel %vm4561, %v4554, %v4558
        %v4564 = vsel %vm4561, %v4555, %v4559
        %v4565 = vsel %vm4561, %v4556, %v4560
        %v4566 = vsel %vm4561, %v4549, %v4553
        %v4567 = vsel %vm4561, %v4550, %v4554
        %v4568 = vsel %vm4561, %v4551, %v4555
        %v4569 = vsel %vm4561, %v4552, %v4556
        %v4570 = vsel %vm4561, %v4545, %v4549
        %v4571 = vsel %vm4561, %v4546, %v4550
        %v4572 = vsel %vm4561, %v4547, %v4551
        %v4573 = vsel %vm4561, %v4548, %v4552
        %v4574 = vsel %vm4561, %v4541, %v4545
        %v4575 = vsel %vm4561, %v4542, %v4546
        %v4576 = vsel %vm4561, %v4543, %v4547
        %v4577 = vsel %vm4561, %v4544, %v4548
        %v4578 = vsel %vm4561, %v4537, %v4541
        %v4579 = vsel %vm4561, %v4538, %v4542
        %v4580 = vsel %vm4561, %v4539, %v4543
        %v4581 = vsel %vm4561, %v4540, %v4544
        %v4582 = vsel %vm4561, %v4533, %v4537
        %v4583 = vsel %vm4561, %v4534, %v4538
        %v4584 = vsel %vm4561, %v4535, %v4539
        %v4585 = vsel %vm4561, %v4536, %v4540
        %v4586 = vsel %vm4561, %v4529, %v4533
        %v4587 = vsel %vm4561, %v4530, %v4534
        %v4588 = vsel %vm4561, %v4531, %v4535
        %v4589 = vsel %vm4561, %v4532, %v4536
        %v4590 = vsel %vm4561, %v4525, %v4529
        %v4591 = vsel %vm4561, %v4526, %v4530
        %v4592 = vsel %vm4561, %v4527, %v4531
        %v4593 = vsel %vm4561, %v4528, %v4532
        %v4594 = vsel %vm4561, %v4521, %v4525
        %v4595 = vsel %vm4561, %v4522, %v4526
        %v4596 = vsel %vm4561, %v4523, %v4527
        %v4597 = vsel %vm4561, %v4524, %v4528
        %v4598 = vsel %vm4561, %v4517, %v4521
        %v4599 = vsel %vm4561, %v4518, %v4522
        %v4600 = vsel %vm4561, %v4519, %v4523
        %v4601 = vsel %vm4561, %v4520, %v4524
        %v4602 = vsel %vm4561, %v4513, %v4517
        %v4603 = vsel %vm4561, %v4514, %v4518
        %v4604 = vsel %vm4561, %v4515, %v4519
        %v4605 = vsel %vm4561, %v4516, %v4520
        %v4606 = vsel %vm4561, %v4509, %v4513
        %v4607 = vsel %vm4561, %v4510, %v4514
        %v4608 = vsel %vm4561, %v4511, %v4515
        %v4609 = vsel %vm4561, %v4512, %v4516
        %v4610 = vsel %vm4561, %v4505, %v4509
        %v4611 = vsel %vm4561, %v4506, %v4510
        %v4612 = vsel %vm4561, %v4507, %v4511
        %v4613 = vsel %vm4561, %v4508, %v4512
        %v4614 = vsel %vm4561, %v4501, %v4505
        %v4615 = vsel %vm4561, %v4502, %v4506
        %v4616 = vsel %vm4561, %v4503, %v4507
        %v4617 = vsel %vm4561, %v4504, %v4508
        %v4618 = vsel %vm4561, %v4497, %v4501
        %v4619 = vsel %vm4561, %v4498, %v4502
        %v4620 = vsel %vm4561, %v4499, %v4503
        %v4621 = vsel %vm4561, %v4500, %v4504
        %v4622 = vsel %vm4561, %v4557, %v4497
        %v4623 = vsel %vm4561, %v4558, %v4498
        %v4624 = vsel %vm4561, %v4559, %v4499
        %v4625 = vsel %vm4561, %v4560, %v4500
        %vm4626 = vcmp.lt.s32.totalorder %v809, 14
        %vm4627 = vcmp.lt.s32.totalorder %v810, 14
        %vm4628 = vcmp.lt.s32.totalorder %v811, 14
        %vm4629 = vcmp.lt.s32.totalorder %v812, 14
        %vm4630 = vcmp.lt.s32.totalorder %v813, 14
        %vm4631 = vcmp.lt.s32.totalorder %v814, 14
        %vm4632 = vcmp.lt.s32.totalorder %v815, 14
        %vm4633 = vcmp.lt.s32.totalorder %v816, 14
        %vm4634 = vcmp.lt.s32.totalorder %v817, 14
        %vm4635 = vcmp.lt.s32.totalorder %v818, 14
        %vm4636 = vcmp.lt.s32.totalorder %v819, 14
        %vm4637 = vcmp.lt.s32.totalorder %v820, 14
        %vm4638 = vcmp.lt.s32.totalorder %v821, 14
        %vm4639 = vcmp.lt.s32.totalorder %v822, 14
        %vm4640 = vcmp.lt.s32.totalorder %v823, 14
        %vm4641 = vcmp.lt.s32.totalorder %v824, 14
        %v4642 = vsel %vm4626, 1, 0
        %v4643 = vsel %vm4627, 1, 0
        %v4644 = vsel %vm4628, 1, 0
        %v4645 = vsel %vm4629, 1, 0
        %v4646 = vsel %vm4630, 1, 0
        %v4647 = vsel %vm4631, 1, 0
        %v4648 = vsel %vm4632, 1, 0
        %v4649 = vsel %vm4633, 1, 0
        %v4650 = vsel %vm4634, 1, 0
        %v4651 = vsel %vm4635, 1, 0
        %v4652 = vsel %vm4636, 1, 0
        %v4653 = vsel %vm4637, 1, 0
        %v4654 = vsel %vm4638, 1, 0
        %v4655 = vsel %vm4639, 1, 0
        %v4656 = vsel %vm4640, 1, 0
        %v4657 = vsel %vm4641, 1, 0
        %vm4658 = vcmp.eq.s32.totalorder %v4642, 1
        %vm4659 = vcmp.eq.s32.totalorder %v4643, 1
        %vm4660 = vcmp.eq.s32.totalorder %v4644, 1
        %vm4661 = vcmp.eq.s32.totalorder %v4645, 1
        %vm4662 = vcmp.eq.s32.totalorder %v4646, 1
        %vm4663 = vcmp.eq.s32.totalorder %v4647, 1
        %vm4664 = vcmp.eq.s32.totalorder %v4648, 1
        %vm4665 = vcmp.eq.s32.totalorder %v4649, 1
        %vm4666 = vcmp.eq.s32.totalorder %v4650, 1
        %vm4667 = vcmp.eq.s32.totalorder %v4651, 1
        %vm4668 = vcmp.eq.s32.totalorder %v4652, 1
        %vm4669 = vcmp.eq.s32.totalorder %v4653, 1
        %vm4670 = vcmp.eq.s32.totalorder %v4654, 1
        %vm4671 = vcmp.eq.s32.totalorder %v4655, 1
        %vm4672 = vcmp.eq.s32.totalorder %v4656, 1
        %vm4673 = vcmp.eq.s32.totalorder %v4657, 1
        %v4674 = vsel %vm4658, %v4618, 0.0
        %v4675 = vsel %vm4658, %v4619, 0.0
        %v4676 = vsel %vm4658, %v4620, 0.0
        %v4677 = vsel %vm4658, %v4621, 0.0
        %v4678 = vsel %vm4659, %v4614, 0.0
        %v4679 = vsel %vm4659, %v4615, 0.0
        %v4680 = vsel %vm4659, %v4616, 0.0
        %v4681 = vsel %vm4659, %v4617, 0.0
        %v4682 = vsel %vm4660, %v4610, 0.0
        %v4683 = vsel %vm4660, %v4611, 0.0
        %v4684 = vsel %vm4660, %v4612, 0.0
        %v4685 = vsel %vm4660, %v4613, 0.0
        %v4686 = vsel %vm4661, %v4606, 0.0
        %v4687 = vsel %vm4661, %v4607, 0.0
        %v4688 = vsel %vm4661, %v4608, 0.0
        %v4689 = vsel %vm4661, %v4609, 0.0
        %v4690 = vsel %vm4662, %v4602, 0.0
        %v4691 = vsel %vm4662, %v4603, 0.0
        %v4692 = vsel %vm4662, %v4604, 0.0
        %v4693 = vsel %vm4662, %v4605, 0.0
        %v4694 = vsel %vm4663, %v4598, 0.0
        %v4695 = vsel %vm4663, %v4599, 0.0
        %v4696 = vsel %vm4663, %v4600, 0.0
        %v4697 = vsel %vm4663, %v4601, 0.0
        %v4698 = vsel %vm4664, %v4594, 0.0
        %v4699 = vsel %vm4664, %v4595, 0.0
        %v4700 = vsel %vm4664, %v4596, 0.0
        %v4701 = vsel %vm4664, %v4597, 0.0
        %v4702 = vsel %vm4665, %v4590, 0.0
        %v4703 = vsel %vm4665, %v4591, 0.0
        %v4704 = vsel %vm4665, %v4592, 0.0
        %v4705 = vsel %vm4665, %v4593, 0.0
        %v4706 = vsel %vm4666, %v4586, 0.0
        %v4707 = vsel %vm4666, %v4587, 0.0
        %v4708 = vsel %vm4666, %v4588, 0.0
        %v4709 = vsel %vm4666, %v4589, 0.0
        %v4710 = vsel %vm4667, %v4582, 0.0
        %v4711 = vsel %vm4667, %v4583, 0.0
        %v4712 = vsel %vm4667, %v4584, 0.0
        %v4713 = vsel %vm4667, %v4585, 0.0
        %v4714 = vsel %vm4668, %v4578, 0.0
        %v4715 = vsel %vm4668, %v4579, 0.0
        %v4716 = vsel %vm4668, %v4580, 0.0
        %v4717 = vsel %vm4668, %v4581, 0.0
        %v4718 = vsel %vm4669, %v4574, 0.0
        %v4719 = vsel %vm4669, %v4575, 0.0
        %v4720 = vsel %vm4669, %v4576, 0.0
        %v4721 = vsel %vm4669, %v4577, 0.0
        %v4722 = vsel %vm4670, %v4570, 0.0
        %v4723 = vsel %vm4670, %v4571, 0.0
        %v4724 = vsel %vm4670, %v4572, 0.0
        %v4725 = vsel %vm4670, %v4573, 0.0
        %v4726 = vsel %vm4671, %v4566, 0.0
        %v4727 = vsel %vm4671, %v4567, 0.0
        %v4728 = vsel %vm4671, %v4568, 0.0
        %v4729 = vsel %vm4671, %v4569, 0.0
        %v4730 = vsel %vm4672, %v4562, 0.0
        %v4731 = vsel %vm4672, %v4563, 0.0
        %v4732 = vsel %vm4672, %v4564, 0.0
        %v4733 = vsel %vm4672, %v4565, 0.0
        %v4734 = vsel %vm4673, %v4622, 0.0
        %v4735 = vsel %vm4673, %v4623, 0.0
        %v4736 = vsel %vm4673, %v4624, 0.0
        %v4737 = vsel %vm4673, %v4625, 0.0
        %v4738 = vpack.c.bf16 %v4678, %v4674
        %v4739 = vpack.c.bf16 %v4679, %v4675
        %v4740 = vpack.c.bf16 %v4680, %v4676
        %v4741 = vpack.c.bf16 %v4681, %v4677
        %v4742 = vpack.c.bf16 %v4686, %v4682
        %v4743 = vpack.c.bf16 %v4687, %v4683
        %v4744 = vpack.c.bf16 %v4688, %v4684
        %v4745 = vpack.c.bf16 %v4689, %v4685
        %v4746 = vpack.c.bf16 %v4694, %v4690
        %v4747 = vpack.c.bf16 %v4695, %v4691
        %v4748 = vpack.c.bf16 %v4696, %v4692
        %v4749 = vpack.c.bf16 %v4697, %v4693
        %v4750 = vpack.c.bf16 %v4702, %v4698
        %v4751 = vpack.c.bf16 %v4703, %v4699
        %v4752 = vpack.c.bf16 %v4704, %v4700
        %v4753 = vpack.c.bf16 %v4705, %v4701
        %v4754 = vpack.c.bf16 %v4710, %v4706
        %v4755 = vpack.c.bf16 %v4711, %v4707
        %v4756 = vpack.c.bf16 %v4712, %v4708
        %v4757 = vpack.c.bf16 %v4713, %v4709
        %v4758 = vpack.c.bf16 %v4718, %v4714
        %v4759 = vpack.c.bf16 %v4719, %v4715
        %v4760 = vpack.c.bf16 %v4720, %v4716
        %v4761 = vpack.c.bf16 %v4721, %v4717
        %v4762 = vpack.c.bf16 %v4726, %v4722
        %v4763 = vpack.c.bf16 %v4727, %v4723
        %v4764 = vpack.c.bf16 %v4728, %v4724
        %v4765 = vpack.c.bf16 %v4729, %v4725
        %v4766 = vpack.c.bf16 %v4734, %v4730
        %v4767 = vpack.c.bf16 %v4735, %v4731
        %v4768 = vpack.c.bf16 %v4736, %v4732
        %v4769 = vpack.c.bf16 %v4737, %v4733
        %s4770 = scalar_lea.vmem [#allocation6], 1024
        %v4771 = vld [vmem:[%s4770] sm:$0xff]
        %v4772 = vld [vmem:[%s4770 + $0x8] sm:$0xff]
        %v4773 = vld [vmem:[%s4770 + $0x10] sm:$0xff]
        %v4774 = vld [vmem:[%s4770 + $0x18] sm:$0xff]
        %v4775 = vld [vmem:[%s4770 + $0x20] sm:$0xff]
        %v4776 = vld [vmem:[%s4770 + $0x28] sm:$0xff]
        %v4777 = vld [vmem:[%s4770 + $0x30] sm:$0xff]
        %v4778 = vld [vmem:[%s4770 + $0x38] sm:$0xff]
        %v4779 = vld [vmem:[%s4770 + $0x40] sm:$0xff]
        %v4780 = vld [vmem:[%s4770 + $0x48] sm:$0xff]
        %v4781 = vld [vmem:[%s4770 + $0x50] sm:$0xff]
        %v4782 = vld [vmem:[%s4770 + $0x58] sm:$0xff]
        %v4783 = vld [vmem:[%s4770 + $0x60] sm:$0xff]
        %v4784 = vld [vmem:[%s4770 + $0x68] sm:$0xff]
        %v4785 = vld [vmem:[%s4770 + $0x70] sm:$0xff]
        %v4786 = vld [vmem:[%s4770 + $0x78] sm:$0xff]
        %v4787 = vld [vmem:[%s4770 + $0x80] sm:$0xff]
        %v4788 = vld [vmem:[%s4770 + $0x88] sm:$0xff]
        %v4789 = vld [vmem:[%s4770 + $0x90] sm:$0xff]
        %v4790 = vld [vmem:[%s4770 + $0x98] sm:$0xff]
        %v4791 = vld [vmem:[%s4770 + $0xa0] sm:$0xff]
        %v4792 = vld [vmem:[%s4770 + $0xa8] sm:$0xff]
        %v4793 = vld [vmem:[%s4770 + $0xb0] sm:$0xff]
        %v4794 = vld [vmem:[%s4770 + $0xb8] sm:$0xff]
        %v4795 = vld [vmem:[%s4770 + $0xc0] sm:$0xff]
        %v4796 = vld [vmem:[%s4770 + $0xc8] sm:$0xff]
        %v4797 = vld [vmem:[%s4770 + $0xd0] sm:$0xff]
        %v4798 = vld [vmem:[%s4770 + $0xd8] sm:$0xff]
        %v4799 = vld [vmem:[%s4770 + $0xe0] sm:$0xff]
        %v4800 = vld [vmem:[%s4770 + $0xe8] sm:$0xff]
        %v4801 = vld [vmem:[%s4770 + $0xf0] sm:$0xff]
        %v4802 = vld [vmem:[%s4770 + $0xf8] sm:$0xff]
        %v4803 = vld [vmem:[%s4770 + $0x100] sm:$0xff]
        %v4804 = vld [vmem:[%s4770 + $0x108] sm:$0xff]
        %v4805 = vld [vmem:[%s4770 + $0x110] sm:$0xff]
        %v4806 = vld [vmem:[%s4770 + $0x118] sm:$0xff]
        %v4807 = vld [vmem:[%s4770 + $0x120] sm:$0xff]
        %v4808 = vld [vmem:[%s4770 + $0x128] sm:$0xff]
        %v4809 = vld [vmem:[%s4770 + $0x130] sm:$0xff]
        %v4810 = vld [vmem:[%s4770 + $0x138] sm:$0xff]
        %v4811 = vld [vmem:[%s4770 + $0x140] sm:$0xff]
        %v4812 = vld [vmem:[%s4770 + $0x148] sm:$0xff]
        %v4813 = vld [vmem:[%s4770 + $0x150] sm:$0xff]
        %v4814 = vld [vmem:[%s4770 + $0x158] sm:$0xff]
        %v4815 = vld [vmem:[%s4770 + $0x160] sm:$0xff]
        %v4816 = vld [vmem:[%s4770 + $0x168] sm:$0xff]
        %v4817 = vld [vmem:[%s4770 + $0x170] sm:$0xff]
        %v4818 = vld [vmem:[%s4770 + $0x178] sm:$0xff]
        %v4819 = vld [vmem:[%s4770 + $0x180] sm:$0xff]
        %v4820 = vld [vmem:[%s4770 + $0x188] sm:$0xff]
        %v4821 = vld [vmem:[%s4770 + $0x190] sm:$0xff]
        %v4822 = vld [vmem:[%s4770 + $0x198] sm:$0xff]
        %v4823 = vld [vmem:[%s4770 + $0x1a0] sm:$0xff]
        %v4824 = vld [vmem:[%s4770 + $0x1a8] sm:$0xff]
        %v4825 = vld [vmem:[%s4770 + $0x1b0] sm:$0xff]
        %v4826 = vld [vmem:[%s4770 + $0x1b8] sm:$0xff]
        %v4827 = vld [vmem:[%s4770 + $0x1c0] sm:$0xff]
        %v4828 = vld [vmem:[%s4770 + $0x1c8] sm:$0xff]
        %v4829 = vld [vmem:[%s4770 + $0x1d0] sm:$0xff]
        %v4830 = vld [vmem:[%s4770 + $0x1d8] sm:$0xff]
        %v4831 = vld [vmem:[%s4770 + $0x1e0] sm:$0xff]
        %v4832 = vld [vmem:[%s4770 + $0x1e8] sm:$0xff]
        %v4833 = vld [vmem:[%s4770 + $0x1f0] sm:$0xff]
        %v4834 = vld [vmem:[%s4770 + $0x1f8] sm:$0xff]
        %v4899 = vunpack.c.l.b16 %v4771
        %v4900 = vunpack.c.h.b16 %v4771
        %v4901 = vunpack.c.l.b16 %v4772
        %v4902 = vunpack.c.h.b16 %v4772
        %v4903 = vunpack.c.l.b16 %v4773
        %v4904 = vunpack.c.h.b16 %v4773
        %v4905 = vunpack.c.l.b16 %v4774
        %v4906 = vunpack.c.h.b16 %v4774
        %v4907 = vunpack.c.l.b16 %v4775
        %v4908 = vunpack.c.h.b16 %v4775
        %v4909 = vunpack.c.l.b16 %v4776
        %v4910 = vunpack.c.h.b16 %v4776
        %v4911 = vunpack.c.l.b16 %v4777
        %v4912 = vunpack.c.h.b16 %v4777
        %v4913 = vunpack.c.l.b16 %v4778
        %v4914 = vunpack.c.h.b16 %v4778
        %v4915 = vunpack.c.l.b16 %v4779
        %v4916 = vunpack.c.h.b16 %v4779
        %v4917 = vunpack.c.l.b16 %v4780
        %v4918 = vunpack.c.h.b16 %v4780
        %v4919 = vunpack.c.l.b16 %v4781
        %v4920 = vunpack.c.h.b16 %v4781
        %v4921 = vunpack.c.l.b16 %v4782
        %v4922 = vunpack.c.h.b16 %v4782
        %v4923 = vunpack.c.l.b16 %v4783
        %v4924 = vunpack.c.h.b16 %v4783
        %v4925 = vunpack.c.l.b16 %v4784
        %v4926 = vunpack.c.h.b16 %v4784
        %v4927 = vunpack.c.l.b16 %v4785
        %v4928 = vunpack.c.h.b16 %v4785
        %v4929 = vunpack.c.l.b16 %v4786
        %v4930 = vunpack.c.h.b16 %v4786
        %v4931 = vunpack.c.l.b16 %v4787
        %v4932 = vunpack.c.h.b16 %v4787
        %v4933 = vunpack.c.l.b16 %v4788
        %v4934 = vunpack.c.h.b16 %v4788
        %v4935 = vunpack.c.l.b16 %v4789
        %v4936 = vunpack.c.h.b16 %v4789
        %v4937 = vunpack.c.l.b16 %v4790
        %v4938 = vunpack.c.h.b16 %v4790
        %v4939 = vunpack.c.l.b16 %v4791
        %v4940 = vunpack.c.h.b16 %v4791
        %v4941 = vunpack.c.l.b16 %v4792
        %v4942 = vunpack.c.h.b16 %v4792
        %v4943 = vunpack.c.l.b16 %v4793
        %v4944 = vunpack.c.h.b16 %v4793
        %v4945 = vunpack.c.l.b16 %v4794
        %v4946 = vunpack.c.h.b16 %v4794
        %v4947 = vunpack.c.l.b16 %v4795
        %v4948 = vunpack.c.h.b16 %v4795
        %v4949 = vunpack.c.l.b16 %v4796
        %v4950 = vunpack.c.h.b16 %v4796
        %v4951 = vunpack.c.l.b16 %v4797
        %v4952 = vunpack.c.h.b16 %v4797
        %v4953 = vunpack.c.l.b16 %v4798
        %v4954 = vunpack.c.h.b16 %v4798
        %v4955 = vunpack.c.l.b16 %v4799
        %v4956 = vunpack.c.h.b16 %v4799
        %v4957 = vunpack.c.l.b16 %v4800
        %v4958 = vunpack.c.h.b16 %v4800
        %v4959 = vunpack.c.l.b16 %v4801
        %v4960 = vunpack.c.h.b16 %v4801
        %v4961 = vunpack.c.l.b16 %v4802
        %v4962 = vunpack.c.h.b16 %v4802
        %v4963 = vunpack.c.l.b16 %v4803
        %v4964 = vunpack.c.h.b16 %v4803
        %v4965 = vunpack.c.l.b16 %v4804
        %v4966 = vunpack.c.h.b16 %v4804
        %v4967 = vunpack.c.l.b16 %v4805
        %v4968 = vunpack.c.h.b16 %v4805
        %v4969 = vunpack.c.l.b16 %v4806
        %v4970 = vunpack.c.h.b16 %v4806
        %v4971 = vunpack.c.l.b16 %v4807
        %v4972 = vunpack.c.h.b16 %v4807
        %v4973 = vunpack.c.l.b16 %v4808
        %v4974 = vunpack.c.h.b16 %v4808
        %v4975 = vunpack.c.l.b16 %v4809
        %v4976 = vunpack.c.h.b16 %v4809
        %v4977 = vunpack.c.l.b16 %v4810
        %v4978 = vunpack.c.h.b16 %v4810
        %v4979 = vunpack.c.l.b16 %v4811
        %v4980 = vunpack.c.h.b16 %v4811
        %v4981 = vunpack.c.l.b16 %v4812
        %v4982 = vunpack.c.h.b16 %v4812
        %v4983 = vunpack.c.l.b16 %v4813
        %v4984 = vunpack.c.h.b16 %v4813
        %v4985 = vunpack.c.l.b16 %v4814
        %v4986 = vunpack.c.h.b16 %v4814
        %v4987 = vunpack.c.l.b16 %v4815
        %v4988 = vunpack.c.h.b16 %v4815
        %v4989 = vunpack.c.l.b16 %v4816
        %v4990 = vunpack.c.h.b16 %v4816
        %v4991 = vunpack.c.l.b16 %v4817
        %v4992 = vunpack.c.h.b16 %v4817
        %v4993 = vunpack.c.l.b16 %v4818
        %v4994 = vunpack.c.h.b16 %v4818
        %v4995 = vunpack.c.l.b16 %v4819
        %v4996 = vunpack.c.h.b16 %v4819
        %v4997 = vunpack.c.l.b16 %v4820
        %v4998 = vunpack.c.h.b16 %v4820
        %v4999 = vunpack.c.l.b16 %v4821
        %v5000 = vunpack.c.h.b16 %v4821
        %v5001 = vunpack.c.l.b16 %v4822
        %v5002 = vunpack.c.h.b16 %v4822
        %v5003 = vunpack.c.l.b16 %v4823
        %v5004 = vunpack.c.h.b16 %v4823
        %v5005 = vunpack.c.l.b16 %v4824
        %v5006 = vunpack.c.h.b16 %v4824
        %v5007 = vunpack.c.l.b16 %v4825
        %v5008 = vunpack.c.h.b16 %v4825
        %v5009 = vunpack.c.l.b16 %v4826
        %v5010 = vunpack.c.h.b16 %v4826
        %v5011 = vunpack.c.l.b16 %v4827
        %v5012 = vunpack.c.h.b16 %v4827
        %v5013 = vunpack.c.l.b16 %v4828
        %v5014 = vunpack.c.h.b16 %v4828
        %v5015 = vunpack.c.l.b16 %v4829
        %v5016 = vunpack.c.h.b16 %v4829
        %v5017 = vunpack.c.l.b16 %v4830
        %v5018 = vunpack.c.h.b16 %v4830
        %v5019 = vunpack.c.l.b16 %v4831
        %v5020 = vunpack.c.h.b16 %v4831
        %v5021 = vunpack.c.l.b16 %v4832
        %v5022 = vunpack.c.h.b16 %v4832
        %v5023 = vunpack.c.l.b16 %v4833
        %v5024 = vunpack.c.h.b16 %v4833
        %v5025 = vunpack.c.l.b16 %v4834
        %v5026 = vunpack.c.h.b16 %v4834
        %v5027 = vpack.c.b16 %v4901, %v4899
        %v5028 = vpack.c.b16 %v4902, %v4900
        %v5029 = vpack.c.b16 %v4905, %v4903
        %v5030 = vpack.c.b16 %v4906, %v4904
        %v5031 = vpack.c.b16 %v4909, %v4907
        %v5032 = vpack.c.b16 %v4910, %v4908
        %v5033 = vpack.c.b16 %v4913, %v4911
        %v5034 = vpack.c.b16 %v4914, %v4912
        %v5035 = vpack.c.b16 %v4917, %v4915
        %v5036 = vpack.c.b16 %v4918, %v4916
        %v5037 = vpack.c.b16 %v4921, %v4919
        %v5038 = vpack.c.b16 %v4922, %v4920
        %v5039 = vpack.c.b16 %v4925, %v4923
        %v5040 = vpack.c.b16 %v4926, %v4924
        %v5041 = vpack.c.b16 %v4929, %v4927
        %v5042 = vpack.c.b16 %v4930, %v4928
        %v5043 = vpack.c.b16 %v4933, %v4931
        %v5044 = vpack.c.b16 %v4934, %v4932
        %v5045 = vpack.c.b16 %v4937, %v4935
        %v5046 = vpack.c.b16 %v4938, %v4936
        %v5047 = vpack.c.b16 %v4941, %v4939
        %v5048 = vpack.c.b16 %v4942, %v4940
        %v5049 = vpack.c.b16 %v4945, %v4943
        %v5050 = vpack.c.b16 %v4946, %v4944
        %v5051 = vpack.c.b16 %v4949, %v4947
        %v5052 = vpack.c.b16 %v4950, %v4948
        %v5053 = vpack.c.b16 %v4953, %v4951
        %v5054 = vpack.c.b16 %v4954, %v4952
        %v5055 = vpack.c.b16 %v4957, %v4955
        %v5056 = vpack.c.b16 %v4958, %v4956
        %v5057 = vpack.c.b16 %v4961, %v4959
        %v5058 = vpack.c.b16 %v4962, %v4960
        %v5059 = vpack.c.b16 %v4965, %v4963
        %v5060 = vpack.c.b16 %v4966, %v4964
        %v5061 = vpack.c.b16 %v4969, %v4967
        %v5062 = vpack.c.b16 %v4970, %v4968
        %v5063 = vpack.c.b16 %v4973, %v4971
        %v5064 = vpack.c.b16 %v4974, %v4972
        %v5065 = vpack.c.b16 %v4977, %v4975
        %v5066 = vpack.c.b16 %v4978, %v4976
        %v5067 = vpack.c.b16 %v4981, %v4979
        %v5068 = vpack.c.b16 %v4982, %v4980
        %v5069 = vpack.c.b16 %v4985, %v4983
        %v5070 = vpack.c.b16 %v4986, %v4984
        %v5071 = vpack.c.b16 %v4989, %v4987
        %v5072 = vpack.c.b16 %v4990, %v4988
        %v5073 = vpack.c.b16 %v4993, %v4991
        %v5074 = vpack.c.b16 %v4994, %v4992
        %v5075 = vpack.c.b16 %v4997, %v4995
        %v5076 = vpack.c.b16 %v4998, %v4996
        %v5077 = vpack.c.b16 %v5001, %v4999
        %v5078 = vpack.c.b16 %v5002, %v5000
        %v5079 = vpack.c.b16 %v5005, %v5003
        %v5080 = vpack.c.b16 %v5006, %v5004
        %v5081 = vpack.c.b16 %v5009, %v5007
        %v5082 = vpack.c.b16 %v5010, %v5008
        %v5083 = vpack.c.b16 %v5013, %v5011
        %v5084 = vpack.c.b16 %v5014, %v5012
        %v5085 = vpack.c.b16 %v5017, %v5015
        %v5086 = vpack.c.b16 %v5018, %v5016
        %v5087 = vpack.c.b16 %v5021, %v5019
        %v5088 = vpack.c.b16 %v5022, %v5020
        %v5089 = vpack.c.b16 %v5025, %v5023
        %v5090 = vpack.c.b16 %v5026, %v5024
        %5155 = vmatpush.bf16.msra.mxu0 %v5041
        %5156 = vmatpush.bf16.msra.mxu0 %v5039
        %5157 = vmatpush.bf16.msra.mxu0 %v5037
        %5158 = vmatpush.bf16.msra.mxu0 %v5035
        %5159 = vmatpush.bf16.msra.mxu0 %v5033
        %5160 = vmatpush.bf16.msra.mxu0 %v5031
        %5161 = vmatpush.bf16.msra.mxu0 %v5029
        %5162 = vmatpush.bf16.msra.mxu0 %v5027
        %5163 = vmatmul.bf16.gmra.mxu0 %v4738
        %v5164 = vpop.f32.mrf.mxu0
        %v5165 = vadd.f32 0.0, %v5164
        %v5166 = vpop.f32.mrf.mxu0
        %v5167 = vadd.f32 0.0, %v5166
        %5168 = vmatmul.bf16.gmra.mxu0 %v4742
        %v5169 = vpop.f32.mrf.mxu0
        %v5170 = vadd.f32 0.0, %v5169
        %v5171 = vpop.f32.mrf.mxu0
        %v5172 = vadd.f32 0.0, %v5171
        %5173 = vmatmul.bf16.gmra.mxu0 %v4746
        %v5174 = vpop.f32.mrf.mxu0
        %v5175 = vadd.f32 0.0, %v5174
        %v5176 = vpop.f32.mrf.mxu0
        %v5177 = vadd.f32 0.0, %v5176
        %5178 = vmatmul.bf16.gmra.mxu0 %v4750
        %v5179 = vpop.f32.mrf.mxu0
        %v5180 = vadd.f32 0.0, %v5179
        %v5181 = vpop.f32.mrf.mxu0
        %v5182 = vadd.f32 0.0, %v5181
        %5183 = vmatmul.bf16.gmra.mxu0 %v4754
        %v5184 = vpop.f32.mrf.mxu0
        %v5185 = vadd.f32 0.0, %v5184
        %v5186 = vpop.f32.mrf.mxu0
        %v5187 = vadd.f32 0.0, %v5186
        %5188 = vmatmul.bf16.gmra.mxu0 %v4758
        %v5189 = vpop.f32.mrf.mxu0
        %v5190 = vadd.f32 0.0, %v5189
        %v5191 = vpop.f32.mrf.mxu0
        %v5192 = vadd.f32 0.0, %v5191
        %5193 = vmatmul.bf16.gmra.mxu0 %v4762
        %v5194 = vpop.f32.mrf.mxu0
        %v5195 = vadd.f32 0.0, %v5194
        %v5196 = vpop.f32.mrf.mxu0
        %v5197 = vadd.f32 0.0, %v5196
        %5198 = vmatmul.bf16.gmra.mxu0 %v4766
        %v5199 = vpop.f32.mrf.mxu0
        %v5200 = vadd.f32 0.0, %v5199
        %v5201 = vpop.f32.mrf.mxu0
        %v5202 = vadd.f32 0.0, %v5201
        %5203 = vdwg.mxu0
        %5204 = vmatpush.bf16.msra.mxu0 %v5057
        %5205 = vmatpush.bf16.msra.mxu0 %v5055
        %5206 = vmatpush.bf16.msra.mxu0 %v5053
        %5207 = vmatpush.bf16.msra.mxu0 %v5051
        %5208 = vmatpush.bf16.msra.mxu0 %v5049
        %5209 = vmatpush.bf16.msra.mxu0 %v5047
        %5210 = vmatpush.bf16.msra.mxu0 %v5045
        %5211 = vmatpush.bf16.msra.mxu0 %v5043
        %5212 = vmatmul.bf16.gmra.mxu0 %v4739
        %v5213 = vpop.f32.mrf.mxu0
        %v5214 = vadd.f32 %v5165, %v5213
        %v5215 = vpop.f32.mrf.mxu0
        %v5216 = vadd.f32 %v5167, %v5215
        %5217 = vmatmul.bf16.gmra.mxu0 %v4743
        %v5218 = vpop.f32.mrf.mxu0
        %v5219 = vadd.f32 %v5170, %v5218
        %v5220 = vpop.f32.mrf.mxu0
        %v5221 = vadd.f32 %v5172, %v5220
        %5222 = vmatmul.bf16.gmra.mxu0 %v4747
        %v5223 = vpop.f32.mrf.mxu0
        %v5224 = vadd.f32 %v5175, %v5223
        %v5225 = vpop.f32.mrf.mxu0
        %v5226 = vadd.f32 %v5177, %v5225
        %5227 = vmatmul.bf16.gmra.mxu0 %v4751
        %v5228 = vpop.f32.mrf.mxu0
        %v5229 = vadd.f32 %v5180, %v5228
        %v5230 = vpop.f32.mrf.mxu0
        %v5231 = vadd.f32 %v5182, %v5230
        %5232 = vmatmul.bf16.gmra.mxu0 %v4755
        %v5233 = vpop.f32.mrf.mxu0
        %v5234 = vadd.f32 %v5185, %v5233
        %v5235 = vpop.f32.mrf.mxu0
        %v5236 = vadd.f32 %v5187, %v5235
        %5237 = vmatmul.bf16.gmra.mxu0 %v4759
        %v5238 = vpop.f32.mrf.mxu0
        %v5239 = vadd.f32 %v5190, %v5238
        %v5240 = vpop.f32.mrf.mxu0
        %v5241 = vadd.f32 %v5192, %v5240
        %5242 = vmatmul.bf16.gmra.mxu0 %v4763
        %v5243 = vpop.f32.mrf.mxu0
        %v5244 = vadd.f32 %v5195, %v5243
        %v5245 = vpop.f32.mrf.mxu0
        %v5246 = vadd.f32 %v5197, %v5245
        %5247 = vmatmul.bf16.gmra.mxu0 %v4767
        %v5248 = vpop.f32.mrf.mxu0
        %v5249 = vadd.f32 %v5200, %v5248
        %v5250 = vpop.f32.mrf.mxu0
        %v5251 = vadd.f32 %v5202, %v5250
        %5252 = vdwg.mxu0
        %5253 = vmatpush.bf16.msra.mxu0 %v5073
        %5254 = vmatpush.bf16.msra.mxu0 %v5071
        %5255 = vmatpush.bf16.msra.mxu0 %v5069
        %5256 = vmatpush.bf16.msra.mxu0 %v5067
        %5257 = vmatpush.bf16.msra.mxu0 %v5065
        %5258 = vmatpush.bf16.msra.mxu0 %v5063
        %5259 = vmatpush.bf16.msra.mxu0 %v5061
        %5260 = vmatpush.bf16.msra.mxu0 %v5059
        %5261 = vmatmul.bf16.gmra.mxu0 %v4740
        %v5262 = vpop.f32.mrf.mxu0
        %v5263 = vadd.f32 %v5214, %v5262
        %v5264 = vpop.f32.mrf.mxu0
        %v5265 = vadd.f32 %v5216, %v5264
        %5266 = vmatmul.bf16.gmra.mxu0 %v4744
        %v5267 = vpop.f32.mrf.mxu0
        %v5268 = vadd.f32 %v5219, %v5267
        %v5269 = vpop.f32.mrf.mxu0
        %v5270 = vadd.f32 %v5221, %v5269
        %5271 = vmatmul.bf16.gmra.mxu0 %v4748
        %v5272 = vpop.f32.mrf.mxu0
        %v5273 = vadd.f32 %v5224, %v5272
        %v5274 = vpop.f32.mrf.mxu0
        %v5275 = vadd.f32 %v5226, %v5274
        %5276 = vmatmul.bf16.gmra.mxu0 %v4752
        %v5277 = vpop.f32.mrf.mxu0
        %v5278 = vadd.f32 %v5229, %v5277
        %v5279 = vpop.f32.mrf.mxu0
        %v5280 = vadd.f32 %v5231, %v5279
        %5281 = vmatmul.bf16.gmra.mxu0 %v4756
        %v5282 = vpop.f32.mrf.mxu0
        %v5283 = vadd.f32 %v5234, %v5282
        %v5284 = vpop.f32.mrf.mxu0
        %v5285 = vadd.f32 %v5236, %v5284
        %5286 = vmatmul.bf16.gmra.mxu0 %v4760
        %v5287 = vpop.f32.mrf.mxu0
        %v5288 = vadd.f32 %v5239, %v5287
        %v5289 = vpop.f32.mrf.mxu0
        %v5290 = vadd.f32 %v5241, %v5289
        %5291 = vmatmul.bf16.gmra.mxu0 %v4764
        %v5292 = vpop.f32.mrf.mxu0
        %v5293 = vadd.f32 %v5244, %v5292
        %v5294 = vpop.f32.mrf.mxu0
        %v5295 = vadd.f32 %v5246, %v5294
        %5296 = vmatmul.bf16.gmra.mxu0 %v4768
        %v5297 = vpop.f32.mrf.mxu0
        %v5298 = vadd.f32 %v5249, %v5297
        %v5299 = vpop.f32.mrf.mxu0
        %v5300 = vadd.f32 %v5251, %v5299
        %5301 = vdwg.mxu0
        %5302 = vmatpush.bf16.msra.mxu0 %v5089
        %5303 = vmatpush.bf16.msra.mxu0 %v5087
        %5304 = vmatpush.bf16.msra.mxu0 %v5085
        %5305 = vmatpush.bf16.msra.mxu0 %v5083
        %5306 = vmatpush.bf16.msra.mxu0 %v5081
        %5307 = vmatpush.bf16.msra.mxu0 %v5079
        %5308 = vmatpush.bf16.msra.mxu0 %v5077
        %5309 = vmatpush.bf16.msra.mxu0 %v5075
        %5310 = vmatmul.bf16.gmra.mxu0 %v4741
        %v5311 = vpop.f32.mrf.mxu0
        %v5312 = vadd.f32 %v5263, %v5311
        %v5313 = vpop.f32.mrf.mxu0
        %v5314 = vadd.f32 %v5265, %v5313
        %5315 = vmatmul.bf16.gmra.mxu0 %v4745
        %v5316 = vpop.f32.mrf.mxu0
        %v5317 = vadd.f32 %v5268, %v5316
        %v5318 = vpop.f32.mrf.mxu0
        %v5319 = vadd.f32 %v5270, %v5318
        %5320 = vmatmul.bf16.gmra.mxu0 %v4749
        %v5321 = vpop.f32.mrf.mxu0
        %v5322 = vadd.f32 %v5273, %v5321
        %v5323 = vpop.f32.mrf.mxu0
        %v5324 = vadd.f32 %v5275, %v5323
        %5325 = vmatmul.bf16.gmra.mxu0 %v4753
        %v5326 = vpop.f32.mrf.mxu0
        %v5327 = vadd.f32 %v5278, %v5326
        %v5328 = vpop.f32.mrf.mxu0
        %v5329 = vadd.f32 %v5280, %v5328
        %5330 = vmatmul.bf16.gmra.mxu0 %v4757
        %v5331 = vpop.f32.mrf.mxu0
        %v5332 = vadd.f32 %v5283, %v5331
        %v5333 = vpop.f32.mrf.mxu0
        %v5334 = vadd.f32 %v5285, %v5333
        %5335 = vmatmul.bf16.gmra.mxu0 %v4761
        %v5336 = vpop.f32.mrf.mxu0
        %v5337 = vadd.f32 %v5288, %v5336
        %v5338 = vpop.f32.mrf.mxu0
        %v5339 = vadd.f32 %v5290, %v5338
        %5340 = vmatmul.bf16.gmra.mxu0 %v4765
        %v5341 = vpop.f32.mrf.mxu0
        %v5342 = vadd.f32 %v5293, %v5341
        %v5343 = vpop.f32.mrf.mxu0
        %v5344 = vadd.f32 %v5295, %v5343
        %5345 = vmatmul.bf16.gmra.mxu0 %v4769
        %v5346 = vpop.f32.mrf.mxu0
        %v5347 = vadd.f32 %v5298, %v5346
        %v5348 = vpop.f32.mrf.mxu0
        %v5349 = vadd.f32 %v5300, %v5348
        %5350 = vdwg.mxu0
        %5351 = vmatpush.bf16.msra.mxu0 %v5042
        %5352 = vmatpush.bf16.msra.mxu0 %v5040
        %5353 = vmatpush.bf16.msra.mxu0 %v5038
        %5354 = vmatpush.bf16.msra.mxu0 %v5036
        %5355 = vmatpush.bf16.msra.mxu0 %v5034
        %5356 = vmatpush.bf16.msra.mxu0 %v5032
        %5357 = vmatpush.bf16.msra.mxu0 %v5030
        %5358 = vmatpush.bf16.msra.mxu0 %v5028
        %5359 = vmatmul.bf16.gmra.mxu0 %v4738
        %v5360 = vpop.f32.mrf.mxu0
        %v5361 = vadd.f32 0.0, %v5360
        %v5362 = vpop.f32.mrf.mxu0
        %v5363 = vadd.f32 0.0, %v5362
        %5364 = vmatmul.bf16.gmra.mxu0 %v4742
        %v5365 = vpop.f32.mrf.mxu0
        %v5366 = vadd.f32 0.0, %v5365
        %v5367 = vpop.f32.mrf.mxu0
        %v5368 = vadd.f32 0.0, %v5367
        %5369 = vmatmul.bf16.gmra.mxu0 %v4746
        %v5370 = vpop.f32.mrf.mxu0
        %v5371 = vadd.f32 0.0, %v5370
        %v5372 = vpop.f32.mrf.mxu0
        %v5373 = vadd.f32 0.0, %v5372
        %5374 = vmatmul.bf16.gmra.mxu0 %v4750
        %v5375 = vpop.f32.mrf.mxu0
        %v5376 = vadd.f32 0.0, %v5375
        %v5377 = vpop.f32.mrf.mxu0
        %v5378 = vadd.f32 0.0, %v5377
        %5379 = vmatmul.bf16.gmra.mxu0 %v4754
        %v5380 = vpop.f32.mrf.mxu0
        %v5381 = vadd.f32 0.0, %v5380
        %v5382 = vpop.f32.mrf.mxu0
        %v5383 = vadd.f32 0.0, %v5382
        %5384 = vmatmul.bf16.gmra.mxu0 %v4758
        %v5385 = vpop.f32.mrf.mxu0
        %v5386 = vadd.f32 0.0, %v5385
        %v5387 = vpop.f32.mrf.mxu0
        %v5388 = vadd.f32 0.0, %v5387
        %5389 = vmatmul.bf16.gmra.mxu0 %v4762
        %v5390 = vpop.f32.mrf.mxu0
        %v5391 = vadd.f32 0.0, %v5390
        %v5392 = vpop.f32.mrf.mxu0
        %v5393 = vadd.f32 0.0, %v5392
        %5394 = vmatmul.bf16.gmra.mxu0 %v4766
        %v5395 = vpop.f32.mrf.mxu0
        %v5396 = vadd.f32 0.0, %v5395
        %v5397 = vpop.f32.mrf.mxu0
        %v5398 = vadd.f32 0.0, %v5397
        %5399 = vdwg.mxu0
        %5400 = vmatpush.bf16.msra.mxu0 %v5058
        %5401 = vmatpush.bf16.msra.mxu0 %v5056
        %5402 = vmatpush.bf16.msra.mxu0 %v5054
        %5403 = vmatpush.bf16.msra.mxu0 %v5052
        %5404 = vmatpush.bf16.msra.mxu0 %v5050
        %5405 = vmatpush.bf16.msra.mxu0 %v5048
        %5406 = vmatpush.bf16.msra.mxu0 %v5046
        %5407 = vmatpush.bf16.msra.mxu0 %v5044
        %5408 = vmatmul.bf16.gmra.mxu0 %v4739
        %v5409 = vpop.f32.mrf.mxu0
        %v5410 = vadd.f32 %v5361, %v5409
        %v5411 = vpop.f32.mrf.mxu0
        %v5412 = vadd.f32 %v5363, %v5411
        %5413 = vmatmul.bf16.gmra.mxu0 %v4743
        %v5414 = vpop.f32.mrf.mxu0
        %v5415 = vadd.f32 %v5366, %v5414
        %v5416 = vpop.f32.mrf.mxu0
        %v5417 = vadd.f32 %v5368, %v5416
        %5418 = vmatmul.bf16.gmra.mxu0 %v4747
        %v5419 = vpop.f32.mrf.mxu0
        %v5420 = vadd.f32 %v5371, %v5419
        %v5421 = vpop.f32.mrf.mxu0
        %v5422 = vadd.f32 %v5373, %v5421
        %5423 = vmatmul.bf16.gmra.mxu0 %v4751
        %v5424 = vpop.f32.mrf.mxu0
        %v5425 = vadd.f32 %v5376, %v5424
        %v5426 = vpop.f32.mrf.mxu0
        %v5427 = vadd.f32 %v5378, %v5426
        %5428 = vmatmul.bf16.gmra.mxu0 %v4755
        %v5429 = vpop.f32.mrf.mxu0
        %v5430 = vadd.f32 %v5381, %v5429
        %v5431 = vpop.f32.mrf.mxu0
        %v5432 = vadd.f32 %v5383, %v5431
        %5433 = vmatmul.bf16.gmra.mxu0 %v4759
        %v5434 = vpop.f32.mrf.mxu0
        %v5435 = vadd.f32 %v5386, %v5434
        %v5436 = vpop.f32.mrf.mxu0
        %v5437 = vadd.f32 %v5388, %v5436
        %5438 = vmatmul.bf16.gmra.mxu0 %v4763
        %v5439 = vpop.f32.mrf.mxu0
        %v5440 = vadd.f32 %v5391, %v5439
        %v5441 = vpop.f32.mrf.mxu0
        %v5442 = vadd.f32 %v5393, %v5441
        %5443 = vmatmul.bf16.gmra.mxu0 %v4767
        %v5444 = vpop.f32.mrf.mxu0
        %v5445 = vadd.f32 %v5396, %v5444
        %v5446 = vpop.f32.mrf.mxu0
        %v5447 = vadd.f32 %v5398, %v5446
        %5448 = vdwg.mxu0
        %5449 = vmatpush.bf16.msra.mxu0 %v5074
        %5450 = vmatpush.bf16.msra.mxu0 %v5072
        %5451 = vmatpush.bf16.msra.mxu0 %v5070
        %5452 = vmatpush.bf16.msra.mxu0 %v5068
        %5453 = vmatpush.bf16.msra.mxu0 %v5066
        %5454 = vmatpush.bf16.msra.mxu0 %v5064
        %5455 = vmatpush.bf16.msra.mxu0 %v5062
        %5456 = vmatpush.bf16.msra.mxu0 %v5060
        %5457 = vmatmul.bf16.gmra.mxu0 %v4740
        %v5458 = vpop.f32.mrf.mxu0
        %v5459 = vadd.f32 %v5410, %v5458
        %v5460 = vpop.f32.mrf.mxu0
        %v5461 = vadd.f32 %v5412, %v5460
        %5462 = vmatmul.bf16.gmra.mxu0 %v4744
        %v5463 = vpop.f32.mrf.mxu0
        %v5464 = vadd.f32 %v5415, %v5463
        %v5465 = vpop.f32.mrf.mxu0
        %v5466 = vadd.f32 %v5417, %v5465
        %5467 = vmatmul.bf16.gmra.mxu0 %v4748
        %v5468 = vpop.f32.mrf.mxu0
        %v5469 = vadd.f32 %v5420, %v5468
        %v5470 = vpop.f32.mrf.mxu0
        %v5471 = vadd.f32 %v5422, %v5470
        %5472 = vmatmul.bf16.gmra.mxu0 %v4752
        %v5473 = vpop.f32.mrf.mxu0
        %v5474 = vadd.f32 %v5425, %v5473
        %v5475 = vpop.f32.mrf.mxu0
        %v5476 = vadd.f32 %v5427, %v5475
        %5477 = vmatmul.bf16.gmra.mxu0 %v4756
        %v5478 = vpop.f32.mrf.mxu0
        %v5479 = vadd.f32 %v5430, %v5478
        %v5480 = vpop.f32.mrf.mxu0
        %v5481 = vadd.f32 %v5432, %v5480
        %5482 = vmatmul.bf16.gmra.mxu0 %v4760
        %v5483 = vpop.f32.mrf.mxu0
        %v5484 = vadd.f32 %v5435, %v5483
        %v5485 = vpop.f32.mrf.mxu0
        %v5486 = vadd.f32 %v5437, %v5485
        %5487 = vmatmul.bf16.gmra.mxu0 %v4764
        %v5488 = vpop.f32.mrf.mxu0
        %v5489 = vadd.f32 %v5440, %v5488
        %v5490 = vpop.f32.mrf.mxu0
        %v5491 = vadd.f32 %v5442, %v5490
        %5492 = vmatmul.bf16.gmra.mxu0 %v4768
        %v5493 = vpop.f32.mrf.mxu0
        %v5494 = vadd.f32 %v5445, %v5493
        %v5495 = vpop.f32.mrf.mxu0
        %v5496 = vadd.f32 %v5447, %v5495
        %5497 = vdwg.mxu0
        %5498 = vmatpush.bf16.msra.mxu0 %v5090
        %5499 = vmatpush.bf16.msra.mxu0 %v5088
        %5500 = vmatpush.bf16.msra.mxu0 %v5086
        %5501 = vmatpush.bf16.msra.mxu0 %v5084
        %5502 = vmatpush.bf16.msra.mxu0 %v5082
        %5503 = vmatpush.bf16.msra.mxu0 %v5080
        %5504 = vmatpush.bf16.msra.mxu0 %v5078
        %5505 = vmatpush.bf16.msra.mxu0 %v5076
        %5506 = vmatmul.bf16.gmra.mxu0 %v4741
        %v5507 = vpop.f32.mrf.mxu0
        %v5508 = vadd.f32 %v5459, %v5507
        %v5509 = vpop.f32.mrf.mxu0
        %v5510 = vadd.f32 %v5461, %v5509
        %5511 = vmatmul.bf16.gmra.mxu0 %v4745
        %v5512 = vpop.f32.mrf.mxu0
        %v5513 = vadd.f32 %v5464, %v5512
        %v5514 = vpop.f32.mrf.mxu0
        %v5515 = vadd.f32 %v5466, %v5514
        %5516 = vmatmul.bf16.gmra.mxu0 %v4749
        %v5517 = vpop.f32.mrf.mxu0
        %v5518 = vadd.f32 %v5469, %v5517
        %v5519 = vpop.f32.mrf.mxu0
        %v5520 = vadd.f32 %v5471, %v5519
        %5521 = vmatmul.bf16.gmra.mxu0 %v4753
        %v5522 = vpop.f32.mrf.mxu0
        %v5523 = vadd.f32 %v5474, %v5522
        %v5524 = vpop.f32.mrf.mxu0
        %v5525 = vadd.f32 %v5476, %v5524
        %5526 = vmatmul.bf16.gmra.mxu0 %v4757
        %v5527 = vpop.f32.mrf.mxu0
        %v5528 = vadd.f32 %v5479, %v5527
        %v5529 = vpop.f32.mrf.mxu0
        %v5530 = vadd.f32 %v5481, %v5529
        %5531 = vmatmul.bf16.gmra.mxu0 %v4761
        %v5532 = vpop.f32.mrf.mxu0
        %v5533 = vadd.f32 %v5484, %v5532
        %v5534 = vpop.f32.mrf.mxu0
        %v5535 = vadd.f32 %v5486, %v5534
        %5536 = vmatmul.bf16.gmra.mxu0 %v4765
        %v5537 = vpop.f32.mrf.mxu0
        %v5538 = vadd.f32 %v5489, %v5537
        %v5539 = vpop.f32.mrf.mxu0
        %v5540 = vadd.f32 %v5491, %v5539
        %5541 = vmatmul.bf16.gmra.mxu0 %v4769
        %v5542 = vpop.f32.mrf.mxu0
        %v5543 = vadd.f32 %v5494, %v5542
        %v5544 = vpop.f32.mrf.mxu0
        %v5545 = vadd.f32 %v5496, %v5544
        %5546 = vdwg.mxu0
        %v5547 = vadd.f32 %v4262, %v5312
        %v5548 = vadd.f32 %v4458, %v5508
        %v5549 = vadd.f32 %v4264, %v5314
        %v5550 = vadd.f32 %v4460, %v5510
        %v5551 = vadd.f32 %v4267, %v5317
        %v5552 = vadd.f32 %v4463, %v5513
        %v5553 = vadd.f32 %v4269, %v5319
        %v5554 = vadd.f32 %v4465, %v5515
        %v5555 = vadd.f32 %v4272, %v5322
        %v5556 = vadd.f32 %v4468, %v5518
        %v5557 = vadd.f32 %v4274, %v5324
        %v5558 = vadd.f32 %v4470, %v5520
        %v5559 = vadd.f32 %v4277, %v5327
        %v5560 = vadd.f32 %v4473, %v5523
        %v5561 = vadd.f32 %v4279, %v5329
        %v5562 = vadd.f32 %v4475, %v5525
        %v5563 = vadd.f32 %v4282, %v5332
        %v5564 = vadd.f32 %v4478, %v5528
        %v5565 = vadd.f32 %v4284, %v5334
        %v5566 = vadd.f32 %v4480, %v5530
        %v5567 = vadd.f32 %v4287, %v5337
        %v5568 = vadd.f32 %v4483, %v5533
        %v5569 = vadd.f32 %v4289, %v5339
        %v5570 = vadd.f32 %v4485, %v5535
        %v5571 = vadd.f32 %v4292, %v5342
        %v5572 = vadd.f32 %v4488, %v5538
        %v5573 = vadd.f32 %v4294, %v5344
        %v5574 = vadd.f32 %v4490, %v5540
        %v5575 = vadd.f32 %v4297, %v5347
        %v5576 = vadd.f32 %v4493, %v5543
        %v5577 = vadd.f32 %v4299, %v5349
        %v5578 = vadd.f32 %v4495, %v5545
        %v5579 = vld [vmem:[%s7] sm:$0x3]
        %v5581 = vperm.slane %v5579, 0
        %v5582 = vperm.slane %v5579, 1
        %v5585 = vadd.f32 %v5547, %v5581
        %v5586 = vadd.f32 %v5548, %v5582
        %v5587 = vadd.f32 %v5549, %v5581
        %v5588 = vadd.f32 %v5550, %v5582
        %v5589 = vadd.f32 %v5551, %v5581
        %v5590 = vadd.f32 %v5552, %v5582
        %v5591 = vadd.f32 %v5553, %v5581
        %v5592 = vadd.f32 %v5554, %v5582
        %v5593 = vadd.f32 %v5555, %v5581
        %v5594 = vadd.f32 %v5556, %v5582
        %v5595 = vadd.f32 %v5557, %v5581
        %v5596 = vadd.f32 %v5558, %v5582
        %v5597 = vadd.f32 %v5559, %v5581
        %v5598 = vadd.f32 %v5560, %v5582
        %v5599 = vadd.f32 %v5561, %v5581
        %v5600 = vadd.f32 %v5562, %v5582
        %v5601 = vadd.f32 %v5563, %v5581
        %v5602 = vadd.f32 %v5564, %v5582
        %v5603 = vadd.f32 %v5565, %v5581
        %v5604 = vadd.f32 %v5566, %v5582
        %v5605 = vadd.f32 %v5567, %v5581
        %v5606 = vadd.f32 %v5568, %v5582
        %v5607 = vadd.f32 %v5569, %v5581
        %v5608 = vadd.f32 %v5570, %v5582
        %v5609 = vadd.f32 %v5571, %v5581
        %v5610 = vadd.f32 %v5572, %v5582
        %v5611 = vadd.f32 %v5573, %v5581
        %v5612 = vadd.f32 %v5574, %v5582
        %v5613 = vadd.f32 %v5575, %v5581
        %v5614 = vadd.f32 %v5576, %v5582
        %v5615 = vadd.f32 %v5577, %v5581
        %v5616 = vadd.f32 %v5578, %v5582
        %v5617 = vmax.f32 %v5585, 0.0
        %v5618 = vmax.f32 %v5586, 0.0
        %v5619 = vmax.f32 %v5587, 0.0
        %v5620 = vmax.f32 %v5588, 0.0
        %v5621 = vmax.f32 %v5589, 0.0
        %v5622 = vmax.f32 %v5590, 0.0
        %v5623 = vmax.f32 %v5591, 0.0
        %v5624 = vmax.f32 %v5592, 0.0
        %v5625 = vmax.f32 %v5593, 0.0
        %v5626 = vmax.f32 %v5594, 0.0
        %v5627 = vmax.f32 %v5595, 0.0
        %v5628 = vmax.f32 %v5596, 0.0
        %v5629 = vmax.f32 %v5597, 0.0
        %v5630 = vmax.f32 %v5598, 0.0
        %v5631 = vmax.f32 %v5599, 0.0
        %v5632 = vmax.f32 %v5600, 0.0
        %v5633 = vmax.f32 %v5601, 0.0
        %v5634 = vmax.f32 %v5602, 0.0
        %v5635 = vmax.f32 %v5603, 0.0
        %v5636 = vmax.f32 %v5604, 0.0
        %v5637 = vmax.f32 %v5605, 0.0
        %v5638 = vmax.f32 %v5606, 0.0
        %v5639 = vmax.f32 %v5607, 0.0
        %v5640 = vmax.f32 %v5608, 0.0
        %v5641 = vmax.f32 %v5609, 0.0
        %v5642 = vmax.f32 %v5610, 0.0
        %v5643 = vmax.f32 %v5611, 0.0
        %v5644 = vmax.f32 %v5612, 0.0
        %v5645 = vmax.f32 %v5613, 0.0
        %v5646 = vmax.f32 %v5614, 0.0
        %v5647 = vmax.f32 %v5615, 0.0
        %v5648 = vmax.f32 %v5616, 0.0
        %v5649 = vrot.slane %v5617, 2
        %v5650 = vrot.slane %v5618, 2
        %v5651 = vrot.slane %v5619, 2
        %v5652 = vrot.slane %v5620, 2
        %v5653 = vrot.slane %v5621, 2
        %v5654 = vrot.slane %v5622, 2
        %v5655 = vrot.slane %v5623, 2
        %v5656 = vrot.slane %v5624, 2
        %v5657 = vrot.slane %v5625, 2
        %v5658 = vrot.slane %v5626, 2
        %v5659 = vrot.slane %v5627, 2
        %v5660 = vrot.slane %v5628, 2
        %v5661 = vrot.slane %v5629, 2
        %v5662 = vrot.slane %v5630, 2
        %v5663 = vrot.slane %v5631, 2
        %v5664 = vrot.slane %v5632, 2
        %v5665 = vrot.slane %v5633, 2
        %v5666 = vrot.slane %v5634, 2
        %v5667 = vrot.slane %v5635, 2
        %v5668 = vrot.slane %v5636, 2
        %v5669 = vrot.slane %v5637, 2
        %v5670 = vrot.slane %v5638, 2
        %v5671 = vrot.slane %v5639, 2
        %v5672 = vrot.slane %v5640, 2
        %v5673 = vrot.slane %v5641, 2
        %v5674 = vrot.slane %v5642, 2
        %v5675 = vrot.slane %v5643, 2
        %v5676 = vrot.slane %v5644, 2
        %v5677 = vrot.slane %v5645, 2
        %v5678 = vrot.slane %v5646, 2
        %v5679 = vrot.slane %v5647, 2
        %v5680 = vrot.slane %v5648, 2
        %v5681 = vsel %vm4561, %v5677, %v5679
        %v5682 = vsel %vm4561, %v5678, %v5680
        %v5683 = vsel %vm4561, %v5675, %v5677
        %v5684 = vsel %vm4561, %v5676, %v5678
        %v5685 = vsel %vm4561, %v5673, %v5675
        %v5686 = vsel %vm4561, %v5674, %v5676
        %v5687 = vsel %vm4561, %v5671, %v5673
        %v5688 = vsel %vm4561, %v5672, %v5674
        %v5689 = vsel %vm4561, %v5669, %v5671
        %v5690 = vsel %vm4561, %v5670, %v5672
        %v5691 = vsel %vm4561, %v5667, %v5669
        %v5692 = vsel %vm4561, %v5668, %v5670
        %v5693 = vsel %vm4561, %v5665, %v5667
        %v5694 = vsel %vm4561, %v5666, %v5668
        %v5695 = vsel %vm4561, %v5663, %v5665
        %v5696 = vsel %vm4561, %v5664, %v5666
        %v5697 = vsel %vm4561, %v5661, %v5663
        %v5698 = vsel %vm4561, %v5662, %v5664
        %v5699 = vsel %vm4561, %v5659, %v5661
        %v5700 = vsel %vm4561, %v5660, %v5662
        %v5701 = vsel %vm4561, %v5657, %v5659
        %v5702 = vsel %vm4561, %v5658, %v5660
        %v5703 = vsel %vm4561, %v5655, %v5657
        %v5704 = vsel %vm4561, %v5656, %v5658
        %v5705 = vsel %vm4561, %v5653, %v5655
        %v5706 = vsel %vm4561, %v5654, %v5656
        %v5707 = vsel %vm4561, %v5651, %v5653
        %v5708 = vsel %vm4561, %v5652, %v5654
        %v5709 = vsel %vm4561, %v5649, %v5651
        %v5710 = vsel %vm4561, %v5650, %v5652
        %v5711 = vsel %vm4561, %v5679, %v5649
        %v5712 = vsel %vm4561, %v5680, %v5650
        %v5713 = vmax.f32 %v5617, %v5709
        %v5714 = vmax.f32 %v5618, %v5710
        %v5715 = vmax.f32 %v5619, %v5707
        %v5716 = vmax.f32 %v5620, %v5708
        %v5717 = vmax.f32 %v5621, %v5705
        %v5718 = vmax.f32 %v5622, %v5706
        %v5719 = vmax.f32 %v5623, %v5703
        %v5720 = vmax.f32 %v5624, %v5704
        %v5721 = vmax.f32 %v5625, %v5701
        %v5722 = vmax.f32 %v5626, %v5702
        %v5723 = vmax.f32 %v5627, %v5699
        %v5724 = vmax.f32 %v5628, %v5700
        %v5725 = vmax.f32 %v5629, %v5697
        %v5726 = vmax.f32 %v5630, %v5698
        %v5727 = vmax.f32 %v5631, %v5695
        %v5728 = vmax.f32 %v5632, %v5696
        %v5729 = vmax.f32 %v5633, %v5693
        %v5730 = vmax.f32 %v5634, %v5694
        %v5731 = vmax.f32 %v5635, %v5691
        %v5732 = vmax.f32 %v5636, %v5692
        %v5733 = vmax.f32 %v5637, %v5689
        %v5734 = vmax.f32 %v5638, %v5690
        %v5735 = vmax.f32 %v5639, %v5687
        %v5736 = vmax.f32 %v5640, %v5688
        %v5737 = vmax.f32 %v5641, %v5685
        %v5738 = vmax.f32 %v5642, %v5686
        %v5739 = vmax.f32 %v5643, %v5683
        %v5740 = vmax.f32 %v5644, %v5684
        %v5741 = vmax.f32 %v5645, %v5681
        %v5742 = vmax.f32 %v5646, %v5682
        %v5743 = vmax.f32 %v5647, %v5711
        %v5744 = vmax.f32 %v5648, %v5712
        %5745 = vrot.lane.b32.xlu0 %v5713, 96
        %v5746 = vpop.permute.xlu0 %5745
        %5747 = vrot.lane.b32.xlu0 %v5715, 96
        %v5748 = vpop.permute.xlu0 %5747
        %5749 = vrot.lane.b32.xlu0 %v5717, 96
        %v5750 = vpop.permute.xlu0 %5749
        %5751 = vrot.lane.b32.xlu0 %v5719, 96
        %v5752 = vpop.permute.xlu0 %5751
        %5753 = vrot.lane.b32.xlu0 %v5721, 96
        %v5754 = vpop.permute.xlu0 %5753
        %5755 = vrot.lane.b32.xlu0 %v5723, 96
        %v5756 = vpop.permute.xlu0 %5755
        %5757 = vrot.lane.b32.xlu0 %v5725, 96
        %v5758 = vpop.permute.xlu0 %5757
        %5759 = vrot.lane.b32.xlu0 %v5727, 96
        %v5760 = vpop.permute.xlu0 %5759
        %5761 = vrot.lane.b32.xlu0 %v5729, 96
        %v5762 = vpop.permute.xlu0 %5761
        %5763 = vrot.lane.b32.xlu0 %v5731, 96
        %v5764 = vpop.permute.xlu0 %5763
        %5765 = vrot.lane.b32.xlu0 %v5733, 96
        %v5766 = vpop.permute.xlu0 %5765
        %5767 = vrot.lane.b32.xlu0 %v5735, 96
        %v5768 = vpop.permute.xlu0 %5767
        %5769 = vrot.lane.b32.xlu0 %v5737, 96
        %v5770 = vpop.permute.xlu0 %5769
        %5771 = vrot.lane.b32.xlu0 %v5739, 96
        %v5772 = vpop.permute.xlu0 %5771
        %5773 = vrot.lane.b32.xlu0 %v5741, 96
        %v5774 = vpop.permute.xlu0 %5773
        %5775 = vrot.lane.b32.xlu0 %v5743, 96
        %v5776 = vpop.permute.xlu0 %5775
        %5777 = vrot.lane.b32.xlu0 %v5714, 96
        %v5778 = vpop.permute.xlu0 %5777
        %5779 = vrot.lane.b32.xlu0 %v5716, 96
        %v5780 = vpop.permute.xlu0 %5779
        %5781 = vrot.lane.b32.xlu0 %v5718, 96
        %v5782 = vpop.permute.xlu0 %5781
        %5783 = vrot.lane.b32.xlu0 %v5720, 96
        %v5784 = vpop.permute.xlu0 %5783
        %5785 = vrot.lane.b32.xlu0 %v5722, 96
        %v5786 = vpop.permute.xlu0 %5785
        %5787 = vrot.lane.b32.xlu0 %v5724, 96
        %v5788 = vpop.permute.xlu0 %5787
        %5789 = vrot.lane.b32.xlu0 %v5726, 96
        %v5790 = vpop.permute.xlu0 %5789
        %5791 = vrot.lane.b32.xlu0 %v5728, 96
        %v5792 = vpop.permute.xlu0 %5791
        %5793 = vrot.lane.b32.xlu0 %v5730, 96
        %v5794 = vpop.permute.xlu0 %5793
        %5795 = vrot.lane.b32.xlu0 %v5732, 96
        %v5796 = vpop.permute.xlu0 %5795
        %5797 = vrot.lane.b32.xlu0 %v5734, 96
        %v5798 = vpop.permute.xlu0 %5797
        %5799 = vrot.lane.b32.xlu0 %v5736, 96
        %v5800 = vpop.permute.xlu0 %5799
        %5801 = vrot.lane.b32.xlu0 %v5738, 96
        %v5802 = vpop.permute.xlu0 %5801
        %5803 = vrot.lane.b32.xlu0 %v5740, 96
        %v5804 = vpop.permute.xlu0 %5803
        %5805 = vrot.lane.b32.xlu0 %v5742, 96
        %v5806 = vpop.permute.xlu0 %5805
        %5807 = vrot.lane.b32.xlu0 %v5744, 96
        %v5808 = vpop.permute.xlu0 %5807
        %v5809 = vsel %vm2510, %v5746, %v5778
        %v5810 = vsel %vm2510, %v5748, %v5780
        %v5811 = vsel %vm2510, %v5750, %v5782
        %v5812 = vsel %vm2510, %v5752, %v5784
        %v5813 = vsel %vm2510, %v5754, %v5786
        %v5814 = vsel %vm2510, %v5756, %v5788
        %v5815 = vsel %vm2510, %v5758, %v5790
        %v5816 = vsel %vm2510, %v5760, %v5792
        %v5817 = vsel %vm2510, %v5762, %v5794
        %v5818 = vsel %vm2510, %v5764, %v5796
        %v5819 = vsel %vm2510, %v5766, %v5798
        %v5820 = vsel %vm2510, %v5768, %v5800
        %v5821 = vsel %vm2510, %v5770, %v5802
        %v5822 = vsel %vm2510, %v5772, %v5804
        %v5823 = vsel %vm2510, %v5774, %v5806
        %v5824 = vsel %vm2510, %v5776, %v5808
        %v5825 = vsel %vm2510, %v5778, %v5746
        %v5826 = vsel %vm2510, %v5780, %v5748
        %v5827 = vsel %vm2510, %v5782, %v5750
        %v5828 = vsel %vm2510, %v5784, %v5752
        %v5829 = vsel %vm2510, %v5786, %v5754
        %v5830 = vsel %vm2510, %v5788, %v5756
        %v5831 = vsel %vm2510, %v5790, %v5758
        %v5832 = vsel %vm2510, %v5792, %v5760
        %v5833 = vsel %vm2510, %v5794, %v5762
        %v5834 = vsel %vm2510, %v5796, %v5764
        %v5835 = vsel %vm2510, %v5798, %v5766
        %v5836 = vsel %vm2510, %v5800, %v5768
        %v5837 = vsel %vm2510, %v5802, %v5770
        %v5838 = vsel %vm2510, %v5804, %v5772
        %v5839 = vsel %vm2510, %v5806, %v5774
        %v5840 = vsel %vm2510, %v5808, %v5776
        %v5841 = vmax.f32 %v5713, %v5809
        %v5842 = vmax.f32 %v5714, %v5825
        %v5843 = vmax.f32 %v5715, %v5810
        %v5844 = vmax.f32 %v5716, %v5826
        %v5845 = vmax.f32 %v5717, %v5811
        %v5846 = vmax.f32 %v5718, %v5827
        %v5847 = vmax.f32 %v5719, %v5812
        %v5848 = vmax.f32 %v5720, %v5828
        %v5849 = vmax.f32 %v5721, %v5813
        %v5850 = vmax.f32 %v5722, %v5829
        %v5851 = vmax.f32 %v5723, %v5814
        %v5852 = vmax.f32 %v5724, %v5830
        %v5853 = vmax.f32 %v5725, %v5815
        %v5854 = vmax.f32 %v5726, %v5831
        %v5855 = vmax.f32 %v5727, %v5816
        %v5856 = vmax.f32 %v5728, %v5832
        %v5857 = vmax.f32 %v5729, %v5817
        %v5858 = vmax.f32 %v5730, %v5833
        %v5859 = vmax.f32 %v5731, %v5818
        %v5860 = vmax.f32 %v5732, %v5834
        %v5861 = vmax.f32 %v5733, %v5819
        %v5862 = vmax.f32 %v5734, %v5835
        %v5863 = vmax.f32 %v5735, %v5820
        %v5864 = vmax.f32 %v5736, %v5836
        %v5865 = vmax.f32 %v5737, %v5821
        %v5866 = vmax.f32 %v5738, %v5837
        %v5867 = vmax.f32 %v5739, %v5822
        %v5868 = vmax.f32 %v5740, %v5838
        %v5869 = vmax.f32 %v5741, %v5823
        %v5870 = vmax.f32 %v5742, %v5839
        %v5871 = vmax.f32 %v5743, %v5824
        %v5872 = vmax.f32 %v5744, %v5840
        %v5873 = vrot.slane %v5841, 4
        %v5874 = vrot.slane %v5842, 4
        %v5875 = vrot.slane %v5843, 4
        %v5876 = vrot.slane %v5844, 4
        %v5877 = vrot.slane %v5845, 4
        %v5878 = vrot.slane %v5846, 4
        %v5879 = vrot.slane %v5847, 4
        %v5880 = vrot.slane %v5848, 4
        %v5881 = vrot.slane %v5849, 4
        %v5882 = vrot.slane %v5850, 4
        %v5883 = vrot.slane %v5851, 4
        %v5884 = vrot.slane %v5852, 4
        %v5885 = vrot.slane %v5853, 4
        %v5886 = vrot.slane %v5854, 4
        %v5887 = vrot.slane %v5855, 4
        %v5888 = vrot.slane %v5856, 4
        %v5889 = vrot.slane %v5857, 4
        %v5890 = vrot.slane %v5858, 4
        %v5891 = vrot.slane %v5859, 4
        %v5892 = vrot.slane %v5860, 4
        %v5893 = vrot.slane %v5861, 4
        %v5894 = vrot.slane %v5862, 4
        %v5895 = vrot.slane %v5863, 4
        %v5896 = vrot.slane %v5864, 4
        %v5897 = vrot.slane %v5865, 4
        %v5898 = vrot.slane %v5866, 4
        %v5899 = vrot.slane %v5867, 4
        %v5900 = vrot.slane %v5868, 4
        %v5901 = vrot.slane %v5869, 4
        %v5902 = vrot.slane %v5870, 4
        %v5903 = vrot.slane %v5871, 4
        %v5904 = vrot.slane %v5872, 4
        %vm5905 = vcmp.lt.s32.totalorder %v617, 4
        %v5906 = vsel %vm5905, %v5901, %v5903
        %v5907 = vsel %vm5905, %v5902, %v5904
        %v5908 = vsel %vm5905, %v5899, %v5901
        %v5909 = vsel %vm5905, %v5900, %v5902
        %v5910 = vsel %vm5905, %v5897, %v5899
        %v5911 = vsel %vm5905, %v5898, %v5900
        %v5912 = vsel %vm5905, %v5895, %v5897
        %v5913 = vsel %vm5905, %v5896, %v5898
        %v5914 = vsel %vm5905, %v5893, %v5895
        %v5915 = vsel %vm5905, %v5894, %v5896
        %v5916 = vsel %vm5905, %v5891, %v5893
        %v5917 = vsel %vm5905, %v5892, %v5894
        %v5918 = vsel %vm5905, %v5889, %v5891
        %v5919 = vsel %vm5905, %v5890, %v5892
        %v5920 = vsel %vm5905, %v5887, %v5889
        %v5921 = vsel %vm5905, %v5888, %v5890
        %v5922 = vsel %vm5905, %v5885, %v5887
        %v5923 = vsel %vm5905, %v5886, %v5888
        %v5924 = vsel %vm5905, %v5883, %v5885
        %v5925 = vsel %vm5905, %v5884, %v5886
        %v5926 = vsel %vm5905, %v5881, %v5883
        %v5927 = vsel %vm5905, %v5882, %v5884
        %v5928 = vsel %vm5905, %v5879, %v5881
        %v5929 = vsel %vm5905, %v5880, %v5882
        %v5930 = vsel %vm5905, %v5877, %v5879
        %v5931 = vsel %vm5905, %v5878, %v5880
        %v5932 = vsel %vm5905, %v5875, %v5877
        %v5933 = vsel %vm5905, %v5876, %v5878
        %v5934 = vsel %vm5905, %v5873, %v5875
        %v5935 = vsel %vm5905, %v5874, %v5876
        %v5936 = vsel %vm5905, %v5903, %v5873
        %v5937 = vsel %vm5905, %v5904, %v5874
        %vm5938 = vcmp.ge.s32.totalorder %v809, 4
        %vm5939 = vcmp.ge.s32.totalorder %v810, 4
        %vm5940 = vcmp.ge.s32.totalorder %v811, 4
        %vm5941 = vcmp.ge.s32.totalorder %v812, 4
        %vm5942 = vcmp.ge.s32.totalorder %v813, 4
        %vm5943 = vcmp.ge.s32.totalorder %v814, 4
        %vm5944 = vcmp.ge.s32.totalorder %v815, 4
        %vm5945 = vcmp.ge.s32.totalorder %v816, 4
        %vm5946 = vcmp.ge.s32.totalorder %v817, 4
        %vm5947 = vcmp.ge.s32.totalorder %v818, 4
        %vm5948 = vcmp.ge.s32.totalorder %v819, 4
        %vm5949 = vcmp.ge.s32.totalorder %v820, 4
        %vm5950 = vcmp.ge.s32.totalorder %v821, 4
        %vm5951 = vcmp.ge.s32.totalorder %v822, 4
        %vm5952 = vcmp.ge.s32.totalorder %v823, 4
        %vm5953 = vcmp.ge.s32.totalorder %v824, 4
        %v5954 = vsel %vm5938, 1, 0
        %v5955 = vsel %vm5939, 1, 0
        %v5956 = vsel %vm5940, 1, 0
        %v5957 = vsel %vm5941, 1, 0
        %v5958 = vsel %vm5942, 1, 0
        %v5959 = vsel %vm5943, 1, 0
        %v5960 = vsel %vm5944, 1, 0
        %v5961 = vsel %vm5945, 1, 0
        %v5962 = vsel %vm5946, 1, 0
        %v5963 = vsel %vm5947, 1, 0
        %v5964 = vsel %vm5948, 1, 0
        %v5965 = vsel %vm5949, 1, 0
        %v5966 = vsel %vm5950, 1, 0
        %v5967 = vsel %vm5951, 1, 0
        %v5968 = vsel %vm5952, 1, 0
        %v5969 = vsel %vm5953, 1, 0
        %vm5970 = vcmp.eq.s32.totalorder %v5954, 1
        %vm5971 = vcmp.eq.s32.totalorder %v5955, 1
        %vm5972 = vcmp.eq.s32.totalorder %v5956, 1
        %vm5973 = vcmp.eq.s32.totalorder %v5957, 1
        %vm5974 = vcmp.eq.s32.totalorder %v5958, 1
        %vm5975 = vcmp.eq.s32.totalorder %v5959, 1
        %vm5976 = vcmp.eq.s32.totalorder %v5960, 1
        %vm5977 = vcmp.eq.s32.totalorder %v5961, 1
        %vm5978 = vcmp.eq.s32.totalorder %v5962, 1
        %vm5979 = vcmp.eq.s32.totalorder %v5963, 1
        %vm5980 = vcmp.eq.s32.totalorder %v5964, 1
        %vm5981 = vcmp.eq.s32.totalorder %v5965, 1
        %vm5982 = vcmp.eq.s32.totalorder %v5966, 1
        %vm5983 = vcmp.eq.s32.totalorder %v5967, 1
        %vm5984 = vcmp.eq.s32.totalorder %v5968, 1
        %vm5985 = vcmp.eq.s32.totalorder %v5969, 1
        %v5986 = vsel %vm5970, %v5936, 0.0
        %v5987 = vsel %vm5970, %v5937, 0.0
        %v5988 = vsel %vm5971, %v5934, 0.0
        %v5989 = vsel %vm5971, %v5935, 0.0
        %v5990 = vsel %vm5972, %v5932, 0.0
        %v5991 = vsel %vm5972, %v5933, 0.0
        %v5992 = vsel %vm5973, %v5930, 0.0
        %v5993 = vsel %vm5973, %v5931, 0.0
        %v5994 = vsel %vm5974, %v5928, 0.0
        %v5995 = vsel %vm5974, %v5929, 0.0
        %v5996 = vsel %vm5975, %v5926, 0.0
        %v5997 = vsel %vm5975, %v5927, 0.0
        %v5998 = vsel %vm5976, %v5924, 0.0
        %v5999 = vsel %vm5976, %v5925, 0.0
        %v6000 = vsel %vm5977, %v5922, 0.0
        %v6001 = vsel %vm5977, %v5923, 0.0
        %v6002 = vsel %vm5978, %v5920, 0.0
        %v6003 = vsel %vm5978, %v5921, 0.0
        %v6004 = vsel %vm5979, %v5918, 0.0
        %v6005 = vsel %vm5979, %v5919, 0.0
        %v6006 = vsel %vm5980, %v5916, 0.0
        %v6007 = vsel %vm5980, %v5917, 0.0
        %v6008 = vsel %vm5981, %v5914, 0.0
        %v6009 = vsel %vm5981, %v5915, 0.0
        %v6010 = vsel %vm5982, %v5912, 0.0
        %v6011 = vsel %vm5982, %v5913, 0.0
        %v6012 = vsel %vm5983, %v5910, 0.0
        %v6013 = vsel %vm5983, %v5911, 0.0
        %v6014 = vsel %vm5984, %v5908, 0.0
        %v6015 = vsel %vm5984, %v5909, 0.0
        %v6016 = vsel %vm5985, %v5906, 0.0
        %v6017 = vsel %vm5985, %v5907, 0.0
        %v6018 = vpack.c.bf16 %v5988, %v5986
        %v6019 = vpack.c.bf16 %v5989, %v5987
        %v6020 = vpack.c.bf16 %v5992, %v5990
        %v6021 = vpack.c.bf16 %v5993, %v5991
        %v6022 = vpack.c.bf16 %v5996, %v5994
        %v6023 = vpack.c.bf16 %v5997, %v5995
        %v6024 = vpack.c.bf16 %v6000, %v5998
        %v6025 = vpack.c.bf16 %v6001, %v5999
        %v6026 = vpack.c.bf16 %v6004, %v6002
        %v6027 = vpack.c.bf16 %v6005, %v6003
        %v6028 = vpack.c.bf16 %v6008, %v6006
        %v6029 = vpack.c.bf16 %v6009, %v6007
        %v6030 = vpack.c.bf16 %v6012, %v6010
        %v6031 = vpack.c.bf16 %v6013, %v6011
        %v6032 = vpack.c.bf16 %v6016, %v6014
        %v6033 = vpack.c.bf16 %v6017, %v6015
        %v6034 = vld [vmem:[#allocation7] sm:$0xf]
        %v6035 = vld [vmem:[#allocation7 + $0x4] sm:$0xf]
        %v6036 = vld [vmem:[#allocation7 + $0x8] sm:$0xf]
        %v6037 = vld [vmem:[#allocation7 + $0xc] sm:$0xf]
        %v6038 = vld [vmem:[#allocation7 + $0x10] sm:$0xf]
        %v6039 = vld [vmem:[#allocation7 + $0x14] sm:$0xf]
        %v6040 = vld [vmem:[#allocation7 + $0x18] sm:$0xf]
        %v6041 = vld [vmem:[#allocation7 + $0x1c] sm:$0xf]
        %v6042 = vld [vmem:[#allocation7 + $0x20] sm:$0xf]
        %v6043 = vld [vmem:[#allocation7 + $0x24] sm:$0xf]
        %v6044 = vld [vmem:[#allocation7 + $0x28] sm:$0xf]
        %v6045 = vld [vmem:[#allocation7 + $0x2c] sm:$0xf]
        %v6046 = vld [vmem:[#allocation7 + $0x30] sm:$0xf]
        %v6047 = vld [vmem:[#allocation7 + $0x34] sm:$0xf]
        %v6048 = vld [vmem:[#allocation7 + $0x38] sm:$0xf]
        %v6049 = vld [vmem:[#allocation7 + $0x3c] sm:$0xf]
        %v6050 = vld [vmem:[#allocation7 + $0x40] sm:$0xf]
        %v6051 = vld [vmem:[#allocation7 + $0x44] sm:$0xf]
        %v6052 = vld [vmem:[#allocation7 + $0x48] sm:$0xf]
        %v6053 = vld [vmem:[#allocation7 + $0x4c] sm:$0xf]
        %v6054 = vld [vmem:[#allocation7 + $0x50] sm:$0xf]
        %v6055 = vld [vmem:[#allocation7 + $0x54] sm:$0xf]
        %v6056 = vld [vmem:[#allocation7 + $0x58] sm:$0xf]
        %v6057 = vld [vmem:[#allocation7 + $0x5c] sm:$0xf]
        %v6058 = vld [vmem:[#allocation7 + $0x60] sm:$0xf]
        %v6059 = vld [vmem:[#allocation7 + $0x64] sm:$0xf]
        %v6060 = vld [vmem:[#allocation7 + $0x68] sm:$0xf]
        %v6061 = vld [vmem:[#allocation7 + $0x6c] sm:$0xf]
        %v6062 = vld [vmem:[#allocation7 + $0x70] sm:$0xf]
        %v6063 = vld [vmem:[#allocation7 + $0x74] sm:$0xf]
        %v6064 = vld [vmem:[#allocation7 + $0x78] sm:$0xf]
        %v6065 = vld [vmem:[#allocation7 + $0x7c] sm:$0xf]
        %v6066 = vpack.c.bf16 %v5843, %v5841
        %v6067 = vpack.c.bf16 %v5844, %v5842
        %v6068 = vpack.c.bf16 %v5847, %v5845
        %v6069 = vpack.c.bf16 %v5848, %v5846
        %v6070 = vpack.c.bf16 %v5851, %v5849
        %v6071 = vpack.c.bf16 %v5852, %v5850
        %v6072 = vpack.c.bf16 %v5855, %v5853
        %v6073 = vpack.c.bf16 %v5856, %v5854
        %v6074 = vpack.c.bf16 %v5859, %v5857
        %v6075 = vpack.c.bf16 %v5860, %v5858
        %v6076 = vpack.c.bf16 %v5863, %v5861
        %v6077 = vpack.c.bf16 %v5864, %v5862
        %v6078 = vpack.c.bf16 %v5867, %v5865
        %v6079 = vpack.c.bf16 %v5868, %v5866
        %v6080 = vpack.c.bf16 %v5871, %v5869
        %v6081 = vpack.c.bf16 %v5872, %v5870
        %s6082 = scalar_lea.vmem [#allocation7], 128
        %v6083 = vld [vmem:[%s6082] sm:$0xf]
        %v6084 = vld [vmem:[%s6082 + $0x4] sm:$0xf]
        %v6085 = vld [vmem:[%s6082 + $0x8] sm:$0xf]
        %v6086 = vld [vmem:[%s6082 + $0xc] sm:$0xf]
        %v6087 = vld [vmem:[%s6082 + $0x10] sm:$0xf]
        %v6088 = vld [vmem:[%s6082 + $0x14] sm:$0xf]
        %v6089 = vld [vmem:[%s6082 + $0x18] sm:$0xf]
        %v6090 = vld [vmem:[%s6082 + $0x1c] sm:$0xf]
        %v6091 = vld [vmem:[%s6082 + $0x20] sm:$0xf]
        %v6092 = vld [vmem:[%s6082 + $0x24] sm:$0xf]
        %v6093 = vld [vmem:[%s6082 + $0x28] sm:$0xf]
        %v6094 = vld [vmem:[%s6082 + $0x2c] sm:$0xf]
        %v6095 = vld [vmem:[%s6082 + $0x30] sm:$0xf]
        %v6096 = vld [vmem:[%s6082 + $0x34] sm:$0xf]
        %v6097 = vld [vmem:[%s6082 + $0x38] sm:$0xf]
        %v6098 = vld [vmem:[%s6082 + $0x3c] sm:$0xf]
        %v6099 = vld [vmem:[%s6082 + $0x40] sm:$0xf]
        %v6100 = vld [vmem:[%s6082 + $0x44] sm:$0xf]
        %v6101 = vld [vmem:[%s6082 + $0x48] sm:$0xf]
        %v6102 = vld [vmem:[%s6082 + $0x4c] sm:$0xf]
        %v6103 = vld [vmem:[%s6082 + $0x50] sm:$0xf]
        %v6104 = vld [vmem:[%s6082 + $0x54] sm:$0xf]
        %v6105 = vld [vmem:[%s6082 + $0x58] sm:$0xf]
        %v6106 = vld [vmem:[%s6082 + $0x5c] sm:$0xf]
        %v6107 = vld [vmem:[%s6082 + $0x60] sm:$0xf]
        %v6108 = vld [vmem:[%s6082 + $0x64] sm:$0xf]
        %v6109 = vld [vmem:[%s6082 + $0x68] sm:$0xf]
        %v6110 = vld [vmem:[%s6082 + $0x6c] sm:$0xf]
        %v6111 = vld [vmem:[%s6082 + $0x70] sm:$0xf]
        %v6112 = vld [vmem:[%s6082 + $0x74] sm:$0xf]
        %v6113 = vld [vmem:[%s6082 + $0x78] sm:$0xf]
        %v6114 = vld [vmem:[%s6082 + $0x7c] sm:$0xf]
        %v6147 = vunpack.c.l.b16 %v6083
        %v6148 = vunpack.c.l.b16 %v6084
        %v6149 = vunpack.c.l.b16 %v6085
        %v6150 = vunpack.c.l.b16 %v6086
        %v6151 = vunpack.c.l.b16 %v6087
        %v6152 = vunpack.c.l.b16 %v6088
        %v6153 = vunpack.c.l.b16 %v6089
        %v6154 = vunpack.c.l.b16 %v6090
        %v6155 = vunpack.c.l.b16 %v6091
        %v6156 = vunpack.c.l.b16 %v6092
        %v6157 = vunpack.c.l.b16 %v6093
        %v6158 = vunpack.c.l.b16 %v6094
        %v6159 = vunpack.c.l.b16 %v6095
        %v6160 = vunpack.c.l.b16 %v6096
        %v6161 = vunpack.c.l.b16 %v6097
        %v6162 = vunpack.c.l.b16 %v6098
        %v6163 = vunpack.c.l.b16 %v6099
        %v6164 = vunpack.c.l.b16 %v6100
        %v6165 = vunpack.c.l.b16 %v6101
        %v6166 = vunpack.c.l.b16 %v6102
        %v6167 = vunpack.c.l.b16 %v6103
        %v6168 = vunpack.c.l.b16 %v6104
        %v6169 = vunpack.c.l.b16 %v6105
        %v6170 = vunpack.c.l.b16 %v6106
        %v6171 = vunpack.c.l.b16 %v6107
        %v6172 = vunpack.c.l.b16 %v6108
        %v6173 = vunpack.c.l.b16 %v6109
        %v6174 = vunpack.c.l.b16 %v6110
        %v6175 = vunpack.c.l.b16 %v6111
        %v6176 = vunpack.c.l.b16 %v6112
        %v6177 = vunpack.c.l.b16 %v6113
        %v6178 = vunpack.c.l.b16 %v6114
        %v6179 = vpack.c.b16 %v6148, %v6147
        %v6180 = vpack.c.b16 %v6150, %v6149
        %v6181 = vpack.c.b16 %v6152, %v6151
        %v6182 = vpack.c.b16 %v6154, %v6153
        %v6183 = vpack.c.b16 %v6156, %v6155
        %v6184 = vpack.c.b16 %v6158, %v6157
        %v6185 = vpack.c.b16 %v6160, %v6159
        %v6186 = vpack.c.b16 %v6162, %v6161
        %v6187 = vpack.c.b16 %v6164, %v6163
        %v6188 = vpack.c.b16 %v6166, %v6165
        %v6189 = vpack.c.b16 %v6168, %v6167
        %v6190 = vpack.c.b16 %v6170, %v6169
        %v6191 = vpack.c.b16 %v6172, %v6171
        %v6192 = vpack.c.b16 %v6174, %v6173
        %v6193 = vpack.c.b16 %v6176, %v6175
        %v6194 = vpack.c.b16 %v6178, %v6177
        %6211 = vmatpush.bf16.msra.mxu0 %v6186
        %6212 = vmatpush.bf16.msra.mxu0 %v6185
        %6213 = vmatpush.bf16.msra.mxu0 %v6184
        %6214 = vmatpush.bf16.msra.mxu0 %v6183
        %6215 = vmatpush.bf16.msra.mxu0 %v6182
        %6216 = vmatpush.bf16.msra.mxu0 %v6181
        %6217 = vmatpush.bf16.msra.mxu0 %v6180
        %6218 = vmatpush.bf16.msra.mxu0 %v6179
        %6219 = vmatmul.bf16.gmra.mxu0 %v6066
        %v6220 = vpop.f32.mrf.mxu0
        %v6221 = vadd.f32 0.0, %v6220
        %v6222 = vpop.f32.mrf.mxu0
        %v6223 = vadd.f32 0.0, %v6222
        %6224 = vmatmul.bf16.gmra.mxu0 %v6068
        %v6225 = vpop.f32.mrf.mxu0
        %v6226 = vadd.f32 0.0, %v6225
        %v6227 = vpop.f32.mrf.mxu0
        %v6228 = vadd.f32 0.0, %v6227
        %6229 = vmatmul.bf16.gmra.mxu0 %v6070
        %v6230 = vpop.f32.mrf.mxu0
        %v6231 = vadd.f32 0.0, %v6230
        %v6232 = vpop.f32.mrf.mxu0
        %v6233 = vadd.f32 0.0, %v6232
        %6234 = vmatmul.bf16.gmra.mxu0 %v6072
        %v6235 = vpop.f32.mrf.mxu0
        %v6236 = vadd.f32 0.0, %v6235
        %v6237 = vpop.f32.mrf.mxu0
        %v6238 = vadd.f32 0.0, %v6237
        %6239 = vmatmul.bf16.gmra.mxu0 %v6074
        %v6240 = vpop.f32.mrf.mxu0
        %v6241 = vadd.f32 0.0, %v6240
        %v6242 = vpop.f32.mrf.mxu0
        %v6243 = vadd.f32 0.0, %v6242
        %6244 = vmatmul.bf16.gmra.mxu0 %v6076
        %v6245 = vpop.f32.mrf.mxu0
        %v6246 = vadd.f32 0.0, %v6245
        %v6247 = vpop.f32.mrf.mxu0
        %v6248 = vadd.f32 0.0, %v6247
        %6249 = vmatmul.bf16.gmra.mxu0 %v6078
        %v6250 = vpop.f32.mrf.mxu0
        %v6251 = vadd.f32 0.0, %v6250
        %v6252 = vpop.f32.mrf.mxu0
        %v6253 = vadd.f32 0.0, %v6252
        %6254 = vmatmul.bf16.gmra.mxu0 %v6080
        %v6255 = vpop.f32.mrf.mxu0
        %v6256 = vadd.f32 0.0, %v6255
        %v6257 = vpop.f32.mrf.mxu0
        %v6258 = vadd.f32 0.0, %v6257
        %6259 = vdwg.mxu0
        %6260 = vmatpush.bf16.msra.mxu0 %v6194
        %6261 = vmatpush.bf16.msra.mxu0 %v6193
        %6262 = vmatpush.bf16.msra.mxu0 %v6192
        %6263 = vmatpush.bf16.msra.mxu0 %v6191
        %6264 = vmatpush.bf16.msra.mxu0 %v6190
        %6265 = vmatpush.bf16.msra.mxu0 %v6189
        %6266 = vmatpush.bf16.msra.mxu0 %v6188
        %6267 = vmatpush.bf16.msra.mxu0 %v6187
        %6268 = vmatmul.bf16.gmra.mxu0 %v6067
        %v6269 = vpop.f32.mrf.mxu0
        %v6270 = vadd.f32 %v6221, %v6269
        %v6271 = vpop.f32.mrf.mxu0
        %v6272 = vadd.f32 %v6223, %v6271
        %6273 = vmatmul.bf16.gmra.mxu0 %v6069
        %v6274 = vpop.f32.mrf.mxu0
        %v6275 = vadd.f32 %v6226, %v6274
        %v6276 = vpop.f32.mrf.mxu0
        %v6277 = vadd.f32 %v6228, %v6276
        %6278 = vmatmul.bf16.gmra.mxu0 %v6071
        %v6279 = vpop.f32.mrf.mxu0
        %v6280 = vadd.f32 %v6231, %v6279
        %v6281 = vpop.f32.mrf.mxu0
        %v6282 = vadd.f32 %v6233, %v6281
        %6283 = vmatmul.bf16.gmra.mxu0 %v6073
        %v6284 = vpop.f32.mrf.mxu0
        %v6285 = vadd.f32 %v6236, %v6284
        %v6286 = vpop.f32.mrf.mxu0
        %v6287 = vadd.f32 %v6238, %v6286
        %6288 = vmatmul.bf16.gmra.mxu0 %v6075
        %v6289 = vpop.f32.mrf.mxu0
        %v6290 = vadd.f32 %v6241, %v6289
        %v6291 = vpop.f32.mrf.mxu0
        %v6292 = vadd.f32 %v6243, %v6291
        %6293 = vmatmul.bf16.gmra.mxu0 %v6077
        %v6294 = vpop.f32.mrf.mxu0
        %v6295 = vadd.f32 %v6246, %v6294
        %v6296 = vpop.f32.mrf.mxu0
        %v6297 = vadd.f32 %v6248, %v6296
        %6298 = vmatmul.bf16.gmra.mxu0 %v6079
        %v6299 = vpop.f32.mrf.mxu0
        %v6300 = vadd.f32 %v6251, %v6299
        %v6301 = vpop.f32.mrf.mxu0
        %v6302 = vadd.f32 %v6253, %v6301
        %6303 = vmatmul.bf16.gmra.mxu0 %v6081
        %v6304 = vpop.f32.mrf.mxu0
        %v6305 = vadd.f32 %v6256, %v6304
        %v6306 = vpop.f32.mrf.mxu0
        %v6307 = vadd.f32 %v6258, %v6306
        %6308 = vdwg.mxu0
        %v6341 = vunpack.c.l.b16 %v6034
        %v6342 = vunpack.c.l.b16 %v6035
        %v6343 = vunpack.c.l.b16 %v6036
        %v6344 = vunpack.c.l.b16 %v6037
        %v6345 = vunpack.c.l.b16 %v6038
        %v6346 = vunpack.c.l.b16 %v6039
        %v6347 = vunpack.c.l.b16 %v6040
        %v6348 = vunpack.c.l.b16 %v6041
        %v6349 = vunpack.c.l.b16 %v6042
        %v6350 = vunpack.c.l.b16 %v6043
        %v6351 = vunpack.c.l.b16 %v6044
        %v6352 = vunpack.c.l.b16 %v6045
        %v6353 = vunpack.c.l.b16 %v6046
        %v6354 = vunpack.c.l.b16 %v6047
        %v6355 = vunpack.c.l.b16 %v6048
        %v6356 = vunpack.c.l.b16 %v6049
        %v6357 = vunpack.c.l.b16 %v6050
        %v6358 = vunpack.c.l.b16 %v6051
        %v6359 = vunpack.c.l.b16 %v6052
        %v6360 = vunpack.c.l.b16 %v6053
        %v6361 = vunpack.c.l.b16 %v6054
        %v6362 = vunpack.c.l.b16 %v6055
        %v6363 = vunpack.c.l.b16 %v6056
        %v6364 = vunpack.c.l.b16 %v6057
        %v6365 = vunpack.c.l.b16 %v6058
        %v6366 = vunpack.c.l.b16 %v6059
        %v6367 = vunpack.c.l.b16 %v6060
        %v6368 = vunpack.c.l.b16 %v6061
        %v6369 = vunpack.c.l.b16 %v6062
        %v6370 = vunpack.c.l.b16 %v6063
        %v6371 = vunpack.c.l.b16 %v6064
        %v6372 = vunpack.c.l.b16 %v6065
        %v6373 = vpack.c.b16 %v6342, %v6341
        %v6374 = vpack.c.b16 %v6344, %v6343
        %v6375 = vpack.c.b16 %v6346, %v6345
        %v6376 = vpack.c.b16 %v6348, %v6347
        %v6377 = vpack.c.b16 %v6350, %v6349
        %v6378 = vpack.c.b16 %v6352, %v6351
        %v6379 = vpack.c.b16 %v6354, %v6353
        %v6380 = vpack.c.b16 %v6356, %v6355
        %v6381 = vpack.c.b16 %v6358, %v6357
        %v6382 = vpack.c.b16 %v6360, %v6359
        %v6383 = vpack.c.b16 %v6362, %v6361
        %v6384 = vpack.c.b16 %v6364, %v6363
        %v6385 = vpack.c.b16 %v6366, %v6365
        %v6386 = vpack.c.b16 %v6368, %v6367
        %v6387 = vpack.c.b16 %v6370, %v6369
        %v6388 = vpack.c.b16 %v6372, %v6371
        %6405 = vmatpush.bf16.msra.mxu0 %v6380
        %6406 = vmatpush.bf16.msra.mxu0 %v6379
        %6407 = vmatpush.bf16.msra.mxu0 %v6378
        %6408 = vmatpush.bf16.msra.mxu0 %v6377
        %6409 = vmatpush.bf16.msra.mxu0 %v6376
        %6410 = vmatpush.bf16.msra.mxu0 %v6375
        %6411 = vmatpush.bf16.msra.mxu0 %v6374
        %6412 = vmatpush.bf16.msra.mxu0 %v6373
        %6413 = vmatmul.bf16.gmra.mxu0 %v6018
        %v6414 = vpop.f32.mrf.mxu0
        %v6415 = vadd.f32 %v6270, %v6414
        %v6416 = vpop.f32.mrf.mxu0
        %v6417 = vadd.f32 %v6272, %v6416
        %6418 = vmatmul.bf16.gmra.mxu0 %v6020
        %v6419 = vpop.f32.mrf.mxu0
        %v6420 = vadd.f32 %v6275, %v6419
        %v6421 = vpop.f32.mrf.mxu0
        %v6422 = vadd.f32 %v6277, %v6421
        %6423 = vmatmul.bf16.gmra.mxu0 %v6022
        %v6424 = vpop.f32.mrf.mxu0
        %v6425 = vadd.f32 %v6280, %v6424
        %v6426 = vpop.f32.mrf.mxu0
        %v6427 = vadd.f32 %v6282, %v6426
        %6428 = vmatmul.bf16.gmra.mxu0 %v6024
        %v6429 = vpop.f32.mrf.mxu0
        %v6430 = vadd.f32 %v6285, %v6429
        %v6431 = vpop.f32.mrf.mxu0
        %v6432 = vadd.f32 %v6287, %v6431
        %6433 = vmatmul.bf16.gmra.mxu0 %v6026
        %v6434 = vpop.f32.mrf.mxu0
        %v6435 = vadd.f32 %v6290, %v6434
        %v6436 = vpop.f32.mrf.mxu0
        %v6437 = vadd.f32 %v6292, %v6436
        %6438 = vmatmul.bf16.gmra.mxu0 %v6028
        %v6439 = vpop.f32.mrf.mxu0
        %v6440 = vadd.f32 %v6295, %v6439
        %v6441 = vpop.f32.mrf.mxu0
        %v6442 = vadd.f32 %v6297, %v6441
        %6443 = vmatmul.bf16.gmra.mxu0 %v6030
        %v6444 = vpop.f32.mrf.mxu0
        %v6445 = vadd.f32 %v6300, %v6444
        %v6446 = vpop.f32.mrf.mxu0
        %v6447 = vadd.f32 %v6302, %v6446
        %6448 = vmatmul.bf16.gmra.mxu0 %v6032
        %v6449 = vpop.f32.mrf.mxu0
        %v6450 = vadd.f32 %v6305, %v6449
        %v6451 = vpop.f32.mrf.mxu0
        %v6452 = vadd.f32 %v6307, %v6451
        %6453 = vdwg.mxu0
        %6454 = vmatpush.bf16.msra.mxu0 %v6388
        %6455 = vmatpush.bf16.msra.mxu0 %v6387
        %6456 = vmatpush.bf16.msra.mxu0 %v6386
        %6457 = vmatpush.bf16.msra.mxu0 %v6385
        %6458 = vmatpush.bf16.msra.mxu0 %v6384
        %6459 = vmatpush.bf16.msra.mxu0 %v6383
        %6460 = vmatpush.bf16.msra.mxu0 %v6382
        %6461 = vmatpush.bf16.msra.mxu0 %v6381
        %6462 = vmatmul.bf16.gmra.mxu0 %v6019
        %v6463 = vpop.f32.mrf.mxu0
        %v6464 = vadd.f32 %v6415, %v6463
        %v6465 = vpop.f32.mrf.mxu0
        %v6466 = vadd.f32 %v6417, %v6465
        %6467 = vmatmul.bf16.gmra.mxu0 %v6021
        %v6468 = vpop.f32.mrf.mxu0
        %v6469 = vadd.f32 %v6420, %v6468
        %v6470 = vpop.f32.mrf.mxu0
        %v6471 = vadd.f32 %v6422, %v6470
        %6472 = vmatmul.bf16.gmra.mxu0 %v6023
        %v6473 = vpop.f32.mrf.mxu0
        %v6474 = vadd.f32 %v6425, %v6473
        %v6475 = vpop.f32.mrf.mxu0
        %v6476 = vadd.f32 %v6427, %v6475
        %6477 = vmatmul.bf16.gmra.mxu0 %v6025
        %v6478 = vpop.f32.mrf.mxu0
        %v6479 = vadd.f32 %v6430, %v6478
        %v6480 = vpop.f32.mrf.mxu0
        %v6481 = vadd.f32 %v6432, %v6480
        %6482 = vmatmul.bf16.gmra.mxu0 %v6027
        %v6483 = vpop.f32.mrf.mxu0
        %v6484 = vadd.f32 %v6435, %v6483
        %v6485 = vpop.f32.mrf.mxu0
        %v6486 = vadd.f32 %v6437, %v6485
        %6487 = vmatmul.bf16.gmra.mxu0 %v6029
        %v6488 = vpop.f32.mrf.mxu0
        %v6489 = vadd.f32 %v6440, %v6488
        %v6490 = vpop.f32.mrf.mxu0
        %v6491 = vadd.f32 %v6442, %v6490
        %6492 = vmatmul.bf16.gmra.mxu0 %v6031
        %v6493 = vpop.f32.mrf.mxu0
        %v6494 = vadd.f32 %v6445, %v6493
        %v6495 = vpop.f32.mrf.mxu0
        %v6496 = vadd.f32 %v6447, %v6495
        %6497 = vmatmul.bf16.gmra.mxu0 %v6033
        %v6498 = vpop.f32.mrf.mxu0
        %v6499 = vadd.f32 %v6450, %v6498
        %v6500 = vpop.f32.mrf.mxu0
        %v6501 = vadd.f32 %v6452, %v6500
        %6502 = vdwg.mxu0
        %vm6503 = vcmp.lt.s32.totalorder %v809, 12
        %vm6504 = vcmp.lt.s32.totalorder %v810, 12
        %vm6505 = vcmp.lt.s32.totalorder %v811, 12
        %vm6506 = vcmp.lt.s32.totalorder %v812, 12
        %vm6507 = vcmp.lt.s32.totalorder %v813, 12
        %vm6508 = vcmp.lt.s32.totalorder %v814, 12
        %vm6509 = vcmp.lt.s32.totalorder %v815, 12
        %vm6510 = vcmp.lt.s32.totalorder %v816, 12
        %vm6511 = vcmp.lt.s32.totalorder %v817, 12
        %vm6512 = vcmp.lt.s32.totalorder %v818, 12
        %vm6513 = vcmp.lt.s32.totalorder %v819, 12
        %vm6514 = vcmp.lt.s32.totalorder %v820, 12
        %vm6515 = vcmp.lt.s32.totalorder %v821, 12
        %vm6516 = vcmp.lt.s32.totalorder %v822, 12
        %vm6517 = vcmp.lt.s32.totalorder %v823, 12
        %vm6518 = vcmp.lt.s32.totalorder %v824, 12
        %v6519 = vsel %vm6503, 1, 0
        %v6520 = vsel %vm6504, 1, 0
        %v6521 = vsel %vm6505, 1, 0
        %v6522 = vsel %vm6506, 1, 0
        %v6523 = vsel %vm6507, 1, 0
        %v6524 = vsel %vm6508, 1, 0
        %v6525 = vsel %vm6509, 1, 0
        %v6526 = vsel %vm6510, 1, 0
        %v6527 = vsel %vm6511, 1, 0
        %v6528 = vsel %vm6512, 1, 0
        %v6529 = vsel %vm6513, 1, 0
        %v6530 = vsel %vm6514, 1, 0
        %v6531 = vsel %vm6515, 1, 0
        %v6532 = vsel %vm6516, 1, 0
        %v6533 = vsel %vm6517, 1, 0
        %v6534 = vsel %vm6518, 1, 0
        %vm6535 = vcmp.eq.s32.totalorder %v6519, 1
        %vm6536 = vcmp.eq.s32.totalorder %v6520, 1
        %vm6537 = vcmp.eq.s32.totalorder %v6521, 1
        %vm6538 = vcmp.eq.s32.totalorder %v6522, 1
        %vm6539 = vcmp.eq.s32.totalorder %v6523, 1
        %vm6540 = vcmp.eq.s32.totalorder %v6524, 1
        %vm6541 = vcmp.eq.s32.totalorder %v6525, 1
        %vm6542 = vcmp.eq.s32.totalorder %v6526, 1
        %vm6543 = vcmp.eq.s32.totalorder %v6527, 1
        %vm6544 = vcmp.eq.s32.totalorder %v6528, 1
        %vm6545 = vcmp.eq.s32.totalorder %v6529, 1
        %vm6546 = vcmp.eq.s32.totalorder %v6530, 1
        %vm6547 = vcmp.eq.s32.totalorder %v6531, 1
        %vm6548 = vcmp.eq.s32.totalorder %v6532, 1
        %vm6549 = vcmp.eq.s32.totalorder %v6533, 1
        %vm6550 = vcmp.eq.s32.totalorder %v6534, 1
        %v6551 = vsel %vm6535, %v5934, 0.0
        %v6552 = vsel %vm6535, %v5935, 0.0
        %v6553 = vsel %vm6536, %v5932, 0.0
        %v6554 = vsel %vm6536, %v5933, 0.0
        %v6555 = vsel %vm6537, %v5930, 0.0
        %v6556 = vsel %vm6537, %v5931, 0.0
        %v6557 = vsel %vm6538, %v5928, 0.0
        %v6558 = vsel %vm6538, %v5929, 0.0
        %v6559 = vsel %vm6539, %v5926, 0.0
        %v6560 = vsel %vm6539, %v5927, 0.0
        %v6561 = vsel %vm6540, %v5924, 0.0
        %v6562 = vsel %vm6540, %v5925, 0.0
        %v6563 = vsel %vm6541, %v5922, 0.0
        %v6564 = vsel %vm6541, %v5923, 0.0
        %v6565 = vsel %vm6542, %v5920, 0.0
        %v6566 = vsel %vm6542, %v5921, 0.0
        %v6567 = vsel %vm6543, %v5918, 0.0
        %v6568 = vsel %vm6543, %v5919, 0.0
        %v6569 = vsel %vm6544, %v5916, 0.0
        %v6570 = vsel %vm6544, %v5917, 0.0
        %v6571 = vsel %vm6545, %v5914, 0.0
        %v6572 = vsel %vm6545, %v5915, 0.0
        %v6573 = vsel %vm6546, %v5912, 0.0
        %v6574 = vsel %vm6546, %v5913, 0.0
        %v6575 = vsel %vm6547, %v5910, 0.0
        %v6576 = vsel %vm6547, %v5911, 0.0
        %v6577 = vsel %vm6548, %v5908, 0.0
        %v6578 = vsel %vm6548, %v5909, 0.0
        %v6579 = vsel %vm6549, %v5906, 0.0
        %v6580 = vsel %vm6549, %v5907, 0.0
        %v6581 = vsel %vm6550, %v5936, 0.0
        %v6582 = vsel %vm6550, %v5937, 0.0
        %v6583 = vpack.c.bf16 %v6553, %v6551
        %v6584 = vpack.c.bf16 %v6554, %v6552
        %v6585 = vpack.c.bf16 %v6557, %v6555
        %v6586 = vpack.c.bf16 %v6558, %v6556
        %v6587 = vpack.c.bf16 %v6561, %v6559
        %v6588 = vpack.c.bf16 %v6562, %v6560
        %v6589 = vpack.c.bf16 %v6565, %v6563
        %v6590 = vpack.c.bf16 %v6566, %v6564
        %v6591 = vpack.c.bf16 %v6569, %v6567
        %v6592 = vpack.c.bf16 %v6570, %v6568
        %v6593 = vpack.c.bf16 %v6573, %v6571
        %v6594 = vpack.c.bf16 %v6574, %v6572
        %v6595 = vpack.c.bf16 %v6577, %v6575
        %v6596 = vpack.c.bf16 %v6578, %v6576
        %v6597 = vpack.c.bf16 %v6581, %v6579
        %v6598 = vpack.c.bf16 %v6582, %v6580
        %s6599 = scalar_lea.vmem [#allocation7], 256
        %v6600 = vld [vmem:[%s6599] sm:$0xf]
        %v6601 = vld [vmem:[%s6599 + $0x4] sm:$0xf]
        %v6602 = vld [vmem:[%s6599 + $0x8] sm:$0xf]
        %v6603 = vld [vmem:[%s6599 + $0xc] sm:$0xf]
        %v6604 = vld [vmem:[%s6599 + $0x10] sm:$0xf]
        %v6605 = vld [vmem:[%s6599 + $0x14] sm:$0xf]
        %v6606 = vld [vmem:[%s6599 + $0x18] sm:$0xf]
        %v6607 = vld [vmem:[%s6599 + $0x1c] sm:$0xf]
        %v6608 = vld [vmem:[%s6599 + $0x20] sm:$0xf]
        %v6609 = vld [vmem:[%s6599 + $0x24] sm:$0xf]
        %v6610 = vld [vmem:[%s6599 + $0x28] sm:$0xf]
        %v6611 = vld [vmem:[%s6599 + $0x2c] sm:$0xf]
        %v6612 = vld [vmem:[%s6599 + $0x30] sm:$0xf]
        %v6613 = vld [vmem:[%s6599 + $0x34] sm:$0xf]
        %v6614 = vld [vmem:[%s6599 + $0x38] sm:$0xf]
        %v6615 = vld [vmem:[%s6599 + $0x3c] sm:$0xf]
        %v6616 = vld [vmem:[%s6599 + $0x40] sm:$0xf]
        %v6617 = vld [vmem:[%s6599 + $0x44] sm:$0xf]
        %v6618 = vld [vmem:[%s6599 + $0x48] sm:$0xf]
        %v6619 = vld [vmem:[%s6599 + $0x4c] sm:$0xf]
        %v6620 = vld [vmem:[%s6599 + $0x50] sm:$0xf]
        %v6621 = vld [vmem:[%s6599 + $0x54] sm:$0xf]
        %v6622 = vld [vmem:[%s6599 + $0x58] sm:$0xf]
        %v6623 = vld [vmem:[%s6599 + $0x5c] sm:$0xf]
        %v6624 = vld [vmem:[%s6599 + $0x60] sm:$0xf]
        %v6625 = vld [vmem:[%s6599 + $0x64] sm:$0xf]
        %v6626 = vld [vmem:[%s6599 + $0x68] sm:$0xf]
        %v6627 = vld [vmem:[%s6599 + $0x6c] sm:$0xf]
        %v6628 = vld [vmem:[%s6599 + $0x70] sm:$0xf]
        %v6629 = vld [vmem:[%s6599 + $0x74] sm:$0xf]
        %v6630 = vld [vmem:[%s6599 + $0x78] sm:$0xf]
        %v6631 = vld [vmem:[%s6599 + $0x7c] sm:$0xf]
        %v6664 = vunpack.c.l.b16 %v6600
        %v6665 = vunpack.c.l.b16 %v6601
        %v6666 = vunpack.c.l.b16 %v6602
        %v6667 = vunpack.c.l.b16 %v6603
        %v6668 = vunpack.c.l.b16 %v6604
        %v6669 = vunpack.c.l.b16 %v6605
        %v6670 = vunpack.c.l.b16 %v6606
        %v6671 = vunpack.c.l.b16 %v6607
        %v6672 = vunpack.c.l.b16 %v6608
        %v6673 = vunpack.c.l.b16 %v6609
        %v6674 = vunpack.c.l.b16 %v6610
        %v6675 = vunpack.c.l.b16 %v6611
        %v6676 = vunpack.c.l.b16 %v6612
        %v6677 = vunpack.c.l.b16 %v6613
        %v6678 = vunpack.c.l.b16 %v6614
        %v6679 = vunpack.c.l.b16 %v6615
        %v6680 = vunpack.c.l.b16 %v6616
        %v6681 = vunpack.c.l.b16 %v6617
        %v6682 = vunpack.c.l.b16 %v6618
        %v6683 = vunpack.c.l.b16 %v6619
        %v6684 = vunpack.c.l.b16 %v6620
        %v6685 = vunpack.c.l.b16 %v6621
        %v6686 = vunpack.c.l.b16 %v6622
        %v6687 = vunpack.c.l.b16 %v6623
        %v6688 = vunpack.c.l.b16 %v6624
        %v6689 = vunpack.c.l.b16 %v6625
        %v6690 = vunpack.c.l.b16 %v6626
        %v6691 = vunpack.c.l.b16 %v6627
        %v6692 = vunpack.c.l.b16 %v6628
        %v6693 = vunpack.c.l.b16 %v6629
        %v6694 = vunpack.c.l.b16 %v6630
        %v6695 = vunpack.c.l.b16 %v6631
        %v6696 = vpack.c.b16 %v6665, %v6664
        %v6697 = vpack.c.b16 %v6667, %v6666
        %v6698 = vpack.c.b16 %v6669, %v6668
        %v6699 = vpack.c.b16 %v6671, %v6670
        %v6700 = vpack.c.b16 %v6673, %v6672
        %v6701 = vpack.c.b16 %v6675, %v6674
        %v6702 = vpack.c.b16 %v6677, %v6676
        %v6703 = vpack.c.b16 %v6679, %v6678
        %v6704 = vpack.c.b16 %v6681, %v6680
        %v6705 = vpack.c.b16 %v6683, %v6682
        %v6706 = vpack.c.b16 %v6685, %v6684
        %v6707 = vpack.c.b16 %v6687, %v6686
        %v6708 = vpack.c.b16 %v6689, %v6688
        %v6709 = vpack.c.b16 %v6691, %v6690
        %v6710 = vpack.c.b16 %v6693, %v6692
        %v6711 = vpack.c.b16 %v6695, %v6694
        %6728 = vmatpush.bf16.msra.mxu0 %v6703
        %6729 = vmatpush.bf16.msra.mxu0 %v6702
        %6730 = vmatpush.bf16.msra.mxu0 %v6701
        %6731 = vmatpush.bf16.msra.mxu0 %v6700
        %6732 = vmatpush.bf16.msra.mxu0 %v6699
        %6733 = vmatpush.bf16.msra.mxu0 %v6698
        %6734 = vmatpush.bf16.msra.mxu0 %v6697
        %6735 = vmatpush.bf16.msra.mxu0 %v6696
        %6736 = vmatmul.bf16.gmra.mxu0 %v6583
        %v6737 = vpop.f32.mrf.mxu0
        %v6738 = vadd.f32 0.0, %v6737
        %v6739 = vpop.f32.mrf.mxu0
        %v6740 = vadd.f32 0.0, %v6739
        %6741 = vmatmul.bf16.gmra.mxu0 %v6585
        %v6742 = vpop.f32.mrf.mxu0
        %v6743 = vadd.f32 0.0, %v6742
        %v6744 = vpop.f32.mrf.mxu0
        %v6745 = vadd.f32 0.0, %v6744
        %6746 = vmatmul.bf16.gmra.mxu0 %v6587
        %v6747 = vpop.f32.mrf.mxu0
        %v6748 = vadd.f32 0.0, %v6747
        %v6749 = vpop.f32.mrf.mxu0
        %v6750 = vadd.f32 0.0, %v6749
        %6751 = vmatmul.bf16.gmra.mxu0 %v6589
        %v6752 = vpop.f32.mrf.mxu0
        %v6753 = vadd.f32 0.0, %v6752
        %v6754 = vpop.f32.mrf.mxu0
        %v6755 = vadd.f32 0.0, %v6754
        %6756 = vmatmul.bf16.gmra.mxu0 %v6591
        %v6757 = vpop.f32.mrf.mxu0
        %v6758 = vadd.f32 0.0, %v6757
        %v6759 = vpop.f32.mrf.mxu0
        %v6760 = vadd.f32 0.0, %v6759
        %6761 = vmatmul.bf16.gmra.mxu0 %v6593
        %v6762 = vpop.f32.mrf.mxu0
        %v6763 = vadd.f32 0.0, %v6762
        %v6764 = vpop.f32.mrf.mxu0
        %v6765 = vadd.f32 0.0, %v6764
        %6766 = vmatmul.bf16.gmra.mxu0 %v6595
        %v6767 = vpop.f32.mrf.mxu0
        %v6768 = vadd.f32 0.0, %v6767
        %v6769 = vpop.f32.mrf.mxu0
        %v6770 = vadd.f32 0.0, %v6769
        %6771 = vmatmul.bf16.gmra.mxu0 %v6597
        %v6772 = vpop.f32.mrf.mxu0
        %v6773 = vadd.f32 0.0, %v6772
        %v6774 = vpop.f32.mrf.mxu0
        %v6775 = vadd.f32 0.0, %v6774
        %6776 = vdwg.mxu0
        %6777 = vmatpush.bf16.msra.mxu0 %v6711
        %6778 = vmatpush.bf16.msra.mxu0 %v6710
        %6779 = vmatpush.bf16.msra.mxu0 %v6709
        %6780 = vmatpush.bf16.msra.mxu0 %v6708
        %6781 = vmatpush.bf16.msra.mxu0 %v6707
        %6782 = vmatpush.bf16.msra.mxu0 %v6706
        %6783 = vmatpush.bf16.msra.mxu0 %v6705
        %6784 = vmatpush.bf16.msra.mxu0 %v6704
        %6785 = vmatmul.bf16.gmra.mxu0 %v6584
        %v6786 = vpop.f32.mrf.mxu0
        %v6787 = vadd.f32 %v6738, %v6786
        %v6788 = vpop.f32.mrf.mxu0
        %v6789 = vadd.f32 %v6740, %v6788
        %6790 = vmatmul.bf16.gmra.mxu0 %v6586
        %v6791 = vpop.f32.mrf.mxu0
        %v6792 = vadd.f32 %v6743, %v6791
        %v6793 = vpop.f32.mrf.mxu0
        %v6794 = vadd.f32 %v6745, %v6793
        %6795 = vmatmul.bf16.gmra.mxu0 %v6588
        %v6796 = vpop.f32.mrf.mxu0
        %v6797 = vadd.f32 %v6748, %v6796
        %v6798 = vpop.f32.mrf.mxu0
        %v6799 = vadd.f32 %v6750, %v6798
        %6800 = vmatmul.bf16.gmra.mxu0 %v6590
        %v6801 = vpop.f32.mrf.mxu0
        %v6802 = vadd.f32 %v6753, %v6801
        %v6803 = vpop.f32.mrf.mxu0
        %v6804 = vadd.f32 %v6755, %v6803
        %6805 = vmatmul.bf16.gmra.mxu0 %v6592
        %v6806 = vpop.f32.mrf.mxu0
        %v6807 = vadd.f32 %v6758, %v6806
        %v6808 = vpop.f32.mrf.mxu0
        %v6809 = vadd.f32 %v6760, %v6808
        %6810 = vmatmul.bf16.gmra.mxu0 %v6594
        %v6811 = vpop.f32.mrf.mxu0
        %v6812 = vadd.f32 %v6763, %v6811
        %v6813 = vpop.f32.mrf.mxu0
        %v6814 = vadd.f32 %v6765, %v6813
        %6815 = vmatmul.bf16.gmra.mxu0 %v6596
        %v6816 = vpop.f32.mrf.mxu0
        %v6817 = vadd.f32 %v6768, %v6816
        %v6818 = vpop.f32.mrf.mxu0
        %v6819 = vadd.f32 %v6770, %v6818
        %6820 = vmatmul.bf16.gmra.mxu0 %v6598
        %v6821 = vpop.f32.mrf.mxu0
        %v6822 = vadd.f32 %v6773, %v6821
        %v6823 = vpop.f32.mrf.mxu0
        %v6824 = vadd.f32 %v6775, %v6823
        %6825 = vdwg.mxu0
        %v6826 = vadd.f32 %v6464, %v6787
        %v6827 = vadd.f32 %v6466, %v6789
        %v6828 = vadd.f32 %v6469, %v6792
        %v6829 = vadd.f32 %v6471, %v6794
        %v6830 = vadd.f32 %v6474, %v6797
        %v6831 = vadd.f32 %v6476, %v6799
        %v6832 = vadd.f32 %v6479, %v6802
        %v6833 = vadd.f32 %v6481, %v6804
        %v6834 = vadd.f32 %v6484, %v6807
        %v6835 = vadd.f32 %v6486, %v6809
        %v6836 = vadd.f32 %v6489, %v6812
        %v6837 = vadd.f32 %v6491, %v6814
        %v6838 = vadd.f32 %v6494, %v6817
        %v6839 = vadd.f32 %v6496, %v6819
        %v6840 = vadd.f32 %v6499, %v6822
        %v6841 = vadd.f32 %v6501, %v6824
        %v6842 = vld [vmem:[%s8] sm:$0x1]
        %v6844 = vperm.slane %v6842, 0
        %v6846 = vadd.f32 %v6826, %v6844
        %v6847 = vadd.f32 %v6827, %v6844
        %v6848 = vadd.f32 %v6828, %v6844
        %v6849 = vadd.f32 %v6829, %v6844
        %v6850 = vadd.f32 %v6830, %v6844
        %v6851 = vadd.f32 %v6831, %v6844
        %v6852 = vadd.f32 %v6832, %v6844
        %v6853 = vadd.f32 %v6833, %v6844
        %v6854 = vadd.f32 %v6834, %v6844
        %v6855 = vadd.f32 %v6835, %v6844
        %v6856 = vadd.f32 %v6836, %v6844
        %v6857 = vadd.f32 %v6837, %v6844
        %v6858 = vadd.f32 %v6838, %v6844
        %v6859 = vadd.f32 %v6839, %v6844
        %v6860 = vadd.f32 %v6840, %v6844
        %v6861 = vadd.f32 %v6841, %v6844
        %v6862 = vmax.f32 %v6846, 0.0
        %v6863 = vmax.f32 %v6847, 0.0
        %v6864 = vmax.f32 %v6848, 0.0
        %v6865 = vmax.f32 %v6849, 0.0
        %v6866 = vmax.f32 %v6850, 0.0
        %v6867 = vmax.f32 %v6851, 0.0
        %v6868 = vmax.f32 %v6852, 0.0
        %v6869 = vmax.f32 %v6853, 0.0
        %v6870 = vmax.f32 %v6854, 0.0
        %v6871 = vmax.f32 %v6855, 0.0
        %v6872 = vmax.f32 %v6856, 0.0
        %v6873 = vmax.f32 %v6857, 0.0
        %v6874 = vmax.f32 %v6858, 0.0
        %v6875 = vmax.f32 %v6859, 0.0
        %v6876 = vmax.f32 %v6860, 0.0
        %v6877 = vmax.f32 %v6861, 0.0
        %v6878 = vrot.slane %v6862, 4
        %v6879 = vrot.slane %v6863, 4
        %v6880 = vrot.slane %v6864, 4
        %v6881 = vrot.slane %v6865, 4
        %v6882 = vrot.slane %v6866, 4
        %v6883 = vrot.slane %v6867, 4
        %v6884 = vrot.slane %v6868, 4
        %v6885 = vrot.slane %v6869, 4
        %v6886 = vrot.slane %v6870, 4
        %v6887 = vrot.slane %v6871, 4
        %v6888 = vrot.slane %v6872, 4
        %v6889 = vrot.slane %v6873, 4
        %v6890 = vrot.slane %v6874, 4
        %v6891 = vrot.slane %v6875, 4
        %v6892 = vrot.slane %v6876, 4
        %v6893 = vrot.slane %v6877, 4
        %v6894 = vsel %vm5905, %v6892, %v6893
        %v6895 = vsel %vm5905, %v6891, %v6892
        %v6896 = vsel %vm5905, %v6890, %v6891
        %v6897 = vsel %vm5905, %v6889, %v6890
        %v6898 = vsel %vm5905, %v6888, %v6889
        %v6899 = vsel %vm5905, %v6887, %v6888
        %v6900 = vsel %vm5905, %v6886, %v6887
        %v6901 = vsel %vm5905, %v6885, %v6886
        %v6902 = vsel %vm5905, %v6884, %v6885
        %v6903 = vsel %vm5905, %v6883, %v6884
        %v6904 = vsel %vm5905, %v6882, %v6883
        %v6905 = vsel %vm5905, %v6881, %v6882
        %v6906 = vsel %vm5905, %v6880, %v6881
        %v6907 = vsel %vm5905, %v6879, %v6880
        %v6908 = vsel %vm5905, %v6878, %v6879
        %v6909 = vsel %vm5905, %v6893, %v6878
        %v6910 = vmax.f32 %v6862, %v6908
        %v6911 = vmax.f32 %v6863, %v6907
        %v6912 = vmax.f32 %v6864, %v6906
        %v6913 = vmax.f32 %v6865, %v6905
        %v6914 = vmax.f32 %v6866, %v6904
        %v6915 = vmax.f32 %v6867, %v6903
        %v6916 = vmax.f32 %v6868, %v6902
        %v6917 = vmax.f32 %v6869, %v6901
        %v6918 = vmax.f32 %v6870, %v6900
        %v6919 = vmax.f32 %v6871, %v6899
        %v6920 = vmax.f32 %v6872, %v6898
        %v6921 = vmax.f32 %v6873, %v6897
        %v6922 = vmax.f32 %v6874, %v6896
        %v6923 = vmax.f32 %v6875, %v6895
        %v6924 = vmax.f32 %v6876, %v6894
        %v6925 = vmax.f32 %v6877, %v6909
        %6926 = vrot.lane.b32.xlu0 %v6910, 96
        %v6927 = vpop.permute.xlu0 %6926
        %6928 = vrot.lane.b32.xlu0 %v6911, 96
        %v6929 = vpop.permute.xlu0 %6928
        %6930 = vrot.lane.b32.xlu0 %v6912, 96
        %v6931 = vpop.permute.xlu0 %6930
        %6932 = vrot.lane.b32.xlu0 %v6913, 96
        %v6933 = vpop.permute.xlu0 %6932
        %6934 = vrot.lane.b32.xlu0 %v6914, 96
        %v6935 = vpop.permute.xlu0 %6934
        %6936 = vrot.lane.b32.xlu0 %v6915, 96
        %v6937 = vpop.permute.xlu0 %6936
        %6938 = vrot.lane.b32.xlu0 %v6916, 96
        %v6939 = vpop.permute.xlu0 %6938
        %6940 = vrot.lane.b32.xlu0 %v6917, 96
        %v6941 = vpop.permute.xlu0 %6940
        %6942 = vrot.lane.b32.xlu0 %v6918, 96
        %v6943 = vpop.permute.xlu0 %6942
        %6944 = vrot.lane.b32.xlu0 %v6919, 96
        %v6945 = vpop.permute.xlu0 %6944
        %6946 = vrot.lane.b32.xlu0 %v6920, 96
        %v6947 = vpop.permute.xlu0 %6946
        %6948 = vrot.lane.b32.xlu0 %v6921, 96
        %v6949 = vpop.permute.xlu0 %6948
        %6950 = vrot.lane.b32.xlu0 %v6922, 96
        %v6951 = vpop.permute.xlu0 %6950
        %6952 = vrot.lane.b32.xlu0 %v6923, 96
        %v6953 = vpop.permute.xlu0 %6952
        %6954 = vrot.lane.b32.xlu0 %v6924, 96
        %v6955 = vpop.permute.xlu0 %6954
        %6956 = vrot.lane.b32.xlu0 %v6925, 96
        %v6957 = vpop.permute.xlu0 %6956
        %v6958 = vmax.f32 %v6910, %v6927
        %v6959 = vmax.f32 %v6911, %v6929
        %v6960 = vmax.f32 %v6912, %v6931
        %v6961 = vmax.f32 %v6913, %v6933
        %v6962 = vmax.f32 %v6914, %v6935
        %v6963 = vmax.f32 %v6915, %v6937
        %v6964 = vmax.f32 %v6916, %v6939
        %v6965 = vmax.f32 %v6917, %v6941
        %v6966 = vmax.f32 %v6918, %v6943
        %v6967 = vmax.f32 %v6919, %v6945
        %v6968 = vmax.f32 %v6920, %v6947
        %v6969 = vmax.f32 %v6921, %v6949
        %v6970 = vmax.f32 %v6922, %v6951
        %v6971 = vmax.f32 %v6923, %v6953
        %v6972 = vmax.f32 %v6924, %v6955
        %v6973 = vmax.f32 %v6925, %v6957
        %vm6974 = vcmp.ge.s32.totalorder %v809, 8
        %vm6975 = vcmp.ge.s32.totalorder %v810, 8
        %vm6976 = vcmp.ge.s32.totalorder %v811, 8
        %vm6977 = vcmp.ge.s32.totalorder %v812, 8
        %vm6978 = vcmp.ge.s32.totalorder %v813, 8
        %vm6979 = vcmp.ge.s32.totalorder %v814, 8
        %vm6980 = vcmp.ge.s32.totalorder %v815, 8
        %vm6981 = vcmp.ge.s32.totalorder %v816, 8
        %vm6982 = vcmp.ge.s32.totalorder %v817, 8
        %vm6983 = vcmp.ge.s32.totalorder %v818, 8
        %vm6984 = vcmp.ge.s32.totalorder %v819, 8
        %vm6985 = vcmp.ge.s32.totalorder %v820, 8
        %vm6986 = vcmp.ge.s32.totalorder %v821, 8
        %vm6987 = vcmp.ge.s32.totalorder %v822, 8
        %vm6988 = vcmp.ge.s32.totalorder %v823, 8
        %vm6989 = vcmp.ge.s32.totalorder %v824, 8
        %v6990 = vsel %vm6974, 1, 0
        %v6991 = vsel %vm6975, 1, 0
        %v6992 = vsel %vm6976, 1, 0
        %v6993 = vsel %vm6977, 1, 0
        %v6994 = vsel %vm6978, 1, 0
        %v6995 = vsel %vm6979, 1, 0
        %v6996 = vsel %vm6980, 1, 0
        %v6997 = vsel %vm6981, 1, 0
        %v6998 = vsel %vm6982, 1, 0
        %v6999 = vsel %vm6983, 1, 0
        %v7000 = vsel %vm6984, 1, 0
        %v7001 = vsel %vm6985, 1, 0
        %v7002 = vsel %vm6986, 1, 0
        %v7003 = vsel %vm6987, 1, 0
        %v7004 = vsel %vm6988, 1, 0
        %v7005 = vsel %vm6989, 1, 0
        %vm7006 = vcmp.eq.s32.totalorder %v6990, 1
        %vm7007 = vcmp.eq.s32.totalorder %v6991, 1
        %vm7008 = vcmp.eq.s32.totalorder %v6992, 1
        %vm7009 = vcmp.eq.s32.totalorder %v6993, 1
        %vm7010 = vcmp.eq.s32.totalorder %v6994, 1
        %vm7011 = vcmp.eq.s32.totalorder %v6995, 1
        %vm7012 = vcmp.eq.s32.totalorder %v6996, 1
        %vm7013 = vcmp.eq.s32.totalorder %v6997, 1
        %vm7014 = vcmp.eq.s32.totalorder %v6998, 1
        %vm7015 = vcmp.eq.s32.totalorder %v6999, 1
        %vm7016 = vcmp.eq.s32.totalorder %v7000, 1
        %vm7017 = vcmp.eq.s32.totalorder %v7001, 1
        %vm7018 = vcmp.eq.s32.totalorder %v7002, 1
        %vm7019 = vcmp.eq.s32.totalorder %v7003, 1
        %vm7020 = vcmp.eq.s32.totalorder %v7004, 1
        %vm7021 = vcmp.eq.s32.totalorder %v7005, 1
        %v7022 = vsel %vm7006, %v6973, 0.0
        %v7023 = vsel %vm7007, %v6958, 0.0
        %v7024 = vsel %vm7008, %v6959, 0.0
        %v7025 = vsel %vm7009, %v6960, 0.0
        %v7026 = vsel %vm7010, %v6961, 0.0
        %v7027 = vsel %vm7011, %v6962, 0.0
        %v7028 = vsel %vm7012, %v6963, 0.0
        %v7029 = vsel %vm7013, %v6964, 0.0
        %v7030 = vsel %vm7014, %v6965, 0.0
        %v7031 = vsel %vm7015, %v6966, 0.0
        %v7032 = vsel %vm7016, %v6967, 0.0
        %v7033 = vsel %vm7017, %v6968, 0.0
        %v7034 = vsel %vm7018, %v6969, 0.0
        %v7035 = vsel %vm7019, %v6970, 0.0
        %v7036 = vsel %vm7020, %v6971, 0.0
        %v7037 = vsel %vm7021, %v6972, 0.0
        %v7038 = vld [vmem:[#allocation9] sm:$0xff]
        %v7039 = vld [vmem:[#allocation9 + $0x8] sm:$0xff]
        %v7040 = vld [vmem:[#allocation9 + $0x10] sm:$0xff]
        %v7041 = vld [vmem:[#allocation9 + $0x18] sm:$0xff]
        %v7042 = vld [vmem:[#allocation9 + $0x20] sm:$0xff]
        %v7043 = vld [vmem:[#allocation9 + $0x28] sm:$0xff]
        %v7044 = vld [vmem:[#allocation9 + $0x30] sm:$0xff]
        %v7045 = vld [vmem:[#allocation9 + $0x38] sm:$0xff]
        %v7046 = vld [vmem:[#allocation9 + $0x40] sm:$0xff]
        %v7047 = vld [vmem:[#allocation9 + $0x48] sm:$0xff]
        %v7048 = vld [vmem:[#allocation9 + $0x50] sm:$0xff]
        %v7049 = vld [vmem:[#allocation9 + $0x58] sm:$0xff]
        %v7050 = vld [vmem:[#allocation9 + $0x60] sm:$0xff]
        %v7051 = vld [vmem:[#allocation9 + $0x68] sm:$0xff]
        %v7052 = vld [vmem:[#allocation9 + $0x70] sm:$0xff]
        %v7053 = vld [vmem:[#allocation9 + $0x78] sm:$0xff]
        %s7054 = scalar_lea.vmem [#allocation9], 128
        %v7055 = vld [vmem:[%s7054] sm:$0xff]
        %v7056 = vld [vmem:[%s7054 + $0x8] sm:$0xff]
        %v7057 = vld [vmem:[%s7054 + $0x10] sm:$0xff]
        %v7058 = vld [vmem:[%s7054 + $0x18] sm:$0xff]
        %v7059 = vld [vmem:[%s7054 + $0x20] sm:$0xff]
        %v7060 = vld [vmem:[%s7054 + $0x28] sm:$0xff]
        %v7061 = vld [vmem:[%s7054 + $0x30] sm:$0xff]
        %v7062 = vld [vmem:[%s7054 + $0x38] sm:$0xff]
        %v7063 = vld [vmem:[%s7054 + $0x40] sm:$0xff]
        %v7064 = vld [vmem:[%s7054 + $0x48] sm:$0xff]
        %v7065 = vld [vmem:[%s7054 + $0x50] sm:$0xff]
        %v7066 = vld [vmem:[%s7054 + $0x58] sm:$0xff]
        %v7067 = vld [vmem:[%s7054 + $0x60] sm:$0xff]
        %v7068 = vld [vmem:[%s7054 + $0x68] sm:$0xff]
        %v7069 = vld [vmem:[%s7054 + $0x70] sm:$0xff]
        %v7070 = vld [vmem:[%s7054 + $0x78] sm:$0xff]
        %7071 = vmatpush.msra.mxu0 %v7070
        %7072 = vmatpush.msra.mxu0 %v7069
        %7073 = vmatpush.msra.mxu0 %v7068
        %7074 = vmatpush.msra.mxu0 %v7067
        %7075 = vmatpush.msra.mxu0 %v7066
        %7076 = vmatpush.msra.mxu0 %v7065
        %7077 = vmatpush.msra.mxu0 %v7064
        %7078 = vmatpush.msra.mxu0 %v7063
        %7079 = vmatpush.msra.mxu0 %v7062
        %7080 = vmatpush.msra.mxu0 %v7061
        %7081 = vmatpush.msra.mxu0 %v7060
        %7082 = vmatpush.msra.mxu0 %v7059
        %7083 = vmatpush.msra.mxu0 %v7058
        %7084 = vmatpush.msra.mxu0 %v7057
        %7085 = vmatpush.msra.mxu0 %v7056
        %7086 = vmatpush.msra.mxu0 %v7055
        %7087 = vmatmul.f32.gmra.mxu0 %v6958
        %v7088 = vpop.f32.mrf.mxu0
        %v7089 = vadd.f32 0.0, %v7088
        %7090 = vmatmul.f32.gmra.mxu0 %v6959
        %v7091 = vpop.f32.mrf.mxu0
        %v7092 = vadd.f32 0.0, %v7091
        %7093 = vmatmul.f32.gmra.mxu0 %v6960
        %v7094 = vpop.f32.mrf.mxu0
        %v7095 = vadd.f32 0.0, %v7094
        %7096 = vmatmul.f32.gmra.mxu0 %v6961
        %v7097 = vpop.f32.mrf.mxu0
        %v7098 = vadd.f32 0.0, %v7097
        %7099 = vmatmul.f32.gmra.mxu0 %v6962
        %v7100 = vpop.f32.mrf.mxu0
        %v7101 = vadd.f32 0.0, %v7100
        %7102 = vmatmul.f32.gmra.mxu0 %v6963
        %v7103 = vpop.f32.mrf.mxu0
        %v7104 = vadd.f32 0.0, %v7103
        %7105 = vmatmul.f32.gmra.mxu0 %v6964
        %v7106 = vpop.f32.mrf.mxu0
        %v7107 = vadd.f32 0.0, %v7106
        %7108 = vmatmul.f32.gmra.mxu0 %v6965
        %v7109 = vpop.f32.mrf.mxu0
        %v7110 = vadd.f32 0.0, %v7109
        %7111 = vmatmul.f32.gmra.mxu0 %v6966
        %v7112 = vpop.f32.mrf.mxu0
        %v7113 = vadd.f32 0.0, %v7112
        %7114 = vmatmul.f32.gmra.mxu0 %v6967
        %v7115 = vpop.f32.mrf.mxu0
        %v7116 = vadd.f32 0.0, %v7115
        %7117 = vmatmul.f32.gmra.mxu0 %v6968
        %v7118 = vpop.f32.mrf.mxu0
        %v7119 = vadd.f32 0.0, %v7118
        %7120 = vmatmul.f32.gmra.mxu0 %v6969
        %v7121 = vpop.f32.mrf.mxu0
        %v7122 = vadd.f32 0.0, %v7121
        %7123 = vmatmul.f32.gmra.mxu0 %v6970
        %v7124 = vpop.f32.mrf.mxu0
        %v7125 = vadd.f32 0.0, %v7124
        %7126 = vmatmul.f32.gmra.mxu0 %v6971
        %v7127 = vpop.f32.mrf.mxu0
        %v7128 = vadd.f32 0.0, %v7127
        %7129 = vmatmul.f32.gmra.mxu0 %v6972
        %v7130 = vpop.f32.mrf.mxu0
        %v7131 = vadd.f32 0.0, %v7130
        %7132 = vmatmul.f32.gmra.mxu0 %v6973
        %v7133 = vpop.f32.mrf.mxu0
        %v7134 = vadd.f32 0.0, %v7133
        %7135 = vdwg.mxu0
        %7136 = vmatpush.msra.mxu0 %v7053
        %7137 = vmatpush.msra.mxu0 %v7052
        %7138 = vmatpush.msra.mxu0 %v7051
        %7139 = vmatpush.msra.mxu0 %v7050
        %7140 = vmatpush.msra.mxu0 %v7049
        %7141 = vmatpush.msra.mxu0 %v7048
        %7142 = vmatpush.msra.mxu0 %v7047
        %7143 = vmatpush.msra.mxu0 %v7046
        %7144 = vmatpush.msra.mxu0 %v7045
        %7145 = vmatpush.msra.mxu0 %v7044
        %7146 = vmatpush.msra.mxu0 %v7043
        %7147 = vmatpush.msra.mxu0 %v7042
        %7148 = vmatpush.msra.mxu0 %v7041
        %7149 = vmatpush.msra.mxu0 %v7040
        %7150 = vmatpush.msra.mxu0 %v7039
        %7151 = vmatpush.msra.mxu0 %v7038
        %7152 = vmatmul.f32.gmra.mxu0 %v7022
        %v7153 = vpop.f32.mrf.mxu0
        %v7154 = vadd.f32 %v7089, %v7153
        %7155 = vmatmul.f32.gmra.mxu0 %v7023
        %v7156 = vpop.f32.mrf.mxu0
        %v7157 = vadd.f32 %v7092, %v7156
        %7158 = vmatmul.f32.gmra.mxu0 %v7024
        %v7159 = vpop.f32.mrf.mxu0
        %v7160 = vadd.f32 %v7095, %v7159
        %7161 = vmatmul.f32.gmra.mxu0 %v7025
        %v7162 = vpop.f32.mrf.mxu0
        %v7163 = vadd.f32 %v7098, %v7162
        %7164 = vmatmul.f32.gmra.mxu0 %v7026
        %v7165 = vpop.f32.mrf.mxu0
        %v7166 = vadd.f32 %v7101, %v7165
        %7167 = vmatmul.f32.gmra.mxu0 %v7027
        %v7168 = vpop.f32.mrf.mxu0
        %v7169 = vadd.f32 %v7104, %v7168
        %7170 = vmatmul.f32.gmra.mxu0 %v7028
        %v7171 = vpop.f32.mrf.mxu0
        %v7172 = vadd.f32 %v7107, %v7171
        %7173 = vmatmul.f32.gmra.mxu0 %v7029
        %v7174 = vpop.f32.mrf.mxu0
        %v7175 = vadd.f32 %v7110, %v7174
        %7176 = vmatmul.f32.gmra.mxu0 %v7030
        %v7177 = vpop.f32.mrf.mxu0
        %v7178 = vadd.f32 %v7113, %v7177
        %7179 = vmatmul.f32.gmra.mxu0 %v7031
        %v7180 = vpop.f32.mrf.mxu0
        %v7181 = vadd.f32 %v7116, %v7180
        %7182 = vmatmul.f32.gmra.mxu0 %v7032
        %v7183 = vpop.f32.mrf.mxu0
        %v7184 = vadd.f32 %v7119, %v7183
        %7185 = vmatmul.f32.gmra.mxu0 %v7033
        %v7186 = vpop.f32.mrf.mxu0
        %v7187 = vadd.f32 %v7122, %v7186
        %7188 = vmatmul.f32.gmra.mxu0 %v7034
        %v7189 = vpop.f32.mrf.mxu0
        %v7190 = vadd.f32 %v7125, %v7189
        %7191 = vmatmul.f32.gmra.mxu0 %v7035
        %v7192 = vpop.f32.mrf.mxu0
        %v7193 = vadd.f32 %v7128, %v7192
        %7194 = vmatmul.f32.gmra.mxu0 %v7036
        %v7195 = vpop.f32.mrf.mxu0
        %v7196 = vadd.f32 %v7131, %v7195
        %7197 = vmatmul.f32.gmra.mxu0 %v7037
        %v7198 = vpop.f32.mrf.mxu0
        %v7199 = vadd.f32 %v7134, %v7198
        %7200 = vdwg.mxu0
        %vm7201 = vcmp.lt.s32.totalorder %v809, 8
        %vm7202 = vcmp.lt.s32.totalorder %v810, 8
        %vm7203 = vcmp.lt.s32.totalorder %v811, 8
        %vm7204 = vcmp.lt.s32.totalorder %v812, 8
        %vm7205 = vcmp.lt.s32.totalorder %v813, 8
        %vm7206 = vcmp.lt.s32.totalorder %v814, 8
        %vm7207 = vcmp.lt.s32.totalorder %v815, 8
        %vm7208 = vcmp.lt.s32.totalorder %v816, 8
        %vm7209 = vcmp.lt.s32.totalorder %v817, 8
        %vm7210 = vcmp.lt.s32.totalorder %v818, 8
        %vm7211 = vcmp.lt.s32.totalorder %v819, 8
        %vm7212 = vcmp.lt.s32.totalorder %v820, 8
        %vm7213 = vcmp.lt.s32.totalorder %v821, 8
        %vm7214 = vcmp.lt.s32.totalorder %v822, 8
        %vm7215 = vcmp.lt.s32.totalorder %v823, 8
        %vm7216 = vcmp.lt.s32.totalorder %v824, 8
        %v7217 = vsel %vm7201, 1, 0
        %v7218 = vsel %vm7202, 1, 0
        %v7219 = vsel %vm7203, 1, 0
        %v7220 = vsel %vm7204, 1, 0
        %v7221 = vsel %vm7205, 1, 0
        %v7222 = vsel %vm7206, 1, 0
        %v7223 = vsel %vm7207, 1, 0
        %v7224 = vsel %vm7208, 1, 0
        %v7225 = vsel %vm7209, 1, 0
        %v7226 = vsel %vm7210, 1, 0
        %v7227 = vsel %vm7211, 1, 0
        %v7228 = vsel %vm7212, 1, 0
        %v7229 = vsel %vm7213, 1, 0
        %v7230 = vsel %vm7214, 1, 0
        %v7231 = vsel %vm7215, 1, 0
        %v7232 = vsel %vm7216, 1, 0
        %vm7233 = vcmp.eq.s32.totalorder %v7217, 1
        %vm7234 = vcmp.eq.s32.totalorder %v7218, 1
        %vm7235 = vcmp.eq.s32.totalorder %v7219, 1
        %vm7236 = vcmp.eq.s32.totalorder %v7220, 1
        %vm7237 = vcmp.eq.s32.totalorder %v7221, 1
        %vm7238 = vcmp.eq.s32.totalorder %v7222, 1
        %vm7239 = vcmp.eq.s32.totalorder %v7223, 1
        %vm7240 = vcmp.eq.s32.totalorder %v7224, 1
        %vm7241 = vcmp.eq.s32.totalorder %v7225, 1
        %vm7242 = vcmp.eq.s32.totalorder %v7226, 1
        %vm7243 = vcmp.eq.s32.totalorder %v7227, 1
        %vm7244 = vcmp.eq.s32.totalorder %v7228, 1
        %vm7245 = vcmp.eq.s32.totalorder %v7229, 1
        %vm7246 = vcmp.eq.s32.totalorder %v7230, 1
        %vm7247 = vcmp.eq.s32.totalorder %v7231, 1
        %vm7248 = vcmp.eq.s32.totalorder %v7232, 1
        %v7249 = vsel %vm7233, %v6959, 0.0
        %v7250 = vsel %vm7234, %v6960, 0.0
        %v7251 = vsel %vm7235, %v6961, 0.0
        %v7252 = vsel %vm7236, %v6962, 0.0
        %v7253 = vsel %vm7237, %v6963, 0.0
        %v7254 = vsel %vm7238, %v6964, 0.0
        %v7255 = vsel %vm7239, %v6965, 0.0
        %v7256 = vsel %vm7240, %v6966, 0.0
        %v7257 = vsel %vm7241, %v6967, 0.0
        %v7258 = vsel %vm7242, %v6968, 0.0
        %v7259 = vsel %vm7243, %v6969, 0.0
        %v7260 = vsel %vm7244, %v6970, 0.0
        %v7261 = vsel %vm7245, %v6971, 0.0
        %v7262 = vsel %vm7246, %v6972, 0.0
        %v7263 = vsel %vm7247, %v6973, 0.0
        %v7264 = vsel %vm7248, %v6958, 0.0
        %s7265 = scalar_lea.vmem [#allocation9], 256
        %v7266 = vld [vmem:[%s7265] sm:$0xff]
        %v7267 = vld [vmem:[%s7265 + $0x8] sm:$0xff]
        %v7268 = vld [vmem:[%s7265 + $0x10] sm:$0xff]
        %v7269 = vld [vmem:[%s7265 + $0x18] sm:$0xff]
        %v7270 = vld [vmem:[%s7265 + $0x20] sm:$0xff]
        %v7271 = vld [vmem:[%s7265 + $0x28] sm:$0xff]
        %v7272 = vld [vmem:[%s7265 + $0x30] sm:$0xff]
        %v7273 = vld [vmem:[%s7265 + $0x38] sm:$0xff]
        %v7274 = vld [vmem:[%s7265 + $0x40] sm:$0xff]
        %v7275 = vld [vmem:[%s7265 + $0x48] sm:$0xff]
        %v7276 = vld [vmem:[%s7265 + $0x50] sm:$0xff]
        %v7277 = vld [vmem:[%s7265 + $0x58] sm:$0xff]
        %v7278 = vld [vmem:[%s7265 + $0x60] sm:$0xff]
        %v7279 = vld [vmem:[%s7265 + $0x68] sm:$0xff]
        %v7280 = vld [vmem:[%s7265 + $0x70] sm:$0xff]
        %v7281 = vld [vmem:[%s7265 + $0x78] sm:$0xff]
        %7282 = vmatpush.msra.mxu0 %v7281
        %7283 = vmatpush.msra.mxu0 %v7280
        %7284 = vmatpush.msra.mxu0 %v7279
        %7285 = vmatpush.msra.mxu0 %v7278
        %7286 = vmatpush.msra.mxu0 %v7277
        %7287 = vmatpush.msra.mxu0 %v7276
        %7288 = vmatpush.msra.mxu0 %v7275
        %7289 = vmatpush.msra.mxu0 %v7274
        %7290 = vmatpush.msra.mxu0 %v7273
        %7291 = vmatpush.msra.mxu0 %v7272
        %7292 = vmatpush.msra.mxu0 %v7271
        %7293 = vmatpush.msra.mxu0 %v7270
        %7294 = vmatpush.msra.mxu0 %v7269
        %7295 = vmatpush.msra.mxu0 %v7268
        %7296 = vmatpush.msra.mxu0 %v7267
        %7297 = vmatpush.msra.mxu0 %v7266
        %7298 = vmatmul.f32.gmra.mxu0 %v7249
        %v7299 = vpop.f32.mrf.mxu0
        %v7300 = vadd.f32 0.0, %v7299
        %7301 = vmatmul.f32.gmra.mxu0 %v7250
        %v7302 = vpop.f32.mrf.mxu0
        %v7303 = vadd.f32 0.0, %v7302
        %7304 = vmatmul.f32.gmra.mxu0 %v7251
        %v7305 = vpop.f32.mrf.mxu0
        %v7306 = vadd.f32 0.0, %v7305
        %7307 = vmatmul.f32.gmra.mxu0 %v7252
        %v7308 = vpop.f32.mrf.mxu0
        %v7309 = vadd.f32 0.0, %v7308
        %7310 = vmatmul.f32.gmra.mxu0 %v7253
        %v7311 = vpop.f32.mrf.mxu0
        %v7312 = vadd.f32 0.0, %v7311
        %7313 = vmatmul.f32.gmra.mxu0 %v7254
        %v7314 = vpop.f32.mrf.mxu0
        %v7315 = vadd.f32 0.0, %v7314
        %7316 = vmatmul.f32.gmra.mxu0 %v7255
        %v7317 = vpop.f32.mrf.mxu0
        %v7318 = vadd.f32 0.0, %v7317
        %7319 = vmatmul.f32.gmra.mxu0 %v7256
        %v7320 = vpop.f32.mrf.mxu0
        %v7321 = vadd.f32 0.0, %v7320
        %7322 = vmatmul.f32.gmra.mxu0 %v7257
        %v7323 = vpop.f32.mrf.mxu0
        %v7324 = vadd.f32 0.0, %v7323
        %7325 = vmatmul.f32.gmra.mxu0 %v7258
        %v7326 = vpop.f32.mrf.mxu0
        %v7327 = vadd.f32 0.0, %v7326
        %7328 = vmatmul.f32.gmra.mxu0 %v7259
        %v7329 = vpop.f32.mrf.mxu0
        %v7330 = vadd.f32 0.0, %v7329
        %7331 = vmatmul.f32.gmra.mxu0 %v7260
        %v7332 = vpop.f32.mrf.mxu0
        %v7333 = vadd.f32 0.0, %v7332
        %7334 = vmatmul.f32.gmra.mxu0 %v7261
        %v7335 = vpop.f32.mrf.mxu0
        %v7336 = vadd.f32 0.0, %v7335
        %7337 = vmatmul.f32.gmra.mxu0 %v7262
        %v7338 = vpop.f32.mrf.mxu0
        %v7339 = vadd.f32 0.0, %v7338
        %7340 = vmatmul.f32.gmra.mxu0 %v7263
        %v7341 = vpop.f32.mrf.mxu0
        %v7342 = vadd.f32 0.0, %v7341
        %7343 = vmatmul.f32.gmra.mxu0 %v7264
        %v7344 = vpop.f32.mrf.mxu0
        %v7345 = vadd.f32 0.0, %v7344
        %7346 = vdwg.mxu0
        %v7347 = vadd.f32 %v7154, %v7300
        %v7348 = vadd.f32 %v7157, %v7303
        %v7349 = vadd.f32 %v7160, %v7306
        %v7350 = vadd.f32 %v7163, %v7309
        %v7351 = vadd.f32 %v7166, %v7312
        %v7352 = vadd.f32 %v7169, %v7315
        %v7353 = vadd.f32 %v7172, %v7318
        %v7354 = vadd.f32 %v7175, %v7321
        %v7355 = vadd.f32 %v7178, %v7324
        %v7356 = vadd.f32 %v7181, %v7327
        %v7357 = vadd.f32 %v7184, %v7330
        %v7358 = vadd.f32 %v7187, %v7333
        %v7359 = vadd.f32 %v7190, %v7336
        %v7360 = vadd.f32 %v7193, %v7339
        %v7361 = vadd.f32 %v7196, %v7342
        %v7362 = vadd.f32 %v7199, %v7345
        %v7363 = vld [vmem:[%s9] sm:$0x1]
        %v7365 = vperm.slane %v7363, 0
        %v7367 = vadd.f32 %v7347, %v7365
        %v7368 = vadd.f32 %v7348, %v7365
        %v7369 = vadd.f32 %v7349, %v7365
        %v7370 = vadd.f32 %v7350, %v7365
        %v7371 = vadd.f32 %v7351, %v7365
        %v7372 = vadd.f32 %v7352, %v7365
        %v7373 = vadd.f32 %v7353, %v7365
        %v7374 = vadd.f32 %v7354, %v7365
        %v7375 = vadd.f32 %v7355, %v7365
        %v7376 = vadd.f32 %v7356, %v7365
        %v7377 = vadd.f32 %v7357, %v7365
        %v7378 = vadd.f32 %v7358, %v7365
        %v7379 = vadd.f32 %v7359, %v7365
        %v7380 = vadd.f32 %v7360, %v7365
        %v7381 = vadd.f32 %v7361, %v7365
        %v7382 = vadd.f32 %v7362, %v7365
        %v7383 = vmax.f32 %v7367, 0.0
        %v7384 = vmax.f32 %v7368, 0.0
        %v7385 = vmax.f32 %v7369, 0.0
        %v7386 = vmax.f32 %v7370, 0.0
        %v7387 = vmax.f32 %v7371, 0.0
        %v7388 = vmax.f32 %v7372, 0.0
        %v7389 = vmax.f32 %v7373, 0.0
        %v7390 = vmax.f32 %v7374, 0.0
        %v7391 = vmax.f32 %v7375, 0.0
        %v7392 = vmax.f32 %v7376, 0.0
        %v7393 = vmax.f32 %v7377, 0.0
        %v7394 = vmax.f32 %v7378, 0.0
        %v7395 = vmax.f32 %v7379, 0.0
        %v7396 = vmax.f32 %v7380, 0.0
        %v7397 = vmax.f32 %v7381, 0.0
        %v7398 = vmax.f32 %v7382, 0.0
        %v7399 = vmax.f32 %v7383, %v7384
        %v7400 = vmax.f32 %v7384, %v7385
        %v7401 = vmax.f32 %v7385, %v7386
        %v7402 = vmax.f32 %v7386, %v7387
        %v7403 = vmax.f32 %v7387, %v7388
        %v7404 = vmax.f32 %v7388, %v7389
        %v7405 = vmax.f32 %v7389, %v7390
        %v7406 = vmax.f32 %v7390, %v7391
        %v7407 = vmax.f32 %v7391, %v7392
        %v7408 = vmax.f32 %v7392, %v7393
        %v7409 = vmax.f32 %v7393, %v7394
        %v7410 = vmax.f32 %v7394, %v7395
        %v7411 = vmax.f32 %v7395, %v7396
        %v7412 = vmax.f32 %v7396, %v7397
        %v7413 = vmax.f32 %v7397, %v7398
        %v7414 = vmax.f32 %v7398, %v7383
        %7415 = vrot.lane.b32.xlu0 %v7399, 64
        %v7416 = vpop.permute.xlu0 %7415
        %7417 = vrot.lane.b32.xlu0 %v7400, 64
        %v7418 = vpop.permute.xlu0 %7417
        %7419 = vrot.lane.b32.xlu0 %v7401, 64
        %v7420 = vpop.permute.xlu0 %7419
        %7421 = vrot.lane.b32.xlu0 %v7402, 64
        %v7422 = vpop.permute.xlu0 %7421
        %7423 = vrot.lane.b32.xlu0 %v7403, 64
        %v7424 = vpop.permute.xlu0 %7423
        %7425 = vrot.lane.b32.xlu0 %v7404, 64
        %v7426 = vpop.permute.xlu0 %7425
        %7427 = vrot.lane.b32.xlu0 %v7405, 64
        %v7428 = vpop.permute.xlu0 %7427
        %7429 = vrot.lane.b32.xlu0 %v7406, 64
        %v7430 = vpop.permute.xlu0 %7429
        %7431 = vrot.lane.b32.xlu0 %v7407, 64
        %v7432 = vpop.permute.xlu0 %7431
        %7433 = vrot.lane.b32.xlu0 %v7408, 64
        %v7434 = vpop.permute.xlu0 %7433
        %7435 = vrot.lane.b32.xlu0 %v7409, 64
        %v7436 = vpop.permute.xlu0 %7435
        %7437 = vrot.lane.b32.xlu0 %v7410, 64
        %v7438 = vpop.permute.xlu0 %7437
        %7439 = vrot.lane.b32.xlu0 %v7411, 64
        %v7440 = vpop.permute.xlu0 %7439
        %7441 = vrot.lane.b32.xlu0 %v7412, 64
        %v7442 = vpop.permute.xlu0 %7441
        %7443 = vrot.lane.b32.xlu0 %v7413, 64
        %v7444 = vpop.permute.xlu0 %7443
        %7445 = vrot.lane.b32.xlu0 %v7414, 64
        %v7446 = vpop.permute.xlu0 %7445
        %v7447 = vmax.f32 %v7399, %v7416
        %v7448 = vmax.f32 %v7400, %v7418
        %v7449 = vmax.f32 %v7401, %v7420
        %v7450 = vmax.f32 %v7402, %v7422
        %v7451 = vmax.f32 %v7403, %v7424
        %v7452 = vmax.f32 %v7404, %v7426
        %v7453 = vmax.f32 %v7405, %v7428
        %v7454 = vmax.f32 %v7406, %v7430
        %v7455 = vmax.f32 %v7407, %v7432
        %v7456 = vmax.f32 %v7408, %v7434
        %v7457 = vmax.f32 %v7409, %v7436
        %v7458 = vmax.f32 %v7410, %v7438
        %v7459 = vmax.f32 %v7411, %v7440
        %v7460 = vmax.f32 %v7412, %v7442
        %v7461 = vmax.f32 %v7413, %v7444
        %v7462 = vmax.f32 %v7414, %v7446
        %v7463 = vmul.u32 %v617, 16
        %vm7464 = vcmp.eq.s32.totalorder %v2509, %v7463
        %v7465 = vsel %vm7464, 1, 0
        %v7466 = vcvt.s32.f32 %v7465
        %7467 = vmatpush.msra.mxu0 %v7462
        %7468 = vmatpush.msra.mxu0 %v7461
        %7469 = vmatpush.msra.mxu0 %v7460
        %7470 = vmatpush.msra.mxu0 %v7459
        %7471 = vmatpush.msra.mxu0 %v7458
        %7472 = vmatpush.msra.mxu0 %v7457
        %7473 = vmatpush.msra.mxu0 %v7456
        %7474 = vmatpush.msra.mxu0 %v7455
        %7475 = vmatpush.msra.mxu0 %v7454
        %7476 = vmatpush.msra.mxu0 %v7453
        %7477 = vmatpush.msra.mxu0 %v7452
        %7478 = vmatpush.msra.mxu0 %v7451
        %7479 = vmatpush.msra.mxu0 %v7450
        %7480 = vmatpush.msra.mxu0 %v7449
        %7481 = vmatpush.msra.mxu0 %v7448
        %7482 = vmatpush.msra.mxu0 %v7447
        %7483 = vmatmul.f32.gmra.mxu0 %v7466
        %v7484 = vpop.f32.mrf.mxu0
        %v7485 = vadd.f32 0.0, %v7484
        %7486 = vdwg.mxu0
        %v7487 = vld [vmem:[#allocation10] sm:$0xff]
        %v7488 = vld [vmem:[#allocation10 + $0x8] sm:$0xff]
        %v7489 = vld [vmem:[#allocation10 + $0x10] sm:$0xff]
        %v7490 = vld [vmem:[#allocation10 + $0x18] sm:$0xff]
        %v7491 = vld [vmem:[#allocation10 + $0x20] sm:$0xff]
        %v7492 = vld [vmem:[#allocation10 + $0x28] sm:$0xff]
        %v7493 = vld [vmem:[#allocation10 + $0x30] sm:$0xff]
        %v7494 = vld [vmem:[#allocation10 + $0x38] sm:$0xff]
        %v7495 = vld [vmem:[#allocation10 + $0x40] sm:$0xff]
        %v7496 = vld [vmem:[#allocation10 + $0x48] sm:$0xff]
        %v7497 = vld [vmem:[#allocation10 + $0x50] sm:$0xff]
        %v7498 = vld [vmem:[#allocation10 + $0x58] sm:$0xff]
        %v7499 = vld [vmem:[#allocation10 + $0x60] sm:$0xff]
        %v7500 = vld [vmem:[#allocation10 + $0x68] sm:$0xff]
        %v7501 = vld [vmem:[#allocation10 + $0x70] sm:$0xff]
        %v7502 = vld [vmem:[#allocation10 + $0x78] sm:$0xff]
        %v7503 = vld [vmem:[%s611] sm:$0xff]
        %v7504 = vld [vmem:[%s11] sm:$0xff]
        %v7505 = vld [vmem:[%s11 + $0x8] sm:$0xff]
        %vm7506 = vcmask 64512
        %v7508 = vsel %vm7506, %v7503, 0
        %7510 = vmatpush.msra.mxu0 0.0
        %7511 = vmatpush.msra.mxu0 0.0
        %7512 = vmatpush.msra.mxu0 0.0
        %7513 = vmatpush.msra.mxu0 0.0
        %7514 = vmatpush.msra.mxu0 0.0
        %7515 = vmatpush.msra.mxu0 0.0
        %7516 = vmatpush.msra.mxu0 0.0
        %7517 = vmatpush.msra.mxu0 0.0
        %7518 = vmatpush.msra.mxu0 0.0
        %7519 = vmatpush.msra.mxu0 0.0
        %7520 = vmatpush.msra.mxu0 0.0
        %7521 = vmatpush.msra.mxu0 0.0
        %7522 = vmatpush.msra.mxu0 0.0
        %7523 = vmatpush.msra.mxu0 0.0
        %7524 = vmatpush.msra.mxu0 0.0
        %7525 = vmatpush.msra.mxu0 %v7504
        %7526 = vmatmul.f32.gmra.mxu0 %v7508
        %v7527 = vpop.f32.mrf.mxu0
        %v7528 = vadd.f32 0.0, %v7527
        %7529 = vdwg.mxu0
        %7530 = vmatpush.msra.mxu0 0.0
        %7531 = vmatpush.msra.mxu0 0.0
        %7532 = vmatpush.msra.mxu0 0.0
        %7533 = vmatpush.msra.mxu0 0.0
        %7534 = vmatpush.msra.mxu0 0.0
        %7535 = vmatpush.msra.mxu0 0.0
        %7536 = vmatpush.msra.mxu0 0.0
        %7537 = vmatpush.msra.mxu0 0.0
        %7538 = vmatpush.msra.mxu0 0.0
        %7539 = vmatpush.msra.mxu0 0.0
        %7540 = vmatpush.msra.mxu0 0.0
        %7541 = vmatpush.msra.mxu0 0.0
        %7542 = vmatpush.msra.mxu0 0.0
        %7543 = vmatpush.msra.mxu0 0.0
        %7544 = vmatpush.msra.mxu0 0.0
        %7545 = vmatpush.msra.mxu0 %v7505
        %7546 = vmatmul.f32.gmra.mxu0 %v7508
        %v7547 = vpop.f32.mrf.mxu0
        %v7548 = vadd.f32 0.0, %v7547
        %7549 = vdwg.mxu0
        %vm7550 = vcmask 523264
        %v7552 = vsel %vm7550, %v7485, 0
        %7554 = vmatpush.msra.mxu0 0.0
        %7555 = vmatpush.msra.mxu0 0.0
        %7556 = vmatpush.msra.mxu0 0.0
        %7557 = vmatpush.msra.mxu0 0.0
        %7558 = vmatpush.msra.mxu0 0.0
        %7559 = vmatpush.msra.mxu0 0.0
        %7560 = vmatpush.msra.mxu0 0.0
        %7561 = vmatpush.msra.mxu0 0.0
        %7562 = vmatpush.msra.mxu0 %v7501
        %7563 = vmatpush.msra.mxu0 %v7499
        %7564 = vmatpush.msra.mxu0 %v7497
        %7565 = vmatpush.msra.mxu0 %v7495
        %7566 = vmatpush.msra.mxu0 %v7493
        %7567 = vmatpush.msra.mxu0 %v7491
        %7568 = vmatpush.msra.mxu0 %v7489
        %7569 = vmatpush.msra.mxu0 %v7487
        %7570 = vmatmul.f32.gmra.mxu0 %v7552
        %v7571 = vpop.f32.mrf.mxu0
        %v7572 = vadd.f32 %v7528, %v7571
        %7573 = vdwg.mxu0
        %7574 = vmatpush.msra.mxu0 0.0
        %7575 = vmatpush.msra.mxu0 0.0
        %7576 = vmatpush.msra.mxu0 0.0
        %7577 = vmatpush.msra.mxu0 0.0
        %7578 = vmatpush.msra.mxu0 0.0
        %7579 = vmatpush.msra.mxu0 0.0
        %7580 = vmatpush.msra.mxu0 0.0
        %7581 = vmatpush.msra.mxu0 0.0
        %7582 = vmatpush.msra.mxu0 %v7502
        %7583 = vmatpush.msra.mxu0 %v7500
        %7584 = vmatpush.msra.mxu0 %v7498
        %7585 = vmatpush.msra.mxu0 %v7496
        %7586 = vmatpush.msra.mxu0 %v7494
        %7587 = vmatpush.msra.mxu0 %v7492
        %7588 = vmatpush.msra.mxu0 %v7490
        %7589 = vmatpush.msra.mxu0 %v7488
        %7590 = vmatmul.f32.gmra.mxu0 %v7552
        %v7591 = vpop.f32.mrf.mxu0
        %v7592 = vadd.f32 %v7548, %v7591
        %7593 = vdwg.mxu0
        %v7594 = vld [vmem:[%s12] sm:$0x3]
        %v7596 = vperm.slane %v7594, 0
        %v7597 = vperm.slane %v7594, 1
        %v7600 = vadd.f32 %v7572, %v7596
        %v7601 = vadd.f32 %v7592, %v7597
        %7603 = vrot.lane.b32.xlu0 %v7600, 96
        %v7604 = vpop.permute.xlu0 %7603
        %v7606 = vmax.f32 %v7600, %v7604
        %7607 = vrot.lane.b32.xlu0 %v7600, 64
        %v7608 = vpop.permute.xlu0 %7607
        %v7610 = vmax.f32 %v7606, %v7608
        %7611 = vrot.lane.b32.xlu0 %v7600, 32
        %v7612 = vpop.permute.xlu0 %7611
        %v7614 = vmax.f32 %v7610, %v7612
        %v7615 = vmax.f32 %v7614, %v7601
        %7617 = vrot.lane.b32.xlu0 %v7601, 96
        %v7618 = vpop.permute.xlu0 %7617
        %v7620 = vmax.f32 %v7615, %v7618
        %v7621 = vld [vmem:[%s13] sm:$0xff]
        %v7622 = vld [vmem:[%s13 + $0x8] sm:$0xff]
        %v7623 = vld [vmem:[%s13 + $0x10] sm:$0xff]
        %v7624 = vld [vmem:[%s13 + $0x18] sm:$0xff]
        %v7625 = vld [vmem:[%s14] sm:$0x1]
        %v7627 = vperm.slane %v7625, 0
        %vm7629 = vcmask 261120
        %v7631 = vsel %vm7629, %v7620, 0
        %7633 = vmatpush.msra.mxu0 0.0
        %7634 = vmatpush.msra.mxu0 0.0
        %7635 = vmatpush.msra.mxu0 0.0
        %7636 = vmatpush.msra.mxu0 0.0
        %7637 = vmatpush.msra.mxu0 0.0
        %7638 = vmatpush.msra.mxu0 0.0
        %7639 = vmatpush.msra.mxu0 0.0
        %7640 = vmatpush.msra.mxu0 0.0
        %7641 = vmatpush.msra.mxu0 0.0
        %7642 = vmatpush.msra.mxu0 0.0
        %7643 = vmatpush.msra.mxu0 0.0
        %7644 = vmatpush.msra.mxu0 0.0
        %7645 = vmatpush.msra.mxu0 %v7624
        %7646 = vmatpush.msra.mxu0 %v7623
        %7647 = vmatpush.msra.mxu0 %v7622
        %7648 = vmatpush.msra.mxu0 %v7621
        %7649 = vmatmul.f32.gmra.mxu0 %v7631
        %v7650 = vpop.f32.mrf.mxu0
        %v7651 = vadd.f32 %v7627, %v7650
        %7652 = vdwg.mxu0
        %7654 = vrot.lane.b32.xlu0 %v7651, 124
        %v7655 = vpop.permute.xlu0 %7654
        %v7657 = vmax.f32 %v7651, %v7655
        %7658 = vrot.lane.b32.xlu0 %v7651, 120
        %v7659 = vpop.permute.xlu0 %7658
        %v7661 = vmax.f32 %v7657, %v7659
        %7662 = vrot.lane.b32.xlu0 %v7651, 116
        %v7663 = vpop.permute.xlu0 %7662
        %v7665 = vmax.f32 %v7661, %v7663
        %7666 = vrot.lane.b32.xlu0 %v7651, 112
        %v7667 = vpop.permute.xlu0 %7666
        %v7669 = vmax.f32 %v7665, %v7667
        %7670 = vrot.lane.b32.xlu0 %v7651, 108
        %v7671 = vpop.permute.xlu0 %7670
        %v7673 = vmax.f32 %v7669, %v7671
        %vm7674 = vcmask 31744
        %7675 = vst.msk [vmem:[%s615] sm:$0xff] %vm7674, %v7673
        %p7676 = scmp.lt.s32.totalorder %s32, 1
        %s7677 = scalar_select %p7676, %s32, 1
        %s7678 = smul.addr %s7677, 8
        %s7679 = scalar_lea.vmem %s15, %s7678
        // Predicated region
        $region105: #{cnn_maxo_forward.1} parent=79 // pred_check
          %p7680 = pneg %p375
        $region106: #{cnn_maxo_forward.1} parent=79 // pred_check_branch
          %7682 = sbr.rel (%p7680) target = $region108
        $region107: #{cnn_maxo_forward.1} parent=79 // pred_region
          _
        $region108: #{cnn_maxo_forward.1} parent=79 // pred_fallthru
          _
      $region80: #{cnn_maxo_forward.1} parent=5 // pred_fallthru
        _
      %p7683 = scmp.le.s32.totalorder 2, %s27
      // Predicated region
      $region109: #{cnn_maxo_forward.1} parent=5 // pred_check
        %p7684 = pneg %p7683
      $region110: #{cnn_maxo_forward.1} parent=5 // pred_check_branch
        %7686 = sbr.rel (%p7684) target = $region112
      $region111: #{cnn_maxo_forward.1} parent=5 // pred_region
        %s7687 = ssub.s32 %s27, 2
        // Predicated region
        $region113: #{cnn_maxo_forward.1} parent=111 // pred_check
          %p7688 = pneg %p381
        $region114: #{cnn_maxo_forward.1} parent=111 // pred_check_branch
          %7690 = sbr.rel (%p7688) target = $region116
        $region115: #{cnn_maxo_forward.1} parent=111 // pred_region
          %p7691 = scmp.lt.s32.totalorder %s33, 1
          %s7692 = scalar_select %p7691, %s33, 1
          %s7693 = smul.addr %s7692, 8
          %s7694 = scalar_lea.vmem %s15, %s7693
        $region116: #{cnn_maxo_forward.1} parent=111 // pred_fallthru
          _
      $region112: #{cnn_maxo_forward.1} parent=5 // pred_fallthru
        _
    $region6: #{cnn_maxo_forward.1} parent=1 // loop_footer
      %s31 = sadd.s32 1, %s27
    $region7: #{cnn_maxo_forward.1} parent=1 // loop_footer_branch
      %26 = sbr.rel target = $region3
    $region8: #{cnn_maxo_forward.1} parent=1 // loop_exit
      _
    %7695 = vsyncpa [#allocation3], 1
    %s7696 = scalar_lea.sflag [#allocation3], 1
    %7697 = vsyncpa %s7696, 1
    %7698 = vsyncpa [#allocation5], 1
    %7699 = vsyncpa [#allocation8], 1
    %7700 = vsyncpa [#allocation11], 1

</llo_original>
